<compile_context>
chip_gen: v7x
topology: tpu7x:2x2x1
jax: 0.10.0
libtpu: 0.0.40
codegen_flags: <defaults>
</compile_context>

<pallas_src>
import jax
import jax.numpy as jnp
from jax.experimental import pallas as pl
from jax.experimental.pallas import tpu as pltpu


def _num_tensorcores() -> int:
    """Best-effort TensorCore count (v7x = 2, v5e/v6e = 1)."""
    try:
        info = pltpu.get_tpu_info()
        for name in ("num_tensorcores", "tensorcore_count"):
            v = getattr(info, name, None)
            if isinstance(v, int) and v > 0:
                return v
    except Exception:
        pass
    try:
        kind = jax.devices()[0].device_kind.lower()
        if "v7" in kind:
            return 2
    except Exception:
        pass
    return 1


def _sincos_kernel(pos_ref, freq_ref, phase_ref, out_ref):
    # pos_ref:   (tile_n, r)  f32  -- r positions folded per output row
    # freq_ref:  (r, Dp)      f32  -- resident; row k holds freq in segment k
    # phase_ref: (1, Dp)      f32  -- resident; [0, pi/2, 0, pi/2, ...]
    # out_ref:   (tile_n, Dp)
    r = freq_ref.shape[0]
    pos = pos_ref[...]
    freq = freq_ref[...]
    # theta[i, j] = pos[i, j // D] * freq[j % D]; segments are disjoint so the
    # sum over k is exact.  Pure VALU broadcast muls/adds (no MXU, no masks).
    theta = pos[:, 0:1] * freq[0:1, :]
    for k in range(1, r):
        theta = theta + pos[:, k : k + 1] * freq[k : k + 1, :]
    # Single EUP transcendental per element; math in f32, cast only at store.
    out_ref[...] = jnp.sin(theta + phase_ref[...]).astype(out_ref.dtype)


def sinusoidal_position_embedding(position_ids, output_dim: int, *,
                                  tile_n: int | None = None,
                                  out_dtype=jnp.float32):
    """Pallas equivalent of SinusoidalPositionEmbedding.forward.

    position_ids: (N,) int/float array -> (N, output_dim) array of out_dtype.
    (positions above 2^24 lose integer exactness after the f32 cast, matching
    typical PyTorch float behavior.)
    """
    assert output_dim % 2 == 0, "output_dim must be even"
    n = int(position_ids.shape[0])
    D = int(output_dim)

    # Lane packing: fold r rows into one lane-dense 128-wide output row when
    # D divides 128 (small-D case); otherwise r = 1 and the block equals D.
    r = (128 // D) if (D < 128 and 128 % D == 0) else 1
    Dp = r * D

    n_cores = _num_tensorcores()
    itemsize = jnp.dtype(out_dtype).itemsize

    # ---- tiny host-side tables (resident in VMEM across all grid steps)
    half = jnp.arange(D // 2, dtype=jnp.float32)
    freq_full = jnp.repeat(jnp.power(10000.0, -2.0 * half / D), 2)          # (D,)
    phase_full = jnp.tile(jnp.array([0.0, jnp.pi / 2], jnp.float32), D // 2)  # (D,)
    freq_packed = jnp.kron(jnp.eye(r, dtype=jnp.float32), freq_full[None, :])  # (r, Dp)
    phase_packed = jnp.tile(phase_full, r)[None, :]                          # (1, Dp)

    # ---- tile sizing
    n_rows = -(-n // r)                       # packed output rows
    n_rows8 = ((n_rows + 7) // 8) * 8
    if tile_n is None:
        target_block_bytes = 8 << 20          # ~8 MiB output block
        tile_n = max(8, (target_block_bytes // (itemsize * Dp)) // 8 * 8)
        if n_cores > 1 and n_rows8 >= 4 * 8:
            # >= 2 blocks per TensorCore so the output writeback DMA of one
            # block overlaps compute of the next (otherwise exposed epilogue).
            quarter = ((-(-n_rows8 // 4) + 7) // 8) * 8
            tile_n = min(tile_n, quarter)
    tile_n = max(8, (int(tile_n) // 8) * 8)
    tile_n = min(tile_n, n_rows8)

    grid = -(-n_rows8 // tile_n)
    if n_cores > 1 and grid > 1 and grid % 2 == 1:
        grid += 1                             # even step count across 2 cores
    n_rows_padded = grid * tile_n

    pos = position_ids.astype(jnp.float32).reshape(-1)
    pos = jnp.pad(pos, (0, n_rows_padded * r - n))
    pos = pos.reshape(n_rows_padded, r)

    cost = pl.CostEstimate(
        flops=(2 * r + 1) * n_rows_padded * Dp,
        transcendentals=n_rows_padded * Dp,
        bytes_accessed=(n_rows_padded * Dp * itemsize          # output
                        + n_rows_padded * r * 4                 # positions
                        + (r + 1) * Dp * 4),                    # freq + phase
    )

    out = pl.pallas_call(
        _sincos_kernel,
        out_shape=jax.ShapeDtypeStruct((n_rows_padded, Dp), out_dtype),
        grid=(grid,),
        in_specs=[
            pl.BlockSpec((tile_n, r), lambda i: (i, 0)),   # positions, tiled
            pl.BlockSpec((r, Dp), lambda i: (0, 0)),       # freq table, resident
            pl.BlockSpec((1, Dp), lambda i: (0, 0)),       # phase table, resident
        ],
        out_specs=pl.BlockSpec((tile_n, Dp), lambda i: (i, 0)),
        compiler_params=pltpu.CompilerParams(
            dimension_semantics=("parallel",),
            vmem_limit_bytes=(48 << 20) if n_cores > 1 else (64 << 20),
        ),
        cost_estimate=cost,
    )(pos, freq_packed, phase_packed)

    # Unfold the lane packing: (n_rows_padded, r*D) -> (n_rows_padded*r, D)
    out = out.reshape(n_rows_padded * r, D)
    return out[:n]


def _reference(position_ids, output_dim):
    # Pure-JAX transcription of the PyTorch forward (correctness check).
    pos = position_ids.astype(jnp.float32)[None]               # (1, N)
    idx = jnp.arange(output_dim // 2, dtype=jnp.float32)
    idx = jnp.power(10000.0, -2.0 * idx / output_dim)          # (D/2,)
    emb = jnp.einsum("bn,d->bnd", pos, idx)                    # (1, N, D/2)
    emb = jnp.stack([jnp.sin(emb), jnp.cos(emb)], axis=-1)     # (1, N, D/2, 2)
    return emb.reshape(-1, output_dim)                         # (N, D)


if __name__ == "__main__":
    key = jax.random.PRNGKey(0)
    seq = 512
    output_dim = 128    # lane-dense output path

    position_ids = jax.random.randint(key, (seq,), minval=0, maxval=512)

    out = jax.block_until_ready(sinusoidal_position_embedding(position_ids, output_dim))
    ref = _reference(position_ids, output_dim)
    assert out.shape == (seq, output_dim)
    # sin(theta + pi/2) vs cos(theta): pi/2-addition rounding at |theta|~500
    # costs a few e-5 absolute, so tolerance is slightly looser than bit-exact.
    assert jnp.allclose(out, ref, atol=5e-4, rtol=1e-5)

    # Small-D path (D=32): r=4 rows packed into one lane-dense 128-wide row.
    out_small = jax.block_until_ready(
        sinusoidal_position_embedding(position_ids[:40], 32))
    assert out_small.shape == (40, 32)
    assert jnp.allclose(out_small, _reference(position_ids[:40], 32),
                        atol=5e-4, rtol=1e-5)

    # bf16 output (math in f32, cast on store) halves the HBM store stream.
    out_bf16 = jax.block_until_ready(
        sinusoidal_position_embedding(position_ids, output_dim, out_dtype=jnp.bfloat16))
    assert jnp.allclose(out_bf16.astype(jnp.float32), ref, atol=2e-2, rtol=1e-2)

    print("KERNEL_OK")
</pallas_src>

<mosaic_0001>
module attributes {stable_mosaic.version = 11 : i64} {
  func.func @_sincos_kernel(%arg0: i32, %arg1: memref<512x1xf32, #tpu.memory_space<vmem>>, %arg2: memref<1x128xf32, #tpu.memory_space<vmem>>, %arg3: memref<1x128xf32, #tpu.memory_space<vmem>>, %arg4: memref<512x128xf32, #tpu.memory_space<vmem>>) attributes {dimension_semantics = [#tpu.dimension_semantics<parallel>], iteration_bounds = array<i64: 1>, scalar_prefetch = 0 : i64, scratch_operands = 0 : i64, tpu.core_type = #tpu.core_type<tc>, window_params = [{transform_indices = @transform_0, window_bounds = array<i64: 512, 1>}, {pipeline_mode = #tpu.pipeline_mode<synchronous>, transform_indices = @transform_1, window_bounds = array<i64: 1, 128>}, {pipeline_mode = #tpu.pipeline_mode<synchronous>, transform_indices = @transform_2, window_bounds = array<i64: 1, 128>}, {transform_indices = @transform_3, window_bounds = array<i64: 512, 128>}]} {
    %c0 = arith.constant 0 : index
    %c0_0 = arith.constant 0 : index
    %0 = vector.load %arg1[%c0, %c0_0] : memref<512x1xf32, #tpu.memory_space<vmem>>, vector<512x1xf32>
    %c0_1 = arith.constant 0 : index
    %c0_2 = arith.constant 0 : index
    %1 = vector.load %arg2[%c0_1, %c0_2] : memref<1x128xf32, #tpu.memory_space<vmem>>, vector<1x128xf32>
    %2 = vector.broadcast %0 : vector<512x1xf32> to vector<512x128xf32>
    %3 = vector.broadcast %1 : vector<1x128xf32> to vector<512x128xf32>
    %4 = arith.mulf %2, %3 : vector<512x128xf32>
    %c0_3 = arith.constant 0 : index
    %c0_4 = arith.constant 0 : index
    %5 = vector.load %arg3[%c0_3, %c0_4] : memref<1x128xf32, #tpu.memory_space<vmem>>, vector<1x128xf32>
    %6 = vector.broadcast %5 : vector<1x128xf32> to vector<512x128xf32>
    %7 = arith.addf %4, %6 : vector<512x128xf32>
    %8 = math.sin %7 : vector<512x128xf32>
    %c0_5 = arith.constant 0 : index
    %c0_6 = arith.constant 0 : index
    %9 = vector.load %arg4[%c0_5, %c0_6] : memref<512x128xf32, #tpu.memory_space<vmem>>, vector<512x128xf32>
    tpu.vector_store %arg4[%c0_5, %c0_6], %8 {strides = array<i32>} : memref<512x128xf32, #tpu.memory_space<vmem>>, vector<512x128xf32>,
    return
  }
  func.func @transform_0(%arg0: i32) -> (i32, i32) {
    %c0_i32 = arith.constant 0 : i32
    %c0_i32_0 = arith.constant 0 : i32
    return %arg0, %c0_i32 : i32, i32
  }
  func.func @transform_1(%arg0: i32) -> (i32, i32) {
    %c0_i32 = arith.constant 0 : i32
    %c0_i32_0 = arith.constant 0 : i32
    %c0_i32_1 = arith.constant 0 : i32
    return %c0_i32, %c0_i32_0 : i32, i32
  }
  func.func @transform_2(%arg0: i32) -> (i32, i32) {
    %c0_i32 = arith.constant 0 : i32
    %c0_i32_0 = arith.constant 0 : i32
    %c0_i32_1 = arith.constant 0 : i32
    return %c0_i32, %c0_i32_0 : i32, i32
  }
  func.func @transform_3(%arg0: i32) -> (i32, i32) {
    %c0_i32 = arith.constant 0 : i32
    %c0_i32_0 = arith.constant 0 : i32
    return %arg0, %c0_i32 : i32, i32
  }
}

</mosaic_0001>

<llo_original>
// kernel: tpu_custom_call.1
$region0: #{tpu_custom_call.1}
  #allocation0 [shape = 'u32[]', space=smem, size = 0x4, offset = 0x4, fixed_abs, tag = 'smem constant byte address 0x4 - core index']
  #allocation1 [shape = 'u32[144,128]{1,0:T(1,128)}', space=vmem, size = 0x12000, scoped, tag = 'internal scratch']
  %s0 = inlined_call_operand.hbm [shape: f32[512,1], index: 0, kind: input, shape index: {}]
  %s1 = inlined_call_operand.hbm [shape: f32[1,128], index: 1, kind: input, shape index: {}]
  %s2 = inlined_call_operand.hbm [shape: f32[1,128], index: 2, kind: input, shape index: {}]
  %s3 = inlined_call_operand.hbm [shape: f32[512,128], index: 3, kind: output, shape index: {}]
  %s4 = sld [smem:[#allocation0]]
  $region34: #{tpu_custom_call.1} parent=0
    _
  %s6 = ssub.s32 1, %s4
  %s7 = scalar_select 0, %s6, %s4
  $region1: #{tpu_custom_call.1} parent=0
    #allocation2 [shape = 'u8[262144]{0}', space=vmem, size = 0x40000, scoped, tag = 'input window, operand 0, single buffered']
    #allocation3 [shape = 's32[1]{0}', space=sflag, size = 0x4, scoped, tag = 'scoped memory for tpu_custom_call.1']
    #allocation4 [shape = 's32[1]{0}', space=sflag, size = 0x4, scoped, tag = 'scoped memory for tpu_custom_call.1']
    #allocation5 [shape = 'u8[512]{0}', space=vmem, size = 0x400, scoped, tag = 'input window, operand 1, single buffered']
    #allocation6 [shape = 's32[1]{0}', space=sflag, size = 0x4, scoped, tag = 'scoped memory for tpu_custom_call.1']
    #allocation7 [shape = 'u8[512]{0}', space=vmem, size = 0x400, scoped, tag = 'input window, operand 2, single buffered']
    #allocation8 [shape = 'u8[262144]{0}', space=vmem, size = 0x40000, scoped, tag = 'output window, operand 0, single buffered']
    %8 = vsyncpa [#allocation3], 0
    %9 = vsyncpa [#allocation6], 0
    %10 = vsyncpa [#allocation4], 0
    // Predicated region
    $region2: #{tpu_custom_call.1} parent=1 // pred_check
      _
    $region3: #{tpu_custom_call.1} parent=1 // pred_check_branch
      %12 = sbr.rel (0) target = $region5
    $region4: #{tpu_custom_call.1} parent=1 // pred_region
      %s14 = ssub.s32 8192, 8192
      %15 = vsyncadd [#allocation3], %s14
      %s16 = sshll.u32 [#allocation2], 4
      %s17 = int_to_ptr.vmem [resolvable:$true] %s16
      %22 = dma.hbm_to_vmem [thread:$0]  %s0, 8192, %s17, [#allocation3], 128, 128, 8
    $region5: #{tpu_custom_call.1} parent=1 // pred_fallthru
      _
    // Predicated region
    $region6: #{tpu_custom_call.1} parent=1 // pred_check
      _
    $region7: #{tpu_custom_call.1} parent=1 // pred_check_branch
      %24 = sbr.rel (0) target = $region9
    $region8: #{tpu_custom_call.1} parent=1 // pred_region
      %s26 = ssub.s32 16, 16
      %27 = vsyncadd [#allocation6], %s26
      %s29 = sshll.u32 [#allocation5], 4
      %s30 = int_to_ptr.vmem [resolvable:$true] %s29
      %32 = dma.hbm_to_vmem [thread:$0]  %s1, 16, %s30, [#allocation6]
    $region9: #{tpu_custom_call.1} parent=1 // pred_fallthru
      _
    // Predicated region
    $region10: #{tpu_custom_call.1} parent=1 // pred_check
      _
    $region11: #{tpu_custom_call.1} parent=1 // pred_check_branch
      %34 = sbr.rel (0) target = $region13
    $region12: #{tpu_custom_call.1} parent=1 // pred_region
      %s36 = ssub.s32 16, 16
      %37 = vsyncadd [#allocation6], %s36
      %s39 = sshll.u32 [#allocation7], 4
      %s40 = int_to_ptr.vmem [resolvable:$true] %s39
      %42 = dma.hbm_to_vmem [thread:$0]  %s2, 16, %s40, [#allocation6]
    $region13: #{tpu_custom_call.1} parent=1 // pred_fallthru
      _
    // Predicated region
    $region14: #{tpu_custom_call.1} parent=1 // pred_check
      _
    $region15: #{tpu_custom_call.1} parent=1 // pred_check_branch
      %44 = sbr.rel (0) target = $region17
    $region16: #{tpu_custom_call.1} parent=1 // pred_region
      %45 = dma.done [#allocation3], 8192
    $region17: #{tpu_custom_call.1} parent=1 // pred_fallthru
      _
    // Predicated region
    $region18: #{tpu_custom_call.1} parent=1 // pred_check
      _
    $region19: #{tpu_custom_call.1} parent=1 // pred_check_branch
      %47 = sbr.rel (0) target = $region21
    $region20: #{tpu_custom_call.1} parent=1 // pred_region
      %48 = dma.done [#allocation6], 16
    $region21: #{tpu_custom_call.1} parent=1 // pred_fallthru
      _
    // Predicated region
    $region22: #{tpu_custom_call.1} parent=1 // pred_check
      _
    $region23: #{tpu_custom_call.1} parent=1 // pred_check_branch
      %50 = sbr.rel (0) target = $region25
    $region24: #{tpu_custom_call.1} parent=1 // pred_region
      %51 = dma.done [#allocation6], 16
    $region25: #{tpu_custom_call.1} parent=1 // pred_fallthru
      _
    %v52 = vld [vmem:[#allocation2] sm:$0xff]
    %v53 = vld [vmem:[#allocation2 + $0x8] sm:$0xff]
    %v54 = vld [vmem:[#allocation2 + $0x10] sm:$0xff]
    %v55 = vld [vmem:[#allocation2 + $0x18] sm:$0xff]
    %v56 = vld [vmem:[#allocation2 + $0x20] sm:$0xff]
    %v57 = vld [vmem:[#allocation2 + $0x28] sm:$0xff]
    %v58 = vld [vmem:[#allocation2 + $0x30] sm:$0xff]
    %v59 = vld [vmem:[#allocation2 + $0x38] sm:$0xff]
    %v60 = vld [vmem:[#allocation2 + $0x40] sm:$0xff]
    %v61 = vld [vmem:[#allocation2 + $0x48] sm:$0xff]
    %v62 = vld [vmem:[#allocation2 + $0x50] sm:$0xff]
    %v63 = vld [vmem:[#allocation2 + $0x58] sm:$0xff]
    %v64 = vld [vmem:[#allocation2 + $0x60] sm:$0xff]
    %v65 = vld [vmem:[#allocation2 + $0x68] sm:$0xff]
    %v66 = vld [vmem:[#allocation2 + $0x70] sm:$0xff]
    %v67 = vld [vmem:[#allocation2 + $0x78] sm:$0xff]
    %v68 = vld [vmem:[#allocation2 + $0x80] sm:$0xff]
    %v69 = vld [vmem:[#allocation2 + $0x88] sm:$0xff]
    %v70 = vld [vmem:[#allocation2 + $0x90] sm:$0xff]
    %v71 = vld [vmem:[#allocation2 + $0x98] sm:$0xff]
    %v72 = vld [vmem:[#allocation2 + $0xa0] sm:$0xff]
    %v73 = vld [vmem:[#allocation2 + $0xa8] sm:$0xff]
    %v74 = vld [vmem:[#allocation2 + $0xb0] sm:$0xff]
    %v75 = vld [vmem:[#allocation2 + $0xb8] sm:$0xff]
    %v76 = vld [vmem:[#allocation2 + $0xc0] sm:$0xff]
    %v77 = vld [vmem:[#allocation2 + $0xc8] sm:$0xff]
    %v78 = vld [vmem:[#allocation2 + $0xd0] sm:$0xff]
    %v79 = vld [vmem:[#allocation2 + $0xd8] sm:$0xff]
    %v80 = vld [vmem:[#allocation2 + $0xe0] sm:$0xff]
    %v81 = vld [vmem:[#allocation2 + $0xe8] sm:$0xff]
    %v82 = vld [vmem:[#allocation2 + $0xf0] sm:$0xff]
    %v83 = vld [vmem:[#allocation2 + $0xf8] sm:$0xff]
    %v84 = vld [vmem:[#allocation2 + $0x100] sm:$0xff]
    %v85 = vld [vmem:[#allocation2 + $0x108] sm:$0xff]
    %v86 = vld [vmem:[#allocation2 + $0x110] sm:$0xff]
    %v87 = vld [vmem:[#allocation2 + $0x118] sm:$0xff]
    %v88 = vld [vmem:[#allocation2 + $0x120] sm:$0xff]
    %v89 = vld [vmem:[#allocation2 + $0x128] sm:$0xff]
    %v90 = vld [vmem:[#allocation2 + $0x130] sm:$0xff]
    %v91 = vld [vmem:[#allocation2 + $0x138] sm:$0xff]
    %v92 = vld [vmem:[#allocation2 + $0x140] sm:$0xff]
    %v93 = vld [vmem:[#allocation2 + $0x148] sm:$0xff]
    %v94 = vld [vmem:[#allocation2 + $0x150] sm:$0xff]
    %v95 = vld [vmem:[#allocation2 + $0x158] sm:$0xff]
    %v96 = vld [vmem:[#allocation2 + $0x160] sm:$0xff]
    %v97 = vld [vmem:[#allocation2 + $0x168] sm:$0xff]
    %v98 = vld [vmem:[#allocation2 + $0x170] sm:$0xff]
    %v99 = vld [vmem:[#allocation2 + $0x178] sm:$0xff]
    %v100 = vld [vmem:[#allocation2 + $0x180] sm:$0xff]
    %v101 = vld [vmem:[#allocation2 + $0x188] sm:$0xff]
    %v102 = vld [vmem:[#allocation2 + $0x190] sm:$0xff]
    %v103 = vld [vmem:[#allocation2 + $0x198] sm:$0xff]
    %v104 = vld [vmem:[#allocation2 + $0x1a0] sm:$0xff]
    %v105 = vld [vmem:[#allocation2 + $0x1a8] sm:$0xff]
    %v106 = vld [vmem:[#allocation2 + $0x1b0] sm:$0xff]
    %v107 = vld [vmem:[#allocation2 + $0x1b8] sm:$0xff]
    %v108 = vld [vmem:[#allocation2 + $0x1c0] sm:$0xff]
    %v109 = vld [vmem:[#allocation2 + $0x1c8] sm:$0xff]
    %v110 = vld [vmem:[#allocation2 + $0x1d0] sm:$0xff]
    %v111 = vld [vmem:[#allocation2 + $0x1d8] sm:$0xff]
    %v112 = vld [vmem:[#allocation2 + $0x1e0] sm:$0xff]
    %v113 = vld [vmem:[#allocation2 + $0x1e8] sm:$0xff]
    %v114 = vld [vmem:[#allocation2 + $0x1f0] sm:$0xff]
    %v115 = vld [vmem:[#allocation2 + $0x1f8] sm:$0xff]
    %v116 = vld [vmem:[#allocation5] sm:$0x1]
    %118 = vset.pattern.permute.xlu0 0
    %119 = vperm.xlu0 %118, %v52
    %v120 = vpop.permute.xlu0 %119
    %123 = vset.pattern.permute.xlu0 0
    %124 = vperm.xlu0 %123, %v53
    %v125 = vpop.permute.xlu0 %124
    %128 = vset.pattern.permute.xlu0 0
    %129 = vperm.xlu0 %128, %v54
    %v130 = vpop.permute.xlu0 %129
    %133 = vset.pattern.permute.xlu0 0
    %134 = vperm.xlu0 %133, %v55
    %v135 = vpop.permute.xlu0 %134
    %138 = vset.pattern.permute.xlu0 0
    %139 = vperm.xlu0 %138, %v56
    %v140 = vpop.permute.xlu0 %139
    %143 = vset.pattern.permute.xlu0 0
    %144 = vperm.xlu0 %143, %v57
    %v145 = vpop.permute.xlu0 %144
    %148 = vset.pattern.permute.xlu0 0
    %149 = vperm.xlu0 %148, %v58
    %v150 = vpop.permute.xlu0 %149
    %153 = vset.pattern.permute.xlu0 0
    %154 = vperm.xlu0 %153, %v59
    %v155 = vpop.permute.xlu0 %154
    %158 = vset.pattern.permute.xlu0 0
    %159 = vperm.xlu0 %158, %v60
    %v160 = vpop.permute.xlu0 %159
    %163 = vset.pattern.permute.xlu0 0
    %164 = vperm.xlu0 %163, %v61
    %v165 = vpop.permute.xlu0 %164
    %168 = vset.pattern.permute.xlu0 0
    %169 = vperm.xlu0 %168, %v62
    %v170 = vpop.permute.xlu0 %169
    %173 = vset.pattern.permute.xlu0 0
    %174 = vperm.xlu0 %173, %v63
    %v175 = vpop.permute.xlu0 %174
    %178 = vset.pattern.permute.xlu0 0
    %179 = vperm.xlu0 %178, %v64
    %v180 = vpop.permute.xlu0 %179
    %183 = vset.pattern.permute.xlu0 0
    %184 = vperm.xlu0 %183, %v65
    %v185 = vpop.permute.xlu0 %184
    %188 = vset.pattern.permute.xlu0 0
    %189 = vperm.xlu0 %188, %v66
    %v190 = vpop.permute.xlu0 %189
    %193 = vset.pattern.permute.xlu0 0
    %194 = vperm.xlu0 %193, %v67
    %v195 = vpop.permute.xlu0 %194
    %198 = vset.pattern.permute.xlu0 0
    %199 = vperm.xlu0 %198, %v68
    %v200 = vpop.permute.xlu0 %199
    %203 = vset.pattern.permute.xlu0 0
    %204 = vperm.xlu0 %203, %v69
    %v205 = vpop.permute.xlu0 %204
    %208 = vset.pattern.permute.xlu0 0
    %209 = vperm.xlu0 %208, %v70
    %v210 = vpop.permute.xlu0 %209
    %213 = vset.pattern.permute.xlu0 0
    %214 = vperm.xlu0 %213, %v71
    %v215 = vpop.permute.xlu0 %214
    %218 = vset.pattern.permute.xlu0 0
    %219 = vperm.xlu0 %218, %v72
    %v220 = vpop.permute.xlu0 %219
    %223 = vset.pattern.permute.xlu0 0
    %224 = vperm.xlu0 %223, %v73
    %v225 = vpop.permute.xlu0 %224
    %228 = vset.pattern.permute.xlu0 0
    %229 = vperm.xlu0 %228, %v74
    %v230 = vpop.permute.xlu0 %229
    %233 = vset.pattern.permute.xlu0 0
    %234 = vperm.xlu0 %233, %v75
    %v235 = vpop.permute.xlu0 %234
    %238 = vset.pattern.permute.xlu0 0
    %239 = vperm.xlu0 %238, %v76
    %v240 = vpop.permute.xlu0 %239
    %243 = vset.pattern.permute.xlu0 0
    %244 = vperm.xlu0 %243, %v77
    %v245 = vpop.permute.xlu0 %244
    %248 = vset.pattern.permute.xlu0 0
    %249 = vperm.xlu0 %248, %v78
    %v250 = vpop.permute.xlu0 %249
    %253 = vset.pattern.permute.xlu0 0
    %254 = vperm.xlu0 %253, %v79
    %v255 = vpop.permute.xlu0 %254
    %258 = vset.pattern.permute.xlu0 0
    %259 = vperm.xlu0 %258, %v80
    %v260 = vpop.permute.xlu0 %259
    %263 = vset.pattern.permute.xlu0 0
    %264 = vperm.xlu0 %263, %v81
    %v265 = vpop.permute.xlu0 %264
    %268 = vset.pattern.permute.xlu0 0
    %269 = vperm.xlu0 %268, %v82
    %v270 = vpop.permute.xlu0 %269
    %273 = vset.pattern.permute.xlu0 0
    %274 = vperm.xlu0 %273, %v83
    %v275 = vpop.permute.xlu0 %274
    %278 = vset.pattern.permute.xlu0 0
    %279 = vperm.xlu0 %278, %v84
    %v280 = vpop.permute.xlu0 %279
    %283 = vset.pattern.permute.xlu0 0
    %284 = vperm.xlu0 %283, %v85
    %v285 = vpop.permute.xlu0 %284
    %288 = vset.pattern.permute.xlu0 0
    %289 = vperm.xlu0 %288, %v86
    %v290 = vpop.permute.xlu0 %289
    %293 = vset.pattern.permute.xlu0 0
    %294 = vperm.xlu0 %293, %v87
    %v295 = vpop.permute.xlu0 %294
    %298 = vset.pattern.permute.xlu0 0
    %299 = vperm.xlu0 %298, %v88
    %v300 = vpop.permute.xlu0 %299
    %303 = vset.pattern.permute.xlu0 0
    %304 = vperm.xlu0 %303, %v89
    %v305 = vpop.permute.xlu0 %304
    %308 = vset.pattern.permute.xlu0 0
    %309 = vperm.xlu0 %308, %v90
    %v310 = vpop.permute.xlu0 %309
    %313 = vset.pattern.permute.xlu0 0
    %314 = vperm.xlu0 %313, %v91
    %v315 = vpop.permute.xlu0 %314
    %318 = vset.pattern.permute.xlu0 0
    %319 = vperm.xlu0 %318, %v92
    %v320 = vpop.permute.xlu0 %319
    %323 = vset.pattern.permute.xlu0 0
    %324 = vperm.xlu0 %323, %v93
    %v325 = vpop.permute.xlu0 %324
    %328 = vset.pattern.permute.xlu0 0
    %329 = vperm.xlu0 %328, %v94
    %v330 = vpop.permute.xlu0 %329
    %333 = vset.pattern.permute.xlu0 0
    %334 = vperm.xlu0 %333, %v95
    %v335 = vpop.permute.xlu0 %334
    %338 = vset.pattern.permute.xlu0 0
    %339 = vperm.xlu0 %338, %v96
    %v340 = vpop.permute.xlu0 %339
    %343 = vset.pattern.permute.xlu0 0
    %344 = vperm.xlu0 %343, %v97
    %v345 = vpop.permute.xlu0 %344
    %348 = vset.pattern.permute.xlu0 0
    %349 = vperm.xlu0 %348, %v98
    %v350 = vpop.permute.xlu0 %349
    %353 = vset.pattern.permute.xlu0 0
    %354 = vperm.xlu0 %353, %v99
    %v355 = vpop.permute.xlu0 %354
    %358 = vset.pattern.permute.xlu0 0
    %359 = vperm.xlu0 %358, %v100
    %v360 = vpop.permute.xlu0 %359
    %363 = vset.pattern.permute.xlu0 0
    %364 = vperm.xlu0 %363, %v101
    %v365 = vpop.permute.xlu0 %364
    %368 = vset.pattern.permute.xlu0 0
    %369 = vperm.xlu0 %368, %v102
    %v370 = vpop.permute.xlu0 %369
    %373 = vset.pattern.permute.xlu0 0
    %374 = vperm.xlu0 %373, %v103
    %v375 = vpop.permute.xlu0 %374
    %378 = vset.pattern.permute.xlu0 0
    %379 = vperm.xlu0 %378, %v104
    %v380 = vpop.permute.xlu0 %379
    %383 = vset.pattern.permute.xlu0 0
    %384 = vperm.xlu0 %383, %v105
    %v385 = vpop.permute.xlu0 %384
    %388 = vset.pattern.permute.xlu0 0
    %389 = vperm.xlu0 %388, %v106
    %v390 = vpop.permute.xlu0 %389
    %393 = vset.pattern.permute.xlu0 0
    %394 = vperm.xlu0 %393, %v107
    %v395 = vpop.permute.xlu0 %394
    %398 = vset.pattern.permute.xlu0 0
    %399 = vperm.xlu0 %398, %v108
    %v400 = vpop.permute.xlu0 %399
    %403 = vset.pattern.permute.xlu0 0
    %404 = vperm.xlu0 %403, %v109
    %v405 = vpop.permute.xlu0 %404
    %408 = vset.pattern.permute.xlu0 0
    %409 = vperm.xlu0 %408, %v110
    %v410 = vpop.permute.xlu0 %409
    %413 = vset.pattern.permute.xlu0 0
    %414 = vperm.xlu0 %413, %v111
    %v415 = vpop.permute.xlu0 %414
    %418 = vset.pattern.permute.xlu0 0
    %419 = vperm.xlu0 %418, %v112
    %v420 = vpop.permute.xlu0 %419
    %423 = vset.pattern.permute.xlu0 0
    %424 = vperm.xlu0 %423, %v113
    %v425 = vpop.permute.xlu0 %424
    %428 = vset.pattern.permute.xlu0 0
    %429 = vperm.xlu0 %428, %v114
    %v430 = vpop.permute.xlu0 %429
    %433 = vset.pattern.permute.xlu0 0
    %434 = vperm.xlu0 %433, %v115
    %v435 = vpop.permute.xlu0 %434
    %v438 = vlaneseq
    %v439 = vshrl.u32 %v438, 7
    %v440 = vsub.s32 0, %v439
    %v441 = vrot.slane %v116, %v440
    %v443 = vmul.f32 %v120, %v441
    %v444 = vmul.f32 %v125, %v441
    %v445 = vmul.f32 %v130, %v441
    %v446 = vmul.f32 %v135, %v441
    %v447 = vmul.f32 %v140, %v441
    %v448 = vmul.f32 %v145, %v441
    %v449 = vmul.f32 %v150, %v441
    %v450 = vmul.f32 %v155, %v441
    %v451 = vmul.f32 %v160, %v441
    %v452 = vmul.f32 %v165, %v441
    %v453 = vmul.f32 %v170, %v441
    %v454 = vmul.f32 %v175, %v441
    %v455 = vmul.f32 %v180, %v441
    %v456 = vmul.f32 %v185, %v441
    %v457 = vmul.f32 %v190, %v441
    %v458 = vmul.f32 %v195, %v441
    %v459 = vmul.f32 %v200, %v441
    %v460 = vmul.f32 %v205, %v441
    %v461 = vmul.f32 %v210, %v441
    %v462 = vmul.f32 %v215, %v441
    %v463 = vmul.f32 %v220, %v441
    %v464 = vmul.f32 %v225, %v441
    %v465 = vmul.f32 %v230, %v441
    %v466 = vmul.f32 %v235, %v441
    %v467 = vmul.f32 %v240, %v441
    %v468 = vmul.f32 %v245, %v441
    %v469 = vmul.f32 %v250, %v441
    %v470 = vmul.f32 %v255, %v441
    %v471 = vmul.f32 %v260, %v441
    %v472 = vmul.f32 %v265, %v441
    %v473 = vmul.f32 %v270, %v441
    %v474 = vmul.f32 %v275, %v441
    %v475 = vmul.f32 %v280, %v441
    %v476 = vmul.f32 %v285, %v441
    %v477 = vmul.f32 %v290, %v441
    %v478 = vmul.f32 %v295, %v441
    %v479 = vmul.f32 %v300, %v441
    %v480 = vmul.f32 %v305, %v441
    %v481 = vmul.f32 %v310, %v441
    %v482 = vmul.f32 %v315, %v441
    %v483 = vmul.f32 %v320, %v441
    %v484 = vmul.f32 %v325, %v441
    %v485 = vmul.f32 %v330, %v441
    %v486 = vmul.f32 %v335, %v441
    %v487 = vmul.f32 %v340, %v441
    %v488 = vmul.f32 %v345, %v441
    %v489 = vmul.f32 %v350, %v441
    %v490 = vmul.f32 %v355, %v441
    %v491 = vmul.f32 %v360, %v441
    %v492 = vmul.f32 %v365, %v441
    %v493 = vmul.f32 %v370, %v441
    %v494 = vmul.f32 %v375, %v441
    %v495 = vmul.f32 %v380, %v441
    %v496 = vmul.f32 %v385, %v441
    %v497 = vmul.f32 %v390, %v441
    %v498 = vmul.f32 %v395, %v441
    %v499 = vmul.f32 %v400, %v441
    %v500 = vmul.f32 %v405, %v441
    %v501 = vmul.f32 %v410, %v441
    %v502 = vmul.f32 %v415, %v441
    %v503 = vmul.f32 %v420, %v441
    %v504 = vmul.f32 %v425, %v441
    %v505 = vmul.f32 %v430, %v441
    %v506 = vmul.f32 %v435, %v441
    %v507 = vld [vmem:[#allocation7] sm:$0x1]
    %v509 = vlaneseq
    %v510 = vshrl.u32 %v509, 7
    %v511 = vsub.s32 0, %v510
    %v512 = vrot.slane %v507, %v511
    %v514 = vadd.f32 %v443, %v512
    %v515 = vadd.f32 %v444, %v512
    %v516 = vadd.f32 %v445, %v512
    %v517 = vadd.f32 %v446, %v512
    %v518 = vadd.f32 %v447, %v512
    %v519 = vadd.f32 %v448, %v512
    %v520 = vadd.f32 %v449, %v512
    %v521 = vadd.f32 %v450, %v512
    %v522 = vadd.f32 %v451, %v512
    %v523 = vadd.f32 %v452, %v512
    %v524 = vadd.f32 %v453, %v512
    %v525 = vadd.f32 %v454, %v512
    %v526 = vadd.f32 %v455, %v512
    %v527 = vadd.f32 %v456, %v512
    %v528 = vadd.f32 %v457, %v512
    %v529 = vadd.f32 %v458, %v512
    %v530 = vadd.f32 %v459, %v512
    %v531 = vadd.f32 %v460, %v512
    %v532 = vadd.f32 %v461, %v512
    %v533 = vadd.f32 %v462, %v512
    %v534 = vadd.f32 %v463, %v512
    %v535 = vadd.f32 %v464, %v512
    %v536 = vadd.f32 %v465, %v512
    %v537 = vadd.f32 %v466, %v512
    %v538 = vadd.f32 %v467, %v512
    %v539 = vadd.f32 %v468, %v512
    %v540 = vadd.f32 %v469, %v512
    %v541 = vadd.f32 %v470, %v512
    %v542 = vadd.f32 %v471, %v512
    %v543 = vadd.f32 %v472, %v512
    %v544 = vadd.f32 %v473, %v512
    %v545 = vadd.f32 %v474, %v512
    %v546 = vadd.f32 %v475, %v512
    %v547 = vadd.f32 %v476, %v512
    %v548 = vadd.f32 %v477, %v512
    %v549 = vadd.f32 %v478, %v512
    %v550 = vadd.f32 %v479, %v512
    %v551 = vadd.f32 %v480, %v512
    %v552 = vadd.f32 %v481, %v512
    %v553 = vadd.f32 %v482, %v512
    %v554 = vadd.f32 %v483, %v512
    %v555 = vadd.f32 %v484, %v512
    %v556 = vadd.f32 %v485, %v512
    %v557 = vadd.f32 %v486, %v512
    %v558 = vadd.f32 %v487, %v512
    %v559 = vadd.f32 %v488, %v512
    %v560 = vadd.f32 %v489, %v512
    %v561 = vadd.f32 %v490, %v512
    %v562 = vadd.f32 %v491, %v512
    %v563 = vadd.f32 %v492, %v512
    %v564 = vadd.f32 %v493, %v512
    %v565 = vadd.f32 %v494, %v512
    %v566 = vadd.f32 %v495, %v512
    %v567 = vadd.f32 %v496, %v512
    %v568 = vadd.f32 %v497, %v512
    %v569 = vadd.f32 %v498, %v512
    %v570 = vadd.f32 %v499, %v512
    %v571 = vadd.f32 %v500, %v512
    %v572 = vadd.f32 %v501, %v512
    %v573 = vadd.f32 %v502, %v512
    %v574 = vadd.f32 %v503, %v512
    %v575 = vadd.f32 %v504, %v512
    %v576 = vadd.f32 %v505, %v512
    %v577 = vadd.f32 %v506, %v512
    %v578 = vand.u32 2147483647, %v514
    %vm579 = vcmp.le.f32.partialorder %v578, 0.7853982
    %vm580 = vcmp.lt.s32.totalorder %v514, 0
    %v581 = vand.u32 %v514, 2139095040
    %v582 = vshrl.u32 %v581, 23
    %v583 = vsub.s32 %v582, 127
    %v584 = vand.u32 2147483647, %v514
    %v585 = vand.u32 %v584, 8388607
    %v586 = vor.u32 %v585, 8388608
    %v587 = vsub.s32 0, %v586
    %v588 = vadd.s32 %v583, 1
    %vm589 = vcmp.gt.s32.totalorder %v588, 0
    %v590 = vsel %vm589, %v588, 0
    %v591 = vshrl.u32 %v590, 5
    %v592 = vand.u32 %v590, 31
    %v593 = vsub.s32 32, %v592
    %v594 = vshrl.u32 683565275, %v593
    %v595 = vshll.u32 683565275, %v592
    %v596 = vshrl.u32 2475754826, %v593
    %v597 = vor.u32 %v595, %v596
    %v598 = vshll.u32 2475754826, %v592
    %v599 = vshrl.u32 2131351028, %v593
    %v600 = vor.u32 %v598, %v599
    %v601 = vshll.u32 2131351028, %v592
    %v602 = vshrl.u32 2102212464, %v593
    %v603 = vor.u32 %v601, %v602
    %v604 = vshll.u32 2102212464, %v592
    %v605 = vshrl.u32 920167782, %v593
    %v606 = vor.u32 %v604, %v605
    %v607 = vshll.u32 920167782, %v592
    %v608 = vshrl.u32 1326507024, %v593
    %v609 = vor.u32 %v607, %v608
    %vm610 = vcmp.lt.s32.totalorder %v591, 1
    %vm611 = vcmp.lt.s32.totalorder %v591, 2
    %vm612 = vcmp.lt.s32.totalorder %v591, 3
    %vm613 = vcmp.lt.s32.totalorder %v591, 4
    %v614 = vsel %vm610, %v594, %v597
    %v615 = vsel %vm613, %v603, 2102212464
    %v616 = vsel %vm612, %v600, %v615
    %v617 = vsel %vm611, %v614, %v616
    %v618 = vsel %vm610, %v597, %v600
    %v619 = vsel %vm613, %v606, 920167782
    %v620 = vsel %vm612, %v603, %v619
    %v621 = vsel %vm611, %v618, %v620
    %v622 = vsel %vm610, %v600, %v603
    %v623 = vsel %vm613, %v609, 1326507024
    %v624 = vsel %vm612, %v606, %v623
    %v625 = vsel %vm611, %v622, %v624
    %v626 = vshll.u32 %v586, 8
    %v627 = vmul.u32.u64.compose %v626, %v625
    %v628 = vextract.low.u32 %v627
    %v629 = vextract.high.u32 %v627
    %v630 = vmul.u32.u64.compose %v626, %v621
    %v631 = vextract.low.u32 %v630
    %v632 = vextract.high.u32 %v630
    %v633 = vmul.u32 %v626, %v617
    %v634 = vadd.s32 %v629, %v631
    %vm635 = vc.u32 %v629, %v631
    %v636 = vadd.s32 %v632, 1
    %v637 = vsel %vm635, %v636, %v632
    %v638 = vadd.s32 %v633, %v637
    %v639 = vadd.s32 %v638, 536870912
    %v640 = vshrl.u32 %v639, 30
    %v641 = vshll.u32 %v640, 30
    %v642 = vsub.s32 %v638, %v641
    %vm643 = vcmp.lt.s32.totalorder %v642, 0
    %v644 = vsub.s32 0, %v642
    %v645 = vsel %vm643, %v644, %v642
    %v646 = vclz %v645
    %v647 = vsub.s32 %v646, 2
    %vm648 = vcmp.gt.s32.totalorder 0, %v647
    %v649 = vsel %vm648, 0, %v647
    %v650 = vsub.s32 32, %v649
    %v651 = vshll.u32 %v642, %v649
    %v652 = vshrl.u32 %v634, %v650
    %v653 = vor.u32 %v651, %v652
    %v654 = vsub.s32 4294967266, %v649
    %v655 = vadd.s32 %v654, 127
    %v656 = vshll.u32 %v655, 23
    %v657 = vor.u32 4788187, %v656
    %v658 = vand.u32 2147483647, %v657
    %v660 = vcvt.s32.f32 %v653
    %v661 = vmul.f32 %v660, %v658
    %v662 = vxor.u32 %v661, 2147483648
    %v663 = vsel %vm580, %v662, %v661
    %v664 = vsub.s32 4, %v640
    %v665 = vsel %vm580, %v664, %v640
    %v666 = vsel %vm579, %v514, %v663
    %v667 = vsel %vm579, 0, %v665
    %v668 = vcosq.f32.pop %v666
    %v669 = vsinq.f32.pop %v666
    %vm670 = vweird.f32 %v514
    %v671 = vadd.s32 %v667, 3
    %v672 = vand.u32 %v671, 3
    %vm673 = vcmp.lt.s32.totalorder %v672, 2
    %vm674 = vcmp.eq.s32.totalorder %v672, 0
    %v675 = vxor.u32 %v669, 2147483648
    %v676 = vsel %vm674, %v668, %v675
    %vm677 = vcmp.eq.s32.totalorder %v672, 2
    %v678 = vxor.u32 %v668, 2147483648
    %v679 = vsel %vm677, %v678, %v669
    %v680 = vsel %vm673, %v676, %v679
    %v681 = vsel %vm670, nan, %v680
    %v682 = vand.u32 2147483647, %v515
    %vm683 = vcmp.le.f32.partialorder %v682, 0.7853982
    %vm684 = vcmp.lt.s32.totalorder %v515, 0
    %v685 = vand.u32 %v515, 2139095040
    %v686 = vshrl.u32 %v685, 23
    %v687 = vsub.s32 %v686, 127
    %v688 = vand.u32 2147483647, %v515
    %v689 = vand.u32 %v688, 8388607
    %v690 = vor.u32 %v689, 8388608
    %v691 = vsub.s32 0, %v690
    %v692 = vadd.s32 %v687, 1
    %vm693 = vcmp.gt.s32.totalorder %v692, 0
    %v694 = vsel %vm693, %v692, 0
    %v695 = vshrl.u32 %v694, 5
    %v696 = vand.u32 %v694, 31
    %v697 = vsub.s32 32, %v696
    %v698 = vshrl.u32 683565275, %v697
    %v699 = vshll.u32 683565275, %v696
    %v700 = vshrl.u32 2475754826, %v697
    %v701 = vor.u32 %v699, %v700
    %v702 = vshll.u32 2475754826, %v696
    %v703 = vshrl.u32 2131351028, %v697
    %v704 = vor.u32 %v702, %v703
    %v705 = vshll.u32 2131351028, %v696
    %v706 = vshrl.u32 2102212464, %v697
    %v707 = vor.u32 %v705, %v706
    %v708 = vshll.u32 2102212464, %v696
    %v709 = vshrl.u32 920167782, %v697
    %v710 = vor.u32 %v708, %v709
    %v711 = vshll.u32 920167782, %v696
    %v712 = vshrl.u32 1326507024, %v697
    %v713 = vor.u32 %v711, %v712
    %vm714 = vcmp.lt.s32.totalorder %v695, 1
    %vm715 = vcmp.lt.s32.totalorder %v695, 2
    %vm716 = vcmp.lt.s32.totalorder %v695, 3
    %vm717 = vcmp.lt.s32.totalorder %v695, 4
    %v718 = vsel %vm714, %v698, %v701
    %v719 = vsel %vm717, %v707, 2102212464
    %v720 = vsel %vm716, %v704, %v719
    %v721 = vsel %vm715, %v718, %v720
    %v722 = vsel %vm714, %v701, %v704
    %v723 = vsel %vm717, %v710, 920167782
    %v724 = vsel %vm716, %v707, %v723
    %v725 = vsel %vm715, %v722, %v724
    %v726 = vsel %vm714, %v704, %v707
    %v727 = vsel %vm717, %v713, 1326507024
    %v728 = vsel %vm716, %v710, %v727
    %v729 = vsel %vm715, %v726, %v728
    %v730 = vshll.u32 %v690, 8
    %v731 = vmul.u32.u64.compose %v730, %v729
    %v732 = vextract.low.u32 %v731
    %v733 = vextract.high.u32 %v731
    %v734 = vmul.u32.u64.compose %v730, %v725
    %v735 = vextract.low.u32 %v734
    %v736 = vextract.high.u32 %v734
    %v737 = vmul.u32 %v730, %v721
    %v738 = vadd.s32 %v733, %v735
    %vm739 = vc.u32 %v733, %v735
    %v740 = vadd.s32 %v736, 1
    %v741 = vsel %vm739, %v740, %v736
    %v742 = vadd.s32 %v737, %v741
    %v743 = vadd.s32 %v742, 536870912
    %v744 = vshrl.u32 %v743, 30
    %v745 = vshll.u32 %v744, 30
    %v746 = vsub.s32 %v742, %v745
    %vm747 = vcmp.lt.s32.totalorder %v746, 0
    %v748 = vsub.s32 0, %v746
    %v749 = vsel %vm747, %v748, %v746
    %v750 = vclz %v749
    %v751 = vsub.s32 %v750, 2
    %vm752 = vcmp.gt.s32.totalorder 0, %v751
    %v753 = vsel %vm752, 0, %v751
    %v754 = vsub.s32 32, %v753
    %v755 = vshll.u32 %v746, %v753
    %v756 = vshrl.u32 %v738, %v754
    %v757 = vor.u32 %v755, %v756
    %v758 = vsub.s32 4294967266, %v753
    %v759 = vadd.s32 %v758, 127
    %v760 = vshll.u32 %v759, 23
    %v761 = vor.u32 4788187, %v760
    %v762 = vand.u32 2147483647, %v761
    %v764 = vcvt.s32.f32 %v757
    %v765 = vmul.f32 %v764, %v762
    %v766 = vxor.u32 %v765, 2147483648
    %v767 = vsel %vm684, %v766, %v765
    %v768 = vsub.s32 4, %v744
    %v769 = vsel %vm684, %v768, %v744
    %v770 = vsel %vm683, %v515, %v767
    %v771 = vsel %vm683, 0, %v769
    %v772 = vcosq.f32.pop %v770
    %v773 = vsinq.f32.pop %v770
    %vm774 = vweird.f32 %v515
    %v775 = vadd.s32 %v771, 3
    %v776 = vand.u32 %v775, 3
    %vm777 = vcmp.lt.s32.totalorder %v776, 2
    %vm778 = vcmp.eq.s32.totalorder %v776, 0
    %v779 = vxor.u32 %v773, 2147483648
    %v780 = vsel %vm778, %v772, %v779
    %vm781 = vcmp.eq.s32.totalorder %v776, 2
    %v782 = vxor.u32 %v772, 2147483648
    %v783 = vsel %vm781, %v782, %v773
    %v784 = vsel %vm777, %v780, %v783
    %v785 = vsel %vm774, nan, %v784
    %v786 = vand.u32 2147483647, %v516
    %vm787 = vcmp.le.f32.partialorder %v786, 0.7853982
    %vm788 = vcmp.lt.s32.totalorder %v516, 0
    %v789 = vand.u32 %v516, 2139095040
    %v790 = vshrl.u32 %v789, 23
    %v791 = vsub.s32 %v790, 127
    %v792 = vand.u32 2147483647, %v516
    %v793 = vand.u32 %v792, 8388607
    %v794 = vor.u32 %v793, 8388608
    %v795 = vsub.s32 0, %v794
    %v796 = vadd.s32 %v791, 1
    %vm797 = vcmp.gt.s32.totalorder %v796, 0
    %v798 = vsel %vm797, %v796, 0
    %v799 = vshrl.u32 %v798, 5
    %v800 = vand.u32 %v798, 31
    %v801 = vsub.s32 32, %v800
    %v802 = vshrl.u32 683565275, %v801
    %v803 = vshll.u32 683565275, %v800
    %v804 = vshrl.u32 2475754826, %v801
    %v805 = vor.u32 %v803, %v804
    %v806 = vshll.u32 2475754826, %v800
    %v807 = vshrl.u32 2131351028, %v801
    %v808 = vor.u32 %v806, %v807
    %v809 = vshll.u32 2131351028, %v800
    %v810 = vshrl.u32 2102212464, %v801
    %v811 = vor.u32 %v809, %v810
    %v812 = vshll.u32 2102212464, %v800
    %v813 = vshrl.u32 920167782, %v801
    %v814 = vor.u32 %v812, %v813
    %v815 = vshll.u32 920167782, %v800
    %v816 = vshrl.u32 1326507024, %v801
    %v817 = vor.u32 %v815, %v816
    %vm818 = vcmp.lt.s32.totalorder %v799, 1
    %vm819 = vcmp.lt.s32.totalorder %v799, 2
    %vm820 = vcmp.lt.s32.totalorder %v799, 3
    %vm821 = vcmp.lt.s32.totalorder %v799, 4
    %v822 = vsel %vm818, %v802, %v805
    %v823 = vsel %vm821, %v811, 2102212464
    %v824 = vsel %vm820, %v808, %v823
    %v825 = vsel %vm819, %v822, %v824
    %v826 = vsel %vm818, %v805, %v808
    %v827 = vsel %vm821, %v814, 920167782
    %v828 = vsel %vm820, %v811, %v827
    %v829 = vsel %vm819, %v826, %v828
    %v830 = vsel %vm818, %v808, %v811
    %v831 = vsel %vm821, %v817, 1326507024
    %v832 = vsel %vm820, %v814, %v831
    %v833 = vsel %vm819, %v830, %v832
    %v834 = vshll.u32 %v794, 8
    %v835 = vmul.u32.u64.compose %v834, %v833
    %v836 = vextract.low.u32 %v835
    %v837 = vextract.high.u32 %v835
    %v838 = vmul.u32.u64.compose %v834, %v829
    %v839 = vextract.low.u32 %v838
    %v840 = vextract.high.u32 %v838
    %v841 = vmul.u32 %v834, %v825
    %v842 = vadd.s32 %v837, %v839
    %vm843 = vc.u32 %v837, %v839
    %v844 = vadd.s32 %v840, 1
    %v845 = vsel %vm843, %v844, %v840
    %v846 = vadd.s32 %v841, %v845
    %v847 = vadd.s32 %v846, 536870912
    %v848 = vshrl.u32 %v847, 30
    %v849 = vshll.u32 %v848, 30
    %v850 = vsub.s32 %v846, %v849
    %vm851 = vcmp.lt.s32.totalorder %v850, 0
    %v852 = vsub.s32 0, %v850
    %v853 = vsel %vm851, %v852, %v850
    %v854 = vclz %v853
    %v855 = vsub.s32 %v854, 2
    %vm856 = vcmp.gt.s32.totalorder 0, %v855
    %v857 = vsel %vm856, 0, %v855
    %v858 = vsub.s32 32, %v857
    %v859 = vshll.u32 %v850, %v857
    %v860 = vshrl.u32 %v842, %v858
    %v861 = vor.u32 %v859, %v860
    %v862 = vsub.s32 4294967266, %v857
    %v863 = vadd.s32 %v862, 127
    %v864 = vshll.u32 %v863, 23
    %v865 = vor.u32 4788187, %v864
    %v866 = vand.u32 2147483647, %v865
    %v868 = vcvt.s32.f32 %v861
    %v869 = vmul.f32 %v868, %v866
    %v870 = vxor.u32 %v869, 2147483648
    %v871 = vsel %vm788, %v870, %v869
    %v872 = vsub.s32 4, %v848
    %v873 = vsel %vm788, %v872, %v848
    %v874 = vsel %vm787, %v516, %v871
    %v875 = vsel %vm787, 0, %v873
    %v876 = vcosq.f32.pop %v874
    %v877 = vsinq.f32.pop %v874
    %vm878 = vweird.f32 %v516
    %v879 = vadd.s32 %v875, 3
    %v880 = vand.u32 %v879, 3
    %vm881 = vcmp.lt.s32.totalorder %v880, 2
    %vm882 = vcmp.eq.s32.totalorder %v880, 0
    %v883 = vxor.u32 %v877, 2147483648
    %v884 = vsel %vm882, %v876, %v883
    %vm885 = vcmp.eq.s32.totalorder %v880, 2
    %v886 = vxor.u32 %v876, 2147483648
    %v887 = vsel %vm885, %v886, %v877
    %v888 = vsel %vm881, %v884, %v887
    %v889 = vsel %vm878, nan, %v888
    %v890 = vand.u32 2147483647, %v517
    %vm891 = vcmp.le.f32.partialorder %v890, 0.7853982
    %vm892 = vcmp.lt.s32.totalorder %v517, 0
    %v893 = vand.u32 %v517, 2139095040
    %v894 = vshrl.u32 %v893, 23
    %v895 = vsub.s32 %v894, 127
    %v896 = vand.u32 2147483647, %v517
    %v897 = vand.u32 %v896, 8388607
    %v898 = vor.u32 %v897, 8388608
    %v899 = vsub.s32 0, %v898
    %v900 = vadd.s32 %v895, 1
    %vm901 = vcmp.gt.s32.totalorder %v900, 0
    %v902 = vsel %vm901, %v900, 0
    %v903 = vshrl.u32 %v902, 5
    %v904 = vand.u32 %v902, 31
    %v905 = vsub.s32 32, %v904
    %v906 = vshrl.u32 683565275, %v905
    %v907 = vshll.u32 683565275, %v904
    %v908 = vshrl.u32 2475754826, %v905
    %v909 = vor.u32 %v907, %v908
    %v910 = vshll.u32 2475754826, %v904
    %v911 = vshrl.u32 2131351028, %v905
    %v912 = vor.u32 %v910, %v911
    %v913 = vshll.u32 2131351028, %v904
    %v914 = vshrl.u32 2102212464, %v905
    %v915 = vor.u32 %v913, %v914
    %v916 = vshll.u32 2102212464, %v904
    %v917 = vshrl.u32 920167782, %v905
    %v918 = vor.u32 %v916, %v917
    %v919 = vshll.u32 920167782, %v904
    %v920 = vshrl.u32 1326507024, %v905
    %v921 = vor.u32 %v919, %v920
    %vm922 = vcmp.lt.s32.totalorder %v903, 1
    %vm923 = vcmp.lt.s32.totalorder %v903, 2
    %vm924 = vcmp.lt.s32.totalorder %v903, 3
    %vm925 = vcmp.lt.s32.totalorder %v903, 4
    %v926 = vsel %vm922, %v906, %v909
    %v927 = vsel %vm925, %v915, 2102212464
    %v928 = vsel %vm924, %v912, %v927
    %v929 = vsel %vm923, %v926, %v928
    %v930 = vsel %vm922, %v909, %v912
    %v931 = vsel %vm925, %v918, 920167782
    %v932 = vsel %vm924, %v915, %v931
    %v933 = vsel %vm923, %v930, %v932
    %v934 = vsel %vm922, %v912, %v915
    %v935 = vsel %vm925, %v921, 1326507024
    %v936 = vsel %vm924, %v918, %v935
    %v937 = vsel %vm923, %v934, %v936
    %v938 = vshll.u32 %v898, 8
    %v939 = vmul.u32.u64.compose %v938, %v937
    %v940 = vextract.low.u32 %v939
    %v941 = vextract.high.u32 %v939
    %v942 = vmul.u32.u64.compose %v938, %v933
    %v943 = vextract.low.u32 %v942
    %v944 = vextract.high.u32 %v942
    %v945 = vmul.u32 %v938, %v929
    %v946 = vadd.s32 %v941, %v943
    %vm947 = vc.u32 %v941, %v943
    %v948 = vadd.s32 %v944, 1
    %v949 = vsel %vm947, %v948, %v944
    %v950 = vadd.s32 %v945, %v949
    %v951 = vadd.s32 %v950, 536870912
    %v952 = vshrl.u32 %v951, 30
    %v953 = vshll.u32 %v952, 30
    %v954 = vsub.s32 %v950, %v953
    %vm955 = vcmp.lt.s32.totalorder %v954, 0
    %v956 = vsub.s32 0, %v954
    %v957 = vsel %vm955, %v956, %v954
    %v958 = vclz %v957
    %v959 = vsub.s32 %v958, 2
    %vm960 = vcmp.gt.s32.totalorder 0, %v959
    %v961 = vsel %vm960, 0, %v959
    %v962 = vsub.s32 32, %v961
    %v963 = vshll.u32 %v954, %v961
    %v964 = vshrl.u32 %v946, %v962
    %v965 = vor.u32 %v963, %v964
    %v966 = vsub.s32 4294967266, %v961
    %v967 = vadd.s32 %v966, 127
    %v968 = vshll.u32 %v967, 23
    %v969 = vor.u32 4788187, %v968
    %v970 = vand.u32 2147483647, %v969
    %v972 = vcvt.s32.f32 %v965
    %v973 = vmul.f32 %v972, %v970
    %v974 = vxor.u32 %v973, 2147483648
    %v975 = vsel %vm892, %v974, %v973
    %v976 = vsub.s32 4, %v952
    %v977 = vsel %vm892, %v976, %v952
    %v978 = vsel %vm891, %v517, %v975
    %v979 = vsel %vm891, 0, %v977
    %v980 = vcosq.f32.pop %v978
    %v981 = vsinq.f32.pop %v978
    %vm982 = vweird.f32 %v517
    %v983 = vadd.s32 %v979, 3
    %v984 = vand.u32 %v983, 3
    %vm985 = vcmp.lt.s32.totalorder %v984, 2
    %vm986 = vcmp.eq.s32.totalorder %v984, 0
    %v987 = vxor.u32 %v981, 2147483648
    %v988 = vsel %vm986, %v980, %v987
    %vm989 = vcmp.eq.s32.totalorder %v984, 2
    %v990 = vxor.u32 %v980, 2147483648
    %v991 = vsel %vm989, %v990, %v981
    %v992 = vsel %vm985, %v988, %v991
    %v993 = vsel %vm982, nan, %v992
    %v994 = vand.u32 2147483647, %v518
    %vm995 = vcmp.le.f32.partialorder %v994, 0.7853982
    %vm996 = vcmp.lt.s32.totalorder %v518, 0
    %v997 = vand.u32 %v518, 2139095040
    %v998 = vshrl.u32 %v997, 23
    %v999 = vsub.s32 %v998, 127
    %v1000 = vand.u32 2147483647, %v518
    %v1001 = vand.u32 %v1000, 8388607
    %v1002 = vor.u32 %v1001, 8388608
    %v1003 = vsub.s32 0, %v1002
    %v1004 = vadd.s32 %v999, 1
    %vm1005 = vcmp.gt.s32.totalorder %v1004, 0
    %v1006 = vsel %vm1005, %v1004, 0
    %v1007 = vshrl.u32 %v1006, 5
    %v1008 = vand.u32 %v1006, 31
    %v1009 = vsub.s32 32, %v1008
    %v1010 = vshrl.u32 683565275, %v1009
    %v1011 = vshll.u32 683565275, %v1008
    %v1012 = vshrl.u32 2475754826, %v1009
    %v1013 = vor.u32 %v1011, %v1012
    %v1014 = vshll.u32 2475754826, %v1008
    %v1015 = vshrl.u32 2131351028, %v1009
    %v1016 = vor.u32 %v1014, %v1015
    %v1017 = vshll.u32 2131351028, %v1008
    %v1018 = vshrl.u32 2102212464, %v1009
    %v1019 = vor.u32 %v1017, %v1018
    %v1020 = vshll.u32 2102212464, %v1008
    %v1021 = vshrl.u32 920167782, %v1009
    %v1022 = vor.u32 %v1020, %v1021
    %v1023 = vshll.u32 920167782, %v1008
    %v1024 = vshrl.u32 1326507024, %v1009
    %v1025 = vor.u32 %v1023, %v1024
    %vm1026 = vcmp.lt.s32.totalorder %v1007, 1
    %vm1027 = vcmp.lt.s32.totalorder %v1007, 2
    %vm1028 = vcmp.lt.s32.totalorder %v1007, 3
    %vm1029 = vcmp.lt.s32.totalorder %v1007, 4
    %v1030 = vsel %vm1026, %v1010, %v1013
    %v1031 = vsel %vm1029, %v1019, 2102212464
    %v1032 = vsel %vm1028, %v1016, %v1031
    %v1033 = vsel %vm1027, %v1030, %v1032
    %v1034 = vsel %vm1026, %v1013, %v1016
    %v1035 = vsel %vm1029, %v1022, 920167782
    %v1036 = vsel %vm1028, %v1019, %v1035
    %v1037 = vsel %vm1027, %v1034, %v1036
    %v1038 = vsel %vm1026, %v1016, %v1019
    %v1039 = vsel %vm1029, %v1025, 1326507024
    %v1040 = vsel %vm1028, %v1022, %v1039
    %v1041 = vsel %vm1027, %v1038, %v1040
    %v1042 = vshll.u32 %v1002, 8
    %v1043 = vmul.u32.u64.compose %v1042, %v1041
    %v1044 = vextract.low.u32 %v1043
    %v1045 = vextract.high.u32 %v1043
    %v1046 = vmul.u32.u64.compose %v1042, %v1037
    %v1047 = vextract.low.u32 %v1046
    %v1048 = vextract.high.u32 %v1046
    %v1049 = vmul.u32 %v1042, %v1033
    %v1050 = vadd.s32 %v1045, %v1047
    %vm1051 = vc.u32 %v1045, %v1047
    %v1052 = vadd.s32 %v1048, 1
    %v1053 = vsel %vm1051, %v1052, %v1048
    %v1054 = vadd.s32 %v1049, %v1053
    %v1055 = vadd.s32 %v1054, 536870912
    %v1056 = vshrl.u32 %v1055, 30
    %v1057 = vshll.u32 %v1056, 30
    %v1058 = vsub.s32 %v1054, %v1057
    %vm1059 = vcmp.lt.s32.totalorder %v1058, 0
    %v1060 = vsub.s32 0, %v1058
    %v1061 = vsel %vm1059, %v1060, %v1058
    %v1062 = vclz %v1061
    %v1063 = vsub.s32 %v1062, 2
    %vm1064 = vcmp.gt.s32.totalorder 0, %v1063
    %v1065 = vsel %vm1064, 0, %v1063
    %v1066 = vsub.s32 32, %v1065
    %v1067 = vshll.u32 %v1058, %v1065
    %v1068 = vshrl.u32 %v1050, %v1066
    %v1069 = vor.u32 %v1067, %v1068
    %v1070 = vsub.s32 4294967266, %v1065
    %v1071 = vadd.s32 %v1070, 127
    %v1072 = vshll.u32 %v1071, 23
    %v1073 = vor.u32 4788187, %v1072
    %v1074 = vand.u32 2147483647, %v1073
    %v1076 = vcvt.s32.f32 %v1069
    %v1077 = vmul.f32 %v1076, %v1074
    %v1078 = vxor.u32 %v1077, 2147483648
    %v1079 = vsel %vm996, %v1078, %v1077
    %v1080 = vsub.s32 4, %v1056
    %v1081 = vsel %vm996, %v1080, %v1056
    %v1082 = vsel %vm995, %v518, %v1079
    %v1083 = vsel %vm995, 0, %v1081
    %v1084 = vcosq.f32.pop %v1082
    %v1085 = vsinq.f32.pop %v1082
    %vm1086 = vweird.f32 %v518
    %v1087 = vadd.s32 %v1083, 3
    %v1088 = vand.u32 %v1087, 3
    %vm1089 = vcmp.lt.s32.totalorder %v1088, 2
    %vm1090 = vcmp.eq.s32.totalorder %v1088, 0
    %v1091 = vxor.u32 %v1085, 2147483648
    %v1092 = vsel %vm1090, %v1084, %v1091
    %vm1093 = vcmp.eq.s32.totalorder %v1088, 2
    %v1094 = vxor.u32 %v1084, 2147483648
    %v1095 = vsel %vm1093, %v1094, %v1085
    %v1096 = vsel %vm1089, %v1092, %v1095
    %v1097 = vsel %vm1086, nan, %v1096
    %v1098 = vand.u32 2147483647, %v519
    %vm1099 = vcmp.le.f32.partialorder %v1098, 0.7853982
    %vm1100 = vcmp.lt.s32.totalorder %v519, 0
    %v1101 = vand.u32 %v519, 2139095040
    %v1102 = vshrl.u32 %v1101, 23
    %v1103 = vsub.s32 %v1102, 127
    %v1104 = vand.u32 2147483647, %v519
    %v1105 = vand.u32 %v1104, 8388607
    %v1106 = vor.u32 %v1105, 8388608
    %v1107 = vsub.s32 0, %v1106
    %v1108 = vadd.s32 %v1103, 1
    %vm1109 = vcmp.gt.s32.totalorder %v1108, 0
    %v1110 = vsel %vm1109, %v1108, 0
    %v1111 = vshrl.u32 %v1110, 5
    %v1112 = vand.u32 %v1110, 31
    %v1113 = vsub.s32 32, %v1112
    %v1114 = vshrl.u32 683565275, %v1113
    %v1115 = vshll.u32 683565275, %v1112
    %v1116 = vshrl.u32 2475754826, %v1113
    %v1117 = vor.u32 %v1115, %v1116
    %v1118 = vshll.u32 2475754826, %v1112
    %v1119 = vshrl.u32 2131351028, %v1113
    %v1120 = vor.u32 %v1118, %v1119
    %v1121 = vshll.u32 2131351028, %v1112
    %v1122 = vshrl.u32 2102212464, %v1113
    %v1123 = vor.u32 %v1121, %v1122
    %v1124 = vshll.u32 2102212464, %v1112
    %v1125 = vshrl.u32 920167782, %v1113
    %v1126 = vor.u32 %v1124, %v1125
    %v1127 = vshll.u32 920167782, %v1112
    %v1128 = vshrl.u32 1326507024, %v1113
    %v1129 = vor.u32 %v1127, %v1128
    %vm1130 = vcmp.lt.s32.totalorder %v1111, 1
    %vm1131 = vcmp.lt.s32.totalorder %v1111, 2
    %vm1132 = vcmp.lt.s32.totalorder %v1111, 3
    %vm1133 = vcmp.lt.s32.totalorder %v1111, 4
    %v1134 = vsel %vm1130, %v1114, %v1117
    %v1135 = vsel %vm1133, %v1123, 2102212464
    %v1136 = vsel %vm1132, %v1120, %v1135
    %v1137 = vsel %vm1131, %v1134, %v1136
    %v1138 = vsel %vm1130, %v1117, %v1120
    %v1139 = vsel %vm1133, %v1126, 920167782
    %v1140 = vsel %vm1132, %v1123, %v1139
    %v1141 = vsel %vm1131, %v1138, %v1140
    %v1142 = vsel %vm1130, %v1120, %v1123
    %v1143 = vsel %vm1133, %v1129, 1326507024
    %v1144 = vsel %vm1132, %v1126, %v1143
    %v1145 = vsel %vm1131, %v1142, %v1144
    %v1146 = vshll.u32 %v1106, 8
    %v1147 = vmul.u32.u64.compose %v1146, %v1145
    %v1148 = vextract.low.u32 %v1147
    %v1149 = vextract.high.u32 %v1147
    %v1150 = vmul.u32.u64.compose %v1146, %v1141
    %v1151 = vextract.low.u32 %v1150
    %v1152 = vextract.high.u32 %v1150
    %v1153 = vmul.u32 %v1146, %v1137
    %v1154 = vadd.s32 %v1149, %v1151
    %vm1155 = vc.u32 %v1149, %v1151
    %v1156 = vadd.s32 %v1152, 1
    %v1157 = vsel %vm1155, %v1156, %v1152
    %v1158 = vadd.s32 %v1153, %v1157
    %v1159 = vadd.s32 %v1158, 536870912
    %v1160 = vshrl.u32 %v1159, 30
    %v1161 = vshll.u32 %v1160, 30
    %v1162 = vsub.s32 %v1158, %v1161
    %vm1163 = vcmp.lt.s32.totalorder %v1162, 0
    %v1164 = vsub.s32 0, %v1162
    %v1165 = vsel %vm1163, %v1164, %v1162
    %v1166 = vclz %v1165
    %v1167 = vsub.s32 %v1166, 2
    %vm1168 = vcmp.gt.s32.totalorder 0, %v1167
    %v1169 = vsel %vm1168, 0, %v1167
    %v1170 = vsub.s32 32, %v1169
    %v1171 = vshll.u32 %v1162, %v1169
    %v1172 = vshrl.u32 %v1154, %v1170
    %v1173 = vor.u32 %v1171, %v1172
    %v1174 = vsub.s32 4294967266, %v1169
    %v1175 = vadd.s32 %v1174, 127
    %v1176 = vshll.u32 %v1175, 23
    %v1177 = vor.u32 4788187, %v1176
    %v1178 = vand.u32 2147483647, %v1177
    %v1180 = vcvt.s32.f32 %v1173
    %v1181 = vmul.f32 %v1180, %v1178
    %v1182 = vxor.u32 %v1181, 2147483648
    %v1183 = vsel %vm1100, %v1182, %v1181
    %v1184 = vsub.s32 4, %v1160
    %v1185 = vsel %vm1100, %v1184, %v1160
    %v1186 = vsel %vm1099, %v519, %v1183
    %v1187 = vsel %vm1099, 0, %v1185
    %v1188 = vcosq.f32.pop %v1186
    %v1189 = vsinq.f32.pop %v1186
    %vm1190 = vweird.f32 %v519
    %v1191 = vadd.s32 %v1187, 3
    %v1192 = vand.u32 %v1191, 3
    %vm1193 = vcmp.lt.s32.totalorder %v1192, 2
    %vm1194 = vcmp.eq.s32.totalorder %v1192, 0
    %v1195 = vxor.u32 %v1189, 2147483648
    %v1196 = vsel %vm1194, %v1188, %v1195
    %vm1197 = vcmp.eq.s32.totalorder %v1192, 2
    %v1198 = vxor.u32 %v1188, 2147483648
    %v1199 = vsel %vm1197, %v1198, %v1189
    %v1200 = vsel %vm1193, %v1196, %v1199
    %v1201 = vsel %vm1190, nan, %v1200
    %v1202 = vand.u32 2147483647, %v520
    %vm1203 = vcmp.le.f32.partialorder %v1202, 0.7853982
    %vm1204 = vcmp.lt.s32.totalorder %v520, 0
    %v1205 = vand.u32 %v520, 2139095040
    %v1206 = vshrl.u32 %v1205, 23
    %v1207 = vsub.s32 %v1206, 127
    %v1208 = vand.u32 2147483647, %v520
    %v1209 = vand.u32 %v1208, 8388607
    %v1210 = vor.u32 %v1209, 8388608
    %v1211 = vsub.s32 0, %v1210
    %v1212 = vadd.s32 %v1207, 1
    %vm1213 = vcmp.gt.s32.totalorder %v1212, 0
    %v1214 = vsel %vm1213, %v1212, 0
    %v1215 = vshrl.u32 %v1214, 5
    %v1216 = vand.u32 %v1214, 31
    %v1217 = vsub.s32 32, %v1216
    %v1218 = vshrl.u32 683565275, %v1217
    %v1219 = vshll.u32 683565275, %v1216
    %v1220 = vshrl.u32 2475754826, %v1217
    %v1221 = vor.u32 %v1219, %v1220
    %v1222 = vshll.u32 2475754826, %v1216
    %v1223 = vshrl.u32 2131351028, %v1217
    %v1224 = vor.u32 %v1222, %v1223
    %v1225 = vshll.u32 2131351028, %v1216
    %v1226 = vshrl.u32 2102212464, %v1217
    %v1227 = vor.u32 %v1225, %v1226
    %v1228 = vshll.u32 2102212464, %v1216
    %v1229 = vshrl.u32 920167782, %v1217
    %v1230 = vor.u32 %v1228, %v1229
    %v1231 = vshll.u32 920167782, %v1216
    %v1232 = vshrl.u32 1326507024, %v1217
    %v1233 = vor.u32 %v1231, %v1232
    %vm1234 = vcmp.lt.s32.totalorder %v1215, 1
    %vm1235 = vcmp.lt.s32.totalorder %v1215, 2
    %vm1236 = vcmp.lt.s32.totalorder %v1215, 3
    %vm1237 = vcmp.lt.s32.totalorder %v1215, 4
    %v1238 = vsel %vm1234, %v1218, %v1221
    %v1239 = vsel %vm1237, %v1227, 2102212464
    %v1240 = vsel %vm1236, %v1224, %v1239
    %v1241 = vsel %vm1235, %v1238, %v1240
    %v1242 = vsel %vm1234, %v1221, %v1224
    %v1243 = vsel %vm1237, %v1230, 920167782
    %v1244 = vsel %vm1236, %v1227, %v1243
    %v1245 = vsel %vm1235, %v1242, %v1244
    %v1246 = vsel %vm1234, %v1224, %v1227
    %v1247 = vsel %vm1237, %v1233, 1326507024
    %v1248 = vsel %vm1236, %v1230, %v1247
    %v1249 = vsel %vm1235, %v1246, %v1248
    %v1250 = vshll.u32 %v1210, 8
    %v1251 = vmul.u32.u64.compose %v1250, %v1249
    %v1252 = vextract.low.u32 %v1251
    %v1253 = vextract.high.u32 %v1251
    %v1254 = vmul.u32.u64.compose %v1250, %v1245
    %v1255 = vextract.low.u32 %v1254
    %v1256 = vextract.high.u32 %v1254
    %v1257 = vmul.u32 %v1250, %v1241
    %v1258 = vadd.s32 %v1253, %v1255
    %vm1259 = vc.u32 %v1253, %v1255
    %v1260 = vadd.s32 %v1256, 1
    %v1261 = vsel %vm1259, %v1260, %v1256
    %v1262 = vadd.s32 %v1257, %v1261
    %v1263 = vadd.s32 %v1262, 536870912
    %v1264 = vshrl.u32 %v1263, 30
    %v1265 = vshll.u32 %v1264, 30
    %v1266 = vsub.s32 %v1262, %v1265
    %vm1267 = vcmp.lt.s32.totalorder %v1266, 0
    %v1268 = vsub.s32 0, %v1266
    %v1269 = vsel %vm1267, %v1268, %v1266
    %v1270 = vclz %v1269
    %v1271 = vsub.s32 %v1270, 2
    %vm1272 = vcmp.gt.s32.totalorder 0, %v1271
    %v1273 = vsel %vm1272, 0, %v1271
    %v1274 = vsub.s32 32, %v1273
    %v1275 = vshll.u32 %v1266, %v1273
    %v1276 = vshrl.u32 %v1258, %v1274
    %v1277 = vor.u32 %v1275, %v1276
    %v1278 = vsub.s32 4294967266, %v1273
    %v1279 = vadd.s32 %v1278, 127
    %v1280 = vshll.u32 %v1279, 23
    %v1281 = vor.u32 4788187, %v1280
    %v1282 = vand.u32 2147483647, %v1281
    %v1284 = vcvt.s32.f32 %v1277
    %v1285 = vmul.f32 %v1284, %v1282
    %v1286 = vxor.u32 %v1285, 2147483648
    %v1287 = vsel %vm1204, %v1286, %v1285
    %v1288 = vsub.s32 4, %v1264
    %v1289 = vsel %vm1204, %v1288, %v1264
    %v1290 = vsel %vm1203, %v520, %v1287
    %v1291 = vsel %vm1203, 0, %v1289
    %v1292 = vcosq.f32.pop %v1290
    %v1293 = vsinq.f32.pop %v1290
    %vm1294 = vweird.f32 %v520
    %v1295 = vadd.s32 %v1291, 3
    %v1296 = vand.u32 %v1295, 3
    %vm1297 = vcmp.lt.s32.totalorder %v1296, 2
    %vm1298 = vcmp.eq.s32.totalorder %v1296, 0
    %v1299 = vxor.u32 %v1293, 2147483648
    %v1300 = vsel %vm1298, %v1292, %v1299
    %vm1301 = vcmp.eq.s32.totalorder %v1296, 2
    %v1302 = vxor.u32 %v1292, 2147483648
    %v1303 = vsel %vm1301, %v1302, %v1293
    %v1304 = vsel %vm1297, %v1300, %v1303
    %v1305 = vsel %vm1294, nan, %v1304
    %v1306 = vand.u32 2147483647, %v521
    %vm1307 = vcmp.le.f32.partialorder %v1306, 0.7853982
    %vm1308 = vcmp.lt.s32.totalorder %v521, 0
    %v1309 = vand.u32 %v521, 2139095040
    %v1310 = vshrl.u32 %v1309, 23
    %v1311 = vsub.s32 %v1310, 127
    %v1312 = vand.u32 2147483647, %v521
    %v1313 = vand.u32 %v1312, 8388607
    %v1314 = vor.u32 %v1313, 8388608
    %v1315 = vsub.s32 0, %v1314
    %v1316 = vadd.s32 %v1311, 1
    %vm1317 = vcmp.gt.s32.totalorder %v1316, 0
    %v1318 = vsel %vm1317, %v1316, 0
    %v1319 = vshrl.u32 %v1318, 5
    %v1320 = vand.u32 %v1318, 31
    %v1321 = vsub.s32 32, %v1320
    %v1322 = vshrl.u32 683565275, %v1321
    %v1323 = vshll.u32 683565275, %v1320
    %v1324 = vshrl.u32 2475754826, %v1321
    %v1325 = vor.u32 %v1323, %v1324
    %v1326 = vshll.u32 2475754826, %v1320
    %v1327 = vshrl.u32 2131351028, %v1321
    %v1328 = vor.u32 %v1326, %v1327
    %v1329 = vshll.u32 2131351028, %v1320
    %v1330 = vshrl.u32 2102212464, %v1321
    %v1331 = vor.u32 %v1329, %v1330
    %v1332 = vshll.u32 2102212464, %v1320
    %v1333 = vshrl.u32 920167782, %v1321
    %v1334 = vor.u32 %v1332, %v1333
    %v1335 = vshll.u32 920167782, %v1320
    %v1336 = vshrl.u32 1326507024, %v1321
    %v1337 = vor.u32 %v1335, %v1336
    %vm1338 = vcmp.lt.s32.totalorder %v1319, 1
    %vm1339 = vcmp.lt.s32.totalorder %v1319, 2
    %vm1340 = vcmp.lt.s32.totalorder %v1319, 3
    %vm1341 = vcmp.lt.s32.totalorder %v1319, 4
    %v1342 = vsel %vm1338, %v1322, %v1325
    %v1343 = vsel %vm1341, %v1331, 2102212464
    %v1344 = vsel %vm1340, %v1328, %v1343
    %v1345 = vsel %vm1339, %v1342, %v1344
    %v1346 = vsel %vm1338, %v1325, %v1328
    %v1347 = vsel %vm1341, %v1334, 920167782
    %v1348 = vsel %vm1340, %v1331, %v1347
    %v1349 = vsel %vm1339, %v1346, %v1348
    %v1350 = vsel %vm1338, %v1328, %v1331
    %v1351 = vsel %vm1341, %v1337, 1326507024
    %v1352 = vsel %vm1340, %v1334, %v1351
    %v1353 = vsel %vm1339, %v1350, %v1352
    %v1354 = vshll.u32 %v1314, 8
    %v1355 = vmul.u32.u64.compose %v1354, %v1353
    %v1356 = vextract.low.u32 %v1355
    %v1357 = vextract.high.u32 %v1355
    %v1358 = vmul.u32.u64.compose %v1354, %v1349
    %v1359 = vextract.low.u32 %v1358
    %v1360 = vextract.high.u32 %v1358
    %v1361 = vmul.u32 %v1354, %v1345
    %v1362 = vadd.s32 %v1357, %v1359
    %vm1363 = vc.u32 %v1357, %v1359
    %v1364 = vadd.s32 %v1360, 1
    %v1365 = vsel %vm1363, %v1364, %v1360
    %v1366 = vadd.s32 %v1361, %v1365
    %v1367 = vadd.s32 %v1366, 536870912
    %v1368 = vshrl.u32 %v1367, 30
    %v1369 = vshll.u32 %v1368, 30
    %v1370 = vsub.s32 %v1366, %v1369
    %vm1371 = vcmp.lt.s32.totalorder %v1370, 0
    %v1372 = vsub.s32 0, %v1370
    %v1373 = vsel %vm1371, %v1372, %v1370
    %v1374 = vclz %v1373
    %v1375 = vsub.s32 %v1374, 2
    %vm1376 = vcmp.gt.s32.totalorder 0, %v1375
    %v1377 = vsel %vm1376, 0, %v1375
    %v1378 = vsub.s32 32, %v1377
    %v1379 = vshll.u32 %v1370, %v1377
    %v1380 = vshrl.u32 %v1362, %v1378
    %v1381 = vor.u32 %v1379, %v1380
    %v1382 = vsub.s32 4294967266, %v1377
    %v1383 = vadd.s32 %v1382, 127
    %v1384 = vshll.u32 %v1383, 23
    %v1385 = vor.u32 4788187, %v1384
    %v1386 = vand.u32 2147483647, %v1385
    %v1388 = vcvt.s32.f32 %v1381
    %v1389 = vmul.f32 %v1388, %v1386
    %v1390 = vxor.u32 %v1389, 2147483648
    %v1391 = vsel %vm1308, %v1390, %v1389
    %v1392 = vsub.s32 4, %v1368
    %v1393 = vsel %vm1308, %v1392, %v1368
    %v1394 = vsel %vm1307, %v521, %v1391
    %v1395 = vsel %vm1307, 0, %v1393
    %v1396 = vcosq.f32.pop %v1394
    %v1397 = vsinq.f32.pop %v1394
    %vm1398 = vweird.f32 %v521
    %v1399 = vadd.s32 %v1395, 3
    %v1400 = vand.u32 %v1399, 3
    %vm1401 = vcmp.lt.s32.totalorder %v1400, 2
    %vm1402 = vcmp.eq.s32.totalorder %v1400, 0
    %v1403 = vxor.u32 %v1397, 2147483648
    %v1404 = vsel %vm1402, %v1396, %v1403
    %vm1405 = vcmp.eq.s32.totalorder %v1400, 2
    %v1406 = vxor.u32 %v1396, 2147483648
    %v1407 = vsel %vm1405, %v1406, %v1397
    %v1408 = vsel %vm1401, %v1404, %v1407
    %v1409 = vsel %vm1398, nan, %v1408
    %v1410 = vand.u32 2147483647, %v522
    %vm1411 = vcmp.le.f32.partialorder %v1410, 0.7853982
    %vm1412 = vcmp.lt.s32.totalorder %v522, 0
    %v1413 = vand.u32 %v522, 2139095040
    %v1414 = vshrl.u32 %v1413, 23
    %v1415 = vsub.s32 %v1414, 127
    %v1416 = vand.u32 2147483647, %v522
    %v1417 = vand.u32 %v1416, 8388607
    %v1418 = vor.u32 %v1417, 8388608
    %v1419 = vsub.s32 0, %v1418
    %v1420 = vadd.s32 %v1415, 1
    %vm1421 = vcmp.gt.s32.totalorder %v1420, 0
    %v1422 = vsel %vm1421, %v1420, 0
    %v1423 = vshrl.u32 %v1422, 5
    %v1424 = vand.u32 %v1422, 31
    %v1425 = vsub.s32 32, %v1424
    %v1426 = vshrl.u32 683565275, %v1425
    %v1427 = vshll.u32 683565275, %v1424
    %v1428 = vshrl.u32 2475754826, %v1425
    %v1429 = vor.u32 %v1427, %v1428
    %v1430 = vshll.u32 2475754826, %v1424
    %v1431 = vshrl.u32 2131351028, %v1425
    %v1432 = vor.u32 %v1430, %v1431
    %v1433 = vshll.u32 2131351028, %v1424
    %v1434 = vshrl.u32 2102212464, %v1425
    %v1435 = vor.u32 %v1433, %v1434
    %v1436 = vshll.u32 2102212464, %v1424
    %v1437 = vshrl.u32 920167782, %v1425
    %v1438 = vor.u32 %v1436, %v1437
    %v1439 = vshll.u32 920167782, %v1424
    %v1440 = vshrl.u32 1326507024, %v1425
    %v1441 = vor.u32 %v1439, %v1440
    %vm1442 = vcmp.lt.s32.totalorder %v1423, 1
    %vm1443 = vcmp.lt.s32.totalorder %v1423, 2
    %vm1444 = vcmp.lt.s32.totalorder %v1423, 3
    %vm1445 = vcmp.lt.s32.totalorder %v1423, 4
    %v1446 = vsel %vm1442, %v1426, %v1429
    %v1447 = vsel %vm1445, %v1435, 2102212464
    %v1448 = vsel %vm1444, %v1432, %v1447
    %v1449 = vsel %vm1443, %v1446, %v1448
    %v1450 = vsel %vm1442, %v1429, %v1432
    %v1451 = vsel %vm1445, %v1438, 920167782
    %v1452 = vsel %vm1444, %v1435, %v1451
    %v1453 = vsel %vm1443, %v1450, %v1452
    %v1454 = vsel %vm1442, %v1432, %v1435
    %v1455 = vsel %vm1445, %v1441, 1326507024
    %v1456 = vsel %vm1444, %v1438, %v1455
    %v1457 = vsel %vm1443, %v1454, %v1456
    %v1458 = vshll.u32 %v1418, 8
    %v1459 = vmul.u32.u64.compose %v1458, %v1457
    %v1460 = vextract.low.u32 %v1459
    %v1461 = vextract.high.u32 %v1459
    %v1462 = vmul.u32.u64.compose %v1458, %v1453
    %v1463 = vextract.low.u32 %v1462
    %v1464 = vextract.high.u32 %v1462
    %v1465 = vmul.u32 %v1458, %v1449
    %v1466 = vadd.s32 %v1461, %v1463
    %vm1467 = vc.u32 %v1461, %v1463
    %v1468 = vadd.s32 %v1464, 1
    %v1469 = vsel %vm1467, %v1468, %v1464
    %v1470 = vadd.s32 %v1465, %v1469
    %v1471 = vadd.s32 %v1470, 536870912
    %v1472 = vshrl.u32 %v1471, 30
    %v1473 = vshll.u32 %v1472, 30
    %v1474 = vsub.s32 %v1470, %v1473
    %vm1475 = vcmp.lt.s32.totalorder %v1474, 0
    %v1476 = vsub.s32 0, %v1474
    %v1477 = vsel %vm1475, %v1476, %v1474
    %v1478 = vclz %v1477
    %v1479 = vsub.s32 %v1478, 2
    %vm1480 = vcmp.gt.s32.totalorder 0, %v1479
    %v1481 = vsel %vm1480, 0, %v1479
    %v1482 = vsub.s32 32, %v1481
    %v1483 = vshll.u32 %v1474, %v1481
    %v1484 = vshrl.u32 %v1466, %v1482
    %v1485 = vor.u32 %v1483, %v1484
    %v1486 = vsub.s32 4294967266, %v1481
    %v1487 = vadd.s32 %v1486, 127
    %v1488 = vshll.u32 %v1487, 23
    %v1489 = vor.u32 4788187, %v1488
    %v1490 = vand.u32 2147483647, %v1489
    %v1492 = vcvt.s32.f32 %v1485
    %v1493 = vmul.f32 %v1492, %v1490
    %v1494 = vxor.u32 %v1493, 2147483648
    %v1495 = vsel %vm1412, %v1494, %v1493
    %v1496 = vsub.s32 4, %v1472
    %v1497 = vsel %vm1412, %v1496, %v1472
    %v1498 = vsel %vm1411, %v522, %v1495
    %v1499 = vsel %vm1411, 0, %v1497
    %v1500 = vcosq.f32.pop %v1498
    %v1501 = vsinq.f32.pop %v1498
    %vm1502 = vweird.f32 %v522
    %v1503 = vadd.s32 %v1499, 3
    %v1504 = vand.u32 %v1503, 3
    %vm1505 = vcmp.lt.s32.totalorder %v1504, 2
    %vm1506 = vcmp.eq.s32.totalorder %v1504, 0
    %v1507 = vxor.u32 %v1501, 2147483648
    %v1508 = vsel %vm1506, %v1500, %v1507
    %vm1509 = vcmp.eq.s32.totalorder %v1504, 2
    %v1510 = vxor.u32 %v1500, 2147483648
    %v1511 = vsel %vm1509, %v1510, %v1501
    %v1512 = vsel %vm1505, %v1508, %v1511
    %v1513 = vsel %vm1502, nan, %v1512
    %v1514 = vand.u32 2147483647, %v523
    %vm1515 = vcmp.le.f32.partialorder %v1514, 0.7853982
    %vm1516 = vcmp.lt.s32.totalorder %v523, 0
    %v1517 = vand.u32 %v523, 2139095040
    %v1518 = vshrl.u32 %v1517, 23
    %v1519 = vsub.s32 %v1518, 127
    %v1520 = vand.u32 2147483647, %v523
    %v1521 = vand.u32 %v1520, 8388607
    %v1522 = vor.u32 %v1521, 8388608
    %v1523 = vsub.s32 0, %v1522
    %v1524 = vadd.s32 %v1519, 1
    %vm1525 = vcmp.gt.s32.totalorder %v1524, 0
    %v1526 = vsel %vm1525, %v1524, 0
    %v1527 = vshrl.u32 %v1526, 5
    %v1528 = vand.u32 %v1526, 31
    %v1529 = vsub.s32 32, %v1528
    %v1530 = vshrl.u32 683565275, %v1529
    %v1531 = vshll.u32 683565275, %v1528
    %v1532 = vshrl.u32 2475754826, %v1529
    %v1533 = vor.u32 %v1531, %v1532
    %v1534 = vshll.u32 2475754826, %v1528
    %v1535 = vshrl.u32 2131351028, %v1529
    %v1536 = vor.u32 %v1534, %v1535
    %v1537 = vshll.u32 2131351028, %v1528
    %v1538 = vshrl.u32 2102212464, %v1529
    %v1539 = vor.u32 %v1537, %v1538
    %v1540 = vshll.u32 2102212464, %v1528
    %v1541 = vshrl.u32 920167782, %v1529
    %v1542 = vor.u32 %v1540, %v1541
    %v1543 = vshll.u32 920167782, %v1528
    %v1544 = vshrl.u32 1326507024, %v1529
    %v1545 = vor.u32 %v1543, %v1544
    %vm1546 = vcmp.lt.s32.totalorder %v1527, 1
    %vm1547 = vcmp.lt.s32.totalorder %v1527, 2
    %vm1548 = vcmp.lt.s32.totalorder %v1527, 3
    %vm1549 = vcmp.lt.s32.totalorder %v1527, 4
    %v1550 = vsel %vm1546, %v1530, %v1533
    %v1551 = vsel %vm1549, %v1539, 2102212464
    %v1552 = vsel %vm1548, %v1536, %v1551
    %v1553 = vsel %vm1547, %v1550, %v1552
    %v1554 = vsel %vm1546, %v1533, %v1536
    %v1555 = vsel %vm1549, %v1542, 920167782
    %v1556 = vsel %vm1548, %v1539, %v1555
    %v1557 = vsel %vm1547, %v1554, %v1556
    %v1558 = vsel %vm1546, %v1536, %v1539
    %v1559 = vsel %vm1549, %v1545, 1326507024
    %v1560 = vsel %vm1548, %v1542, %v1559
    %v1561 = vsel %vm1547, %v1558, %v1560
    %v1562 = vshll.u32 %v1522, 8
    %v1563 = vmul.u32.u64.compose %v1562, %v1561
    %v1564 = vextract.low.u32 %v1563
    %v1565 = vextract.high.u32 %v1563
    %v1566 = vmul.u32.u64.compose %v1562, %v1557
    %v1567 = vextract.low.u32 %v1566
    %v1568 = vextract.high.u32 %v1566
    %v1569 = vmul.u32 %v1562, %v1553
    %v1570 = vadd.s32 %v1565, %v1567
    %vm1571 = vc.u32 %v1565, %v1567
    %v1572 = vadd.s32 %v1568, 1
    %v1573 = vsel %vm1571, %v1572, %v1568
    %v1574 = vadd.s32 %v1569, %v1573
    %v1575 = vadd.s32 %v1574, 536870912
    %v1576 = vshrl.u32 %v1575, 30
    %v1577 = vshll.u32 %v1576, 30
    %v1578 = vsub.s32 %v1574, %v1577
    %vm1579 = vcmp.lt.s32.totalorder %v1578, 0
    %v1580 = vsub.s32 0, %v1578
    %v1581 = vsel %vm1579, %v1580, %v1578
    %v1582 = vclz %v1581
    %v1583 = vsub.s32 %v1582, 2
    %vm1584 = vcmp.gt.s32.totalorder 0, %v1583
    %v1585 = vsel %vm1584, 0, %v1583
    %v1586 = vsub.s32 32, %v1585
    %v1587 = vshll.u32 %v1578, %v1585
    %v1588 = vshrl.u32 %v1570, %v1586
    %v1589 = vor.u32 %v1587, %v1588
    %v1590 = vsub.s32 4294967266, %v1585
    %v1591 = vadd.s32 %v1590, 127
    %v1592 = vshll.u32 %v1591, 23
    %v1593 = vor.u32 4788187, %v1592
    %v1594 = vand.u32 2147483647, %v1593
    %v1596 = vcvt.s32.f32 %v1589
    %v1597 = vmul.f32 %v1596, %v1594
    %v1598 = vxor.u32 %v1597, 2147483648
    %v1599 = vsel %vm1516, %v1598, %v1597
    %v1600 = vsub.s32 4, %v1576
    %v1601 = vsel %vm1516, %v1600, %v1576
    %v1602 = vsel %vm1515, %v523, %v1599
    %v1603 = vsel %vm1515, 0, %v1601
    %v1604 = vcosq.f32.pop %v1602
    %v1605 = vsinq.f32.pop %v1602
    %vm1606 = vweird.f32 %v523
    %v1607 = vadd.s32 %v1603, 3
    %v1608 = vand.u32 %v1607, 3
    %vm1609 = vcmp.lt.s32.totalorder %v1608, 2
    %vm1610 = vcmp.eq.s32.totalorder %v1608, 0
    %v1611 = vxor.u32 %v1605, 2147483648
    %v1612 = vsel %vm1610, %v1604, %v1611
    %vm1613 = vcmp.eq.s32.totalorder %v1608, 2
    %v1614 = vxor.u32 %v1604, 2147483648
    %v1615 = vsel %vm1613, %v1614, %v1605
    %v1616 = vsel %vm1609, %v1612, %v1615
    %v1617 = vsel %vm1606, nan, %v1616
    %v1618 = vand.u32 2147483647, %v524
    %vm1619 = vcmp.le.f32.partialorder %v1618, 0.7853982
    %vm1620 = vcmp.lt.s32.totalorder %v524, 0
    %v1621 = vand.u32 %v524, 2139095040
    %v1622 = vshrl.u32 %v1621, 23
    %v1623 = vsub.s32 %v1622, 127
    %v1624 = vand.u32 2147483647, %v524
    %v1625 = vand.u32 %v1624, 8388607
    %v1626 = vor.u32 %v1625, 8388608
    %v1627 = vsub.s32 0, %v1626
    %v1628 = vadd.s32 %v1623, 1
    %vm1629 = vcmp.gt.s32.totalorder %v1628, 0
    %v1630 = vsel %vm1629, %v1628, 0
    %v1631 = vshrl.u32 %v1630, 5
    %v1632 = vand.u32 %v1630, 31
    %v1633 = vsub.s32 32, %v1632
    %v1634 = vshrl.u32 683565275, %v1633
    %v1635 = vshll.u32 683565275, %v1632
    %v1636 = vshrl.u32 2475754826, %v1633
    %v1637 = vor.u32 %v1635, %v1636
    %v1638 = vshll.u32 2475754826, %v1632
    %v1639 = vshrl.u32 2131351028, %v1633
    %v1640 = vor.u32 %v1638, %v1639
    %v1641 = vshll.u32 2131351028, %v1632
    %v1642 = vshrl.u32 2102212464, %v1633
    %v1643 = vor.u32 %v1641, %v1642
    %v1644 = vshll.u32 2102212464, %v1632
    %v1645 = vshrl.u32 920167782, %v1633
    %v1646 = vor.u32 %v1644, %v1645
    %v1647 = vshll.u32 920167782, %v1632
    %v1648 = vshrl.u32 1326507024, %v1633
    %v1649 = vor.u32 %v1647, %v1648
    %vm1650 = vcmp.lt.s32.totalorder %v1631, 1
    %vm1651 = vcmp.lt.s32.totalorder %v1631, 2
    %vm1652 = vcmp.lt.s32.totalorder %v1631, 3
    %vm1653 = vcmp.lt.s32.totalorder %v1631, 4
    %v1654 = vsel %vm1650, %v1634, %v1637
    %v1655 = vsel %vm1653, %v1643, 2102212464
    %v1656 = vsel %vm1652, %v1640, %v1655
    %v1657 = vsel %vm1651, %v1654, %v1656
    %v1658 = vsel %vm1650, %v1637, %v1640
    %v1659 = vsel %vm1653, %v1646, 920167782
    %v1660 = vsel %vm1652, %v1643, %v1659
    %v1661 = vsel %vm1651, %v1658, %v1660
    %v1662 = vsel %vm1650, %v1640, %v1643
    %v1663 = vsel %vm1653, %v1649, 1326507024
    %v1664 = vsel %vm1652, %v1646, %v1663
    %v1665 = vsel %vm1651, %v1662, %v1664
    %v1666 = vshll.u32 %v1626, 8
    %v1667 = vmul.u32.u64.compose %v1666, %v1665
    %v1668 = vextract.low.u32 %v1667
    %v1669 = vextract.high.u32 %v1667
    %v1670 = vmul.u32.u64.compose %v1666, %v1661
    %v1671 = vextract.low.u32 %v1670
    %v1672 = vextract.high.u32 %v1670
    %v1673 = vmul.u32 %v1666, %v1657
    %v1674 = vadd.s32 %v1669, %v1671
    %vm1675 = vc.u32 %v1669, %v1671
    %v1676 = vadd.s32 %v1672, 1
    %v1677 = vsel %vm1675, %v1676, %v1672
    %v1678 = vadd.s32 %v1673, %v1677
    %v1679 = vadd.s32 %v1678, 536870912
    %v1680 = vshrl.u32 %v1679, 30
    %v1681 = vshll.u32 %v1680, 30
    %v1682 = vsub.s32 %v1678, %v1681
    %vm1683 = vcmp.lt.s32.totalorder %v1682, 0
    %v1684 = vsub.s32 0, %v1682
    %v1685 = vsel %vm1683, %v1684, %v1682
    %v1686 = vclz %v1685
    %v1687 = vsub.s32 %v1686, 2
    %vm1688 = vcmp.gt.s32.totalorder 0, %v1687
    %v1689 = vsel %vm1688, 0, %v1687
    %v1690 = vsub.s32 32, %v1689
    %v1691 = vshll.u32 %v1682, %v1689
    %v1692 = vshrl.u32 %v1674, %v1690
    %v1693 = vor.u32 %v1691, %v1692
    %v1694 = vsub.s32 4294967266, %v1689
    %v1695 = vadd.s32 %v1694, 127
    %v1696 = vshll.u32 %v1695, 23
    %v1697 = vor.u32 4788187, %v1696
    %v1698 = vand.u32 2147483647, %v1697
    %v1700 = vcvt.s32.f32 %v1693
    %v1701 = vmul.f32 %v1700, %v1698
    %v1702 = vxor.u32 %v1701, 2147483648
    %v1703 = vsel %vm1620, %v1702, %v1701
    %v1704 = vsub.s32 4, %v1680
    %v1705 = vsel %vm1620, %v1704, %v1680
    %v1706 = vsel %vm1619, %v524, %v1703
    %v1707 = vsel %vm1619, 0, %v1705
    %v1708 = vcosq.f32.pop %v1706
    %v1709 = vsinq.f32.pop %v1706
    %vm1710 = vweird.f32 %v524
    %v1711 = vadd.s32 %v1707, 3
    %v1712 = vand.u32 %v1711, 3
    %vm1713 = vcmp.lt.s32.totalorder %v1712, 2
    %vm1714 = vcmp.eq.s32.totalorder %v1712, 0
    %v1715 = vxor.u32 %v1709, 2147483648
    %v1716 = vsel %vm1714, %v1708, %v1715
    %vm1717 = vcmp.eq.s32.totalorder %v1712, 2
    %v1718 = vxor.u32 %v1708, 2147483648
    %v1719 = vsel %vm1717, %v1718, %v1709
    %v1720 = vsel %vm1713, %v1716, %v1719
    %v1721 = vsel %vm1710, nan, %v1720
    %v1722 = vand.u32 2147483647, %v525
    %vm1723 = vcmp.le.f32.partialorder %v1722, 0.7853982
    %vm1724 = vcmp.lt.s32.totalorder %v525, 0
    %v1725 = vand.u32 %v525, 2139095040
    %v1726 = vshrl.u32 %v1725, 23
    %v1727 = vsub.s32 %v1726, 127
    %v1728 = vand.u32 2147483647, %v525
    %v1729 = vand.u32 %v1728, 8388607
    %v1730 = vor.u32 %v1729, 8388608
    %v1731 = vsub.s32 0, %v1730
    %v1732 = vadd.s32 %v1727, 1
    %vm1733 = vcmp.gt.s32.totalorder %v1732, 0
    %v1734 = vsel %vm1733, %v1732, 0
    %v1735 = vshrl.u32 %v1734, 5
    %v1736 = vand.u32 %v1734, 31
    %v1737 = vsub.s32 32, %v1736
    %v1738 = vshrl.u32 683565275, %v1737
    %v1739 = vshll.u32 683565275, %v1736
    %v1740 = vshrl.u32 2475754826, %v1737
    %v1741 = vor.u32 %v1739, %v1740
    %v1742 = vshll.u32 2475754826, %v1736
    %v1743 = vshrl.u32 2131351028, %v1737
    %v1744 = vor.u32 %v1742, %v1743
    %v1745 = vshll.u32 2131351028, %v1736
    %v1746 = vshrl.u32 2102212464, %v1737
    %v1747 = vor.u32 %v1745, %v1746
    %v1748 = vshll.u32 2102212464, %v1736
    %v1749 = vshrl.u32 920167782, %v1737
    %v1750 = vor.u32 %v1748, %v1749
    %v1751 = vshll.u32 920167782, %v1736
    %v1752 = vshrl.u32 1326507024, %v1737
    %v1753 = vor.u32 %v1751, %v1752
    %vm1754 = vcmp.lt.s32.totalorder %v1735, 1
    %vm1755 = vcmp.lt.s32.totalorder %v1735, 2
    %vm1756 = vcmp.lt.s32.totalorder %v1735, 3
    %vm1757 = vcmp.lt.s32.totalorder %v1735, 4
    %v1758 = vsel %vm1754, %v1738, %v1741
    %v1759 = vsel %vm1757, %v1747, 2102212464
    %v1760 = vsel %vm1756, %v1744, %v1759
    %v1761 = vsel %vm1755, %v1758, %v1760
    %v1762 = vsel %vm1754, %v1741, %v1744
    %v1763 = vsel %vm1757, %v1750, 920167782
    %v1764 = vsel %vm1756, %v1747, %v1763
    %v1765 = vsel %vm1755, %v1762, %v1764
    %v1766 = vsel %vm1754, %v1744, %v1747
    %v1767 = vsel %vm1757, %v1753, 1326507024
    %v1768 = vsel %vm1756, %v1750, %v1767
    %v1769 = vsel %vm1755, %v1766, %v1768
    %v1770 = vshll.u32 %v1730, 8
    %v1771 = vmul.u32.u64.compose %v1770, %v1769
    %v1772 = vextract.low.u32 %v1771
    %v1773 = vextract.high.u32 %v1771
    %v1774 = vmul.u32.u64.compose %v1770, %v1765
    %v1775 = vextract.low.u32 %v1774
    %v1776 = vextract.high.u32 %v1774
    %v1777 = vmul.u32 %v1770, %v1761
    %v1778 = vadd.s32 %v1773, %v1775
    %vm1779 = vc.u32 %v1773, %v1775
    %v1780 = vadd.s32 %v1776, 1
    %v1781 = vsel %vm1779, %v1780, %v1776
    %v1782 = vadd.s32 %v1777, %v1781
    %v1783 = vadd.s32 %v1782, 536870912
    %v1784 = vshrl.u32 %v1783, 30
    %v1785 = vshll.u32 %v1784, 30
    %v1786 = vsub.s32 %v1782, %v1785
    %vm1787 = vcmp.lt.s32.totalorder %v1786, 0
    %v1788 = vsub.s32 0, %v1786
    %v1789 = vsel %vm1787, %v1788, %v1786
    %v1790 = vclz %v1789
    %v1791 = vsub.s32 %v1790, 2
    %vm1792 = vcmp.gt.s32.totalorder 0, %v1791
    %v1793 = vsel %vm1792, 0, %v1791
    %v1794 = vsub.s32 32, %v1793
    %v1795 = vshll.u32 %v1786, %v1793
    %v1796 = vshrl.u32 %v1778, %v1794
    %v1797 = vor.u32 %v1795, %v1796
    %v1798 = vsub.s32 4294967266, %v1793
    %v1799 = vadd.s32 %v1798, 127
    %v1800 = vshll.u32 %v1799, 23
    %v1801 = vor.u32 4788187, %v1800
    %v1802 = vand.u32 2147483647, %v1801
    %v1804 = vcvt.s32.f32 %v1797
    %v1805 = vmul.f32 %v1804, %v1802
    %v1806 = vxor.u32 %v1805, 2147483648
    %v1807 = vsel %vm1724, %v1806, %v1805
    %v1808 = vsub.s32 4, %v1784
    %v1809 = vsel %vm1724, %v1808, %v1784
    %v1810 = vsel %vm1723, %v525, %v1807
    %v1811 = vsel %vm1723, 0, %v1809
    %v1812 = vcosq.f32.pop %v1810
    %v1813 = vsinq.f32.pop %v1810
    %vm1814 = vweird.f32 %v525
    %v1815 = vadd.s32 %v1811, 3
    %v1816 = vand.u32 %v1815, 3
    %vm1817 = vcmp.lt.s32.totalorder %v1816, 2
    %vm1818 = vcmp.eq.s32.totalorder %v1816, 0
    %v1819 = vxor.u32 %v1813, 2147483648
    %v1820 = vsel %vm1818, %v1812, %v1819
    %vm1821 = vcmp.eq.s32.totalorder %v1816, 2
    %v1822 = vxor.u32 %v1812, 2147483648
    %v1823 = vsel %vm1821, %v1822, %v1813
    %v1824 = vsel %vm1817, %v1820, %v1823
    %v1825 = vsel %vm1814, nan, %v1824
    %v1826 = vand.u32 2147483647, %v526
    %vm1827 = vcmp.le.f32.partialorder %v1826, 0.7853982
    %vm1828 = vcmp.lt.s32.totalorder %v526, 0
    %v1829 = vand.u32 %v526, 2139095040
    %v1830 = vshrl.u32 %v1829, 23
    %v1831 = vsub.s32 %v1830, 127
    %v1832 = vand.u32 2147483647, %v526
    %v1833 = vand.u32 %v1832, 8388607
    %v1834 = vor.u32 %v1833, 8388608
    %v1835 = vsub.s32 0, %v1834
    %v1836 = vadd.s32 %v1831, 1
    %vm1837 = vcmp.gt.s32.totalorder %v1836, 0
    %v1838 = vsel %vm1837, %v1836, 0
    %v1839 = vshrl.u32 %v1838, 5
    %v1840 = vand.u32 %v1838, 31
    %v1841 = vsub.s32 32, %v1840
    %v1842 = vshrl.u32 683565275, %v1841
    %v1843 = vshll.u32 683565275, %v1840
    %v1844 = vshrl.u32 2475754826, %v1841
    %v1845 = vor.u32 %v1843, %v1844
    %v1846 = vshll.u32 2475754826, %v1840
    %v1847 = vshrl.u32 2131351028, %v1841
    %v1848 = vor.u32 %v1846, %v1847
    %v1849 = vshll.u32 2131351028, %v1840
    %v1850 = vshrl.u32 2102212464, %v1841
    %v1851 = vor.u32 %v1849, %v1850
    %v1852 = vshll.u32 2102212464, %v1840
    %v1853 = vshrl.u32 920167782, %v1841
    %v1854 = vor.u32 %v1852, %v1853
    %v1855 = vshll.u32 920167782, %v1840
    %v1856 = vshrl.u32 1326507024, %v1841
    %v1857 = vor.u32 %v1855, %v1856
    %vm1858 = vcmp.lt.s32.totalorder %v1839, 1
    %vm1859 = vcmp.lt.s32.totalorder %v1839, 2
    %vm1860 = vcmp.lt.s32.totalorder %v1839, 3
    %vm1861 = vcmp.lt.s32.totalorder %v1839, 4
    %v1862 = vsel %vm1858, %v1842, %v1845
    %v1863 = vsel %vm1861, %v1851, 2102212464
    %v1864 = vsel %vm1860, %v1848, %v1863
    %v1865 = vsel %vm1859, %v1862, %v1864
    %v1866 = vsel %vm1858, %v1845, %v1848
    %v1867 = vsel %vm1861, %v1854, 920167782
    %v1868 = vsel %vm1860, %v1851, %v1867
    %v1869 = vsel %vm1859, %v1866, %v1868
    %v1870 = vsel %vm1858, %v1848, %v1851
    %v1871 = vsel %vm1861, %v1857, 1326507024
    %v1872 = vsel %vm1860, %v1854, %v1871
    %v1873 = vsel %vm1859, %v1870, %v1872
    %v1874 = vshll.u32 %v1834, 8
    %v1875 = vmul.u32.u64.compose %v1874, %v1873
    %v1876 = vextract.low.u32 %v1875
    %v1877 = vextract.high.u32 %v1875
    %v1878 = vmul.u32.u64.compose %v1874, %v1869
    %v1879 = vextract.low.u32 %v1878
    %v1880 = vextract.high.u32 %v1878
    %v1881 = vmul.u32 %v1874, %v1865
    %v1882 = vadd.s32 %v1877, %v1879
    %vm1883 = vc.u32 %v1877, %v1879
    %v1884 = vadd.s32 %v1880, 1
    %v1885 = vsel %vm1883, %v1884, %v1880
    %v1886 = vadd.s32 %v1881, %v1885
    %v1887 = vadd.s32 %v1886, 536870912
    %v1888 = vshrl.u32 %v1887, 30
    %v1889 = vshll.u32 %v1888, 30
    %v1890 = vsub.s32 %v1886, %v1889
    %vm1891 = vcmp.lt.s32.totalorder %v1890, 0
    %v1892 = vsub.s32 0, %v1890
    %v1893 = vsel %vm1891, %v1892, %v1890
    %v1894 = vclz %v1893
    %v1895 = vsub.s32 %v1894, 2
    %vm1896 = vcmp.gt.s32.totalorder 0, %v1895
    %v1897 = vsel %vm1896, 0, %v1895
    %v1898 = vsub.s32 32, %v1897
    %v1899 = vshll.u32 %v1890, %v1897
    %v1900 = vshrl.u32 %v1882, %v1898
    %v1901 = vor.u32 %v1899, %v1900
    %v1902 = vsub.s32 4294967266, %v1897
    %v1903 = vadd.s32 %v1902, 127
    %v1904 = vshll.u32 %v1903, 23
    %v1905 = vor.u32 4788187, %v1904
    %v1906 = vand.u32 2147483647, %v1905
    %v1908 = vcvt.s32.f32 %v1901
    %v1909 = vmul.f32 %v1908, %v1906
    %v1910 = vxor.u32 %v1909, 2147483648
    %v1911 = vsel %vm1828, %v1910, %v1909
    %v1912 = vsub.s32 4, %v1888
    %v1913 = vsel %vm1828, %v1912, %v1888
    %v1914 = vsel %vm1827, %v526, %v1911
    %v1915 = vsel %vm1827, 0, %v1913
    %v1916 = vcosq.f32.pop %v1914
    %v1917 = vsinq.f32.pop %v1914
    %vm1918 = vweird.f32 %v526
    %v1919 = vadd.s32 %v1915, 3
    %v1920 = vand.u32 %v1919, 3
    %vm1921 = vcmp.lt.s32.totalorder %v1920, 2
    %vm1922 = vcmp.eq.s32.totalorder %v1920, 0
    %v1923 = vxor.u32 %v1917, 2147483648
    %v1924 = vsel %vm1922, %v1916, %v1923
    %vm1925 = vcmp.eq.s32.totalorder %v1920, 2
    %v1926 = vxor.u32 %v1916, 2147483648
    %v1927 = vsel %vm1925, %v1926, %v1917
    %v1928 = vsel %vm1921, %v1924, %v1927
    %v1929 = vsel %vm1918, nan, %v1928
    %v1930 = vand.u32 2147483647, %v527
    %vm1931 = vcmp.le.f32.partialorder %v1930, 0.7853982
    %vm1932 = vcmp.lt.s32.totalorder %v527, 0
    %v1933 = vand.u32 %v527, 2139095040
    %v1934 = vshrl.u32 %v1933, 23
    %v1935 = vsub.s32 %v1934, 127
    %v1936 = vand.u32 2147483647, %v527
    %v1937 = vand.u32 %v1936, 8388607
    %v1938 = vor.u32 %v1937, 8388608
    %v1939 = vsub.s32 0, %v1938
    %v1940 = vadd.s32 %v1935, 1
    %vm1941 = vcmp.gt.s32.totalorder %v1940, 0
    %v1942 = vsel %vm1941, %v1940, 0
    %v1943 = vshrl.u32 %v1942, 5
    %v1944 = vand.u32 %v1942, 31
    %v1945 = vsub.s32 32, %v1944
    %v1946 = vshrl.u32 683565275, %v1945
    %v1947 = vshll.u32 683565275, %v1944
    %v1948 = vshrl.u32 2475754826, %v1945
    %v1949 = vor.u32 %v1947, %v1948
    %v1950 = vshll.u32 2475754826, %v1944
    %v1951 = vshrl.u32 2131351028, %v1945
    %v1952 = vor.u32 %v1950, %v1951
    %v1953 = vshll.u32 2131351028, %v1944
    %v1954 = vshrl.u32 2102212464, %v1945
    %v1955 = vor.u32 %v1953, %v1954
    %v1956 = vshll.u32 2102212464, %v1944
    %v1957 = vshrl.u32 920167782, %v1945
    %v1958 = vor.u32 %v1956, %v1957
    %v1959 = vshll.u32 920167782, %v1944
    %v1960 = vshrl.u32 1326507024, %v1945
    %v1961 = vor.u32 %v1959, %v1960
    %vm1962 = vcmp.lt.s32.totalorder %v1943, 1
    %vm1963 = vcmp.lt.s32.totalorder %v1943, 2
    %vm1964 = vcmp.lt.s32.totalorder %v1943, 3
    %vm1965 = vcmp.lt.s32.totalorder %v1943, 4
    %v1966 = vsel %vm1962, %v1946, %v1949
    %v1967 = vsel %vm1965, %v1955, 2102212464
    %v1968 = vsel %vm1964, %v1952, %v1967
    %v1969 = vsel %vm1963, %v1966, %v1968
    %v1970 = vsel %vm1962, %v1949, %v1952
    %v1971 = vsel %vm1965, %v1958, 920167782
    %v1972 = vsel %vm1964, %v1955, %v1971
    %v1973 = vsel %vm1963, %v1970, %v1972
    %v1974 = vsel %vm1962, %v1952, %v1955
    %v1975 = vsel %vm1965, %v1961, 1326507024
    %v1976 = vsel %vm1964, %v1958, %v1975
    %v1977 = vsel %vm1963, %v1974, %v1976
    %v1978 = vshll.u32 %v1938, 8
    %v1979 = vmul.u32.u64.compose %v1978, %v1977
    %v1980 = vextract.low.u32 %v1979
    %v1981 = vextract.high.u32 %v1979
    %v1982 = vmul.u32.u64.compose %v1978, %v1973
    %v1983 = vextract.low.u32 %v1982
    %v1984 = vextract.high.u32 %v1982
    %v1985 = vmul.u32 %v1978, %v1969
    %v1986 = vadd.s32 %v1981, %v1983
    %vm1987 = vc.u32 %v1981, %v1983
    %v1988 = vadd.s32 %v1984, 1
    %v1989 = vsel %vm1987, %v1988, %v1984
    %v1990 = vadd.s32 %v1985, %v1989
    %v1991 = vadd.s32 %v1990, 536870912
    %v1992 = vshrl.u32 %v1991, 30
    %v1993 = vshll.u32 %v1992, 30
    %v1994 = vsub.s32 %v1990, %v1993
    %vm1995 = vcmp.lt.s32.totalorder %v1994, 0
    %v1996 = vsub.s32 0, %v1994
    %v1997 = vsel %vm1995, %v1996, %v1994
    %v1998 = vclz %v1997
    %v1999 = vsub.s32 %v1998, 2
    %vm2000 = vcmp.gt.s32.totalorder 0, %v1999
    %v2001 = vsel %vm2000, 0, %v1999
    %v2002 = vsub.s32 32, %v2001
    %v2003 = vshll.u32 %v1994, %v2001
    %v2004 = vshrl.u32 %v1986, %v2002
    %v2005 = vor.u32 %v2003, %v2004
    %v2006 = vsub.s32 4294967266, %v2001
    %v2007 = vadd.s32 %v2006, 127
    %v2008 = vshll.u32 %v2007, 23
    %v2009 = vor.u32 4788187, %v2008
    %v2010 = vand.u32 2147483647, %v2009
    %v2012 = vcvt.s32.f32 %v2005
    %v2013 = vmul.f32 %v2012, %v2010
    %v2014 = vxor.u32 %v2013, 2147483648
    %v2015 = vsel %vm1932, %v2014, %v2013
    %v2016 = vsub.s32 4, %v1992
    %v2017 = vsel %vm1932, %v2016, %v1992
    %v2018 = vsel %vm1931, %v527, %v2015
    %v2019 = vsel %vm1931, 0, %v2017
    %v2020 = vcosq.f32.pop %v2018
    %v2021 = vsinq.f32.pop %v2018
    %vm2022 = vweird.f32 %v527
    %v2023 = vadd.s32 %v2019, 3
    %v2024 = vand.u32 %v2023, 3
    %vm2025 = vcmp.lt.s32.totalorder %v2024, 2
    %vm2026 = vcmp.eq.s32.totalorder %v2024, 0
    %v2027 = vxor.u32 %v2021, 2147483648
    %v2028 = vsel %vm2026, %v2020, %v2027
    %vm2029 = vcmp.eq.s32.totalorder %v2024, 2
    %v2030 = vxor.u32 %v2020, 2147483648
    %v2031 = vsel %vm2029, %v2030, %v2021
    %v2032 = vsel %vm2025, %v2028, %v2031
    %v2033 = vsel %vm2022, nan, %v2032
    %v2034 = vand.u32 2147483647, %v528
    %vm2035 = vcmp.le.f32.partialorder %v2034, 0.7853982
    %vm2036 = vcmp.lt.s32.totalorder %v528, 0
    %v2037 = vand.u32 %v528, 2139095040
    %v2038 = vshrl.u32 %v2037, 23
    %v2039 = vsub.s32 %v2038, 127
    %v2040 = vand.u32 2147483647, %v528
    %v2041 = vand.u32 %v2040, 8388607
    %v2042 = vor.u32 %v2041, 8388608
    %v2043 = vsub.s32 0, %v2042
    %v2044 = vadd.s32 %v2039, 1
    %vm2045 = vcmp.gt.s32.totalorder %v2044, 0
    %v2046 = vsel %vm2045, %v2044, 0
    %v2047 = vshrl.u32 %v2046, 5
    %v2048 = vand.u32 %v2046, 31
    %v2049 = vsub.s32 32, %v2048
    %v2050 = vshrl.u32 683565275, %v2049
    %v2051 = vshll.u32 683565275, %v2048
    %v2052 = vshrl.u32 2475754826, %v2049
    %v2053 = vor.u32 %v2051, %v2052
    %v2054 = vshll.u32 2475754826, %v2048
    %v2055 = vshrl.u32 2131351028, %v2049
    %v2056 = vor.u32 %v2054, %v2055
    %v2057 = vshll.u32 2131351028, %v2048
    %v2058 = vshrl.u32 2102212464, %v2049
    %v2059 = vor.u32 %v2057, %v2058
    %v2060 = vshll.u32 2102212464, %v2048
    %v2061 = vshrl.u32 920167782, %v2049
    %v2062 = vor.u32 %v2060, %v2061
    %v2063 = vshll.u32 920167782, %v2048
    %v2064 = vshrl.u32 1326507024, %v2049
    %v2065 = vor.u32 %v2063, %v2064
    %vm2066 = vcmp.lt.s32.totalorder %v2047, 1
    %vm2067 = vcmp.lt.s32.totalorder %v2047, 2
    %vm2068 = vcmp.lt.s32.totalorder %v2047, 3
    %vm2069 = vcmp.lt.s32.totalorder %v2047, 4
    %v2070 = vsel %vm2066, %v2050, %v2053
    %v2071 = vsel %vm2069, %v2059, 2102212464
    %v2072 = vsel %vm2068, %v2056, %v2071
    %v2073 = vsel %vm2067, %v2070, %v2072
    %v2074 = vsel %vm2066, %v2053, %v2056
    %v2075 = vsel %vm2069, %v2062, 920167782
    %v2076 = vsel %vm2068, %v2059, %v2075
    %v2077 = vsel %vm2067, %v2074, %v2076
    %v2078 = vsel %vm2066, %v2056, %v2059
    %v2079 = vsel %vm2069, %v2065, 1326507024
    %v2080 = vsel %vm2068, %v2062, %v2079
    %v2081 = vsel %vm2067, %v2078, %v2080
    %v2082 = vshll.u32 %v2042, 8
    %v2083 = vmul.u32.u64.compose %v2082, %v2081
    %v2084 = vextract.low.u32 %v2083
    %v2085 = vextract.high.u32 %v2083
    %v2086 = vmul.u32.u64.compose %v2082, %v2077
    %v2087 = vextract.low.u32 %v2086
    %v2088 = vextract.high.u32 %v2086
    %v2089 = vmul.u32 %v2082, %v2073
    %v2090 = vadd.s32 %v2085, %v2087
    %vm2091 = vc.u32 %v2085, %v2087
    %v2092 = vadd.s32 %v2088, 1
    %v2093 = vsel %vm2091, %v2092, %v2088
    %v2094 = vadd.s32 %v2089, %v2093
    %v2095 = vadd.s32 %v2094, 536870912
    %v2096 = vshrl.u32 %v2095, 30
    %v2097 = vshll.u32 %v2096, 30
    %v2098 = vsub.s32 %v2094, %v2097
    %vm2099 = vcmp.lt.s32.totalorder %v2098, 0
    %v2100 = vsub.s32 0, %v2098
    %v2101 = vsel %vm2099, %v2100, %v2098
    %v2102 = vclz %v2101
    %v2103 = vsub.s32 %v2102, 2
    %vm2104 = vcmp.gt.s32.totalorder 0, %v2103
    %v2105 = vsel %vm2104, 0, %v2103
    %v2106 = vsub.s32 32, %v2105
    %v2107 = vshll.u32 %v2098, %v2105
    %v2108 = vshrl.u32 %v2090, %v2106
    %v2109 = vor.u32 %v2107, %v2108
    %v2110 = vsub.s32 4294967266, %v2105
    %v2111 = vadd.s32 %v2110, 127
    %v2112 = vshll.u32 %v2111, 23
    %v2113 = vor.u32 4788187, %v2112
    %v2114 = vand.u32 2147483647, %v2113
    %v2116 = vcvt.s32.f32 %v2109
    %v2117 = vmul.f32 %v2116, %v2114
    %v2118 = vxor.u32 %v2117, 2147483648
    %v2119 = vsel %vm2036, %v2118, %v2117
    %v2120 = vsub.s32 4, %v2096
    %v2121 = vsel %vm2036, %v2120, %v2096
    %v2122 = vsel %vm2035, %v528, %v2119
    %v2123 = vsel %vm2035, 0, %v2121
    %v2124 = vcosq.f32.pop %v2122
    %v2125 = vsinq.f32.pop %v2122
    %vm2126 = vweird.f32 %v528
    %v2127 = vadd.s32 %v2123, 3
    %v2128 = vand.u32 %v2127, 3
    %vm2129 = vcmp.lt.s32.totalorder %v2128, 2
    %vm2130 = vcmp.eq.s32.totalorder %v2128, 0
    %v2131 = vxor.u32 %v2125, 2147483648
    %v2132 = vsel %vm2130, %v2124, %v2131
    %vm2133 = vcmp.eq.s32.totalorder %v2128, 2
    %v2134 = vxor.u32 %v2124, 2147483648
    %v2135 = vsel %vm2133, %v2134, %v2125
    %v2136 = vsel %vm2129, %v2132, %v2135
    %v2137 = vsel %vm2126, nan, %v2136
    %v2138 = vand.u32 2147483647, %v529
    %vm2139 = vcmp.le.f32.partialorder %v2138, 0.7853982
    %vm2140 = vcmp.lt.s32.totalorder %v529, 0
    %v2141 = vand.u32 %v529, 2139095040
    %v2142 = vshrl.u32 %v2141, 23
    %v2143 = vsub.s32 %v2142, 127
    %v2144 = vand.u32 2147483647, %v529
    %v2145 = vand.u32 %v2144, 8388607
    %v2146 = vor.u32 %v2145, 8388608
    %v2147 = vsub.s32 0, %v2146
    %v2148 = vadd.s32 %v2143, 1
    %vm2149 = vcmp.gt.s32.totalorder %v2148, 0
    %v2150 = vsel %vm2149, %v2148, 0
    %v2151 = vshrl.u32 %v2150, 5
    %v2152 = vand.u32 %v2150, 31
    %v2153 = vsub.s32 32, %v2152
    %v2154 = vshrl.u32 683565275, %v2153
    %v2155 = vshll.u32 683565275, %v2152
    %v2156 = vshrl.u32 2475754826, %v2153
    %v2157 = vor.u32 %v2155, %v2156
    %v2158 = vshll.u32 2475754826, %v2152
    %v2159 = vshrl.u32 2131351028, %v2153
    %v2160 = vor.u32 %v2158, %v2159
    %v2161 = vshll.u32 2131351028, %v2152
    %v2162 = vshrl.u32 2102212464, %v2153
    %v2163 = vor.u32 %v2161, %v2162
    %v2164 = vshll.u32 2102212464, %v2152
    %v2165 = vshrl.u32 920167782, %v2153
    %v2166 = vor.u32 %v2164, %v2165
    %v2167 = vshll.u32 920167782, %v2152
    %v2168 = vshrl.u32 1326507024, %v2153
    %v2169 = vor.u32 %v2167, %v2168
    %vm2170 = vcmp.lt.s32.totalorder %v2151, 1
    %vm2171 = vcmp.lt.s32.totalorder %v2151, 2
    %vm2172 = vcmp.lt.s32.totalorder %v2151, 3
    %vm2173 = vcmp.lt.s32.totalorder %v2151, 4
    %v2174 = vsel %vm2170, %v2154, %v2157
    %v2175 = vsel %vm2173, %v2163, 2102212464
    %v2176 = vsel %vm2172, %v2160, %v2175
    %v2177 = vsel %vm2171, %v2174, %v2176
    %v2178 = vsel %vm2170, %v2157, %v2160
    %v2179 = vsel %vm2173, %v2166, 920167782
    %v2180 = vsel %vm2172, %v2163, %v2179
    %v2181 = vsel %vm2171, %v2178, %v2180
    %v2182 = vsel %vm2170, %v2160, %v2163
    %v2183 = vsel %vm2173, %v2169, 1326507024
    %v2184 = vsel %vm2172, %v2166, %v2183
    %v2185 = vsel %vm2171, %v2182, %v2184
    %v2186 = vshll.u32 %v2146, 8
    %v2187 = vmul.u32.u64.compose %v2186, %v2185
    %v2188 = vextract.low.u32 %v2187
    %v2189 = vextract.high.u32 %v2187
    %v2190 = vmul.u32.u64.compose %v2186, %v2181
    %v2191 = vextract.low.u32 %v2190
    %v2192 = vextract.high.u32 %v2190
    %v2193 = vmul.u32 %v2186, %v2177
    %v2194 = vadd.s32 %v2189, %v2191
    %vm2195 = vc.u32 %v2189, %v2191
    %v2196 = vadd.s32 %v2192, 1
    %v2197 = vsel %vm2195, %v2196, %v2192
    %v2198 = vadd.s32 %v2193, %v2197
    %v2199 = vadd.s32 %v2198, 536870912
    %v2200 = vshrl.u32 %v2199, 30
    %v2201 = vshll.u32 %v2200, 30
    %v2202 = vsub.s32 %v2198, %v2201
    %vm2203 = vcmp.lt.s32.totalorder %v2202, 0
    %v2204 = vsub.s32 0, %v2202
    %v2205 = vsel %vm2203, %v2204, %v2202
    %v2206 = vclz %v2205
    %v2207 = vsub.s32 %v2206, 2
    %vm2208 = vcmp.gt.s32.totalorder 0, %v2207
    %v2209 = vsel %vm2208, 0, %v2207
    %v2210 = vsub.s32 32, %v2209
    %v2211 = vshll.u32 %v2202, %v2209
    %v2212 = vshrl.u32 %v2194, %v2210
    %v2213 = vor.u32 %v2211, %v2212
    %v2214 = vsub.s32 4294967266, %v2209
    %v2215 = vadd.s32 %v2214, 127
    %v2216 = vshll.u32 %v2215, 23
    %v2217 = vor.u32 4788187, %v2216
    %v2218 = vand.u32 2147483647, %v2217
    %v2220 = vcvt.s32.f32 %v2213
    %v2221 = vmul.f32 %v2220, %v2218
    %v2222 = vxor.u32 %v2221, 2147483648
    %v2223 = vsel %vm2140, %v2222, %v2221
    %v2224 = vsub.s32 4, %v2200
    %v2225 = vsel %vm2140, %v2224, %v2200
    %v2226 = vsel %vm2139, %v529, %v2223
    %v2227 = vsel %vm2139, 0, %v2225
    %v2228 = vcosq.f32.pop %v2226
    %v2229 = vsinq.f32.pop %v2226
    %vm2230 = vweird.f32 %v529
    %v2231 = vadd.s32 %v2227, 3
    %v2232 = vand.u32 %v2231, 3
    %vm2233 = vcmp.lt.s32.totalorder %v2232, 2
    %vm2234 = vcmp.eq.s32.totalorder %v2232, 0
    %v2235 = vxor.u32 %v2229, 2147483648
    %v2236 = vsel %vm2234, %v2228, %v2235
    %vm2237 = vcmp.eq.s32.totalorder %v2232, 2
    %v2238 = vxor.u32 %v2228, 2147483648
    %v2239 = vsel %vm2237, %v2238, %v2229
    %v2240 = vsel %vm2233, %v2236, %v2239
    %v2241 = vsel %vm2230, nan, %v2240
    %v2242 = vand.u32 2147483647, %v530
    %vm2243 = vcmp.le.f32.partialorder %v2242, 0.7853982
    %vm2244 = vcmp.lt.s32.totalorder %v530, 0
    %v2245 = vand.u32 %v530, 2139095040
    %v2246 = vshrl.u32 %v2245, 23
    %v2247 = vsub.s32 %v2246, 127
    %v2248 = vand.u32 2147483647, %v530
    %v2249 = vand.u32 %v2248, 8388607
    %v2250 = vor.u32 %v2249, 8388608
    %v2251 = vsub.s32 0, %v2250
    %v2252 = vadd.s32 %v2247, 1
    %vm2253 = vcmp.gt.s32.totalorder %v2252, 0
    %v2254 = vsel %vm2253, %v2252, 0
    %v2255 = vshrl.u32 %v2254, 5
    %v2256 = vand.u32 %v2254, 31
    %v2257 = vsub.s32 32, %v2256
    %v2258 = vshrl.u32 683565275, %v2257
    %v2259 = vshll.u32 683565275, %v2256
    %v2260 = vshrl.u32 2475754826, %v2257
    %v2261 = vor.u32 %v2259, %v2260
    %v2262 = vshll.u32 2475754826, %v2256
    %v2263 = vshrl.u32 2131351028, %v2257
    %v2264 = vor.u32 %v2262, %v2263
    %v2265 = vshll.u32 2131351028, %v2256
    %v2266 = vshrl.u32 2102212464, %v2257
    %v2267 = vor.u32 %v2265, %v2266
    %v2268 = vshll.u32 2102212464, %v2256
    %v2269 = vshrl.u32 920167782, %v2257
    %v2270 = vor.u32 %v2268, %v2269
    %v2271 = vshll.u32 920167782, %v2256
    %v2272 = vshrl.u32 1326507024, %v2257
    %v2273 = vor.u32 %v2271, %v2272
    %vm2274 = vcmp.lt.s32.totalorder %v2255, 1
    %vm2275 = vcmp.lt.s32.totalorder %v2255, 2
    %vm2276 = vcmp.lt.s32.totalorder %v2255, 3
    %vm2277 = vcmp.lt.s32.totalorder %v2255, 4
    %v2278 = vsel %vm2274, %v2258, %v2261
    %v2279 = vsel %vm2277, %v2267, 2102212464
    %v2280 = vsel %vm2276, %v2264, %v2279
    %v2281 = vsel %vm2275, %v2278, %v2280
    %v2282 = vsel %vm2274, %v2261, %v2264
    %v2283 = vsel %vm2277, %v2270, 920167782
    %v2284 = vsel %vm2276, %v2267, %v2283
    %v2285 = vsel %vm2275, %v2282, %v2284
    %v2286 = vsel %vm2274, %v2264, %v2267
    %v2287 = vsel %vm2277, %v2273, 1326507024
    %v2288 = vsel %vm2276, %v2270, %v2287
    %v2289 = vsel %vm2275, %v2286, %v2288
    %v2290 = vshll.u32 %v2250, 8
    %v2291 = vmul.u32.u64.compose %v2290, %v2289
    %v2292 = vextract.low.u32 %v2291
    %v2293 = vextract.high.u32 %v2291
    %v2294 = vmul.u32.u64.compose %v2290, %v2285
    %v2295 = vextract.low.u32 %v2294
    %v2296 = vextract.high.u32 %v2294
    %v2297 = vmul.u32 %v2290, %v2281
    %v2298 = vadd.s32 %v2293, %v2295
    %vm2299 = vc.u32 %v2293, %v2295
    %v2300 = vadd.s32 %v2296, 1
    %v2301 = vsel %vm2299, %v2300, %v2296
    %v2302 = vadd.s32 %v2297, %v2301
    %v2303 = vadd.s32 %v2302, 536870912
    %v2304 = vshrl.u32 %v2303, 30
    %v2305 = vshll.u32 %v2304, 30
    %v2306 = vsub.s32 %v2302, %v2305
    %vm2307 = vcmp.lt.s32.totalorder %v2306, 0
    %v2308 = vsub.s32 0, %v2306
    %v2309 = vsel %vm2307, %v2308, %v2306
    %v2310 = vclz %v2309
    %v2311 = vsub.s32 %v2310, 2
    %vm2312 = vcmp.gt.s32.totalorder 0, %v2311
    %v2313 = vsel %vm2312, 0, %v2311
    %v2314 = vsub.s32 32, %v2313
    %v2315 = vshll.u32 %v2306, %v2313
    %v2316 = vshrl.u32 %v2298, %v2314
    %v2317 = vor.u32 %v2315, %v2316
    %v2318 = vsub.s32 4294967266, %v2313
    %v2319 = vadd.s32 %v2318, 127
    %v2320 = vshll.u32 %v2319, 23
    %v2321 = vor.u32 4788187, %v2320
    %v2322 = vand.u32 2147483647, %v2321
    %v2324 = vcvt.s32.f32 %v2317
    %v2325 = vmul.f32 %v2324, %v2322
    %v2326 = vxor.u32 %v2325, 2147483648
    %v2327 = vsel %vm2244, %v2326, %v2325
    %v2328 = vsub.s32 4, %v2304
    %v2329 = vsel %vm2244, %v2328, %v2304
    %v2330 = vsel %vm2243, %v530, %v2327
    %v2331 = vsel %vm2243, 0, %v2329
    %v2332 = vcosq.f32.pop %v2330
    %v2333 = vsinq.f32.pop %v2330
    %vm2334 = vweird.f32 %v530
    %v2335 = vadd.s32 %v2331, 3
    %v2336 = vand.u32 %v2335, 3
    %vm2337 = vcmp.lt.s32.totalorder %v2336, 2
    %vm2338 = vcmp.eq.s32.totalorder %v2336, 0
    %v2339 = vxor.u32 %v2333, 2147483648
    %v2340 = vsel %vm2338, %v2332, %v2339
    %vm2341 = vcmp.eq.s32.totalorder %v2336, 2
    %v2342 = vxor.u32 %v2332, 2147483648
    %v2343 = vsel %vm2341, %v2342, %v2333
    %v2344 = vsel %vm2337, %v2340, %v2343
    %v2345 = vsel %vm2334, nan, %v2344
    %v2346 = vand.u32 2147483647, %v531
    %vm2347 = vcmp.le.f32.partialorder %v2346, 0.7853982
    %vm2348 = vcmp.lt.s32.totalorder %v531, 0
    %v2349 = vand.u32 %v531, 2139095040
    %v2350 = vshrl.u32 %v2349, 23
    %v2351 = vsub.s32 %v2350, 127
    %v2352 = vand.u32 2147483647, %v531
    %v2353 = vand.u32 %v2352, 8388607
    %v2354 = vor.u32 %v2353, 8388608
    %v2355 = vsub.s32 0, %v2354
    %v2356 = vadd.s32 %v2351, 1
    %vm2357 = vcmp.gt.s32.totalorder %v2356, 0
    %v2358 = vsel %vm2357, %v2356, 0
    %v2359 = vshrl.u32 %v2358, 5
    %v2360 = vand.u32 %v2358, 31
    %v2361 = vsub.s32 32, %v2360
    %v2362 = vshrl.u32 683565275, %v2361
    %v2363 = vshll.u32 683565275, %v2360
    %v2364 = vshrl.u32 2475754826, %v2361
    %v2365 = vor.u32 %v2363, %v2364
    %v2366 = vshll.u32 2475754826, %v2360
    %v2367 = vshrl.u32 2131351028, %v2361
    %v2368 = vor.u32 %v2366, %v2367
    %v2369 = vshll.u32 2131351028, %v2360
    %v2370 = vshrl.u32 2102212464, %v2361
    %v2371 = vor.u32 %v2369, %v2370
    %v2372 = vshll.u32 2102212464, %v2360
    %v2373 = vshrl.u32 920167782, %v2361
    %v2374 = vor.u32 %v2372, %v2373
    %v2375 = vshll.u32 920167782, %v2360
    %v2376 = vshrl.u32 1326507024, %v2361
    %v2377 = vor.u32 %v2375, %v2376
    %vm2378 = vcmp.lt.s32.totalorder %v2359, 1
    %vm2379 = vcmp.lt.s32.totalorder %v2359, 2
    %vm2380 = vcmp.lt.s32.totalorder %v2359, 3
    %vm2381 = vcmp.lt.s32.totalorder %v2359, 4
    %v2382 = vsel %vm2378, %v2362, %v2365
    %v2383 = vsel %vm2381, %v2371, 2102212464
    %v2384 = vsel %vm2380, %v2368, %v2383
    %v2385 = vsel %vm2379, %v2382, %v2384
    %v2386 = vsel %vm2378, %v2365, %v2368
    %v2387 = vsel %vm2381, %v2374, 920167782
    %v2388 = vsel %vm2380, %v2371, %v2387
    %v2389 = vsel %vm2379, %v2386, %v2388
    %v2390 = vsel %vm2378, %v2368, %v2371
    %v2391 = vsel %vm2381, %v2377, 1326507024
    %v2392 = vsel %vm2380, %v2374, %v2391
    %v2393 = vsel %vm2379, %v2390, %v2392
    %v2394 = vshll.u32 %v2354, 8
    %v2395 = vmul.u32.u64.compose %v2394, %v2393
    %v2396 = vextract.low.u32 %v2395
    %v2397 = vextract.high.u32 %v2395
    %v2398 = vmul.u32.u64.compose %v2394, %v2389
    %v2399 = vextract.low.u32 %v2398
    %v2400 = vextract.high.u32 %v2398
    %v2401 = vmul.u32 %v2394, %v2385
    %v2402 = vadd.s32 %v2397, %v2399
    %vm2403 = vc.u32 %v2397, %v2399
    %v2404 = vadd.s32 %v2400, 1
    %v2405 = vsel %vm2403, %v2404, %v2400
    %v2406 = vadd.s32 %v2401, %v2405
    %v2407 = vadd.s32 %v2406, 536870912
    %v2408 = vshrl.u32 %v2407, 30
    %v2409 = vshll.u32 %v2408, 30
    %v2410 = vsub.s32 %v2406, %v2409
    %vm2411 = vcmp.lt.s32.totalorder %v2410, 0
    %v2412 = vsub.s32 0, %v2410
    %v2413 = vsel %vm2411, %v2412, %v2410
    %v2414 = vclz %v2413
    %v2415 = vsub.s32 %v2414, 2
    %vm2416 = vcmp.gt.s32.totalorder 0, %v2415
    %v2417 = vsel %vm2416, 0, %v2415
    %v2418 = vsub.s32 32, %v2417
    %v2419 = vshll.u32 %v2410, %v2417
    %v2420 = vshrl.u32 %v2402, %v2418
    %v2421 = vor.u32 %v2419, %v2420
    %v2422 = vsub.s32 4294967266, %v2417
    %v2423 = vadd.s32 %v2422, 127
    %v2424 = vshll.u32 %v2423, 23
    %v2425 = vor.u32 4788187, %v2424
    %v2426 = vand.u32 2147483647, %v2425
    %v2428 = vcvt.s32.f32 %v2421
    %v2429 = vmul.f32 %v2428, %v2426
    %v2430 = vxor.u32 %v2429, 2147483648
    %v2431 = vsel %vm2348, %v2430, %v2429
    %v2432 = vsub.s32 4, %v2408
    %v2433 = vsel %vm2348, %v2432, %v2408
    %v2434 = vsel %vm2347, %v531, %v2431
    %v2435 = vsel %vm2347, 0, %v2433
    %v2436 = vcosq.f32.pop %v2434
    %v2437 = vsinq.f32.pop %v2434
    %vm2438 = vweird.f32 %v531
    %v2439 = vadd.s32 %v2435, 3
    %v2440 = vand.u32 %v2439, 3
    %vm2441 = vcmp.lt.s32.totalorder %v2440, 2
    %vm2442 = vcmp.eq.s32.totalorder %v2440, 0
    %v2443 = vxor.u32 %v2437, 2147483648
    %v2444 = vsel %vm2442, %v2436, %v2443
    %vm2445 = vcmp.eq.s32.totalorder %v2440, 2
    %v2446 = vxor.u32 %v2436, 2147483648
    %v2447 = vsel %vm2445, %v2446, %v2437
    %v2448 = vsel %vm2441, %v2444, %v2447
    %v2449 = vsel %vm2438, nan, %v2448
    %v2450 = vand.u32 2147483647, %v532
    %vm2451 = vcmp.le.f32.partialorder %v2450, 0.7853982
    %vm2452 = vcmp.lt.s32.totalorder %v532, 0
    %v2453 = vand.u32 %v532, 2139095040
    %v2454 = vshrl.u32 %v2453, 23
    %v2455 = vsub.s32 %v2454, 127
    %v2456 = vand.u32 2147483647, %v532
    %v2457 = vand.u32 %v2456, 8388607
    %v2458 = vor.u32 %v2457, 8388608
    %v2459 = vsub.s32 0, %v2458
    %v2460 = vadd.s32 %v2455, 1
    %vm2461 = vcmp.gt.s32.totalorder %v2460, 0
    %v2462 = vsel %vm2461, %v2460, 0
    %v2463 = vshrl.u32 %v2462, 5
    %v2464 = vand.u32 %v2462, 31
    %v2465 = vsub.s32 32, %v2464
    %v2466 = vshrl.u32 683565275, %v2465
    %v2467 = vshll.u32 683565275, %v2464
    %v2468 = vshrl.u32 2475754826, %v2465
    %v2469 = vor.u32 %v2467, %v2468
    %v2470 = vshll.u32 2475754826, %v2464
    %v2471 = vshrl.u32 2131351028, %v2465
    %v2472 = vor.u32 %v2470, %v2471
    %v2473 = vshll.u32 2131351028, %v2464
    %v2474 = vshrl.u32 2102212464, %v2465
    %v2475 = vor.u32 %v2473, %v2474
    %v2476 = vshll.u32 2102212464, %v2464
    %v2477 = vshrl.u32 920167782, %v2465
    %v2478 = vor.u32 %v2476, %v2477
    %v2479 = vshll.u32 920167782, %v2464
    %v2480 = vshrl.u32 1326507024, %v2465
    %v2481 = vor.u32 %v2479, %v2480
    %vm2482 = vcmp.lt.s32.totalorder %v2463, 1
    %vm2483 = vcmp.lt.s32.totalorder %v2463, 2
    %vm2484 = vcmp.lt.s32.totalorder %v2463, 3
    %vm2485 = vcmp.lt.s32.totalorder %v2463, 4
    %v2486 = vsel %vm2482, %v2466, %v2469
    %v2487 = vsel %vm2485, %v2475, 2102212464
    %v2488 = vsel %vm2484, %v2472, %v2487
    %v2489 = vsel %vm2483, %v2486, %v2488
    %v2490 = vsel %vm2482, %v2469, %v2472
    %v2491 = vsel %vm2485, %v2478, 920167782
    %v2492 = vsel %vm2484, %v2475, %v2491
    %v2493 = vsel %vm2483, %v2490, %v2492
    %v2494 = vsel %vm2482, %v2472, %v2475
    %v2495 = vsel %vm2485, %v2481, 1326507024
    %v2496 = vsel %vm2484, %v2478, %v2495
    %v2497 = vsel %vm2483, %v2494, %v2496
    %v2498 = vshll.u32 %v2458, 8
    %v2499 = vmul.u32.u64.compose %v2498, %v2497
    %v2500 = vextract.low.u32 %v2499
    %v2501 = vextract.high.u32 %v2499
    %v2502 = vmul.u32.u64.compose %v2498, %v2493
    %v2503 = vextract.low.u32 %v2502
    %v2504 = vextract.high.u32 %v2502
    %v2505 = vmul.u32 %v2498, %v2489
    %v2506 = vadd.s32 %v2501, %v2503
    %vm2507 = vc.u32 %v2501, %v2503
    %v2508 = vadd.s32 %v2504, 1
    %v2509 = vsel %vm2507, %v2508, %v2504
    %v2510 = vadd.s32 %v2505, %v2509
    %v2511 = vadd.s32 %v2510, 536870912
    %v2512 = vshrl.u32 %v2511, 30
    %v2513 = vshll.u32 %v2512, 30
    %v2514 = vsub.s32 %v2510, %v2513
    %vm2515 = vcmp.lt.s32.totalorder %v2514, 0
    %v2516 = vsub.s32 0, %v2514
    %v2517 = vsel %vm2515, %v2516, %v2514
    %v2518 = vclz %v2517
    %v2519 = vsub.s32 %v2518, 2
    %vm2520 = vcmp.gt.s32.totalorder 0, %v2519
    %v2521 = vsel %vm2520, 0, %v2519
    %v2522 = vsub.s32 32, %v2521
    %v2523 = vshll.u32 %v2514, %v2521
    %v2524 = vshrl.u32 %v2506, %v2522
    %v2525 = vor.u32 %v2523, %v2524
    %v2526 = vsub.s32 4294967266, %v2521
    %v2527 = vadd.s32 %v2526, 127
    %v2528 = vshll.u32 %v2527, 23
    %v2529 = vor.u32 4788187, %v2528
    %v2530 = vand.u32 2147483647, %v2529
    %v2532 = vcvt.s32.f32 %v2525
    %v2533 = vmul.f32 %v2532, %v2530
    %v2534 = vxor.u32 %v2533, 2147483648
    %v2535 = vsel %vm2452, %v2534, %v2533
    %v2536 = vsub.s32 4, %v2512
    %v2537 = vsel %vm2452, %v2536, %v2512
    %v2538 = vsel %vm2451, %v532, %v2535
    %v2539 = vsel %vm2451, 0, %v2537
    %v2540 = vcosq.f32.pop %v2538
    %v2541 = vsinq.f32.pop %v2538
    %vm2542 = vweird.f32 %v532
    %v2543 = vadd.s32 %v2539, 3
    %v2544 = vand.u32 %v2543, 3
    %vm2545 = vcmp.lt.s32.totalorder %v2544, 2
    %vm2546 = vcmp.eq.s32.totalorder %v2544, 0
    %v2547 = vxor.u32 %v2541, 2147483648
    %v2548 = vsel %vm2546, %v2540, %v2547
    %vm2549 = vcmp.eq.s32.totalorder %v2544, 2
    %v2550 = vxor.u32 %v2540, 2147483648
    %v2551 = vsel %vm2549, %v2550, %v2541
    %v2552 = vsel %vm2545, %v2548, %v2551
    %v2553 = vsel %vm2542, nan, %v2552
    %v2554 = vand.u32 2147483647, %v533
    %vm2555 = vcmp.le.f32.partialorder %v2554, 0.7853982
    %vm2556 = vcmp.lt.s32.totalorder %v533, 0
    %v2557 = vand.u32 %v533, 2139095040
    %v2558 = vshrl.u32 %v2557, 23
    %v2559 = vsub.s32 %v2558, 127
    %v2560 = vand.u32 2147483647, %v533
    %v2561 = vand.u32 %v2560, 8388607
    %v2562 = vor.u32 %v2561, 8388608
    %v2563 = vsub.s32 0, %v2562
    %v2564 = vadd.s32 %v2559, 1
    %vm2565 = vcmp.gt.s32.totalorder %v2564, 0
    %v2566 = vsel %vm2565, %v2564, 0
    %v2567 = vshrl.u32 %v2566, 5
    %v2568 = vand.u32 %v2566, 31
    %v2569 = vsub.s32 32, %v2568
    %v2570 = vshrl.u32 683565275, %v2569
    %v2571 = vshll.u32 683565275, %v2568
    %v2572 = vshrl.u32 2475754826, %v2569
    %v2573 = vor.u32 %v2571, %v2572
    %v2574 = vshll.u32 2475754826, %v2568
    %v2575 = vshrl.u32 2131351028, %v2569
    %v2576 = vor.u32 %v2574, %v2575
    %v2577 = vshll.u32 2131351028, %v2568
    %v2578 = vshrl.u32 2102212464, %v2569
    %v2579 = vor.u32 %v2577, %v2578
    %v2580 = vshll.u32 2102212464, %v2568
    %v2581 = vshrl.u32 920167782, %v2569
    %v2582 = vor.u32 %v2580, %v2581
    %v2583 = vshll.u32 920167782, %v2568
    %v2584 = vshrl.u32 1326507024, %v2569
    %v2585 = vor.u32 %v2583, %v2584
    %vm2586 = vcmp.lt.s32.totalorder %v2567, 1
    %vm2587 = vcmp.lt.s32.totalorder %v2567, 2
    %vm2588 = vcmp.lt.s32.totalorder %v2567, 3
    %vm2589 = vcmp.lt.s32.totalorder %v2567, 4
    %v2590 = vsel %vm2586, %v2570, %v2573
    %v2591 = vsel %vm2589, %v2579, 2102212464
    %v2592 = vsel %vm2588, %v2576, %v2591
    %v2593 = vsel %vm2587, %v2590, %v2592
    %v2594 = vsel %vm2586, %v2573, %v2576
    %v2595 = vsel %vm2589, %v2582, 920167782
    %v2596 = vsel %vm2588, %v2579, %v2595
    %v2597 = vsel %vm2587, %v2594, %v2596
    %v2598 = vsel %vm2586, %v2576, %v2579
    %v2599 = vsel %vm2589, %v2585, 1326507024
    %v2600 = vsel %vm2588, %v2582, %v2599
    %v2601 = vsel %vm2587, %v2598, %v2600
    %v2602 = vshll.u32 %v2562, 8
    %v2603 = vmul.u32.u64.compose %v2602, %v2601
    %v2604 = vextract.low.u32 %v2603
    %v2605 = vextract.high.u32 %v2603
    %v2606 = vmul.u32.u64.compose %v2602, %v2597
    %v2607 = vextract.low.u32 %v2606
    %v2608 = vextract.high.u32 %v2606
    %v2609 = vmul.u32 %v2602, %v2593
    %v2610 = vadd.s32 %v2605, %v2607
    %vm2611 = vc.u32 %v2605, %v2607
    %v2612 = vadd.s32 %v2608, 1
    %v2613 = vsel %vm2611, %v2612, %v2608
    %v2614 = vadd.s32 %v2609, %v2613
    %v2615 = vadd.s32 %v2614, 536870912
    %v2616 = vshrl.u32 %v2615, 30
    %v2617 = vshll.u32 %v2616, 30
    %v2618 = vsub.s32 %v2614, %v2617
    %vm2619 = vcmp.lt.s32.totalorder %v2618, 0
    %v2620 = vsub.s32 0, %v2618
    %v2621 = vsel %vm2619, %v2620, %v2618
    %v2622 = vclz %v2621
    %v2623 = vsub.s32 %v2622, 2
    %vm2624 = vcmp.gt.s32.totalorder 0, %v2623
    %v2625 = vsel %vm2624, 0, %v2623
    %v2626 = vsub.s32 32, %v2625
    %v2627 = vshll.u32 %v2618, %v2625
    %v2628 = vshrl.u32 %v2610, %v2626
    %v2629 = vor.u32 %v2627, %v2628
    %v2630 = vsub.s32 4294967266, %v2625
    %v2631 = vadd.s32 %v2630, 127
    %v2632 = vshll.u32 %v2631, 23
    %v2633 = vor.u32 4788187, %v2632
    %v2634 = vand.u32 2147483647, %v2633
    %v2636 = vcvt.s32.f32 %v2629
    %v2637 = vmul.f32 %v2636, %v2634
    %v2638 = vxor.u32 %v2637, 2147483648
    %v2639 = vsel %vm2556, %v2638, %v2637
    %v2640 = vsub.s32 4, %v2616
    %v2641 = vsel %vm2556, %v2640, %v2616
    %v2642 = vsel %vm2555, %v533, %v2639
    %v2643 = vsel %vm2555, 0, %v2641
    %v2644 = vcosq.f32.pop %v2642
    %v2645 = vsinq.f32.pop %v2642
    %vm2646 = vweird.f32 %v533
    %v2647 = vadd.s32 %v2643, 3
    %v2648 = vand.u32 %v2647, 3
    %vm2649 = vcmp.lt.s32.totalorder %v2648, 2
    %vm2650 = vcmp.eq.s32.totalorder %v2648, 0
    %v2651 = vxor.u32 %v2645, 2147483648
    %v2652 = vsel %vm2650, %v2644, %v2651
    %vm2653 = vcmp.eq.s32.totalorder %v2648, 2
    %v2654 = vxor.u32 %v2644, 2147483648
    %v2655 = vsel %vm2653, %v2654, %v2645
    %v2656 = vsel %vm2649, %v2652, %v2655
    %v2657 = vsel %vm2646, nan, %v2656
    %v2658 = vand.u32 2147483647, %v534
    %vm2659 = vcmp.le.f32.partialorder %v2658, 0.7853982
    %vm2660 = vcmp.lt.s32.totalorder %v534, 0
    %v2661 = vand.u32 %v534, 2139095040
    %v2662 = vshrl.u32 %v2661, 23
    %v2663 = vsub.s32 %v2662, 127
    %v2664 = vand.u32 2147483647, %v534
    %v2665 = vand.u32 %v2664, 8388607
    %v2666 = vor.u32 %v2665, 8388608
    %v2667 = vsub.s32 0, %v2666
    %v2668 = vadd.s32 %v2663, 1
    %vm2669 = vcmp.gt.s32.totalorder %v2668, 0
    %v2670 = vsel %vm2669, %v2668, 0
    %v2671 = vshrl.u32 %v2670, 5
    %v2672 = vand.u32 %v2670, 31
    %v2673 = vsub.s32 32, %v2672
    %v2674 = vshrl.u32 683565275, %v2673
    %v2675 = vshll.u32 683565275, %v2672
    %v2676 = vshrl.u32 2475754826, %v2673
    %v2677 = vor.u32 %v2675, %v2676
    %v2678 = vshll.u32 2475754826, %v2672
    %v2679 = vshrl.u32 2131351028, %v2673
    %v2680 = vor.u32 %v2678, %v2679
    %v2681 = vshll.u32 2131351028, %v2672
    %v2682 = vshrl.u32 2102212464, %v2673
    %v2683 = vor.u32 %v2681, %v2682
    %v2684 = vshll.u32 2102212464, %v2672
    %v2685 = vshrl.u32 920167782, %v2673
    %v2686 = vor.u32 %v2684, %v2685
    %v2687 = vshll.u32 920167782, %v2672
    %v2688 = vshrl.u32 1326507024, %v2673
    %v2689 = vor.u32 %v2687, %v2688
    %vm2690 = vcmp.lt.s32.totalorder %v2671, 1
    %vm2691 = vcmp.lt.s32.totalorder %v2671, 2
    %vm2692 = vcmp.lt.s32.totalorder %v2671, 3
    %vm2693 = vcmp.lt.s32.totalorder %v2671, 4
    %v2694 = vsel %vm2690, %v2674, %v2677
    %v2695 = vsel %vm2693, %v2683, 2102212464
    %v2696 = vsel %vm2692, %v2680, %v2695
    %v2697 = vsel %vm2691, %v2694, %v2696
    %v2698 = vsel %vm2690, %v2677, %v2680
    %v2699 = vsel %vm2693, %v2686, 920167782
    %v2700 = vsel %vm2692, %v2683, %v2699
    %v2701 = vsel %vm2691, %v2698, %v2700
    %v2702 = vsel %vm2690, %v2680, %v2683
    %v2703 = vsel %vm2693, %v2689, 1326507024
    %v2704 = vsel %vm2692, %v2686, %v2703
    %v2705 = vsel %vm2691, %v2702, %v2704
    %v2706 = vshll.u32 %v2666, 8
    %v2707 = vmul.u32.u64.compose %v2706, %v2705
    %v2708 = vextract.low.u32 %v2707
    %v2709 = vextract.high.u32 %v2707
    %v2710 = vmul.u32.u64.compose %v2706, %v2701
    %v2711 = vextract.low.u32 %v2710
    %v2712 = vextract.high.u32 %v2710
    %v2713 = vmul.u32 %v2706, %v2697
    %v2714 = vadd.s32 %v2709, %v2711
    %vm2715 = vc.u32 %v2709, %v2711
    %v2716 = vadd.s32 %v2712, 1
    %v2717 = vsel %vm2715, %v2716, %v2712
    %v2718 = vadd.s32 %v2713, %v2717
    %v2719 = vadd.s32 %v2718, 536870912
    %v2720 = vshrl.u32 %v2719, 30
    %v2721 = vshll.u32 %v2720, 30
    %v2722 = vsub.s32 %v2718, %v2721
    %vm2723 = vcmp.lt.s32.totalorder %v2722, 0
    %v2724 = vsub.s32 0, %v2722
    %v2725 = vsel %vm2723, %v2724, %v2722
    %v2726 = vclz %v2725
    %v2727 = vsub.s32 %v2726, 2
    %vm2728 = vcmp.gt.s32.totalorder 0, %v2727
    %v2729 = vsel %vm2728, 0, %v2727
    %v2730 = vsub.s32 32, %v2729
    %v2731 = vshll.u32 %v2722, %v2729
    %v2732 = vshrl.u32 %v2714, %v2730
    %v2733 = vor.u32 %v2731, %v2732
    %v2734 = vsub.s32 4294967266, %v2729
    %v2735 = vadd.s32 %v2734, 127
    %v2736 = vshll.u32 %v2735, 23
    %v2737 = vor.u32 4788187, %v2736
    %v2738 = vand.u32 2147483647, %v2737
    %v2740 = vcvt.s32.f32 %v2733
    %v2741 = vmul.f32 %v2740, %v2738
    %v2742 = vxor.u32 %v2741, 2147483648
    %v2743 = vsel %vm2660, %v2742, %v2741
    %v2744 = vsub.s32 4, %v2720
    %v2745 = vsel %vm2660, %v2744, %v2720
    %v2746 = vsel %vm2659, %v534, %v2743
    %v2747 = vsel %vm2659, 0, %v2745
    %v2748 = vcosq.f32.pop %v2746
    %v2749 = vsinq.f32.pop %v2746
    %vm2750 = vweird.f32 %v534
    %v2751 = vadd.s32 %v2747, 3
    %v2752 = vand.u32 %v2751, 3
    %vm2753 = vcmp.lt.s32.totalorder %v2752, 2
    %vm2754 = vcmp.eq.s32.totalorder %v2752, 0
    %v2755 = vxor.u32 %v2749, 2147483648
    %v2756 = vsel %vm2754, %v2748, %v2755
    %vm2757 = vcmp.eq.s32.totalorder %v2752, 2
    %v2758 = vxor.u32 %v2748, 2147483648
    %v2759 = vsel %vm2757, %v2758, %v2749
    %v2760 = vsel %vm2753, %v2756, %v2759
    %v2761 = vsel %vm2750, nan, %v2760
    %v2762 = vand.u32 2147483647, %v535
    %vm2763 = vcmp.le.f32.partialorder %v2762, 0.7853982
    %vm2764 = vcmp.lt.s32.totalorder %v535, 0
    %v2765 = vand.u32 %v535, 2139095040
    %v2766 = vshrl.u32 %v2765, 23
    %v2767 = vsub.s32 %v2766, 127
    %v2768 = vand.u32 2147483647, %v535
    %v2769 = vand.u32 %v2768, 8388607
    %v2770 = vor.u32 %v2769, 8388608
    %v2771 = vsub.s32 0, %v2770
    %v2772 = vadd.s32 %v2767, 1
    %vm2773 = vcmp.gt.s32.totalorder %v2772, 0
    %v2774 = vsel %vm2773, %v2772, 0
    %v2775 = vshrl.u32 %v2774, 5
    %v2776 = vand.u32 %v2774, 31
    %v2777 = vsub.s32 32, %v2776
    %v2778 = vshrl.u32 683565275, %v2777
    %v2779 = vshll.u32 683565275, %v2776
    %v2780 = vshrl.u32 2475754826, %v2777
    %v2781 = vor.u32 %v2779, %v2780
    %v2782 = vshll.u32 2475754826, %v2776
    %v2783 = vshrl.u32 2131351028, %v2777
    %v2784 = vor.u32 %v2782, %v2783
    %v2785 = vshll.u32 2131351028, %v2776
    %v2786 = vshrl.u32 2102212464, %v2777
    %v2787 = vor.u32 %v2785, %v2786
    %v2788 = vshll.u32 2102212464, %v2776
    %v2789 = vshrl.u32 920167782, %v2777
    %v2790 = vor.u32 %v2788, %v2789
    %v2791 = vshll.u32 920167782, %v2776
    %v2792 = vshrl.u32 1326507024, %v2777
    %v2793 = vor.u32 %v2791, %v2792
    %vm2794 = vcmp.lt.s32.totalorder %v2775, 1
    %vm2795 = vcmp.lt.s32.totalorder %v2775, 2
    %vm2796 = vcmp.lt.s32.totalorder %v2775, 3
    %vm2797 = vcmp.lt.s32.totalorder %v2775, 4
    %v2798 = vsel %vm2794, %v2778, %v2781
    %v2799 = vsel %vm2797, %v2787, 2102212464
    %v2800 = vsel %vm2796, %v2784, %v2799
    %v2801 = vsel %vm2795, %v2798, %v2800
    %v2802 = vsel %vm2794, %v2781, %v2784
    %v2803 = vsel %vm2797, %v2790, 920167782
    %v2804 = vsel %vm2796, %v2787, %v2803
    %v2805 = vsel %vm2795, %v2802, %v2804
    %v2806 = vsel %vm2794, %v2784, %v2787
    %v2807 = vsel %vm2797, %v2793, 1326507024
    %v2808 = vsel %vm2796, %v2790, %v2807
    %v2809 = vsel %vm2795, %v2806, %v2808
    %v2810 = vshll.u32 %v2770, 8
    %v2811 = vmul.u32.u64.compose %v2810, %v2809
    %v2812 = vextract.low.u32 %v2811
    %v2813 = vextract.high.u32 %v2811
    %v2814 = vmul.u32.u64.compose %v2810, %v2805
    %v2815 = vextract.low.u32 %v2814
    %v2816 = vextract.high.u32 %v2814
    %v2817 = vmul.u32 %v2810, %v2801
    %v2818 = vadd.s32 %v2813, %v2815
    %vm2819 = vc.u32 %v2813, %v2815
    %v2820 = vadd.s32 %v2816, 1
    %v2821 = vsel %vm2819, %v2820, %v2816
    %v2822 = vadd.s32 %v2817, %v2821
    %v2823 = vadd.s32 %v2822, 536870912
    %v2824 = vshrl.u32 %v2823, 30
    %v2825 = vshll.u32 %v2824, 30
    %v2826 = vsub.s32 %v2822, %v2825
    %vm2827 = vcmp.lt.s32.totalorder %v2826, 0
    %v2828 = vsub.s32 0, %v2826
    %v2829 = vsel %vm2827, %v2828, %v2826
    %v2830 = vclz %v2829
    %v2831 = vsub.s32 %v2830, 2
    %vm2832 = vcmp.gt.s32.totalorder 0, %v2831
    %v2833 = vsel %vm2832, 0, %v2831
    %v2834 = vsub.s32 32, %v2833
    %v2835 = vshll.u32 %v2826, %v2833
    %v2836 = vshrl.u32 %v2818, %v2834
    %v2837 = vor.u32 %v2835, %v2836
    %v2838 = vsub.s32 4294967266, %v2833
    %v2839 = vadd.s32 %v2838, 127
    %v2840 = vshll.u32 %v2839, 23
    %v2841 = vor.u32 4788187, %v2840
    %v2842 = vand.u32 2147483647, %v2841
    %v2844 = vcvt.s32.f32 %v2837
    %v2845 = vmul.f32 %v2844, %v2842
    %v2846 = vxor.u32 %v2845, 2147483648
    %v2847 = vsel %vm2764, %v2846, %v2845
    %v2848 = vsub.s32 4, %v2824
    %v2849 = vsel %vm2764, %v2848, %v2824
    %v2850 = vsel %vm2763, %v535, %v2847
    %v2851 = vsel %vm2763, 0, %v2849
    %v2852 = vcosq.f32.pop %v2850
    %v2853 = vsinq.f32.pop %v2850
    %vm2854 = vweird.f32 %v535
    %v2855 = vadd.s32 %v2851, 3
    %v2856 = vand.u32 %v2855, 3
    %vm2857 = vcmp.lt.s32.totalorder %v2856, 2
    %vm2858 = vcmp.eq.s32.totalorder %v2856, 0
    %v2859 = vxor.u32 %v2853, 2147483648
    %v2860 = vsel %vm2858, %v2852, %v2859
    %vm2861 = vcmp.eq.s32.totalorder %v2856, 2
    %v2862 = vxor.u32 %v2852, 2147483648
    %v2863 = vsel %vm2861, %v2862, %v2853
    %v2864 = vsel %vm2857, %v2860, %v2863
    %v2865 = vsel %vm2854, nan, %v2864
    %v2866 = vand.u32 2147483647, %v536
    %vm2867 = vcmp.le.f32.partialorder %v2866, 0.7853982
    %vm2868 = vcmp.lt.s32.totalorder %v536, 0
    %v2869 = vand.u32 %v536, 2139095040
    %v2870 = vshrl.u32 %v2869, 23
    %v2871 = vsub.s32 %v2870, 127
    %v2872 = vand.u32 2147483647, %v536
    %v2873 = vand.u32 %v2872, 8388607
    %v2874 = vor.u32 %v2873, 8388608
    %v2875 = vsub.s32 0, %v2874
    %v2876 = vadd.s32 %v2871, 1
    %vm2877 = vcmp.gt.s32.totalorder %v2876, 0
    %v2878 = vsel %vm2877, %v2876, 0
    %v2879 = vshrl.u32 %v2878, 5
    %v2880 = vand.u32 %v2878, 31
    %v2881 = vsub.s32 32, %v2880
    %v2882 = vshrl.u32 683565275, %v2881
    %v2883 = vshll.u32 683565275, %v2880
    %v2884 = vshrl.u32 2475754826, %v2881
    %v2885 = vor.u32 %v2883, %v2884
    %v2886 = vshll.u32 2475754826, %v2880
    %v2887 = vshrl.u32 2131351028, %v2881
    %v2888 = vor.u32 %v2886, %v2887
    %v2889 = vshll.u32 2131351028, %v2880
    %v2890 = vshrl.u32 2102212464, %v2881
    %v2891 = vor.u32 %v2889, %v2890
    %v2892 = vshll.u32 2102212464, %v2880
    %v2893 = vshrl.u32 920167782, %v2881
    %v2894 = vor.u32 %v2892, %v2893
    %v2895 = vshll.u32 920167782, %v2880
    %v2896 = vshrl.u32 1326507024, %v2881
    %v2897 = vor.u32 %v2895, %v2896
    %vm2898 = vcmp.lt.s32.totalorder %v2879, 1
    %vm2899 = vcmp.lt.s32.totalorder %v2879, 2
    %vm2900 = vcmp.lt.s32.totalorder %v2879, 3
    %vm2901 = vcmp.lt.s32.totalorder %v2879, 4
    %v2902 = vsel %vm2898, %v2882, %v2885
    %v2903 = vsel %vm2901, %v2891, 2102212464
    %v2904 = vsel %vm2900, %v2888, %v2903
    %v2905 = vsel %vm2899, %v2902, %v2904
    %v2906 = vsel %vm2898, %v2885, %v2888
    %v2907 = vsel %vm2901, %v2894, 920167782
    %v2908 = vsel %vm2900, %v2891, %v2907
    %v2909 = vsel %vm2899, %v2906, %v2908
    %v2910 = vsel %vm2898, %v2888, %v2891
    %v2911 = vsel %vm2901, %v2897, 1326507024
    %v2912 = vsel %vm2900, %v2894, %v2911
    %v2913 = vsel %vm2899, %v2910, %v2912
    %v2914 = vshll.u32 %v2874, 8
    %v2915 = vmul.u32.u64.compose %v2914, %v2913
    %v2916 = vextract.low.u32 %v2915
    %v2917 = vextract.high.u32 %v2915
    %v2918 = vmul.u32.u64.compose %v2914, %v2909
    %v2919 = vextract.low.u32 %v2918
    %v2920 = vextract.high.u32 %v2918
    %v2921 = vmul.u32 %v2914, %v2905
    %v2922 = vadd.s32 %v2917, %v2919
    %vm2923 = vc.u32 %v2917, %v2919
    %v2924 = vadd.s32 %v2920, 1
    %v2925 = vsel %vm2923, %v2924, %v2920
    %v2926 = vadd.s32 %v2921, %v2925
    %v2927 = vadd.s32 %v2926, 536870912
    %v2928 = vshrl.u32 %v2927, 30
    %v2929 = vshll.u32 %v2928, 30
    %v2930 = vsub.s32 %v2926, %v2929
    %vm2931 = vcmp.lt.s32.totalorder %v2930, 0
    %v2932 = vsub.s32 0, %v2930
    %v2933 = vsel %vm2931, %v2932, %v2930
    %v2934 = vclz %v2933
    %v2935 = vsub.s32 %v2934, 2
    %vm2936 = vcmp.gt.s32.totalorder 0, %v2935
    %v2937 = vsel %vm2936, 0, %v2935
    %v2938 = vsub.s32 32, %v2937
    %v2939 = vshll.u32 %v2930, %v2937
    %v2940 = vshrl.u32 %v2922, %v2938
    %v2941 = vor.u32 %v2939, %v2940
    %v2942 = vsub.s32 4294967266, %v2937
    %v2943 = vadd.s32 %v2942, 127
    %v2944 = vshll.u32 %v2943, 23
    %v2945 = vor.u32 4788187, %v2944
    %v2946 = vand.u32 2147483647, %v2945
    %v2948 = vcvt.s32.f32 %v2941
    %v2949 = vmul.f32 %v2948, %v2946
    %v2950 = vxor.u32 %v2949, 2147483648
    %v2951 = vsel %vm2868, %v2950, %v2949
    %v2952 = vsub.s32 4, %v2928
    %v2953 = vsel %vm2868, %v2952, %v2928
    %v2954 = vsel %vm2867, %v536, %v2951
    %v2955 = vsel %vm2867, 0, %v2953
    %v2956 = vcosq.f32.pop %v2954
    %v2957 = vsinq.f32.pop %v2954
    %vm2958 = vweird.f32 %v536
    %v2959 = vadd.s32 %v2955, 3
    %v2960 = vand.u32 %v2959, 3
    %vm2961 = vcmp.lt.s32.totalorder %v2960, 2
    %vm2962 = vcmp.eq.s32.totalorder %v2960, 0
    %v2963 = vxor.u32 %v2957, 2147483648
    %v2964 = vsel %vm2962, %v2956, %v2963
    %vm2965 = vcmp.eq.s32.totalorder %v2960, 2
    %v2966 = vxor.u32 %v2956, 2147483648
    %v2967 = vsel %vm2965, %v2966, %v2957
    %v2968 = vsel %vm2961, %v2964, %v2967
    %v2969 = vsel %vm2958, nan, %v2968
    %v2970 = vand.u32 2147483647, %v537
    %vm2971 = vcmp.le.f32.partialorder %v2970, 0.7853982
    %vm2972 = vcmp.lt.s32.totalorder %v537, 0
    %v2973 = vand.u32 %v537, 2139095040
    %v2974 = vshrl.u32 %v2973, 23
    %v2975 = vsub.s32 %v2974, 127
    %v2976 = vand.u32 2147483647, %v537
    %v2977 = vand.u32 %v2976, 8388607
    %v2978 = vor.u32 %v2977, 8388608
    %v2979 = vsub.s32 0, %v2978
    %v2980 = vadd.s32 %v2975, 1
    %vm2981 = vcmp.gt.s32.totalorder %v2980, 0
    %v2982 = vsel %vm2981, %v2980, 0
    %v2983 = vshrl.u32 %v2982, 5
    %v2984 = vand.u32 %v2982, 31
    %v2985 = vsub.s32 32, %v2984
    %v2986 = vshrl.u32 683565275, %v2985
    %v2987 = vshll.u32 683565275, %v2984
    %v2988 = vshrl.u32 2475754826, %v2985
    %v2989 = vor.u32 %v2987, %v2988
    %v2990 = vshll.u32 2475754826, %v2984
    %v2991 = vshrl.u32 2131351028, %v2985
    %v2992 = vor.u32 %v2990, %v2991
    %v2993 = vshll.u32 2131351028, %v2984
    %v2994 = vshrl.u32 2102212464, %v2985
    %v2995 = vor.u32 %v2993, %v2994
    %v2996 = vshll.u32 2102212464, %v2984
    %v2997 = vshrl.u32 920167782, %v2985
    %v2998 = vor.u32 %v2996, %v2997
    %v2999 = vshll.u32 920167782, %v2984
    %v3000 = vshrl.u32 1326507024, %v2985
    %v3001 = vor.u32 %v2999, %v3000
    %vm3002 = vcmp.lt.s32.totalorder %v2983, 1
    %vm3003 = vcmp.lt.s32.totalorder %v2983, 2
    %vm3004 = vcmp.lt.s32.totalorder %v2983, 3
    %vm3005 = vcmp.lt.s32.totalorder %v2983, 4
    %v3006 = vsel %vm3002, %v2986, %v2989
    %v3007 = vsel %vm3005, %v2995, 2102212464
    %v3008 = vsel %vm3004, %v2992, %v3007
    %v3009 = vsel %vm3003, %v3006, %v3008
    %v3010 = vsel %vm3002, %v2989, %v2992
    %v3011 = vsel %vm3005, %v2998, 920167782
    %v3012 = vsel %vm3004, %v2995, %v3011
    %v3013 = vsel %vm3003, %v3010, %v3012
    %v3014 = vsel %vm3002, %v2992, %v2995
    %v3015 = vsel %vm3005, %v3001, 1326507024
    %v3016 = vsel %vm3004, %v2998, %v3015
    %v3017 = vsel %vm3003, %v3014, %v3016
    %v3018 = vshll.u32 %v2978, 8
    %v3019 = vmul.u32.u64.compose %v3018, %v3017
    %v3020 = vextract.low.u32 %v3019
    %v3021 = vextract.high.u32 %v3019
    %v3022 = vmul.u32.u64.compose %v3018, %v3013
    %v3023 = vextract.low.u32 %v3022
    %v3024 = vextract.high.u32 %v3022
    %v3025 = vmul.u32 %v3018, %v3009
    %v3026 = vadd.s32 %v3021, %v3023
    %vm3027 = vc.u32 %v3021, %v3023
    %v3028 = vadd.s32 %v3024, 1
    %v3029 = vsel %vm3027, %v3028, %v3024
    %v3030 = vadd.s32 %v3025, %v3029
    %v3031 = vadd.s32 %v3030, 536870912
    %v3032 = vshrl.u32 %v3031, 30
    %v3033 = vshll.u32 %v3032, 30
    %v3034 = vsub.s32 %v3030, %v3033
    %vm3035 = vcmp.lt.s32.totalorder %v3034, 0
    %v3036 = vsub.s32 0, %v3034
    %v3037 = vsel %vm3035, %v3036, %v3034
    %v3038 = vclz %v3037
    %v3039 = vsub.s32 %v3038, 2
    %vm3040 = vcmp.gt.s32.totalorder 0, %v3039
    %v3041 = vsel %vm3040, 0, %v3039
    %v3042 = vsub.s32 32, %v3041
    %v3043 = vshll.u32 %v3034, %v3041
    %v3044 = vshrl.u32 %v3026, %v3042
    %v3045 = vor.u32 %v3043, %v3044
    %v3046 = vsub.s32 4294967266, %v3041
    %v3047 = vadd.s32 %v3046, 127
    %v3048 = vshll.u32 %v3047, 23
    %v3049 = vor.u32 4788187, %v3048
    %v3050 = vand.u32 2147483647, %v3049
    %v3052 = vcvt.s32.f32 %v3045
    %v3053 = vmul.f32 %v3052, %v3050
    %v3054 = vxor.u32 %v3053, 2147483648
    %v3055 = vsel %vm2972, %v3054, %v3053
    %v3056 = vsub.s32 4, %v3032
    %v3057 = vsel %vm2972, %v3056, %v3032
    %v3058 = vsel %vm2971, %v537, %v3055
    %v3059 = vsel %vm2971, 0, %v3057
    %v3060 = vcosq.f32.pop %v3058
    %v3061 = vsinq.f32.pop %v3058
    %vm3062 = vweird.f32 %v537
    %v3063 = vadd.s32 %v3059, 3
    %v3064 = vand.u32 %v3063, 3
    %vm3065 = vcmp.lt.s32.totalorder %v3064, 2
    %vm3066 = vcmp.eq.s32.totalorder %v3064, 0
    %v3067 = vxor.u32 %v3061, 2147483648
    %v3068 = vsel %vm3066, %v3060, %v3067
    %vm3069 = vcmp.eq.s32.totalorder %v3064, 2
    %v3070 = vxor.u32 %v3060, 2147483648
    %v3071 = vsel %vm3069, %v3070, %v3061
    %v3072 = vsel %vm3065, %v3068, %v3071
    %v3073 = vsel %vm3062, nan, %v3072
    %v3074 = vand.u32 2147483647, %v538
    %vm3075 = vcmp.le.f32.partialorder %v3074, 0.7853982
    %vm3076 = vcmp.lt.s32.totalorder %v538, 0
    %v3077 = vand.u32 %v538, 2139095040
    %v3078 = vshrl.u32 %v3077, 23
    %v3079 = vsub.s32 %v3078, 127
    %v3080 = vand.u32 2147483647, %v538
    %v3081 = vand.u32 %v3080, 8388607
    %v3082 = vor.u32 %v3081, 8388608
    %v3083 = vsub.s32 0, %v3082
    %v3084 = vadd.s32 %v3079, 1
    %vm3085 = vcmp.gt.s32.totalorder %v3084, 0
    %v3086 = vsel %vm3085, %v3084, 0
    %v3087 = vshrl.u32 %v3086, 5
    %v3088 = vand.u32 %v3086, 31
    %v3089 = vsub.s32 32, %v3088
    %v3090 = vshrl.u32 683565275, %v3089
    %v3091 = vshll.u32 683565275, %v3088
    %v3092 = vshrl.u32 2475754826, %v3089
    %v3093 = vor.u32 %v3091, %v3092
    %v3094 = vshll.u32 2475754826, %v3088
    %v3095 = vshrl.u32 2131351028, %v3089
    %v3096 = vor.u32 %v3094, %v3095
    %v3097 = vshll.u32 2131351028, %v3088
    %v3098 = vshrl.u32 2102212464, %v3089
    %v3099 = vor.u32 %v3097, %v3098
    %v3100 = vshll.u32 2102212464, %v3088
    %v3101 = vshrl.u32 920167782, %v3089
    %v3102 = vor.u32 %v3100, %v3101
    %v3103 = vshll.u32 920167782, %v3088
    %v3104 = vshrl.u32 1326507024, %v3089
    %v3105 = vor.u32 %v3103, %v3104
    %vm3106 = vcmp.lt.s32.totalorder %v3087, 1
    %vm3107 = vcmp.lt.s32.totalorder %v3087, 2
    %vm3108 = vcmp.lt.s32.totalorder %v3087, 3
    %vm3109 = vcmp.lt.s32.totalorder %v3087, 4
    %v3110 = vsel %vm3106, %v3090, %v3093
    %v3111 = vsel %vm3109, %v3099, 2102212464
    %v3112 = vsel %vm3108, %v3096, %v3111
    %v3113 = vsel %vm3107, %v3110, %v3112
    %v3114 = vsel %vm3106, %v3093, %v3096
    %v3115 = vsel %vm3109, %v3102, 920167782
    %v3116 = vsel %vm3108, %v3099, %v3115
    %v3117 = vsel %vm3107, %v3114, %v3116
    %v3118 = vsel %vm3106, %v3096, %v3099
    %v3119 = vsel %vm3109, %v3105, 1326507024
    %v3120 = vsel %vm3108, %v3102, %v3119
    %v3121 = vsel %vm3107, %v3118, %v3120
    %v3122 = vshll.u32 %v3082, 8
    %v3123 = vmul.u32.u64.compose %v3122, %v3121
    %v3124 = vextract.low.u32 %v3123
    %v3125 = vextract.high.u32 %v3123
    %v3126 = vmul.u32.u64.compose %v3122, %v3117
    %v3127 = vextract.low.u32 %v3126
    %v3128 = vextract.high.u32 %v3126
    %v3129 = vmul.u32 %v3122, %v3113
    %v3130 = vadd.s32 %v3125, %v3127
    %vm3131 = vc.u32 %v3125, %v3127
    %v3132 = vadd.s32 %v3128, 1
    %v3133 = vsel %vm3131, %v3132, %v3128
    %v3134 = vadd.s32 %v3129, %v3133
    %v3135 = vadd.s32 %v3134, 536870912
    %v3136 = vshrl.u32 %v3135, 30
    %v3137 = vshll.u32 %v3136, 30
    %v3138 = vsub.s32 %v3134, %v3137
    %vm3139 = vcmp.lt.s32.totalorder %v3138, 0
    %v3140 = vsub.s32 0, %v3138
    %v3141 = vsel %vm3139, %v3140, %v3138
    %v3142 = vclz %v3141
    %v3143 = vsub.s32 %v3142, 2
    %vm3144 = vcmp.gt.s32.totalorder 0, %v3143
    %v3145 = vsel %vm3144, 0, %v3143
    %v3146 = vsub.s32 32, %v3145
    %v3147 = vshll.u32 %v3138, %v3145
    %v3148 = vshrl.u32 %v3130, %v3146
    %v3149 = vor.u32 %v3147, %v3148
    %v3150 = vsub.s32 4294967266, %v3145
    %v3151 = vadd.s32 %v3150, 127
    %v3152 = vshll.u32 %v3151, 23
    %v3153 = vor.u32 4788187, %v3152
    %v3154 = vand.u32 2147483647, %v3153
    %v3156 = vcvt.s32.f32 %v3149
    %v3157 = vmul.f32 %v3156, %v3154
    %v3158 = vxor.u32 %v3157, 2147483648
    %v3159 = vsel %vm3076, %v3158, %v3157
    %v3160 = vsub.s32 4, %v3136
    %v3161 = vsel %vm3076, %v3160, %v3136
    %v3162 = vsel %vm3075, %v538, %v3159
    %v3163 = vsel %vm3075, 0, %v3161
    %v3164 = vcosq.f32.pop %v3162
    %v3165 = vsinq.f32.pop %v3162
    %vm3166 = vweird.f32 %v538
    %v3167 = vadd.s32 %v3163, 3
    %v3168 = vand.u32 %v3167, 3
    %vm3169 = vcmp.lt.s32.totalorder %v3168, 2
    %vm3170 = vcmp.eq.s32.totalorder %v3168, 0
    %v3171 = vxor.u32 %v3165, 2147483648
    %v3172 = vsel %vm3170, %v3164, %v3171
    %vm3173 = vcmp.eq.s32.totalorder %v3168, 2
    %v3174 = vxor.u32 %v3164, 2147483648
    %v3175 = vsel %vm3173, %v3174, %v3165
    %v3176 = vsel %vm3169, %v3172, %v3175
    %v3177 = vsel %vm3166, nan, %v3176
    %v3178 = vand.u32 2147483647, %v539
    %vm3179 = vcmp.le.f32.partialorder %v3178, 0.7853982
    %vm3180 = vcmp.lt.s32.totalorder %v539, 0
    %v3181 = vand.u32 %v539, 2139095040
    %v3182 = vshrl.u32 %v3181, 23
    %v3183 = vsub.s32 %v3182, 127
    %v3184 = vand.u32 2147483647, %v539
    %v3185 = vand.u32 %v3184, 8388607
    %v3186 = vor.u32 %v3185, 8388608
    %v3187 = vsub.s32 0, %v3186
    %v3188 = vadd.s32 %v3183, 1
    %vm3189 = vcmp.gt.s32.totalorder %v3188, 0
    %v3190 = vsel %vm3189, %v3188, 0
    %v3191 = vshrl.u32 %v3190, 5
    %v3192 = vand.u32 %v3190, 31
    %v3193 = vsub.s32 32, %v3192
    %v3194 = vshrl.u32 683565275, %v3193
    %v3195 = vshll.u32 683565275, %v3192
    %v3196 = vshrl.u32 2475754826, %v3193
    %v3197 = vor.u32 %v3195, %v3196
    %v3198 = vshll.u32 2475754826, %v3192
    %v3199 = vshrl.u32 2131351028, %v3193
    %v3200 = vor.u32 %v3198, %v3199
    %v3201 = vshll.u32 2131351028, %v3192
    %v3202 = vshrl.u32 2102212464, %v3193
    %v3203 = vor.u32 %v3201, %v3202
    %v3204 = vshll.u32 2102212464, %v3192
    %v3205 = vshrl.u32 920167782, %v3193
    %v3206 = vor.u32 %v3204, %v3205
    %v3207 = vshll.u32 920167782, %v3192
    %v3208 = vshrl.u32 1326507024, %v3193
    %v3209 = vor.u32 %v3207, %v3208
    %vm3210 = vcmp.lt.s32.totalorder %v3191, 1
    %vm3211 = vcmp.lt.s32.totalorder %v3191, 2
    %vm3212 = vcmp.lt.s32.totalorder %v3191, 3
    %vm3213 = vcmp.lt.s32.totalorder %v3191, 4
    %v3214 = vsel %vm3210, %v3194, %v3197
    %v3215 = vsel %vm3213, %v3203, 2102212464
    %v3216 = vsel %vm3212, %v3200, %v3215
    %v3217 = vsel %vm3211, %v3214, %v3216
    %v3218 = vsel %vm3210, %v3197, %v3200
    %v3219 = vsel %vm3213, %v3206, 920167782
    %v3220 = vsel %vm3212, %v3203, %v3219
    %v3221 = vsel %vm3211, %v3218, %v3220
    %v3222 = vsel %vm3210, %v3200, %v3203
    %v3223 = vsel %vm3213, %v3209, 1326507024
    %v3224 = vsel %vm3212, %v3206, %v3223
    %v3225 = vsel %vm3211, %v3222, %v3224
    %v3226 = vshll.u32 %v3186, 8
    %v3227 = vmul.u32.u64.compose %v3226, %v3225
    %v3228 = vextract.low.u32 %v3227
    %v3229 = vextract.high.u32 %v3227
    %v3230 = vmul.u32.u64.compose %v3226, %v3221
    %v3231 = vextract.low.u32 %v3230
    %v3232 = vextract.high.u32 %v3230
    %v3233 = vmul.u32 %v3226, %v3217
    %v3234 = vadd.s32 %v3229, %v3231
    %vm3235 = vc.u32 %v3229, %v3231
    %v3236 = vadd.s32 %v3232, 1
    %v3237 = vsel %vm3235, %v3236, %v3232
    %v3238 = vadd.s32 %v3233, %v3237
    %v3239 = vadd.s32 %v3238, 536870912
    %v3240 = vshrl.u32 %v3239, 30
    %v3241 = vshll.u32 %v3240, 30
    %v3242 = vsub.s32 %v3238, %v3241
    %vm3243 = vcmp.lt.s32.totalorder %v3242, 0
    %v3244 = vsub.s32 0, %v3242
    %v3245 = vsel %vm3243, %v3244, %v3242
    %v3246 = vclz %v3245
    %v3247 = vsub.s32 %v3246, 2
    %vm3248 = vcmp.gt.s32.totalorder 0, %v3247
    %v3249 = vsel %vm3248, 0, %v3247
    %v3250 = vsub.s32 32, %v3249
    %v3251 = vshll.u32 %v3242, %v3249
    %v3252 = vshrl.u32 %v3234, %v3250
    %v3253 = vor.u32 %v3251, %v3252
    %v3254 = vsub.s32 4294967266, %v3249
    %v3255 = vadd.s32 %v3254, 127
    %v3256 = vshll.u32 %v3255, 23
    %v3257 = vor.u32 4788187, %v3256
    %v3258 = vand.u32 2147483647, %v3257
    %v3260 = vcvt.s32.f32 %v3253
    %v3261 = vmul.f32 %v3260, %v3258
    %v3262 = vxor.u32 %v3261, 2147483648
    %v3263 = vsel %vm3180, %v3262, %v3261
    %v3264 = vsub.s32 4, %v3240
    %v3265 = vsel %vm3180, %v3264, %v3240
    %v3266 = vsel %vm3179, %v539, %v3263
    %v3267 = vsel %vm3179, 0, %v3265
    %v3268 = vcosq.f32.pop %v3266
    %v3269 = vsinq.f32.pop %v3266
    %vm3270 = vweird.f32 %v539
    %v3271 = vadd.s32 %v3267, 3
    %v3272 = vand.u32 %v3271, 3
    %vm3273 = vcmp.lt.s32.totalorder %v3272, 2
    %vm3274 = vcmp.eq.s32.totalorder %v3272, 0
    %v3275 = vxor.u32 %v3269, 2147483648
    %v3276 = vsel %vm3274, %v3268, %v3275
    %vm3277 = vcmp.eq.s32.totalorder %v3272, 2
    %v3278 = vxor.u32 %v3268, 2147483648
    %v3279 = vsel %vm3277, %v3278, %v3269
    %v3280 = vsel %vm3273, %v3276, %v3279
    %v3281 = vsel %vm3270, nan, %v3280
    %v3282 = vand.u32 2147483647, %v540
    %vm3283 = vcmp.le.f32.partialorder %v3282, 0.7853982
    %vm3284 = vcmp.lt.s32.totalorder %v540, 0
    %v3285 = vand.u32 %v540, 2139095040
    %v3286 = vshrl.u32 %v3285, 23
    %v3287 = vsub.s32 %v3286, 127
    %v3288 = vand.u32 2147483647, %v540
    %v3289 = vand.u32 %v3288, 8388607
    %v3290 = vor.u32 %v3289, 8388608
    %v3291 = vsub.s32 0, %v3290
    %v3292 = vadd.s32 %v3287, 1
    %vm3293 = vcmp.gt.s32.totalorder %v3292, 0
    %v3294 = vsel %vm3293, %v3292, 0
    %v3295 = vshrl.u32 %v3294, 5
    %v3296 = vand.u32 %v3294, 31
    %v3297 = vsub.s32 32, %v3296
    %v3298 = vshrl.u32 683565275, %v3297
    %v3299 = vshll.u32 683565275, %v3296
    %v3300 = vshrl.u32 2475754826, %v3297
    %v3301 = vor.u32 %v3299, %v3300
    %v3302 = vshll.u32 2475754826, %v3296
    %v3303 = vshrl.u32 2131351028, %v3297
    %v3304 = vor.u32 %v3302, %v3303
    %v3305 = vshll.u32 2131351028, %v3296
    %v3306 = vshrl.u32 2102212464, %v3297
    %v3307 = vor.u32 %v3305, %v3306
    %v3308 = vshll.u32 2102212464, %v3296
    %v3309 = vshrl.u32 920167782, %v3297
    %v3310 = vor.u32 %v3308, %v3309
    %v3311 = vshll.u32 920167782, %v3296
    %v3312 = vshrl.u32 1326507024, %v3297
    %v3313 = vor.u32 %v3311, %v3312
    %vm3314 = vcmp.lt.s32.totalorder %v3295, 1
    %vm3315 = vcmp.lt.s32.totalorder %v3295, 2
    %vm3316 = vcmp.lt.s32.totalorder %v3295, 3
    %vm3317 = vcmp.lt.s32.totalorder %v3295, 4
    %v3318 = vsel %vm3314, %v3298, %v3301
    %v3319 = vsel %vm3317, %v3307, 2102212464
    %v3320 = vsel %vm3316, %v3304, %v3319
    %v3321 = vsel %vm3315, %v3318, %v3320
    %v3322 = vsel %vm3314, %v3301, %v3304
    %v3323 = vsel %vm3317, %v3310, 920167782
    %v3324 = vsel %vm3316, %v3307, %v3323
    %v3325 = vsel %vm3315, %v3322, %v3324
    %v3326 = vsel %vm3314, %v3304, %v3307
    %v3327 = vsel %vm3317, %v3313, 1326507024
    %v3328 = vsel %vm3316, %v3310, %v3327
    %v3329 = vsel %vm3315, %v3326, %v3328
    %v3330 = vshll.u32 %v3290, 8
    %v3331 = vmul.u32.u64.compose %v3330, %v3329
    %v3332 = vextract.low.u32 %v3331
    %v3333 = vextract.high.u32 %v3331
    %v3334 = vmul.u32.u64.compose %v3330, %v3325
    %v3335 = vextract.low.u32 %v3334
    %v3336 = vextract.high.u32 %v3334
    %v3337 = vmul.u32 %v3330, %v3321
    %v3338 = vadd.s32 %v3333, %v3335
    %vm3339 = vc.u32 %v3333, %v3335
    %v3340 = vadd.s32 %v3336, 1
    %v3341 = vsel %vm3339, %v3340, %v3336
    %v3342 = vadd.s32 %v3337, %v3341
    %v3343 = vadd.s32 %v3342, 536870912
    %v3344 = vshrl.u32 %v3343, 30
    %v3345 = vshll.u32 %v3344, 30
    %v3346 = vsub.s32 %v3342, %v3345
    %vm3347 = vcmp.lt.s32.totalorder %v3346, 0
    %v3348 = vsub.s32 0, %v3346
    %v3349 = vsel %vm3347, %v3348, %v3346
    %v3350 = vclz %v3349
    %v3351 = vsub.s32 %v3350, 2
    %vm3352 = vcmp.gt.s32.totalorder 0, %v3351
    %v3353 = vsel %vm3352, 0, %v3351
    %v3354 = vsub.s32 32, %v3353
    %v3355 = vshll.u32 %v3346, %v3353
    %v3356 = vshrl.u32 %v3338, %v3354
    %v3357 = vor.u32 %v3355, %v3356
    %v3358 = vsub.s32 4294967266, %v3353
    %v3359 = vadd.s32 %v3358, 127
    %v3360 = vshll.u32 %v3359, 23
    %v3361 = vor.u32 4788187, %v3360
    %v3362 = vand.u32 2147483647, %v3361
    %v3364 = vcvt.s32.f32 %v3357
    %v3365 = vmul.f32 %v3364, %v3362
    %v3366 = vxor.u32 %v3365, 2147483648
    %v3367 = vsel %vm3284, %v3366, %v3365
    %v3368 = vsub.s32 4, %v3344
    %v3369 = vsel %vm3284, %v3368, %v3344
    %v3370 = vsel %vm3283, %v540, %v3367
    %v3371 = vsel %vm3283, 0, %v3369
    %v3372 = vcosq.f32.pop %v3370
    %v3373 = vsinq.f32.pop %v3370
    %vm3374 = vweird.f32 %v540
    %v3375 = vadd.s32 %v3371, 3
    %v3376 = vand.u32 %v3375, 3
    %vm3377 = vcmp.lt.s32.totalorder %v3376, 2
    %vm3378 = vcmp.eq.s32.totalorder %v3376, 0
    %v3379 = vxor.u32 %v3373, 2147483648
    %v3380 = vsel %vm3378, %v3372, %v3379
    %vm3381 = vcmp.eq.s32.totalorder %v3376, 2
    %v3382 = vxor.u32 %v3372, 2147483648
    %v3383 = vsel %vm3381, %v3382, %v3373
    %v3384 = vsel %vm3377, %v3380, %v3383
    %v3385 = vsel %vm3374, nan, %v3384
    %v3386 = vand.u32 2147483647, %v541
    %vm3387 = vcmp.le.f32.partialorder %v3386, 0.7853982
    %vm3388 = vcmp.lt.s32.totalorder %v541, 0
    %v3389 = vand.u32 %v541, 2139095040
    %v3390 = vshrl.u32 %v3389, 23
    %v3391 = vsub.s32 %v3390, 127
    %v3392 = vand.u32 2147483647, %v541
    %v3393 = vand.u32 %v3392, 8388607
    %v3394 = vor.u32 %v3393, 8388608
    %v3395 = vsub.s32 0, %v3394
    %v3396 = vadd.s32 %v3391, 1
    %vm3397 = vcmp.gt.s32.totalorder %v3396, 0
    %v3398 = vsel %vm3397, %v3396, 0
    %v3399 = vshrl.u32 %v3398, 5
    %v3400 = vand.u32 %v3398, 31
    %v3401 = vsub.s32 32, %v3400
    %v3402 = vshrl.u32 683565275, %v3401
    %v3403 = vshll.u32 683565275, %v3400
    %v3404 = vshrl.u32 2475754826, %v3401
    %v3405 = vor.u32 %v3403, %v3404
    %v3406 = vshll.u32 2475754826, %v3400
    %v3407 = vshrl.u32 2131351028, %v3401
    %v3408 = vor.u32 %v3406, %v3407
    %v3409 = vshll.u32 2131351028, %v3400
    %v3410 = vshrl.u32 2102212464, %v3401
    %v3411 = vor.u32 %v3409, %v3410
    %v3412 = vshll.u32 2102212464, %v3400
    %v3413 = vshrl.u32 920167782, %v3401
    %v3414 = vor.u32 %v3412, %v3413
    %v3415 = vshll.u32 920167782, %v3400
    %v3416 = vshrl.u32 1326507024, %v3401
    %v3417 = vor.u32 %v3415, %v3416
    %vm3418 = vcmp.lt.s32.totalorder %v3399, 1
    %vm3419 = vcmp.lt.s32.totalorder %v3399, 2
    %vm3420 = vcmp.lt.s32.totalorder %v3399, 3
    %vm3421 = vcmp.lt.s32.totalorder %v3399, 4
    %v3422 = vsel %vm3418, %v3402, %v3405
    %v3423 = vsel %vm3421, %v3411, 2102212464
    %v3424 = vsel %vm3420, %v3408, %v3423
    %v3425 = vsel %vm3419, %v3422, %v3424
    %v3426 = vsel %vm3418, %v3405, %v3408
    %v3427 = vsel %vm3421, %v3414, 920167782
    %v3428 = vsel %vm3420, %v3411, %v3427
    %v3429 = vsel %vm3419, %v3426, %v3428
    %v3430 = vsel %vm3418, %v3408, %v3411
    %v3431 = vsel %vm3421, %v3417, 1326507024
    %v3432 = vsel %vm3420, %v3414, %v3431
    %v3433 = vsel %vm3419, %v3430, %v3432
    %v3434 = vshll.u32 %v3394, 8
    %v3435 = vmul.u32.u64.compose %v3434, %v3433
    %v3436 = vextract.low.u32 %v3435
    %v3437 = vextract.high.u32 %v3435
    %v3438 = vmul.u32.u64.compose %v3434, %v3429
    %v3439 = vextract.low.u32 %v3438
    %v3440 = vextract.high.u32 %v3438
    %v3441 = vmul.u32 %v3434, %v3425
    %v3442 = vadd.s32 %v3437, %v3439
    %vm3443 = vc.u32 %v3437, %v3439
    %v3444 = vadd.s32 %v3440, 1
    %v3445 = vsel %vm3443, %v3444, %v3440
    %v3446 = vadd.s32 %v3441, %v3445
    %v3447 = vadd.s32 %v3446, 536870912
    %v3448 = vshrl.u32 %v3447, 30
    %v3449 = vshll.u32 %v3448, 30
    %v3450 = vsub.s32 %v3446, %v3449
    %vm3451 = vcmp.lt.s32.totalorder %v3450, 0
    %v3452 = vsub.s32 0, %v3450
    %v3453 = vsel %vm3451, %v3452, %v3450
    %v3454 = vclz %v3453
    %v3455 = vsub.s32 %v3454, 2
    %vm3456 = vcmp.gt.s32.totalorder 0, %v3455
    %v3457 = vsel %vm3456, 0, %v3455
    %v3458 = vsub.s32 32, %v3457
    %v3459 = vshll.u32 %v3450, %v3457
    %v3460 = vshrl.u32 %v3442, %v3458
    %v3461 = vor.u32 %v3459, %v3460
    %v3462 = vsub.s32 4294967266, %v3457
    %v3463 = vadd.s32 %v3462, 127
    %v3464 = vshll.u32 %v3463, 23
    %v3465 = vor.u32 4788187, %v3464
    %v3466 = vand.u32 2147483647, %v3465
    %v3468 = vcvt.s32.f32 %v3461
    %v3469 = vmul.f32 %v3468, %v3466
    %v3470 = vxor.u32 %v3469, 2147483648
    %v3471 = vsel %vm3388, %v3470, %v3469
    %v3472 = vsub.s32 4, %v3448
    %v3473 = vsel %vm3388, %v3472, %v3448
    %v3474 = vsel %vm3387, %v541, %v3471
    %v3475 = vsel %vm3387, 0, %v3473
    %v3476 = vcosq.f32.pop %v3474
    %v3477 = vsinq.f32.pop %v3474
    %vm3478 = vweird.f32 %v541
    %v3479 = vadd.s32 %v3475, 3
    %v3480 = vand.u32 %v3479, 3
    %vm3481 = vcmp.lt.s32.totalorder %v3480, 2
    %vm3482 = vcmp.eq.s32.totalorder %v3480, 0
    %v3483 = vxor.u32 %v3477, 2147483648
    %v3484 = vsel %vm3482, %v3476, %v3483
    %vm3485 = vcmp.eq.s32.totalorder %v3480, 2
    %v3486 = vxor.u32 %v3476, 2147483648
    %v3487 = vsel %vm3485, %v3486, %v3477
    %v3488 = vsel %vm3481, %v3484, %v3487
    %v3489 = vsel %vm3478, nan, %v3488
    %v3490 = vand.u32 2147483647, %v542
    %vm3491 = vcmp.le.f32.partialorder %v3490, 0.7853982
    %vm3492 = vcmp.lt.s32.totalorder %v542, 0
    %v3493 = vand.u32 %v542, 2139095040
    %v3494 = vshrl.u32 %v3493, 23
    %v3495 = vsub.s32 %v3494, 127
    %v3496 = vand.u32 2147483647, %v542
    %v3497 = vand.u32 %v3496, 8388607
    %v3498 = vor.u32 %v3497, 8388608
    %v3499 = vsub.s32 0, %v3498
    %v3500 = vadd.s32 %v3495, 1
    %vm3501 = vcmp.gt.s32.totalorder %v3500, 0
    %v3502 = vsel %vm3501, %v3500, 0
    %v3503 = vshrl.u32 %v3502, 5
    %v3504 = vand.u32 %v3502, 31
    %v3505 = vsub.s32 32, %v3504
    %v3506 = vshrl.u32 683565275, %v3505
    %v3507 = vshll.u32 683565275, %v3504
    %v3508 = vshrl.u32 2475754826, %v3505
    %v3509 = vor.u32 %v3507, %v3508
    %v3510 = vshll.u32 2475754826, %v3504
    %v3511 = vshrl.u32 2131351028, %v3505
    %v3512 = vor.u32 %v3510, %v3511
    %v3513 = vshll.u32 2131351028, %v3504
    %v3514 = vshrl.u32 2102212464, %v3505
    %v3515 = vor.u32 %v3513, %v3514
    %v3516 = vshll.u32 2102212464, %v3504
    %v3517 = vshrl.u32 920167782, %v3505
    %v3518 = vor.u32 %v3516, %v3517
    %v3519 = vshll.u32 920167782, %v3504
    %v3520 = vshrl.u32 1326507024, %v3505
    %v3521 = vor.u32 %v3519, %v3520
    %vm3522 = vcmp.lt.s32.totalorder %v3503, 1
    %vm3523 = vcmp.lt.s32.totalorder %v3503, 2
    %vm3524 = vcmp.lt.s32.totalorder %v3503, 3
    %vm3525 = vcmp.lt.s32.totalorder %v3503, 4
    %v3526 = vsel %vm3522, %v3506, %v3509
    %v3527 = vsel %vm3525, %v3515, 2102212464
    %v3528 = vsel %vm3524, %v3512, %v3527
    %v3529 = vsel %vm3523, %v3526, %v3528
    %v3530 = vsel %vm3522, %v3509, %v3512
    %v3531 = vsel %vm3525, %v3518, 920167782
    %v3532 = vsel %vm3524, %v3515, %v3531
    %v3533 = vsel %vm3523, %v3530, %v3532
    %v3534 = vsel %vm3522, %v3512, %v3515
    %v3535 = vsel %vm3525, %v3521, 1326507024
    %v3536 = vsel %vm3524, %v3518, %v3535
    %v3537 = vsel %vm3523, %v3534, %v3536
    %v3538 = vshll.u32 %v3498, 8
    %v3539 = vmul.u32.u64.compose %v3538, %v3537
    %v3540 = vextract.low.u32 %v3539
    %v3541 = vextract.high.u32 %v3539
    %v3542 = vmul.u32.u64.compose %v3538, %v3533
    %v3543 = vextract.low.u32 %v3542
    %v3544 = vextract.high.u32 %v3542
    %v3545 = vmul.u32 %v3538, %v3529
    %v3546 = vadd.s32 %v3541, %v3543
    %vm3547 = vc.u32 %v3541, %v3543
    %v3548 = vadd.s32 %v3544, 1
    %v3549 = vsel %vm3547, %v3548, %v3544
    %v3550 = vadd.s32 %v3545, %v3549
    %v3551 = vadd.s32 %v3550, 536870912
    %v3552 = vshrl.u32 %v3551, 30
    %v3553 = vshll.u32 %v3552, 30
    %v3554 = vsub.s32 %v3550, %v3553
    %vm3555 = vcmp.lt.s32.totalorder %v3554, 0
    %v3556 = vsub.s32 0, %v3554
    %v3557 = vsel %vm3555, %v3556, %v3554
    %v3558 = vclz %v3557
    %v3559 = vsub.s32 %v3558, 2
    %vm3560 = vcmp.gt.s32.totalorder 0, %v3559
    %v3561 = vsel %vm3560, 0, %v3559
    %v3562 = vsub.s32 32, %v3561
    %v3563 = vshll.u32 %v3554, %v3561
    %v3564 = vshrl.u32 %v3546, %v3562
    %v3565 = vor.u32 %v3563, %v3564
    %v3566 = vsub.s32 4294967266, %v3561
    %v3567 = vadd.s32 %v3566, 127
    %v3568 = vshll.u32 %v3567, 23
    %v3569 = vor.u32 4788187, %v3568
    %v3570 = vand.u32 2147483647, %v3569
    %v3572 = vcvt.s32.f32 %v3565
    %v3573 = vmul.f32 %v3572, %v3570
    %v3574 = vxor.u32 %v3573, 2147483648
    %v3575 = vsel %vm3492, %v3574, %v3573
    %v3576 = vsub.s32 4, %v3552
    %v3577 = vsel %vm3492, %v3576, %v3552
    %v3578 = vsel %vm3491, %v542, %v3575
    %v3579 = vsel %vm3491, 0, %v3577
    %v3580 = vcosq.f32.pop %v3578
    %v3581 = vsinq.f32.pop %v3578
    %vm3582 = vweird.f32 %v542
    %v3583 = vadd.s32 %v3579, 3
    %v3584 = vand.u32 %v3583, 3
    %vm3585 = vcmp.lt.s32.totalorder %v3584, 2
    %vm3586 = vcmp.eq.s32.totalorder %v3584, 0
    %v3587 = vxor.u32 %v3581, 2147483648
    %v3588 = vsel %vm3586, %v3580, %v3587
    %vm3589 = vcmp.eq.s32.totalorder %v3584, 2
    %v3590 = vxor.u32 %v3580, 2147483648
    %v3591 = vsel %vm3589, %v3590, %v3581
    %v3592 = vsel %vm3585, %v3588, %v3591
    %v3593 = vsel %vm3582, nan, %v3592
    %v3594 = vand.u32 2147483647, %v543
    %vm3595 = vcmp.le.f32.partialorder %v3594, 0.7853982
    %vm3596 = vcmp.lt.s32.totalorder %v543, 0
    %v3597 = vand.u32 %v543, 2139095040
    %v3598 = vshrl.u32 %v3597, 23
    %v3599 = vsub.s32 %v3598, 127
    %v3600 = vand.u32 2147483647, %v543
    %v3601 = vand.u32 %v3600, 8388607
    %v3602 = vor.u32 %v3601, 8388608
    %v3603 = vsub.s32 0, %v3602
    %v3604 = vadd.s32 %v3599, 1
    %vm3605 = vcmp.gt.s32.totalorder %v3604, 0
    %v3606 = vsel %vm3605, %v3604, 0
    %v3607 = vshrl.u32 %v3606, 5
    %v3608 = vand.u32 %v3606, 31
    %v3609 = vsub.s32 32, %v3608
    %v3610 = vshrl.u32 683565275, %v3609
    %v3611 = vshll.u32 683565275, %v3608
    %v3612 = vshrl.u32 2475754826, %v3609
    %v3613 = vor.u32 %v3611, %v3612
    %v3614 = vshll.u32 2475754826, %v3608
    %v3615 = vshrl.u32 2131351028, %v3609
    %v3616 = vor.u32 %v3614, %v3615
    %v3617 = vshll.u32 2131351028, %v3608
    %v3618 = vshrl.u32 2102212464, %v3609
    %v3619 = vor.u32 %v3617, %v3618
    %v3620 = vshll.u32 2102212464, %v3608
    %v3621 = vshrl.u32 920167782, %v3609
    %v3622 = vor.u32 %v3620, %v3621
    %v3623 = vshll.u32 920167782, %v3608
    %v3624 = vshrl.u32 1326507024, %v3609
    %v3625 = vor.u32 %v3623, %v3624
    %vm3626 = vcmp.lt.s32.totalorder %v3607, 1
    %vm3627 = vcmp.lt.s32.totalorder %v3607, 2
    %vm3628 = vcmp.lt.s32.totalorder %v3607, 3
    %vm3629 = vcmp.lt.s32.totalorder %v3607, 4
    %v3630 = vsel %vm3626, %v3610, %v3613
    %v3631 = vsel %vm3629, %v3619, 2102212464
    %v3632 = vsel %vm3628, %v3616, %v3631
    %v3633 = vsel %vm3627, %v3630, %v3632
    %v3634 = vsel %vm3626, %v3613, %v3616
    %v3635 = vsel %vm3629, %v3622, 920167782
    %v3636 = vsel %vm3628, %v3619, %v3635
    %v3637 = vsel %vm3627, %v3634, %v3636
    %v3638 = vsel %vm3626, %v3616, %v3619
    %v3639 = vsel %vm3629, %v3625, 1326507024
    %v3640 = vsel %vm3628, %v3622, %v3639
    %v3641 = vsel %vm3627, %v3638, %v3640
    %v3642 = vshll.u32 %v3602, 8
    %v3643 = vmul.u32.u64.compose %v3642, %v3641
    %v3644 = vextract.low.u32 %v3643
    %v3645 = vextract.high.u32 %v3643
    %v3646 = vmul.u32.u64.compose %v3642, %v3637
    %v3647 = vextract.low.u32 %v3646
    %v3648 = vextract.high.u32 %v3646
    %v3649 = vmul.u32 %v3642, %v3633
    %v3650 = vadd.s32 %v3645, %v3647
    %vm3651 = vc.u32 %v3645, %v3647
    %v3652 = vadd.s32 %v3648, 1
    %v3653 = vsel %vm3651, %v3652, %v3648
    %v3654 = vadd.s32 %v3649, %v3653
    %v3655 = vadd.s32 %v3654, 536870912
    %v3656 = vshrl.u32 %v3655, 30
    %v3657 = vshll.u32 %v3656, 30
    %v3658 = vsub.s32 %v3654, %v3657
    %vm3659 = vcmp.lt.s32.totalorder %v3658, 0
    %v3660 = vsub.s32 0, %v3658
    %v3661 = vsel %vm3659, %v3660, %v3658
    %v3662 = vclz %v3661
    %v3663 = vsub.s32 %v3662, 2
    %vm3664 = vcmp.gt.s32.totalorder 0, %v3663
    %v3665 = vsel %vm3664, 0, %v3663
    %v3666 = vsub.s32 32, %v3665
    %v3667 = vshll.u32 %v3658, %v3665
    %v3668 = vshrl.u32 %v3650, %v3666
    %v3669 = vor.u32 %v3667, %v3668
    %v3670 = vsub.s32 4294967266, %v3665
    %v3671 = vadd.s32 %v3670, 127
    %v3672 = vshll.u32 %v3671, 23
    %v3673 = vor.u32 4788187, %v3672
    %v3674 = vand.u32 2147483647, %v3673
    %v3676 = vcvt.s32.f32 %v3669
    %v3677 = vmul.f32 %v3676, %v3674
    %v3678 = vxor.u32 %v3677, 2147483648
    %v3679 = vsel %vm3596, %v3678, %v3677
    %v3680 = vsub.s32 4, %v3656
    %v3681 = vsel %vm3596, %v3680, %v3656
    %v3682 = vsel %vm3595, %v543, %v3679
    %v3683 = vsel %vm3595, 0, %v3681
    %v3684 = vcosq.f32.pop %v3682
    %v3685 = vsinq.f32.pop %v3682
    %vm3686 = vweird.f32 %v543
    %v3687 = vadd.s32 %v3683, 3
    %v3688 = vand.u32 %v3687, 3
    %vm3689 = vcmp.lt.s32.totalorder %v3688, 2
    %vm3690 = vcmp.eq.s32.totalorder %v3688, 0
    %v3691 = vxor.u32 %v3685, 2147483648
    %v3692 = vsel %vm3690, %v3684, %v3691
    %vm3693 = vcmp.eq.s32.totalorder %v3688, 2
    %v3694 = vxor.u32 %v3684, 2147483648
    %v3695 = vsel %vm3693, %v3694, %v3685
    %v3696 = vsel %vm3689, %v3692, %v3695
    %v3697 = vsel %vm3686, nan, %v3696
    %v3698 = vand.u32 2147483647, %v544
    %vm3699 = vcmp.le.f32.partialorder %v3698, 0.7853982
    %vm3700 = vcmp.lt.s32.totalorder %v544, 0
    %v3701 = vand.u32 %v544, 2139095040
    %v3702 = vshrl.u32 %v3701, 23
    %v3703 = vsub.s32 %v3702, 127
    %v3704 = vand.u32 2147483647, %v544
    %v3705 = vand.u32 %v3704, 8388607
    %v3706 = vor.u32 %v3705, 8388608
    %v3707 = vsub.s32 0, %v3706
    %v3708 = vadd.s32 %v3703, 1
    %vm3709 = vcmp.gt.s32.totalorder %v3708, 0
    %v3710 = vsel %vm3709, %v3708, 0
    %v3711 = vshrl.u32 %v3710, 5
    %v3712 = vand.u32 %v3710, 31
    %v3713 = vsub.s32 32, %v3712
    %v3714 = vshrl.u32 683565275, %v3713
    %v3715 = vshll.u32 683565275, %v3712
    %v3716 = vshrl.u32 2475754826, %v3713
    %v3717 = vor.u32 %v3715, %v3716
    %v3718 = vshll.u32 2475754826, %v3712
    %v3719 = vshrl.u32 2131351028, %v3713
    %v3720 = vor.u32 %v3718, %v3719
    %v3721 = vshll.u32 2131351028, %v3712
    %v3722 = vshrl.u32 2102212464, %v3713
    %v3723 = vor.u32 %v3721, %v3722
    %v3724 = vshll.u32 2102212464, %v3712
    %v3725 = vshrl.u32 920167782, %v3713
    %v3726 = vor.u32 %v3724, %v3725
    %v3727 = vshll.u32 920167782, %v3712
    %v3728 = vshrl.u32 1326507024, %v3713
    %v3729 = vor.u32 %v3727, %v3728
    %vm3730 = vcmp.lt.s32.totalorder %v3711, 1
    %vm3731 = vcmp.lt.s32.totalorder %v3711, 2
    %vm3732 = vcmp.lt.s32.totalorder %v3711, 3
    %vm3733 = vcmp.lt.s32.totalorder %v3711, 4
    %v3734 = vsel %vm3730, %v3714, %v3717
    %v3735 = vsel %vm3733, %v3723, 2102212464
    %v3736 = vsel %vm3732, %v3720, %v3735
    %v3737 = vsel %vm3731, %v3734, %v3736
    %v3738 = vsel %vm3730, %v3717, %v3720
    %v3739 = vsel %vm3733, %v3726, 920167782
    %v3740 = vsel %vm3732, %v3723, %v3739
    %v3741 = vsel %vm3731, %v3738, %v3740
    %v3742 = vsel %vm3730, %v3720, %v3723
    %v3743 = vsel %vm3733, %v3729, 1326507024
    %v3744 = vsel %vm3732, %v3726, %v3743
    %v3745 = vsel %vm3731, %v3742, %v3744
    %v3746 = vshll.u32 %v3706, 8
    %v3747 = vmul.u32.u64.compose %v3746, %v3745
    %v3748 = vextract.low.u32 %v3747
    %v3749 = vextract.high.u32 %v3747
    %v3750 = vmul.u32.u64.compose %v3746, %v3741
    %v3751 = vextract.low.u32 %v3750
    %v3752 = vextract.high.u32 %v3750
    %v3753 = vmul.u32 %v3746, %v3737
    %v3754 = vadd.s32 %v3749, %v3751
    %vm3755 = vc.u32 %v3749, %v3751
    %v3756 = vadd.s32 %v3752, 1
    %v3757 = vsel %vm3755, %v3756, %v3752
    %v3758 = vadd.s32 %v3753, %v3757
    %v3759 = vadd.s32 %v3758, 536870912
    %v3760 = vshrl.u32 %v3759, 30
    %v3761 = vshll.u32 %v3760, 30
    %v3762 = vsub.s32 %v3758, %v3761
    %vm3763 = vcmp.lt.s32.totalorder %v3762, 0
    %v3764 = vsub.s32 0, %v3762
    %v3765 = vsel %vm3763, %v3764, %v3762
    %v3766 = vclz %v3765
    %v3767 = vsub.s32 %v3766, 2
    %vm3768 = vcmp.gt.s32.totalorder 0, %v3767
    %v3769 = vsel %vm3768, 0, %v3767
    %v3770 = vsub.s32 32, %v3769
    %v3771 = vshll.u32 %v3762, %v3769
    %v3772 = vshrl.u32 %v3754, %v3770
    %v3773 = vor.u32 %v3771, %v3772
    %v3774 = vsub.s32 4294967266, %v3769
    %v3775 = vadd.s32 %v3774, 127
    %v3776 = vshll.u32 %v3775, 23
    %v3777 = vor.u32 4788187, %v3776
    %v3778 = vand.u32 2147483647, %v3777
    %v3780 = vcvt.s32.f32 %v3773
    %v3781 = vmul.f32 %v3780, %v3778
    %v3782 = vxor.u32 %v3781, 2147483648
    %v3783 = vsel %vm3700, %v3782, %v3781
    %v3784 = vsub.s32 4, %v3760
    %v3785 = vsel %vm3700, %v3784, %v3760
    %v3786 = vsel %vm3699, %v544, %v3783
    %v3787 = vsel %vm3699, 0, %v3785
    %v3788 = vcosq.f32.pop %v3786
    %v3789 = vsinq.f32.pop %v3786
    %vm3790 = vweird.f32 %v544
    %v3791 = vadd.s32 %v3787, 3
    %v3792 = vand.u32 %v3791, 3
    %vm3793 = vcmp.lt.s32.totalorder %v3792, 2
    %vm3794 = vcmp.eq.s32.totalorder %v3792, 0
    %v3795 = vxor.u32 %v3789, 2147483648
    %v3796 = vsel %vm3794, %v3788, %v3795
    %vm3797 = vcmp.eq.s32.totalorder %v3792, 2
    %v3798 = vxor.u32 %v3788, 2147483648
    %v3799 = vsel %vm3797, %v3798, %v3789
    %v3800 = vsel %vm3793, %v3796, %v3799
    %v3801 = vsel %vm3790, nan, %v3800
    %v3802 = vand.u32 2147483647, %v545
    %vm3803 = vcmp.le.f32.partialorder %v3802, 0.7853982
    %vm3804 = vcmp.lt.s32.totalorder %v545, 0
    %v3805 = vand.u32 %v545, 2139095040
    %v3806 = vshrl.u32 %v3805, 23
    %v3807 = vsub.s32 %v3806, 127
    %v3808 = vand.u32 2147483647, %v545
    %v3809 = vand.u32 %v3808, 8388607
    %v3810 = vor.u32 %v3809, 8388608
    %v3811 = vsub.s32 0, %v3810
    %v3812 = vadd.s32 %v3807, 1
    %vm3813 = vcmp.gt.s32.totalorder %v3812, 0
    %v3814 = vsel %vm3813, %v3812, 0
    %v3815 = vshrl.u32 %v3814, 5
    %v3816 = vand.u32 %v3814, 31
    %v3817 = vsub.s32 32, %v3816
    %v3818 = vshrl.u32 683565275, %v3817
    %v3819 = vshll.u32 683565275, %v3816
    %v3820 = vshrl.u32 2475754826, %v3817
    %v3821 = vor.u32 %v3819, %v3820
    %v3822 = vshll.u32 2475754826, %v3816
    %v3823 = vshrl.u32 2131351028, %v3817
    %v3824 = vor.u32 %v3822, %v3823
    %v3825 = vshll.u32 2131351028, %v3816
    %v3826 = vshrl.u32 2102212464, %v3817
    %v3827 = vor.u32 %v3825, %v3826
    %v3828 = vshll.u32 2102212464, %v3816
    %v3829 = vshrl.u32 920167782, %v3817
    %v3830 = vor.u32 %v3828, %v3829
    %v3831 = vshll.u32 920167782, %v3816
    %v3832 = vshrl.u32 1326507024, %v3817
    %v3833 = vor.u32 %v3831, %v3832
    %vm3834 = vcmp.lt.s32.totalorder %v3815, 1
    %vm3835 = vcmp.lt.s32.totalorder %v3815, 2
    %vm3836 = vcmp.lt.s32.totalorder %v3815, 3
    %vm3837 = vcmp.lt.s32.totalorder %v3815, 4
    %v3838 = vsel %vm3834, %v3818, %v3821
    %v3839 = vsel %vm3837, %v3827, 2102212464
    %v3840 = vsel %vm3836, %v3824, %v3839
    %v3841 = vsel %vm3835, %v3838, %v3840
    %v3842 = vsel %vm3834, %v3821, %v3824
    %v3843 = vsel %vm3837, %v3830, 920167782
    %v3844 = vsel %vm3836, %v3827, %v3843
    %v3845 = vsel %vm3835, %v3842, %v3844
    %v3846 = vsel %vm3834, %v3824, %v3827
    %v3847 = vsel %vm3837, %v3833, 1326507024
    %v3848 = vsel %vm3836, %v3830, %v3847
    %v3849 = vsel %vm3835, %v3846, %v3848
    %v3850 = vshll.u32 %v3810, 8
    %v3851 = vmul.u32.u64.compose %v3850, %v3849
    %v3852 = vextract.low.u32 %v3851
    %v3853 = vextract.high.u32 %v3851
    %v3854 = vmul.u32.u64.compose %v3850, %v3845
    %v3855 = vextract.low.u32 %v3854
    %v3856 = vextract.high.u32 %v3854
    %v3857 = vmul.u32 %v3850, %v3841
    %v3858 = vadd.s32 %v3853, %v3855
    %vm3859 = vc.u32 %v3853, %v3855
    %v3860 = vadd.s32 %v3856, 1
    %v3861 = vsel %vm3859, %v3860, %v3856
    %v3862 = vadd.s32 %v3857, %v3861
    %v3863 = vadd.s32 %v3862, 536870912
    %v3864 = vshrl.u32 %v3863, 30
    %v3865 = vshll.u32 %v3864, 30
    %v3866 = vsub.s32 %v3862, %v3865
    %vm3867 = vcmp.lt.s32.totalorder %v3866, 0
    %v3868 = vsub.s32 0, %v3866
    %v3869 = vsel %vm3867, %v3868, %v3866
    %v3870 = vclz %v3869
    %v3871 = vsub.s32 %v3870, 2
    %vm3872 = vcmp.gt.s32.totalorder 0, %v3871
    %v3873 = vsel %vm3872, 0, %v3871
    %v3874 = vsub.s32 32, %v3873
    %v3875 = vshll.u32 %v3866, %v3873
    %v3876 = vshrl.u32 %v3858, %v3874
    %v3877 = vor.u32 %v3875, %v3876
    %v3878 = vsub.s32 4294967266, %v3873
    %v3879 = vadd.s32 %v3878, 127
    %v3880 = vshll.u32 %v3879, 23
    %v3881 = vor.u32 4788187, %v3880
    %v3882 = vand.u32 2147483647, %v3881
    %v3884 = vcvt.s32.f32 %v3877
    %v3885 = vmul.f32 %v3884, %v3882
    %v3886 = vxor.u32 %v3885, 2147483648
    %v3887 = vsel %vm3804, %v3886, %v3885
    %v3888 = vsub.s32 4, %v3864
    %v3889 = vsel %vm3804, %v3888, %v3864
    %v3890 = vsel %vm3803, %v545, %v3887
    %v3891 = vsel %vm3803, 0, %v3889
    %v3892 = vcosq.f32.pop %v3890
    %v3893 = vsinq.f32.pop %v3890
    %vm3894 = vweird.f32 %v545
    %v3895 = vadd.s32 %v3891, 3
    %v3896 = vand.u32 %v3895, 3
    %vm3897 = vcmp.lt.s32.totalorder %v3896, 2
    %vm3898 = vcmp.eq.s32.totalorder %v3896, 0
    %v3899 = vxor.u32 %v3893, 2147483648
    %v3900 = vsel %vm3898, %v3892, %v3899
    %vm3901 = vcmp.eq.s32.totalorder %v3896, 2
    %v3902 = vxor.u32 %v3892, 2147483648
    %v3903 = vsel %vm3901, %v3902, %v3893
    %v3904 = vsel %vm3897, %v3900, %v3903
    %v3905 = vsel %vm3894, nan, %v3904
    %v3906 = vand.u32 2147483647, %v546
    %vm3907 = vcmp.le.f32.partialorder %v3906, 0.7853982
    %vm3908 = vcmp.lt.s32.totalorder %v546, 0
    %v3909 = vand.u32 %v546, 2139095040
    %v3910 = vshrl.u32 %v3909, 23
    %v3911 = vsub.s32 %v3910, 127
    %v3912 = vand.u32 2147483647, %v546
    %v3913 = vand.u32 %v3912, 8388607
    %v3914 = vor.u32 %v3913, 8388608
    %v3915 = vsub.s32 0, %v3914
    %v3916 = vadd.s32 %v3911, 1
    %vm3917 = vcmp.gt.s32.totalorder %v3916, 0
    %v3918 = vsel %vm3917, %v3916, 0
    %v3919 = vshrl.u32 %v3918, 5
    %v3920 = vand.u32 %v3918, 31
    %v3921 = vsub.s32 32, %v3920
    %v3922 = vshrl.u32 683565275, %v3921
    %v3923 = vshll.u32 683565275, %v3920
    %v3924 = vshrl.u32 2475754826, %v3921
    %v3925 = vor.u32 %v3923, %v3924
    %v3926 = vshll.u32 2475754826, %v3920
    %v3927 = vshrl.u32 2131351028, %v3921
    %v3928 = vor.u32 %v3926, %v3927
    %v3929 = vshll.u32 2131351028, %v3920
    %v3930 = vshrl.u32 2102212464, %v3921
    %v3931 = vor.u32 %v3929, %v3930
    %v3932 = vshll.u32 2102212464, %v3920
    %v3933 = vshrl.u32 920167782, %v3921
    %v3934 = vor.u32 %v3932, %v3933
    %v3935 = vshll.u32 920167782, %v3920
    %v3936 = vshrl.u32 1326507024, %v3921
    %v3937 = vor.u32 %v3935, %v3936
    %vm3938 = vcmp.lt.s32.totalorder %v3919, 1
    %vm3939 = vcmp.lt.s32.totalorder %v3919, 2
    %vm3940 = vcmp.lt.s32.totalorder %v3919, 3
    %vm3941 = vcmp.lt.s32.totalorder %v3919, 4
    %v3942 = vsel %vm3938, %v3922, %v3925
    %v3943 = vsel %vm3941, %v3931, 2102212464
    %v3944 = vsel %vm3940, %v3928, %v3943
    %v3945 = vsel %vm3939, %v3942, %v3944
    %v3946 = vsel %vm3938, %v3925, %v3928
    %v3947 = vsel %vm3941, %v3934, 920167782
    %v3948 = vsel %vm3940, %v3931, %v3947
    %v3949 = vsel %vm3939, %v3946, %v3948
    %v3950 = vsel %vm3938, %v3928, %v3931
    %v3951 = vsel %vm3941, %v3937, 1326507024
    %v3952 = vsel %vm3940, %v3934, %v3951
    %v3953 = vsel %vm3939, %v3950, %v3952
    %v3954 = vshll.u32 %v3914, 8
    %v3955 = vmul.u32.u64.compose %v3954, %v3953
    %v3956 = vextract.low.u32 %v3955
    %v3957 = vextract.high.u32 %v3955
    %v3958 = vmul.u32.u64.compose %v3954, %v3949
    %v3959 = vextract.low.u32 %v3958
    %v3960 = vextract.high.u32 %v3958
    %v3961 = vmul.u32 %v3954, %v3945
    %v3962 = vadd.s32 %v3957, %v3959
    %vm3963 = vc.u32 %v3957, %v3959
    %v3964 = vadd.s32 %v3960, 1
    %v3965 = vsel %vm3963, %v3964, %v3960
    %v3966 = vadd.s32 %v3961, %v3965
    %v3967 = vadd.s32 %v3966, 536870912
    %v3968 = vshrl.u32 %v3967, 30
    %v3969 = vshll.u32 %v3968, 30
    %v3970 = vsub.s32 %v3966, %v3969
    %vm3971 = vcmp.lt.s32.totalorder %v3970, 0
    %v3972 = vsub.s32 0, %v3970
    %v3973 = vsel %vm3971, %v3972, %v3970
    %v3974 = vclz %v3973
    %v3975 = vsub.s32 %v3974, 2
    %vm3976 = vcmp.gt.s32.totalorder 0, %v3975
    %v3977 = vsel %vm3976, 0, %v3975
    %v3978 = vsub.s32 32, %v3977
    %v3979 = vshll.u32 %v3970, %v3977
    %v3980 = vshrl.u32 %v3962, %v3978
    %v3981 = vor.u32 %v3979, %v3980
    %v3982 = vsub.s32 4294967266, %v3977
    %v3983 = vadd.s32 %v3982, 127
    %v3984 = vshll.u32 %v3983, 23
    %v3985 = vor.u32 4788187, %v3984
    %v3986 = vand.u32 2147483647, %v3985
    %v3988 = vcvt.s32.f32 %v3981
    %v3989 = vmul.f32 %v3988, %v3986
    %v3990 = vxor.u32 %v3989, 2147483648
    %v3991 = vsel %vm3908, %v3990, %v3989
    %v3992 = vsub.s32 4, %v3968
    %v3993 = vsel %vm3908, %v3992, %v3968
    %v3994 = vsel %vm3907, %v546, %v3991
    %v3995 = vsel %vm3907, 0, %v3993
    %v3996 = vcosq.f32.pop %v3994
    %v3997 = vsinq.f32.pop %v3994
    %vm3998 = vweird.f32 %v546
    %v3999 = vadd.s32 %v3995, 3
    %v4000 = vand.u32 %v3999, 3
    %vm4001 = vcmp.lt.s32.totalorder %v4000, 2
    %vm4002 = vcmp.eq.s32.totalorder %v4000, 0
    %v4003 = vxor.u32 %v3997, 2147483648
    %v4004 = vsel %vm4002, %v3996, %v4003
    %vm4005 = vcmp.eq.s32.totalorder %v4000, 2
    %v4006 = vxor.u32 %v3996, 2147483648
    %v4007 = vsel %vm4005, %v4006, %v3997
    %v4008 = vsel %vm4001, %v4004, %v4007
    %v4009 = vsel %vm3998, nan, %v4008
    %v4010 = vand.u32 2147483647, %v547
    %vm4011 = vcmp.le.f32.partialorder %v4010, 0.7853982
    %vm4012 = vcmp.lt.s32.totalorder %v547, 0
    %v4013 = vand.u32 %v547, 2139095040
    %v4014 = vshrl.u32 %v4013, 23
    %v4015 = vsub.s32 %v4014, 127
    %v4016 = vand.u32 2147483647, %v547
    %v4017 = vand.u32 %v4016, 8388607
    %v4018 = vor.u32 %v4017, 8388608
    %v4019 = vsub.s32 0, %v4018
    %v4020 = vadd.s32 %v4015, 1
    %vm4021 = vcmp.gt.s32.totalorder %v4020, 0
    %v4022 = vsel %vm4021, %v4020, 0
    %v4023 = vshrl.u32 %v4022, 5
    %v4024 = vand.u32 %v4022, 31
    %v4025 = vsub.s32 32, %v4024
    %v4026 = vshrl.u32 683565275, %v4025
    %v4027 = vshll.u32 683565275, %v4024
    %v4028 = vshrl.u32 2475754826, %v4025
    %v4029 = vor.u32 %v4027, %v4028
    %v4030 = vshll.u32 2475754826, %v4024
    %v4031 = vshrl.u32 2131351028, %v4025
    %v4032 = vor.u32 %v4030, %v4031
    %v4033 = vshll.u32 2131351028, %v4024
    %v4034 = vshrl.u32 2102212464, %v4025
    %v4035 = vor.u32 %v4033, %v4034
    %v4036 = vshll.u32 2102212464, %v4024
    %v4037 = vshrl.u32 920167782, %v4025
    %v4038 = vor.u32 %v4036, %v4037
    %v4039 = vshll.u32 920167782, %v4024
    %v4040 = vshrl.u32 1326507024, %v4025
    %v4041 = vor.u32 %v4039, %v4040
    %vm4042 = vcmp.lt.s32.totalorder %v4023, 1
    %vm4043 = vcmp.lt.s32.totalorder %v4023, 2
    %vm4044 = vcmp.lt.s32.totalorder %v4023, 3
    %vm4045 = vcmp.lt.s32.totalorder %v4023, 4
    %v4046 = vsel %vm4042, %v4026, %v4029
    %v4047 = vsel %vm4045, %v4035, 2102212464
    %v4048 = vsel %vm4044, %v4032, %v4047
    %v4049 = vsel %vm4043, %v4046, %v4048
    %v4050 = vsel %vm4042, %v4029, %v4032
    %v4051 = vsel %vm4045, %v4038, 920167782
    %v4052 = vsel %vm4044, %v4035, %v4051
    %v4053 = vsel %vm4043, %v4050, %v4052
    %v4054 = vsel %vm4042, %v4032, %v4035
    %v4055 = vsel %vm4045, %v4041, 1326507024
    %v4056 = vsel %vm4044, %v4038, %v4055
    %v4057 = vsel %vm4043, %v4054, %v4056
    %v4058 = vshll.u32 %v4018, 8
    %v4059 = vmul.u32.u64.compose %v4058, %v4057
    %v4060 = vextract.low.u32 %v4059
    %v4061 = vextract.high.u32 %v4059
    %v4062 = vmul.u32.u64.compose %v4058, %v4053
    %v4063 = vextract.low.u32 %v4062
    %v4064 = vextract.high.u32 %v4062
    %v4065 = vmul.u32 %v4058, %v4049
    %v4066 = vadd.s32 %v4061, %v4063
    %vm4067 = vc.u32 %v4061, %v4063
    %v4068 = vadd.s32 %v4064, 1
    %v4069 = vsel %vm4067, %v4068, %v4064
    %v4070 = vadd.s32 %v4065, %v4069
    %v4071 = vadd.s32 %v4070, 536870912
    %v4072 = vshrl.u32 %v4071, 30
    %v4073 = vshll.u32 %v4072, 30
    %v4074 = vsub.s32 %v4070, %v4073
    %vm4075 = vcmp.lt.s32.totalorder %v4074, 0
    %v4076 = vsub.s32 0, %v4074
    %v4077 = vsel %vm4075, %v4076, %v4074
    %v4078 = vclz %v4077
    %v4079 = vsub.s32 %v4078, 2
    %vm4080 = vcmp.gt.s32.totalorder 0, %v4079
    %v4081 = vsel %vm4080, 0, %v4079
    %v4082 = vsub.s32 32, %v4081
    %v4083 = vshll.u32 %v4074, %v4081
    %v4084 = vshrl.u32 %v4066, %v4082
    %v4085 = vor.u32 %v4083, %v4084
    %v4086 = vsub.s32 4294967266, %v4081
    %v4087 = vadd.s32 %v4086, 127
    %v4088 = vshll.u32 %v4087, 23
    %v4089 = vor.u32 4788187, %v4088
    %v4090 = vand.u32 2147483647, %v4089
    %v4092 = vcvt.s32.f32 %v4085
    %v4093 = vmul.f32 %v4092, %v4090
    %v4094 = vxor.u32 %v4093, 2147483648
    %v4095 = vsel %vm4012, %v4094, %v4093
    %v4096 = vsub.s32 4, %v4072
    %v4097 = vsel %vm4012, %v4096, %v4072
    %v4098 = vsel %vm4011, %v547, %v4095
    %v4099 = vsel %vm4011, 0, %v4097
    %v4100 = vcosq.f32.pop %v4098
    %v4101 = vsinq.f32.pop %v4098
    %vm4102 = vweird.f32 %v547
    %v4103 = vadd.s32 %v4099, 3
    %v4104 = vand.u32 %v4103, 3
    %vm4105 = vcmp.lt.s32.totalorder %v4104, 2
    %vm4106 = vcmp.eq.s32.totalorder %v4104, 0
    %v4107 = vxor.u32 %v4101, 2147483648
    %v4108 = vsel %vm4106, %v4100, %v4107
    %vm4109 = vcmp.eq.s32.totalorder %v4104, 2
    %v4110 = vxor.u32 %v4100, 2147483648
    %v4111 = vsel %vm4109, %v4110, %v4101
    %v4112 = vsel %vm4105, %v4108, %v4111
    %v4113 = vsel %vm4102, nan, %v4112
    %v4114 = vand.u32 2147483647, %v548
    %vm4115 = vcmp.le.f32.partialorder %v4114, 0.7853982
    %vm4116 = vcmp.lt.s32.totalorder %v548, 0
    %v4117 = vand.u32 %v548, 2139095040
    %v4118 = vshrl.u32 %v4117, 23
    %v4119 = vsub.s32 %v4118, 127
    %v4120 = vand.u32 2147483647, %v548
    %v4121 = vand.u32 %v4120, 8388607
    %v4122 = vor.u32 %v4121, 8388608
    %v4123 = vsub.s32 0, %v4122
    %v4124 = vadd.s32 %v4119, 1
    %vm4125 = vcmp.gt.s32.totalorder %v4124, 0
    %v4126 = vsel %vm4125, %v4124, 0
    %v4127 = vshrl.u32 %v4126, 5
    %v4128 = vand.u32 %v4126, 31
    %v4129 = vsub.s32 32, %v4128
    %v4130 = vshrl.u32 683565275, %v4129
    %v4131 = vshll.u32 683565275, %v4128
    %v4132 = vshrl.u32 2475754826, %v4129
    %v4133 = vor.u32 %v4131, %v4132
    %v4134 = vshll.u32 2475754826, %v4128
    %v4135 = vshrl.u32 2131351028, %v4129
    %v4136 = vor.u32 %v4134, %v4135
    %v4137 = vshll.u32 2131351028, %v4128
    %v4138 = vshrl.u32 2102212464, %v4129
    %v4139 = vor.u32 %v4137, %v4138
    %v4140 = vshll.u32 2102212464, %v4128
    %v4141 = vshrl.u32 920167782, %v4129
    %v4142 = vor.u32 %v4140, %v4141
    %v4143 = vshll.u32 920167782, %v4128
    %v4144 = vshrl.u32 1326507024, %v4129
    %v4145 = vor.u32 %v4143, %v4144
    %vm4146 = vcmp.lt.s32.totalorder %v4127, 1
    %vm4147 = vcmp.lt.s32.totalorder %v4127, 2
    %vm4148 = vcmp.lt.s32.totalorder %v4127, 3
    %vm4149 = vcmp.lt.s32.totalorder %v4127, 4
    %v4150 = vsel %vm4146, %v4130, %v4133
    %v4151 = vsel %vm4149, %v4139, 2102212464
    %v4152 = vsel %vm4148, %v4136, %v4151
    %v4153 = vsel %vm4147, %v4150, %v4152
    %v4154 = vsel %vm4146, %v4133, %v4136
    %v4155 = vsel %vm4149, %v4142, 920167782
    %v4156 = vsel %vm4148, %v4139, %v4155
    %v4157 = vsel %vm4147, %v4154, %v4156
    %v4158 = vsel %vm4146, %v4136, %v4139
    %v4159 = vsel %vm4149, %v4145, 1326507024
    %v4160 = vsel %vm4148, %v4142, %v4159
    %v4161 = vsel %vm4147, %v4158, %v4160
    %v4162 = vshll.u32 %v4122, 8
    %v4163 = vmul.u32.u64.compose %v4162, %v4161
    %v4164 = vextract.low.u32 %v4163
    %v4165 = vextract.high.u32 %v4163
    %v4166 = vmul.u32.u64.compose %v4162, %v4157
    %v4167 = vextract.low.u32 %v4166
    %v4168 = vextract.high.u32 %v4166
    %v4169 = vmul.u32 %v4162, %v4153
    %v4170 = vadd.s32 %v4165, %v4167
    %vm4171 = vc.u32 %v4165, %v4167
    %v4172 = vadd.s32 %v4168, 1
    %v4173 = vsel %vm4171, %v4172, %v4168
    %v4174 = vadd.s32 %v4169, %v4173
    %v4175 = vadd.s32 %v4174, 536870912
    %v4176 = vshrl.u32 %v4175, 30
    %v4177 = vshll.u32 %v4176, 30
    %v4178 = vsub.s32 %v4174, %v4177
    %vm4179 = vcmp.lt.s32.totalorder %v4178, 0
    %v4180 = vsub.s32 0, %v4178
    %v4181 = vsel %vm4179, %v4180, %v4178
    %v4182 = vclz %v4181
    %v4183 = vsub.s32 %v4182, 2
    %vm4184 = vcmp.gt.s32.totalorder 0, %v4183
    %v4185 = vsel %vm4184, 0, %v4183
    %v4186 = vsub.s32 32, %v4185
    %v4187 = vshll.u32 %v4178, %v4185
    %v4188 = vshrl.u32 %v4170, %v4186
    %v4189 = vor.u32 %v4187, %v4188
    %v4190 = vsub.s32 4294967266, %v4185
    %v4191 = vadd.s32 %v4190, 127
    %v4192 = vshll.u32 %v4191, 23
    %v4193 = vor.u32 4788187, %v4192
    %v4194 = vand.u32 2147483647, %v4193
    %v4196 = vcvt.s32.f32 %v4189
    %v4197 = vmul.f32 %v4196, %v4194
    %v4198 = vxor.u32 %v4197, 2147483648
    %v4199 = vsel %vm4116, %v4198, %v4197
    %v4200 = vsub.s32 4, %v4176
    %v4201 = vsel %vm4116, %v4200, %v4176
    %v4202 = vsel %vm4115, %v548, %v4199
    %v4203 = vsel %vm4115, 0, %v4201
    %v4204 = vcosq.f32.pop %v4202
    %v4205 = vsinq.f32.pop %v4202
    %vm4206 = vweird.f32 %v548
    %v4207 = vadd.s32 %v4203, 3
    %v4208 = vand.u32 %v4207, 3
    %vm4209 = vcmp.lt.s32.totalorder %v4208, 2
    %vm4210 = vcmp.eq.s32.totalorder %v4208, 0
    %v4211 = vxor.u32 %v4205, 2147483648
    %v4212 = vsel %vm4210, %v4204, %v4211
    %vm4213 = vcmp.eq.s32.totalorder %v4208, 2
    %v4214 = vxor.u32 %v4204, 2147483648
    %v4215 = vsel %vm4213, %v4214, %v4205
    %v4216 = vsel %vm4209, %v4212, %v4215
    %v4217 = vsel %vm4206, nan, %v4216
    %v4218 = vand.u32 2147483647, %v549
    %vm4219 = vcmp.le.f32.partialorder %v4218, 0.7853982
    %vm4220 = vcmp.lt.s32.totalorder %v549, 0
    %v4221 = vand.u32 %v549, 2139095040
    %v4222 = vshrl.u32 %v4221, 23
    %v4223 = vsub.s32 %v4222, 127
    %v4224 = vand.u32 2147483647, %v549
    %v4225 = vand.u32 %v4224, 8388607
    %v4226 = vor.u32 %v4225, 8388608
    %v4227 = vsub.s32 0, %v4226
    %v4228 = vadd.s32 %v4223, 1
    %vm4229 = vcmp.gt.s32.totalorder %v4228, 0
    %v4230 = vsel %vm4229, %v4228, 0
    %v4231 = vshrl.u32 %v4230, 5
    %v4232 = vand.u32 %v4230, 31
    %v4233 = vsub.s32 32, %v4232
    %v4234 = vshrl.u32 683565275, %v4233
    %v4235 = vshll.u32 683565275, %v4232
    %v4236 = vshrl.u32 2475754826, %v4233
    %v4237 = vor.u32 %v4235, %v4236
    %v4238 = vshll.u32 2475754826, %v4232
    %v4239 = vshrl.u32 2131351028, %v4233
    %v4240 = vor.u32 %v4238, %v4239
    %v4241 = vshll.u32 2131351028, %v4232
    %v4242 = vshrl.u32 2102212464, %v4233
    %v4243 = vor.u32 %v4241, %v4242
    %v4244 = vshll.u32 2102212464, %v4232
    %v4245 = vshrl.u32 920167782, %v4233
    %v4246 = vor.u32 %v4244, %v4245
    %v4247 = vshll.u32 920167782, %v4232
    %v4248 = vshrl.u32 1326507024, %v4233
    %v4249 = vor.u32 %v4247, %v4248
    %vm4250 = vcmp.lt.s32.totalorder %v4231, 1
    %vm4251 = vcmp.lt.s32.totalorder %v4231, 2
    %vm4252 = vcmp.lt.s32.totalorder %v4231, 3
    %vm4253 = vcmp.lt.s32.totalorder %v4231, 4
    %v4254 = vsel %vm4250, %v4234, %v4237
    %v4255 = vsel %vm4253, %v4243, 2102212464
    %v4256 = vsel %vm4252, %v4240, %v4255
    %v4257 = vsel %vm4251, %v4254, %v4256
    %v4258 = vsel %vm4250, %v4237, %v4240
    %v4259 = vsel %vm4253, %v4246, 920167782
    %v4260 = vsel %vm4252, %v4243, %v4259
    %v4261 = vsel %vm4251, %v4258, %v4260
    %v4262 = vsel %vm4250, %v4240, %v4243
    %v4263 = vsel %vm4253, %v4249, 1326507024
    %v4264 = vsel %vm4252, %v4246, %v4263
    %v4265 = vsel %vm4251, %v4262, %v4264
    %v4266 = vshll.u32 %v4226, 8
    %v4267 = vmul.u32.u64.compose %v4266, %v4265
    %v4268 = vextract.low.u32 %v4267
    %v4269 = vextract.high.u32 %v4267
    %v4270 = vmul.u32.u64.compose %v4266, %v4261
    %v4271 = vextract.low.u32 %v4270
    %v4272 = vextract.high.u32 %v4270
    %v4273 = vmul.u32 %v4266, %v4257
    %v4274 = vadd.s32 %v4269, %v4271
    %vm4275 = vc.u32 %v4269, %v4271
    %v4276 = vadd.s32 %v4272, 1
    %v4277 = vsel %vm4275, %v4276, %v4272
    %v4278 = vadd.s32 %v4273, %v4277
    %v4279 = vadd.s32 %v4278, 536870912
    %v4280 = vshrl.u32 %v4279, 30
    %v4281 = vshll.u32 %v4280, 30
    %v4282 = vsub.s32 %v4278, %v4281
    %vm4283 = vcmp.lt.s32.totalorder %v4282, 0
    %v4284 = vsub.s32 0, %v4282
    %v4285 = vsel %vm4283, %v4284, %v4282
    %v4286 = vclz %v4285
    %v4287 = vsub.s32 %v4286, 2
    %vm4288 = vcmp.gt.s32.totalorder 0, %v4287
    %v4289 = vsel %vm4288, 0, %v4287
    %v4290 = vsub.s32 32, %v4289
    %v4291 = vshll.u32 %v4282, %v4289
    %v4292 = vshrl.u32 %v4274, %v4290
    %v4293 = vor.u32 %v4291, %v4292
    %v4294 = vsub.s32 4294967266, %v4289
    %v4295 = vadd.s32 %v4294, 127
    %v4296 = vshll.u32 %v4295, 23
    %v4297 = vor.u32 4788187, %v4296
    %v4298 = vand.u32 2147483647, %v4297
    %v4300 = vcvt.s32.f32 %v4293
    %v4301 = vmul.f32 %v4300, %v4298
    %v4302 = vxor.u32 %v4301, 2147483648
    %v4303 = vsel %vm4220, %v4302, %v4301
    %v4304 = vsub.s32 4, %v4280
    %v4305 = vsel %vm4220, %v4304, %v4280
    %v4306 = vsel %vm4219, %v549, %v4303
    %v4307 = vsel %vm4219, 0, %v4305
    %v4308 = vcosq.f32.pop %v4306
    %v4309 = vsinq.f32.pop %v4306
    %vm4310 = vweird.f32 %v549
    %v4311 = vadd.s32 %v4307, 3
    %v4312 = vand.u32 %v4311, 3
    %vm4313 = vcmp.lt.s32.totalorder %v4312, 2
    %vm4314 = vcmp.eq.s32.totalorder %v4312, 0
    %v4315 = vxor.u32 %v4309, 2147483648
    %v4316 = vsel %vm4314, %v4308, %v4315
    %vm4317 = vcmp.eq.s32.totalorder %v4312, 2
    %v4318 = vxor.u32 %v4308, 2147483648
    %v4319 = vsel %vm4317, %v4318, %v4309
    %v4320 = vsel %vm4313, %v4316, %v4319
    %v4321 = vsel %vm4310, nan, %v4320
    %v4322 = vand.u32 2147483647, %v550
    %vm4323 = vcmp.le.f32.partialorder %v4322, 0.7853982
    %vm4324 = vcmp.lt.s32.totalorder %v550, 0
    %v4325 = vand.u32 %v550, 2139095040
    %v4326 = vshrl.u32 %v4325, 23
    %v4327 = vsub.s32 %v4326, 127
    %v4328 = vand.u32 2147483647, %v550
    %v4329 = vand.u32 %v4328, 8388607
    %v4330 = vor.u32 %v4329, 8388608
    %v4331 = vsub.s32 0, %v4330
    %v4332 = vadd.s32 %v4327, 1
    %vm4333 = vcmp.gt.s32.totalorder %v4332, 0
    %v4334 = vsel %vm4333, %v4332, 0
    %v4335 = vshrl.u32 %v4334, 5
    %v4336 = vand.u32 %v4334, 31
    %v4337 = vsub.s32 32, %v4336
    %v4338 = vshrl.u32 683565275, %v4337
    %v4339 = vshll.u32 683565275, %v4336
    %v4340 = vshrl.u32 2475754826, %v4337
    %v4341 = vor.u32 %v4339, %v4340
    %v4342 = vshll.u32 2475754826, %v4336
    %v4343 = vshrl.u32 2131351028, %v4337
    %v4344 = vor.u32 %v4342, %v4343
    %v4345 = vshll.u32 2131351028, %v4336
    %v4346 = vshrl.u32 2102212464, %v4337
    %v4347 = vor.u32 %v4345, %v4346
    %v4348 = vshll.u32 2102212464, %v4336
    %v4349 = vshrl.u32 920167782, %v4337
    %v4350 = vor.u32 %v4348, %v4349
    %v4351 = vshll.u32 920167782, %v4336
    %v4352 = vshrl.u32 1326507024, %v4337
    %v4353 = vor.u32 %v4351, %v4352
    %vm4354 = vcmp.lt.s32.totalorder %v4335, 1
    %vm4355 = vcmp.lt.s32.totalorder %v4335, 2
    %vm4356 = vcmp.lt.s32.totalorder %v4335, 3
    %vm4357 = vcmp.lt.s32.totalorder %v4335, 4
    %v4358 = vsel %vm4354, %v4338, %v4341
    %v4359 = vsel %vm4357, %v4347, 2102212464
    %v4360 = vsel %vm4356, %v4344, %v4359
    %v4361 = vsel %vm4355, %v4358, %v4360
    %v4362 = vsel %vm4354, %v4341, %v4344
    %v4363 = vsel %vm4357, %v4350, 920167782
    %v4364 = vsel %vm4356, %v4347, %v4363
    %v4365 = vsel %vm4355, %v4362, %v4364
    %v4366 = vsel %vm4354, %v4344, %v4347
    %v4367 = vsel %vm4357, %v4353, 1326507024
    %v4368 = vsel %vm4356, %v4350, %v4367
    %v4369 = vsel %vm4355, %v4366, %v4368
    %v4370 = vshll.u32 %v4330, 8
    %v4371 = vmul.u32.u64.compose %v4370, %v4369
    %v4372 = vextract.low.u32 %v4371
    %v4373 = vextract.high.u32 %v4371
    %v4374 = vmul.u32.u64.compose %v4370, %v4365
    %v4375 = vextract.low.u32 %v4374
    %v4376 = vextract.high.u32 %v4374
    %v4377 = vmul.u32 %v4370, %v4361
    %v4378 = vadd.s32 %v4373, %v4375
    %vm4379 = vc.u32 %v4373, %v4375
    %v4380 = vadd.s32 %v4376, 1
    %v4381 = vsel %vm4379, %v4380, %v4376
    %v4382 = vadd.s32 %v4377, %v4381
    %v4383 = vadd.s32 %v4382, 536870912
    %v4384 = vshrl.u32 %v4383, 30
    %v4385 = vshll.u32 %v4384, 30
    %v4386 = vsub.s32 %v4382, %v4385
    %vm4387 = vcmp.lt.s32.totalorder %v4386, 0
    %v4388 = vsub.s32 0, %v4386
    %v4389 = vsel %vm4387, %v4388, %v4386
    %v4390 = vclz %v4389
    %v4391 = vsub.s32 %v4390, 2
    %vm4392 = vcmp.gt.s32.totalorder 0, %v4391
    %v4393 = vsel %vm4392, 0, %v4391
    %v4394 = vsub.s32 32, %v4393
    %v4395 = vshll.u32 %v4386, %v4393
    %v4396 = vshrl.u32 %v4378, %v4394
    %v4397 = vor.u32 %v4395, %v4396
    %v4398 = vsub.s32 4294967266, %v4393
    %v4399 = vadd.s32 %v4398, 127
    %v4400 = vshll.u32 %v4399, 23
    %v4401 = vor.u32 4788187, %v4400
    %v4402 = vand.u32 2147483647, %v4401
    %v4404 = vcvt.s32.f32 %v4397
    %v4405 = vmul.f32 %v4404, %v4402
    %v4406 = vxor.u32 %v4405, 2147483648
    %v4407 = vsel %vm4324, %v4406, %v4405
    %v4408 = vsub.s32 4, %v4384
    %v4409 = vsel %vm4324, %v4408, %v4384
    %v4410 = vsel %vm4323, %v550, %v4407
    %v4411 = vsel %vm4323, 0, %v4409
    %v4412 = vcosq.f32.pop %v4410
    %v4413 = vsinq.f32.pop %v4410
    %vm4414 = vweird.f32 %v550
    %v4415 = vadd.s32 %v4411, 3
    %v4416 = vand.u32 %v4415, 3
    %vm4417 = vcmp.lt.s32.totalorder %v4416, 2
    %vm4418 = vcmp.eq.s32.totalorder %v4416, 0
    %v4419 = vxor.u32 %v4413, 2147483648
    %v4420 = vsel %vm4418, %v4412, %v4419
    %vm4421 = vcmp.eq.s32.totalorder %v4416, 2
    %v4422 = vxor.u32 %v4412, 2147483648
    %v4423 = vsel %vm4421, %v4422, %v4413
    %v4424 = vsel %vm4417, %v4420, %v4423
    %v4425 = vsel %vm4414, nan, %v4424
    %v4426 = vand.u32 2147483647, %v551
    %vm4427 = vcmp.le.f32.partialorder %v4426, 0.7853982
    %vm4428 = vcmp.lt.s32.totalorder %v551, 0
    %v4429 = vand.u32 %v551, 2139095040
    %v4430 = vshrl.u32 %v4429, 23
    %v4431 = vsub.s32 %v4430, 127
    %v4432 = vand.u32 2147483647, %v551
    %v4433 = vand.u32 %v4432, 8388607
    %v4434 = vor.u32 %v4433, 8388608
    %v4435 = vsub.s32 0, %v4434
    %v4436 = vadd.s32 %v4431, 1
    %vm4437 = vcmp.gt.s32.totalorder %v4436, 0
    %v4438 = vsel %vm4437, %v4436, 0
    %v4439 = vshrl.u32 %v4438, 5
    %v4440 = vand.u32 %v4438, 31
    %v4441 = vsub.s32 32, %v4440
    %v4442 = vshrl.u32 683565275, %v4441
    %v4443 = vshll.u32 683565275, %v4440
    %v4444 = vshrl.u32 2475754826, %v4441
    %v4445 = vor.u32 %v4443, %v4444
    %v4446 = vshll.u32 2475754826, %v4440
    %v4447 = vshrl.u32 2131351028, %v4441
    %v4448 = vor.u32 %v4446, %v4447
    %v4449 = vshll.u32 2131351028, %v4440
    %v4450 = vshrl.u32 2102212464, %v4441
    %v4451 = vor.u32 %v4449, %v4450
    %v4452 = vshll.u32 2102212464, %v4440
    %v4453 = vshrl.u32 920167782, %v4441
    %v4454 = vor.u32 %v4452, %v4453
    %v4455 = vshll.u32 920167782, %v4440
    %v4456 = vshrl.u32 1326507024, %v4441
    %v4457 = vor.u32 %v4455, %v4456
    %vm4458 = vcmp.lt.s32.totalorder %v4439, 1
    %vm4459 = vcmp.lt.s32.totalorder %v4439, 2
    %vm4460 = vcmp.lt.s32.totalorder %v4439, 3
    %vm4461 = vcmp.lt.s32.totalorder %v4439, 4
    %v4462 = vsel %vm4458, %v4442, %v4445
    %v4463 = vsel %vm4461, %v4451, 2102212464
    %v4464 = vsel %vm4460, %v4448, %v4463
    %v4465 = vsel %vm4459, %v4462, %v4464
    %v4466 = vsel %vm4458, %v4445, %v4448
    %v4467 = vsel %vm4461, %v4454, 920167782
    %v4468 = vsel %vm4460, %v4451, %v4467
    %v4469 = vsel %vm4459, %v4466, %v4468
    %v4470 = vsel %vm4458, %v4448, %v4451
    %v4471 = vsel %vm4461, %v4457, 1326507024
    %v4472 = vsel %vm4460, %v4454, %v4471
    %v4473 = vsel %vm4459, %v4470, %v4472
    %v4474 = vshll.u32 %v4434, 8
    %v4475 = vmul.u32.u64.compose %v4474, %v4473
    %v4476 = vextract.low.u32 %v4475
    %v4477 = vextract.high.u32 %v4475
    %v4478 = vmul.u32.u64.compose %v4474, %v4469
    %v4479 = vextract.low.u32 %v4478
    %v4480 = vextract.high.u32 %v4478
    %v4481 = vmul.u32 %v4474, %v4465
    %v4482 = vadd.s32 %v4477, %v4479
    %vm4483 = vc.u32 %v4477, %v4479
    %v4484 = vadd.s32 %v4480, 1
    %v4485 = vsel %vm4483, %v4484, %v4480
    %v4486 = vadd.s32 %v4481, %v4485
    %v4487 = vadd.s32 %v4486, 536870912
    %v4488 = vshrl.u32 %v4487, 30
    %v4489 = vshll.u32 %v4488, 30
    %v4490 = vsub.s32 %v4486, %v4489
    %vm4491 = vcmp.lt.s32.totalorder %v4490, 0
    %v4492 = vsub.s32 0, %v4490
    %v4493 = vsel %vm4491, %v4492, %v4490
    %v4494 = vclz %v4493
    %v4495 = vsub.s32 %v4494, 2
    %vm4496 = vcmp.gt.s32.totalorder 0, %v4495
    %v4497 = vsel %vm4496, 0, %v4495
    %v4498 = vsub.s32 32, %v4497
    %v4499 = vshll.u32 %v4490, %v4497
    %v4500 = vshrl.u32 %v4482, %v4498
    %v4501 = vor.u32 %v4499, %v4500
    %v4502 = vsub.s32 4294967266, %v4497
    %v4503 = vadd.s32 %v4502, 127
    %v4504 = vshll.u32 %v4503, 23
    %v4505 = vor.u32 4788187, %v4504
    %v4506 = vand.u32 2147483647, %v4505
    %v4508 = vcvt.s32.f32 %v4501
    %v4509 = vmul.f32 %v4508, %v4506
    %v4510 = vxor.u32 %v4509, 2147483648
    %v4511 = vsel %vm4428, %v4510, %v4509
    %v4512 = vsub.s32 4, %v4488
    %v4513 = vsel %vm4428, %v4512, %v4488
    %v4514 = vsel %vm4427, %v551, %v4511
    %v4515 = vsel %vm4427, 0, %v4513
    %v4516 = vcosq.f32.pop %v4514
    %v4517 = vsinq.f32.pop %v4514
    %vm4518 = vweird.f32 %v551
    %v4519 = vadd.s32 %v4515, 3
    %v4520 = vand.u32 %v4519, 3
    %vm4521 = vcmp.lt.s32.totalorder %v4520, 2
    %vm4522 = vcmp.eq.s32.totalorder %v4520, 0
    %v4523 = vxor.u32 %v4517, 2147483648
    %v4524 = vsel %vm4522, %v4516, %v4523
    %vm4525 = vcmp.eq.s32.totalorder %v4520, 2
    %v4526 = vxor.u32 %v4516, 2147483648
    %v4527 = vsel %vm4525, %v4526, %v4517
    %v4528 = vsel %vm4521, %v4524, %v4527
    %v4529 = vsel %vm4518, nan, %v4528
    %v4530 = vand.u32 2147483647, %v552
    %vm4531 = vcmp.le.f32.partialorder %v4530, 0.7853982
    %vm4532 = vcmp.lt.s32.totalorder %v552, 0
    %v4533 = vand.u32 %v552, 2139095040
    %v4534 = vshrl.u32 %v4533, 23
    %v4535 = vsub.s32 %v4534, 127
    %v4536 = vand.u32 2147483647, %v552
    %v4537 = vand.u32 %v4536, 8388607
    %v4538 = vor.u32 %v4537, 8388608
    %v4539 = vsub.s32 0, %v4538
    %v4540 = vadd.s32 %v4535, 1
    %vm4541 = vcmp.gt.s32.totalorder %v4540, 0
    %v4542 = vsel %vm4541, %v4540, 0
    %v4543 = vshrl.u32 %v4542, 5
    %v4544 = vand.u32 %v4542, 31
    %v4545 = vsub.s32 32, %v4544
    %v4546 = vshrl.u32 683565275, %v4545
    %v4547 = vshll.u32 683565275, %v4544
    %v4548 = vshrl.u32 2475754826, %v4545
    %v4549 = vor.u32 %v4547, %v4548
    %v4550 = vshll.u32 2475754826, %v4544
    %v4551 = vshrl.u32 2131351028, %v4545
    %v4552 = vor.u32 %v4550, %v4551
    %v4553 = vshll.u32 2131351028, %v4544
    %v4554 = vshrl.u32 2102212464, %v4545
    %v4555 = vor.u32 %v4553, %v4554
    %v4556 = vshll.u32 2102212464, %v4544
    %v4557 = vshrl.u32 920167782, %v4545
    %v4558 = vor.u32 %v4556, %v4557
    %v4559 = vshll.u32 920167782, %v4544
    %v4560 = vshrl.u32 1326507024, %v4545
    %v4561 = vor.u32 %v4559, %v4560
    %vm4562 = vcmp.lt.s32.totalorder %v4543, 1
    %vm4563 = vcmp.lt.s32.totalorder %v4543, 2
    %vm4564 = vcmp.lt.s32.totalorder %v4543, 3
    %vm4565 = vcmp.lt.s32.totalorder %v4543, 4
    %v4566 = vsel %vm4562, %v4546, %v4549
    %v4567 = vsel %vm4565, %v4555, 2102212464
    %v4568 = vsel %vm4564, %v4552, %v4567
    %v4569 = vsel %vm4563, %v4566, %v4568
    %v4570 = vsel %vm4562, %v4549, %v4552
    %v4571 = vsel %vm4565, %v4558, 920167782
    %v4572 = vsel %vm4564, %v4555, %v4571
    %v4573 = vsel %vm4563, %v4570, %v4572
    %v4574 = vsel %vm4562, %v4552, %v4555
    %v4575 = vsel %vm4565, %v4561, 1326507024
    %v4576 = vsel %vm4564, %v4558, %v4575
    %v4577 = vsel %vm4563, %v4574, %v4576
    %v4578 = vshll.u32 %v4538, 8
    %v4579 = vmul.u32.u64.compose %v4578, %v4577
    %v4580 = vextract.low.u32 %v4579
    %v4581 = vextract.high.u32 %v4579
    %v4582 = vmul.u32.u64.compose %v4578, %v4573
    %v4583 = vextract.low.u32 %v4582
    %v4584 = vextract.high.u32 %v4582
    %v4585 = vmul.u32 %v4578, %v4569
    %v4586 = vadd.s32 %v4581, %v4583
    %vm4587 = vc.u32 %v4581, %v4583
    %v4588 = vadd.s32 %v4584, 1
    %v4589 = vsel %vm4587, %v4588, %v4584
    %v4590 = vadd.s32 %v4585, %v4589
    %v4591 = vadd.s32 %v4590, 536870912
    %v4592 = vshrl.u32 %v4591, 30
    %v4593 = vshll.u32 %v4592, 30
    %v4594 = vsub.s32 %v4590, %v4593
    %vm4595 = vcmp.lt.s32.totalorder %v4594, 0
    %v4596 = vsub.s32 0, %v4594
    %v4597 = vsel %vm4595, %v4596, %v4594
    %v4598 = vclz %v4597
    %v4599 = vsub.s32 %v4598, 2
    %vm4600 = vcmp.gt.s32.totalorder 0, %v4599
    %v4601 = vsel %vm4600, 0, %v4599
    %v4602 = vsub.s32 32, %v4601
    %v4603 = vshll.u32 %v4594, %v4601
    %v4604 = vshrl.u32 %v4586, %v4602
    %v4605 = vor.u32 %v4603, %v4604
    %v4606 = vsub.s32 4294967266, %v4601
    %v4607 = vadd.s32 %v4606, 127
    %v4608 = vshll.u32 %v4607, 23
    %v4609 = vor.u32 4788187, %v4608
    %v4610 = vand.u32 2147483647, %v4609
    %v4612 = vcvt.s32.f32 %v4605
    %v4613 = vmul.f32 %v4612, %v4610
    %v4614 = vxor.u32 %v4613, 2147483648
    %v4615 = vsel %vm4532, %v4614, %v4613
    %v4616 = vsub.s32 4, %v4592
    %v4617 = vsel %vm4532, %v4616, %v4592
    %v4618 = vsel %vm4531, %v552, %v4615
    %v4619 = vsel %vm4531, 0, %v4617
    %v4620 = vcosq.f32.pop %v4618
    %v4621 = vsinq.f32.pop %v4618
    %vm4622 = vweird.f32 %v552
    %v4623 = vadd.s32 %v4619, 3
    %v4624 = vand.u32 %v4623, 3
    %vm4625 = vcmp.lt.s32.totalorder %v4624, 2
    %vm4626 = vcmp.eq.s32.totalorder %v4624, 0
    %v4627 = vxor.u32 %v4621, 2147483648
    %v4628 = vsel %vm4626, %v4620, %v4627
    %vm4629 = vcmp.eq.s32.totalorder %v4624, 2
    %v4630 = vxor.u32 %v4620, 2147483648
    %v4631 = vsel %vm4629, %v4630, %v4621
    %v4632 = vsel %vm4625, %v4628, %v4631
    %v4633 = vsel %vm4622, nan, %v4632
    %v4634 = vand.u32 2147483647, %v553
    %vm4635 = vcmp.le.f32.partialorder %v4634, 0.7853982
    %vm4636 = vcmp.lt.s32.totalorder %v553, 0
    %v4637 = vand.u32 %v553, 2139095040
    %v4638 = vshrl.u32 %v4637, 23
    %v4639 = vsub.s32 %v4638, 127
    %v4640 = vand.u32 2147483647, %v553
    %v4641 = vand.u32 %v4640, 8388607
    %v4642 = vor.u32 %v4641, 8388608
    %v4643 = vsub.s32 0, %v4642
    %v4644 = vadd.s32 %v4639, 1
    %vm4645 = vcmp.gt.s32.totalorder %v4644, 0
    %v4646 = vsel %vm4645, %v4644, 0
    %v4647 = vshrl.u32 %v4646, 5
    %v4648 = vand.u32 %v4646, 31
    %v4649 = vsub.s32 32, %v4648
    %v4650 = vshrl.u32 683565275, %v4649
    %v4651 = vshll.u32 683565275, %v4648
    %v4652 = vshrl.u32 2475754826, %v4649
    %v4653 = vor.u32 %v4651, %v4652
    %v4654 = vshll.u32 2475754826, %v4648
    %v4655 = vshrl.u32 2131351028, %v4649
    %v4656 = vor.u32 %v4654, %v4655
    %v4657 = vshll.u32 2131351028, %v4648
    %v4658 = vshrl.u32 2102212464, %v4649
    %v4659 = vor.u32 %v4657, %v4658
    %v4660 = vshll.u32 2102212464, %v4648
    %v4661 = vshrl.u32 920167782, %v4649
    %v4662 = vor.u32 %v4660, %v4661
    %v4663 = vshll.u32 920167782, %v4648
    %v4664 = vshrl.u32 1326507024, %v4649
    %v4665 = vor.u32 %v4663, %v4664
    %vm4666 = vcmp.lt.s32.totalorder %v4647, 1
    %vm4667 = vcmp.lt.s32.totalorder %v4647, 2
    %vm4668 = vcmp.lt.s32.totalorder %v4647, 3
    %vm4669 = vcmp.lt.s32.totalorder %v4647, 4
    %v4670 = vsel %vm4666, %v4650, %v4653
    %v4671 = vsel %vm4669, %v4659, 2102212464
    %v4672 = vsel %vm4668, %v4656, %v4671
    %v4673 = vsel %vm4667, %v4670, %v4672
    %v4674 = vsel %vm4666, %v4653, %v4656
    %v4675 = vsel %vm4669, %v4662, 920167782
    %v4676 = vsel %vm4668, %v4659, %v4675
    %v4677 = vsel %vm4667, %v4674, %v4676
    %v4678 = vsel %vm4666, %v4656, %v4659
    %v4679 = vsel %vm4669, %v4665, 1326507024
    %v4680 = vsel %vm4668, %v4662, %v4679
    %v4681 = vsel %vm4667, %v4678, %v4680
    %v4682 = vshll.u32 %v4642, 8
    %v4683 = vmul.u32.u64.compose %v4682, %v4681
    %v4684 = vextract.low.u32 %v4683
    %v4685 = vextract.high.u32 %v4683
    %v4686 = vmul.u32.u64.compose %v4682, %v4677
    %v4687 = vextract.low.u32 %v4686
    %v4688 = vextract.high.u32 %v4686
    %v4689 = vmul.u32 %v4682, %v4673
    %v4690 = vadd.s32 %v4685, %v4687
    %vm4691 = vc.u32 %v4685, %v4687
    %v4692 = vadd.s32 %v4688, 1
    %v4693 = vsel %vm4691, %v4692, %v4688
    %v4694 = vadd.s32 %v4689, %v4693
    %v4695 = vadd.s32 %v4694, 536870912
    %v4696 = vshrl.u32 %v4695, 30
    %v4697 = vshll.u32 %v4696, 30
    %v4698 = vsub.s32 %v4694, %v4697
    %vm4699 = vcmp.lt.s32.totalorder %v4698, 0
    %v4700 = vsub.s32 0, %v4698
    %v4701 = vsel %vm4699, %v4700, %v4698
    %v4702 = vclz %v4701
    %v4703 = vsub.s32 %v4702, 2
    %vm4704 = vcmp.gt.s32.totalorder 0, %v4703
    %v4705 = vsel %vm4704, 0, %v4703
    %v4706 = vsub.s32 32, %v4705
    %v4707 = vshll.u32 %v4698, %v4705
    %v4708 = vshrl.u32 %v4690, %v4706
    %v4709 = vor.u32 %v4707, %v4708
    %v4710 = vsub.s32 4294967266, %v4705
    %v4711 = vadd.s32 %v4710, 127
    %v4712 = vshll.u32 %v4711, 23
    %v4713 = vor.u32 4788187, %v4712
    %v4714 = vand.u32 2147483647, %v4713
    %v4716 = vcvt.s32.f32 %v4709
    %v4717 = vmul.f32 %v4716, %v4714
    %v4718 = vxor.u32 %v4717, 2147483648
    %v4719 = vsel %vm4636, %v4718, %v4717
    %v4720 = vsub.s32 4, %v4696
    %v4721 = vsel %vm4636, %v4720, %v4696
    %v4722 = vsel %vm4635, %v553, %v4719
    %v4723 = vsel %vm4635, 0, %v4721
    %v4724 = vcosq.f32.pop %v4722
    %v4725 = vsinq.f32.pop %v4722
    %vm4726 = vweird.f32 %v553
    %v4727 = vadd.s32 %v4723, 3
    %v4728 = vand.u32 %v4727, 3
    %vm4729 = vcmp.lt.s32.totalorder %v4728, 2
    %vm4730 = vcmp.eq.s32.totalorder %v4728, 0
    %v4731 = vxor.u32 %v4725, 2147483648
    %v4732 = vsel %vm4730, %v4724, %v4731
    %vm4733 = vcmp.eq.s32.totalorder %v4728, 2
    %v4734 = vxor.u32 %v4724, 2147483648
    %v4735 = vsel %vm4733, %v4734, %v4725
    %v4736 = vsel %vm4729, %v4732, %v4735
    %v4737 = vsel %vm4726, nan, %v4736
    %v4738 = vand.u32 2147483647, %v554
    %vm4739 = vcmp.le.f32.partialorder %v4738, 0.7853982
    %vm4740 = vcmp.lt.s32.totalorder %v554, 0
    %v4741 = vand.u32 %v554, 2139095040
    %v4742 = vshrl.u32 %v4741, 23
    %v4743 = vsub.s32 %v4742, 127
    %v4744 = vand.u32 2147483647, %v554
    %v4745 = vand.u32 %v4744, 8388607
    %v4746 = vor.u32 %v4745, 8388608
    %v4747 = vsub.s32 0, %v4746
    %v4748 = vadd.s32 %v4743, 1
    %vm4749 = vcmp.gt.s32.totalorder %v4748, 0
    %v4750 = vsel %vm4749, %v4748, 0
    %v4751 = vshrl.u32 %v4750, 5
    %v4752 = vand.u32 %v4750, 31
    %v4753 = vsub.s32 32, %v4752
    %v4754 = vshrl.u32 683565275, %v4753
    %v4755 = vshll.u32 683565275, %v4752
    %v4756 = vshrl.u32 2475754826, %v4753
    %v4757 = vor.u32 %v4755, %v4756
    %v4758 = vshll.u32 2475754826, %v4752
    %v4759 = vshrl.u32 2131351028, %v4753
    %v4760 = vor.u32 %v4758, %v4759
    %v4761 = vshll.u32 2131351028, %v4752
    %v4762 = vshrl.u32 2102212464, %v4753
    %v4763 = vor.u32 %v4761, %v4762
    %v4764 = vshll.u32 2102212464, %v4752
    %v4765 = vshrl.u32 920167782, %v4753
    %v4766 = vor.u32 %v4764, %v4765
    %v4767 = vshll.u32 920167782, %v4752
    %v4768 = vshrl.u32 1326507024, %v4753
    %v4769 = vor.u32 %v4767, %v4768
    %vm4770 = vcmp.lt.s32.totalorder %v4751, 1
    %vm4771 = vcmp.lt.s32.totalorder %v4751, 2
    %vm4772 = vcmp.lt.s32.totalorder %v4751, 3
    %vm4773 = vcmp.lt.s32.totalorder %v4751, 4
    %v4774 = vsel %vm4770, %v4754, %v4757
    %v4775 = vsel %vm4773, %v4763, 2102212464
    %v4776 = vsel %vm4772, %v4760, %v4775
    %v4777 = vsel %vm4771, %v4774, %v4776
    %v4778 = vsel %vm4770, %v4757, %v4760
    %v4779 = vsel %vm4773, %v4766, 920167782
    %v4780 = vsel %vm4772, %v4763, %v4779
    %v4781 = vsel %vm4771, %v4778, %v4780
    %v4782 = vsel %vm4770, %v4760, %v4763
    %v4783 = vsel %vm4773, %v4769, 1326507024
    %v4784 = vsel %vm4772, %v4766, %v4783
    %v4785 = vsel %vm4771, %v4782, %v4784
    %v4786 = vshll.u32 %v4746, 8
    %v4787 = vmul.u32.u64.compose %v4786, %v4785
    %v4788 = vextract.low.u32 %v4787
    %v4789 = vextract.high.u32 %v4787
    %v4790 = vmul.u32.u64.compose %v4786, %v4781
    %v4791 = vextract.low.u32 %v4790
    %v4792 = vextract.high.u32 %v4790
    %v4793 = vmul.u32 %v4786, %v4777
    %v4794 = vadd.s32 %v4789, %v4791
    %vm4795 = vc.u32 %v4789, %v4791
    %v4796 = vadd.s32 %v4792, 1
    %v4797 = vsel %vm4795, %v4796, %v4792
    %v4798 = vadd.s32 %v4793, %v4797
    %v4799 = vadd.s32 %v4798, 536870912
    %v4800 = vshrl.u32 %v4799, 30
    %v4801 = vshll.u32 %v4800, 30
    %v4802 = vsub.s32 %v4798, %v4801
    %vm4803 = vcmp.lt.s32.totalorder %v4802, 0
    %v4804 = vsub.s32 0, %v4802
    %v4805 = vsel %vm4803, %v4804, %v4802
    %v4806 = vclz %v4805
    %v4807 = vsub.s32 %v4806, 2
    %vm4808 = vcmp.gt.s32.totalorder 0, %v4807
    %v4809 = vsel %vm4808, 0, %v4807
    %v4810 = vsub.s32 32, %v4809
    %v4811 = vshll.u32 %v4802, %v4809
    %v4812 = vshrl.u32 %v4794, %v4810
    %v4813 = vor.u32 %v4811, %v4812
    %v4814 = vsub.s32 4294967266, %v4809
    %v4815 = vadd.s32 %v4814, 127
    %v4816 = vshll.u32 %v4815, 23
    %v4817 = vor.u32 4788187, %v4816
    %v4818 = vand.u32 2147483647, %v4817
    %v4820 = vcvt.s32.f32 %v4813
    %v4821 = vmul.f32 %v4820, %v4818
    %v4822 = vxor.u32 %v4821, 2147483648
    %v4823 = vsel %vm4740, %v4822, %v4821
    %v4824 = vsub.s32 4, %v4800
    %v4825 = vsel %vm4740, %v4824, %v4800
    %v4826 = vsel %vm4739, %v554, %v4823
    %v4827 = vsel %vm4739, 0, %v4825
    %v4828 = vcosq.f32.pop %v4826
    %v4829 = vsinq.f32.pop %v4826
    %vm4830 = vweird.f32 %v554
    %v4831 = vadd.s32 %v4827, 3
    %v4832 = vand.u32 %v4831, 3
    %vm4833 = vcmp.lt.s32.totalorder %v4832, 2
    %vm4834 = vcmp.eq.s32.totalorder %v4832, 0
    %v4835 = vxor.u32 %v4829, 2147483648
    %v4836 = vsel %vm4834, %v4828, %v4835
    %vm4837 = vcmp.eq.s32.totalorder %v4832, 2
    %v4838 = vxor.u32 %v4828, 2147483648
    %v4839 = vsel %vm4837, %v4838, %v4829
    %v4840 = vsel %vm4833, %v4836, %v4839
    %v4841 = vsel %vm4830, nan, %v4840
    %v4842 = vand.u32 2147483647, %v555
    %vm4843 = vcmp.le.f32.partialorder %v4842, 0.7853982
    %vm4844 = vcmp.lt.s32.totalorder %v555, 0
    %v4845 = vand.u32 %v555, 2139095040
    %v4846 = vshrl.u32 %v4845, 23
    %v4847 = vsub.s32 %v4846, 127
    %v4848 = vand.u32 2147483647, %v555
    %v4849 = vand.u32 %v4848, 8388607
    %v4850 = vor.u32 %v4849, 8388608
    %v4851 = vsub.s32 0, %v4850
    %v4852 = vadd.s32 %v4847, 1
    %vm4853 = vcmp.gt.s32.totalorder %v4852, 0
    %v4854 = vsel %vm4853, %v4852, 0
    %v4855 = vshrl.u32 %v4854, 5
    %v4856 = vand.u32 %v4854, 31
    %v4857 = vsub.s32 32, %v4856
    %v4858 = vshrl.u32 683565275, %v4857
    %v4859 = vshll.u32 683565275, %v4856
    %v4860 = vshrl.u32 2475754826, %v4857
    %v4861 = vor.u32 %v4859, %v4860
    %v4862 = vshll.u32 2475754826, %v4856
    %v4863 = vshrl.u32 2131351028, %v4857
    %v4864 = vor.u32 %v4862, %v4863
    %v4865 = vshll.u32 2131351028, %v4856
    %v4866 = vshrl.u32 2102212464, %v4857
    %v4867 = vor.u32 %v4865, %v4866
    %v4868 = vshll.u32 2102212464, %v4856
    %v4869 = vshrl.u32 920167782, %v4857
    %v4870 = vor.u32 %v4868, %v4869
    %v4871 = vshll.u32 920167782, %v4856
    %v4872 = vshrl.u32 1326507024, %v4857
    %v4873 = vor.u32 %v4871, %v4872
    %vm4874 = vcmp.lt.s32.totalorder %v4855, 1
    %vm4875 = vcmp.lt.s32.totalorder %v4855, 2
    %vm4876 = vcmp.lt.s32.totalorder %v4855, 3
    %vm4877 = vcmp.lt.s32.totalorder %v4855, 4
    %v4878 = vsel %vm4874, %v4858, %v4861
    %v4879 = vsel %vm4877, %v4867, 2102212464
    %v4880 = vsel %vm4876, %v4864, %v4879
    %v4881 = vsel %vm4875, %v4878, %v4880
    %v4882 = vsel %vm4874, %v4861, %v4864
    %v4883 = vsel %vm4877, %v4870, 920167782
    %v4884 = vsel %vm4876, %v4867, %v4883
    %v4885 = vsel %vm4875, %v4882, %v4884
    %v4886 = vsel %vm4874, %v4864, %v4867
    %v4887 = vsel %vm4877, %v4873, 1326507024
    %v4888 = vsel %vm4876, %v4870, %v4887
    %v4889 = vsel %vm4875, %v4886, %v4888
    %v4890 = vshll.u32 %v4850, 8
    %v4891 = vmul.u32.u64.compose %v4890, %v4889
    %v4892 = vextract.low.u32 %v4891
    %v4893 = vextract.high.u32 %v4891
    %v4894 = vmul.u32.u64.compose %v4890, %v4885
    %v4895 = vextract.low.u32 %v4894
    %v4896 = vextract.high.u32 %v4894
    %v4897 = vmul.u32 %v4890, %v4881
    %v4898 = vadd.s32 %v4893, %v4895
    %vm4899 = vc.u32 %v4893, %v4895
    %v4900 = vadd.s32 %v4896, 1
    %v4901 = vsel %vm4899, %v4900, %v4896
    %v4902 = vadd.s32 %v4897, %v4901
    %v4903 = vadd.s32 %v4902, 536870912
    %v4904 = vshrl.u32 %v4903, 30
    %v4905 = vshll.u32 %v4904, 30
    %v4906 = vsub.s32 %v4902, %v4905
    %vm4907 = vcmp.lt.s32.totalorder %v4906, 0
    %v4908 = vsub.s32 0, %v4906
    %v4909 = vsel %vm4907, %v4908, %v4906
    %v4910 = vclz %v4909
    %v4911 = vsub.s32 %v4910, 2
    %vm4912 = vcmp.gt.s32.totalorder 0, %v4911
    %v4913 = vsel %vm4912, 0, %v4911
    %v4914 = vsub.s32 32, %v4913
    %v4915 = vshll.u32 %v4906, %v4913
    %v4916 = vshrl.u32 %v4898, %v4914
    %v4917 = vor.u32 %v4915, %v4916
    %v4918 = vsub.s32 4294967266, %v4913
    %v4919 = vadd.s32 %v4918, 127
    %v4920 = vshll.u32 %v4919, 23
    %v4921 = vor.u32 4788187, %v4920
    %v4922 = vand.u32 2147483647, %v4921
    %v4924 = vcvt.s32.f32 %v4917
    %v4925 = vmul.f32 %v4924, %v4922
    %v4926 = vxor.u32 %v4925, 2147483648
    %v4927 = vsel %vm4844, %v4926, %v4925
    %v4928 = vsub.s32 4, %v4904
    %v4929 = vsel %vm4844, %v4928, %v4904
    %v4930 = vsel %vm4843, %v555, %v4927
    %v4931 = vsel %vm4843, 0, %v4929
    %v4932 = vcosq.f32.pop %v4930
    %v4933 = vsinq.f32.pop %v4930
    %vm4934 = vweird.f32 %v555
    %v4935 = vadd.s32 %v4931, 3
    %v4936 = vand.u32 %v4935, 3
    %vm4937 = vcmp.lt.s32.totalorder %v4936, 2
    %vm4938 = vcmp.eq.s32.totalorder %v4936, 0
    %v4939 = vxor.u32 %v4933, 2147483648
    %v4940 = vsel %vm4938, %v4932, %v4939
    %vm4941 = vcmp.eq.s32.totalorder %v4936, 2
    %v4942 = vxor.u32 %v4932, 2147483648
    %v4943 = vsel %vm4941, %v4942, %v4933
    %v4944 = vsel %vm4937, %v4940, %v4943
    %v4945 = vsel %vm4934, nan, %v4944
    %v4946 = vand.u32 2147483647, %v556
    %vm4947 = vcmp.le.f32.partialorder %v4946, 0.7853982
    %vm4948 = vcmp.lt.s32.totalorder %v556, 0
    %v4949 = vand.u32 %v556, 2139095040
    %v4950 = vshrl.u32 %v4949, 23
    %v4951 = vsub.s32 %v4950, 127
    %v4952 = vand.u32 2147483647, %v556
    %v4953 = vand.u32 %v4952, 8388607
    %v4954 = vor.u32 %v4953, 8388608
    %v4955 = vsub.s32 0, %v4954
    %v4956 = vadd.s32 %v4951, 1
    %vm4957 = vcmp.gt.s32.totalorder %v4956, 0
    %v4958 = vsel %vm4957, %v4956, 0
    %v4959 = vshrl.u32 %v4958, 5
    %v4960 = vand.u32 %v4958, 31
    %v4961 = vsub.s32 32, %v4960
    %v4962 = vshrl.u32 683565275, %v4961
    %v4963 = vshll.u32 683565275, %v4960
    %v4964 = vshrl.u32 2475754826, %v4961
    %v4965 = vor.u32 %v4963, %v4964
    %v4966 = vshll.u32 2475754826, %v4960
    %v4967 = vshrl.u32 2131351028, %v4961
    %v4968 = vor.u32 %v4966, %v4967
    %v4969 = vshll.u32 2131351028, %v4960
    %v4970 = vshrl.u32 2102212464, %v4961
    %v4971 = vor.u32 %v4969, %v4970
    %v4972 = vshll.u32 2102212464, %v4960
    %v4973 = vshrl.u32 920167782, %v4961
    %v4974 = vor.u32 %v4972, %v4973
    %v4975 = vshll.u32 920167782, %v4960
    %v4976 = vshrl.u32 1326507024, %v4961
    %v4977 = vor.u32 %v4975, %v4976
    %vm4978 = vcmp.lt.s32.totalorder %v4959, 1
    %vm4979 = vcmp.lt.s32.totalorder %v4959, 2
    %vm4980 = vcmp.lt.s32.totalorder %v4959, 3
    %vm4981 = vcmp.lt.s32.totalorder %v4959, 4
    %v4982 = vsel %vm4978, %v4962, %v4965
    %v4983 = vsel %vm4981, %v4971, 2102212464
    %v4984 = vsel %vm4980, %v4968, %v4983
    %v4985 = vsel %vm4979, %v4982, %v4984
    %v4986 = vsel %vm4978, %v4965, %v4968
    %v4987 = vsel %vm4981, %v4974, 920167782
    %v4988 = vsel %vm4980, %v4971, %v4987
    %v4989 = vsel %vm4979, %v4986, %v4988
    %v4990 = vsel %vm4978, %v4968, %v4971
    %v4991 = vsel %vm4981, %v4977, 1326507024
    %v4992 = vsel %vm4980, %v4974, %v4991
    %v4993 = vsel %vm4979, %v4990, %v4992
    %v4994 = vshll.u32 %v4954, 8
    %v4995 = vmul.u32.u64.compose %v4994, %v4993
    %v4996 = vextract.low.u32 %v4995
    %v4997 = vextract.high.u32 %v4995
    %v4998 = vmul.u32.u64.compose %v4994, %v4989
    %v4999 = vextract.low.u32 %v4998
    %v5000 = vextract.high.u32 %v4998
    %v5001 = vmul.u32 %v4994, %v4985
    %v5002 = vadd.s32 %v4997, %v4999
    %vm5003 = vc.u32 %v4997, %v4999
    %v5004 = vadd.s32 %v5000, 1
    %v5005 = vsel %vm5003, %v5004, %v5000
    %v5006 = vadd.s32 %v5001, %v5005
    %v5007 = vadd.s32 %v5006, 536870912
    %v5008 = vshrl.u32 %v5007, 30
    %v5009 = vshll.u32 %v5008, 30
    %v5010 = vsub.s32 %v5006, %v5009
    %vm5011 = vcmp.lt.s32.totalorder %v5010, 0
    %v5012 = vsub.s32 0, %v5010
    %v5013 = vsel %vm5011, %v5012, %v5010
    %v5014 = vclz %v5013
    %v5015 = vsub.s32 %v5014, 2
    %vm5016 = vcmp.gt.s32.totalorder 0, %v5015
    %v5017 = vsel %vm5016, 0, %v5015
    %v5018 = vsub.s32 32, %v5017
    %v5019 = vshll.u32 %v5010, %v5017
    %v5020 = vshrl.u32 %v5002, %v5018
    %v5021 = vor.u32 %v5019, %v5020
    %v5022 = vsub.s32 4294967266, %v5017
    %v5023 = vadd.s32 %v5022, 127
    %v5024 = vshll.u32 %v5023, 23
    %v5025 = vor.u32 4788187, %v5024
    %v5026 = vand.u32 2147483647, %v5025
    %v5028 = vcvt.s32.f32 %v5021
    %v5029 = vmul.f32 %v5028, %v5026
    %v5030 = vxor.u32 %v5029, 2147483648
    %v5031 = vsel %vm4948, %v5030, %v5029
    %v5032 = vsub.s32 4, %v5008
    %v5033 = vsel %vm4948, %v5032, %v5008
    %v5034 = vsel %vm4947, %v556, %v5031
    %v5035 = vsel %vm4947, 0, %v5033
    %v5036 = vcosq.f32.pop %v5034
    %v5037 = vsinq.f32.pop %v5034
    %vm5038 = vweird.f32 %v556
    %v5039 = vadd.s32 %v5035, 3
    %v5040 = vand.u32 %v5039, 3
    %vm5041 = vcmp.lt.s32.totalorder %v5040, 2
    %vm5042 = vcmp.eq.s32.totalorder %v5040, 0
    %v5043 = vxor.u32 %v5037, 2147483648
    %v5044 = vsel %vm5042, %v5036, %v5043
    %vm5045 = vcmp.eq.s32.totalorder %v5040, 2
    %v5046 = vxor.u32 %v5036, 2147483648
    %v5047 = vsel %vm5045, %v5046, %v5037
    %v5048 = vsel %vm5041, %v5044, %v5047
    %v5049 = vsel %vm5038, nan, %v5048
    %v5050 = vand.u32 2147483647, %v557
    %vm5051 = vcmp.le.f32.partialorder %v5050, 0.7853982
    %vm5052 = vcmp.lt.s32.totalorder %v557, 0
    %v5053 = vand.u32 %v557, 2139095040
    %v5054 = vshrl.u32 %v5053, 23
    %v5055 = vsub.s32 %v5054, 127
    %v5056 = vand.u32 2147483647, %v557
    %v5057 = vand.u32 %v5056, 8388607
    %v5058 = vor.u32 %v5057, 8388608
    %v5059 = vsub.s32 0, %v5058
    %v5060 = vadd.s32 %v5055, 1
    %vm5061 = vcmp.gt.s32.totalorder %v5060, 0
    %v5062 = vsel %vm5061, %v5060, 0
    %v5063 = vshrl.u32 %v5062, 5
    %v5064 = vand.u32 %v5062, 31
    %v5065 = vsub.s32 32, %v5064
    %v5066 = vshrl.u32 683565275, %v5065
    %v5067 = vshll.u32 683565275, %v5064
    %v5068 = vshrl.u32 2475754826, %v5065
    %v5069 = vor.u32 %v5067, %v5068
    %v5070 = vshll.u32 2475754826, %v5064
    %v5071 = vshrl.u32 2131351028, %v5065
    %v5072 = vor.u32 %v5070, %v5071
    %v5073 = vshll.u32 2131351028, %v5064
    %v5074 = vshrl.u32 2102212464, %v5065
    %v5075 = vor.u32 %v5073, %v5074
    %v5076 = vshll.u32 2102212464, %v5064
    %v5077 = vshrl.u32 920167782, %v5065
    %v5078 = vor.u32 %v5076, %v5077
    %v5079 = vshll.u32 920167782, %v5064
    %v5080 = vshrl.u32 1326507024, %v5065
    %v5081 = vor.u32 %v5079, %v5080
    %vm5082 = vcmp.lt.s32.totalorder %v5063, 1
    %vm5083 = vcmp.lt.s32.totalorder %v5063, 2
    %vm5084 = vcmp.lt.s32.totalorder %v5063, 3
    %vm5085 = vcmp.lt.s32.totalorder %v5063, 4
    %v5086 = vsel %vm5082, %v5066, %v5069
    %v5087 = vsel %vm5085, %v5075, 2102212464
    %v5088 = vsel %vm5084, %v5072, %v5087
    %v5089 = vsel %vm5083, %v5086, %v5088
    %v5090 = vsel %vm5082, %v5069, %v5072
    %v5091 = vsel %vm5085, %v5078, 920167782
    %v5092 = vsel %vm5084, %v5075, %v5091
    %v5093 = vsel %vm5083, %v5090, %v5092
    %v5094 = vsel %vm5082, %v5072, %v5075
    %v5095 = vsel %vm5085, %v5081, 1326507024
    %v5096 = vsel %vm5084, %v5078, %v5095
    %v5097 = vsel %vm5083, %v5094, %v5096
    %v5098 = vshll.u32 %v5058, 8
    %v5099 = vmul.u32.u64.compose %v5098, %v5097
    %v5100 = vextract.low.u32 %v5099
    %v5101 = vextract.high.u32 %v5099
    %v5102 = vmul.u32.u64.compose %v5098, %v5093
    %v5103 = vextract.low.u32 %v5102
    %v5104 = vextract.high.u32 %v5102
    %v5105 = vmul.u32 %v5098, %v5089
    %v5106 = vadd.s32 %v5101, %v5103
    %vm5107 = vc.u32 %v5101, %v5103
    %v5108 = vadd.s32 %v5104, 1
    %v5109 = vsel %vm5107, %v5108, %v5104
    %v5110 = vadd.s32 %v5105, %v5109
    %v5111 = vadd.s32 %v5110, 536870912
    %v5112 = vshrl.u32 %v5111, 30
    %v5113 = vshll.u32 %v5112, 30
    %v5114 = vsub.s32 %v5110, %v5113
    %vm5115 = vcmp.lt.s32.totalorder %v5114, 0
    %v5116 = vsub.s32 0, %v5114
    %v5117 = vsel %vm5115, %v5116, %v5114
    %v5118 = vclz %v5117
    %v5119 = vsub.s32 %v5118, 2
    %vm5120 = vcmp.gt.s32.totalorder 0, %v5119
    %v5121 = vsel %vm5120, 0, %v5119
    %v5122 = vsub.s32 32, %v5121
    %v5123 = vshll.u32 %v5114, %v5121
    %v5124 = vshrl.u32 %v5106, %v5122
    %v5125 = vor.u32 %v5123, %v5124
    %v5126 = vsub.s32 4294967266, %v5121
    %v5127 = vadd.s32 %v5126, 127
    %v5128 = vshll.u32 %v5127, 23
    %v5129 = vor.u32 4788187, %v5128
    %v5130 = vand.u32 2147483647, %v5129
    %v5132 = vcvt.s32.f32 %v5125
    %v5133 = vmul.f32 %v5132, %v5130
    %v5134 = vxor.u32 %v5133, 2147483648
    %v5135 = vsel %vm5052, %v5134, %v5133
    %v5136 = vsub.s32 4, %v5112
    %v5137 = vsel %vm5052, %v5136, %v5112
    %v5138 = vsel %vm5051, %v557, %v5135
    %v5139 = vsel %vm5051, 0, %v5137
    %v5140 = vcosq.f32.pop %v5138
    %v5141 = vsinq.f32.pop %v5138
    %vm5142 = vweird.f32 %v557
    %v5143 = vadd.s32 %v5139, 3
    %v5144 = vand.u32 %v5143, 3
    %vm5145 = vcmp.lt.s32.totalorder %v5144, 2
    %vm5146 = vcmp.eq.s32.totalorder %v5144, 0
    %v5147 = vxor.u32 %v5141, 2147483648
    %v5148 = vsel %vm5146, %v5140, %v5147
    %vm5149 = vcmp.eq.s32.totalorder %v5144, 2
    %v5150 = vxor.u32 %v5140, 2147483648
    %v5151 = vsel %vm5149, %v5150, %v5141
    %v5152 = vsel %vm5145, %v5148, %v5151
    %v5153 = vsel %vm5142, nan, %v5152
    %v5154 = vand.u32 2147483647, %v558
    %vm5155 = vcmp.le.f32.partialorder %v5154, 0.7853982
    %vm5156 = vcmp.lt.s32.totalorder %v558, 0
    %v5157 = vand.u32 %v558, 2139095040
    %v5158 = vshrl.u32 %v5157, 23
    %v5159 = vsub.s32 %v5158, 127
    %v5160 = vand.u32 2147483647, %v558
    %v5161 = vand.u32 %v5160, 8388607
    %v5162 = vor.u32 %v5161, 8388608
    %v5163 = vsub.s32 0, %v5162
    %v5164 = vadd.s32 %v5159, 1
    %vm5165 = vcmp.gt.s32.totalorder %v5164, 0
    %v5166 = vsel %vm5165, %v5164, 0
    %v5167 = vshrl.u32 %v5166, 5
    %v5168 = vand.u32 %v5166, 31
    %v5169 = vsub.s32 32, %v5168
    %v5170 = vshrl.u32 683565275, %v5169
    %v5171 = vshll.u32 683565275, %v5168
    %v5172 = vshrl.u32 2475754826, %v5169
    %v5173 = vor.u32 %v5171, %v5172
    %v5174 = vshll.u32 2475754826, %v5168
    %v5175 = vshrl.u32 2131351028, %v5169
    %v5176 = vor.u32 %v5174, %v5175
    %v5177 = vshll.u32 2131351028, %v5168
    %v5178 = vshrl.u32 2102212464, %v5169
    %v5179 = vor.u32 %v5177, %v5178
    %v5180 = vshll.u32 2102212464, %v5168
    %v5181 = vshrl.u32 920167782, %v5169
    %v5182 = vor.u32 %v5180, %v5181
    %v5183 = vshll.u32 920167782, %v5168
    %v5184 = vshrl.u32 1326507024, %v5169
    %v5185 = vor.u32 %v5183, %v5184
    %vm5186 = vcmp.lt.s32.totalorder %v5167, 1
    %vm5187 = vcmp.lt.s32.totalorder %v5167, 2
    %vm5188 = vcmp.lt.s32.totalorder %v5167, 3
    %vm5189 = vcmp.lt.s32.totalorder %v5167, 4
    %v5190 = vsel %vm5186, %v5170, %v5173
    %v5191 = vsel %vm5189, %v5179, 2102212464
    %v5192 = vsel %vm5188, %v5176, %v5191
    %v5193 = vsel %vm5187, %v5190, %v5192
    %v5194 = vsel %vm5186, %v5173, %v5176
    %v5195 = vsel %vm5189, %v5182, 920167782
    %v5196 = vsel %vm5188, %v5179, %v5195
    %v5197 = vsel %vm5187, %v5194, %v5196
    %v5198 = vsel %vm5186, %v5176, %v5179
    %v5199 = vsel %vm5189, %v5185, 1326507024
    %v5200 = vsel %vm5188, %v5182, %v5199
    %v5201 = vsel %vm5187, %v5198, %v5200
    %v5202 = vshll.u32 %v5162, 8
    %v5203 = vmul.u32.u64.compose %v5202, %v5201
    %v5204 = vextract.low.u32 %v5203
    %v5205 = vextract.high.u32 %v5203
    %v5206 = vmul.u32.u64.compose %v5202, %v5197
    %v5207 = vextract.low.u32 %v5206
    %v5208 = vextract.high.u32 %v5206
    %v5209 = vmul.u32 %v5202, %v5193
    %v5210 = vadd.s32 %v5205, %v5207
    %vm5211 = vc.u32 %v5205, %v5207
    %v5212 = vadd.s32 %v5208, 1
    %v5213 = vsel %vm5211, %v5212, %v5208
    %v5214 = vadd.s32 %v5209, %v5213
    %v5215 = vadd.s32 %v5214, 536870912
    %v5216 = vshrl.u32 %v5215, 30
    %v5217 = vshll.u32 %v5216, 30
    %v5218 = vsub.s32 %v5214, %v5217
    %vm5219 = vcmp.lt.s32.totalorder %v5218, 0
    %v5220 = vsub.s32 0, %v5218
    %v5221 = vsel %vm5219, %v5220, %v5218
    %v5222 = vclz %v5221
    %v5223 = vsub.s32 %v5222, 2
    %vm5224 = vcmp.gt.s32.totalorder 0, %v5223
    %v5225 = vsel %vm5224, 0, %v5223
    %v5226 = vsub.s32 32, %v5225
    %v5227 = vshll.u32 %v5218, %v5225
    %v5228 = vshrl.u32 %v5210, %v5226
    %v5229 = vor.u32 %v5227, %v5228
    %v5230 = vsub.s32 4294967266, %v5225
    %v5231 = vadd.s32 %v5230, 127
    %v5232 = vshll.u32 %v5231, 23
    %v5233 = vor.u32 4788187, %v5232
    %v5234 = vand.u32 2147483647, %v5233
    %v5236 = vcvt.s32.f32 %v5229
    %v5237 = vmul.f32 %v5236, %v5234
    %v5238 = vxor.u32 %v5237, 2147483648
    %v5239 = vsel %vm5156, %v5238, %v5237
    %v5240 = vsub.s32 4, %v5216
    %v5241 = vsel %vm5156, %v5240, %v5216
    %v5242 = vsel %vm5155, %v558, %v5239
    %v5243 = vsel %vm5155, 0, %v5241
    %v5244 = vcosq.f32.pop %v5242
    %v5245 = vsinq.f32.pop %v5242
    %vm5246 = vweird.f32 %v558
    %v5247 = vadd.s32 %v5243, 3
    %v5248 = vand.u32 %v5247, 3
    %vm5249 = vcmp.lt.s32.totalorder %v5248, 2
    %vm5250 = vcmp.eq.s32.totalorder %v5248, 0
    %v5251 = vxor.u32 %v5245, 2147483648
    %v5252 = vsel %vm5250, %v5244, %v5251
    %vm5253 = vcmp.eq.s32.totalorder %v5248, 2
    %v5254 = vxor.u32 %v5244, 2147483648
    %v5255 = vsel %vm5253, %v5254, %v5245
    %v5256 = vsel %vm5249, %v5252, %v5255
    %v5257 = vsel %vm5246, nan, %v5256
    %v5258 = vand.u32 2147483647, %v559
    %vm5259 = vcmp.le.f32.partialorder %v5258, 0.7853982
    %vm5260 = vcmp.lt.s32.totalorder %v559, 0
    %v5261 = vand.u32 %v559, 2139095040
    %v5262 = vshrl.u32 %v5261, 23
    %v5263 = vsub.s32 %v5262, 127
    %v5264 = vand.u32 2147483647, %v559
    %v5265 = vand.u32 %v5264, 8388607
    %v5266 = vor.u32 %v5265, 8388608
    %v5267 = vsub.s32 0, %v5266
    %v5268 = vadd.s32 %v5263, 1
    %vm5269 = vcmp.gt.s32.totalorder %v5268, 0
    %v5270 = vsel %vm5269, %v5268, 0
    %v5271 = vshrl.u32 %v5270, 5
    %v5272 = vand.u32 %v5270, 31
    %v5273 = vsub.s32 32, %v5272
    %v5274 = vshrl.u32 683565275, %v5273
    %v5275 = vshll.u32 683565275, %v5272
    %v5276 = vshrl.u32 2475754826, %v5273
    %v5277 = vor.u32 %v5275, %v5276
    %v5278 = vshll.u32 2475754826, %v5272
    %v5279 = vshrl.u32 2131351028, %v5273
    %v5280 = vor.u32 %v5278, %v5279
    %v5281 = vshll.u32 2131351028, %v5272
    %v5282 = vshrl.u32 2102212464, %v5273
    %v5283 = vor.u32 %v5281, %v5282
    %v5284 = vshll.u32 2102212464, %v5272
    %v5285 = vshrl.u32 920167782, %v5273
    %v5286 = vor.u32 %v5284, %v5285
    %v5287 = vshll.u32 920167782, %v5272
    %v5288 = vshrl.u32 1326507024, %v5273
    %v5289 = vor.u32 %v5287, %v5288
    %vm5290 = vcmp.lt.s32.totalorder %v5271, 1
    %vm5291 = vcmp.lt.s32.totalorder %v5271, 2
    %vm5292 = vcmp.lt.s32.totalorder %v5271, 3
    %vm5293 = vcmp.lt.s32.totalorder %v5271, 4
    %v5294 = vsel %vm5290, %v5274, %v5277
    %v5295 = vsel %vm5293, %v5283, 2102212464
    %v5296 = vsel %vm5292, %v5280, %v5295
    %v5297 = vsel %vm5291, %v5294, %v5296
    %v5298 = vsel %vm5290, %v5277, %v5280
    %v5299 = vsel %vm5293, %v5286, 920167782
    %v5300 = vsel %vm5292, %v5283, %v5299
    %v5301 = vsel %vm5291, %v5298, %v5300
    %v5302 = vsel %vm5290, %v5280, %v5283
    %v5303 = vsel %vm5293, %v5289, 1326507024
    %v5304 = vsel %vm5292, %v5286, %v5303
    %v5305 = vsel %vm5291, %v5302, %v5304
    %v5306 = vshll.u32 %v5266, 8
    %v5307 = vmul.u32.u64.compose %v5306, %v5305
    %v5308 = vextract.low.u32 %v5307
    %v5309 = vextract.high.u32 %v5307
    %v5310 = vmul.u32.u64.compose %v5306, %v5301
    %v5311 = vextract.low.u32 %v5310
    %v5312 = vextract.high.u32 %v5310
    %v5313 = vmul.u32 %v5306, %v5297
    %v5314 = vadd.s32 %v5309, %v5311
    %vm5315 = vc.u32 %v5309, %v5311
    %v5316 = vadd.s32 %v5312, 1
    %v5317 = vsel %vm5315, %v5316, %v5312
    %v5318 = vadd.s32 %v5313, %v5317
    %v5319 = vadd.s32 %v5318, 536870912
    %v5320 = vshrl.u32 %v5319, 30
    %v5321 = vshll.u32 %v5320, 30
    %v5322 = vsub.s32 %v5318, %v5321
    %vm5323 = vcmp.lt.s32.totalorder %v5322, 0
    %v5324 = vsub.s32 0, %v5322
    %v5325 = vsel %vm5323, %v5324, %v5322
    %v5326 = vclz %v5325
    %v5327 = vsub.s32 %v5326, 2
    %vm5328 = vcmp.gt.s32.totalorder 0, %v5327
    %v5329 = vsel %vm5328, 0, %v5327
    %v5330 = vsub.s32 32, %v5329
    %v5331 = vshll.u32 %v5322, %v5329
    %v5332 = vshrl.u32 %v5314, %v5330
    %v5333 = vor.u32 %v5331, %v5332
    %v5334 = vsub.s32 4294967266, %v5329
    %v5335 = vadd.s32 %v5334, 127
    %v5336 = vshll.u32 %v5335, 23
    %v5337 = vor.u32 4788187, %v5336
    %v5338 = vand.u32 2147483647, %v5337
    %v5340 = vcvt.s32.f32 %v5333
    %v5341 = vmul.f32 %v5340, %v5338
    %v5342 = vxor.u32 %v5341, 2147483648
    %v5343 = vsel %vm5260, %v5342, %v5341
    %v5344 = vsub.s32 4, %v5320
    %v5345 = vsel %vm5260, %v5344, %v5320
    %v5346 = vsel %vm5259, %v559, %v5343
    %v5347 = vsel %vm5259, 0, %v5345
    %v5348 = vcosq.f32.pop %v5346
    %v5349 = vsinq.f32.pop %v5346
    %vm5350 = vweird.f32 %v559
    %v5351 = vadd.s32 %v5347, 3
    %v5352 = vand.u32 %v5351, 3
    %vm5353 = vcmp.lt.s32.totalorder %v5352, 2
    %vm5354 = vcmp.eq.s32.totalorder %v5352, 0
    %v5355 = vxor.u32 %v5349, 2147483648
    %v5356 = vsel %vm5354, %v5348, %v5355
    %vm5357 = vcmp.eq.s32.totalorder %v5352, 2
    %v5358 = vxor.u32 %v5348, 2147483648
    %v5359 = vsel %vm5357, %v5358, %v5349
    %v5360 = vsel %vm5353, %v5356, %v5359
    %v5361 = vsel %vm5350, nan, %v5360
    %v5362 = vand.u32 2147483647, %v560
    %vm5363 = vcmp.le.f32.partialorder %v5362, 0.7853982
    %vm5364 = vcmp.lt.s32.totalorder %v560, 0
    %v5365 = vand.u32 %v560, 2139095040
    %v5366 = vshrl.u32 %v5365, 23
    %v5367 = vsub.s32 %v5366, 127
    %v5368 = vand.u32 2147483647, %v560
    %v5369 = vand.u32 %v5368, 8388607
    %v5370 = vor.u32 %v5369, 8388608
    %v5371 = vsub.s32 0, %v5370
    %v5372 = vadd.s32 %v5367, 1
    %vm5373 = vcmp.gt.s32.totalorder %v5372, 0
    %v5374 = vsel %vm5373, %v5372, 0
    %v5375 = vshrl.u32 %v5374, 5
    %v5376 = vand.u32 %v5374, 31
    %v5377 = vsub.s32 32, %v5376
    %v5378 = vshrl.u32 683565275, %v5377
    %v5379 = vshll.u32 683565275, %v5376
    %v5380 = vshrl.u32 2475754826, %v5377
    %v5381 = vor.u32 %v5379, %v5380
    %v5382 = vshll.u32 2475754826, %v5376
    %v5383 = vshrl.u32 2131351028, %v5377
    %v5384 = vor.u32 %v5382, %v5383
    %v5385 = vshll.u32 2131351028, %v5376
    %v5386 = vshrl.u32 2102212464, %v5377
    %v5387 = vor.u32 %v5385, %v5386
    %v5388 = vshll.u32 2102212464, %v5376
    %v5389 = vshrl.u32 920167782, %v5377
    %v5390 = vor.u32 %v5388, %v5389
    %v5391 = vshll.u32 920167782, %v5376
    %v5392 = vshrl.u32 1326507024, %v5377
    %v5393 = vor.u32 %v5391, %v5392
    %vm5394 = vcmp.lt.s32.totalorder %v5375, 1
    %vm5395 = vcmp.lt.s32.totalorder %v5375, 2
    %vm5396 = vcmp.lt.s32.totalorder %v5375, 3
    %vm5397 = vcmp.lt.s32.totalorder %v5375, 4
    %v5398 = vsel %vm5394, %v5378, %v5381
    %v5399 = vsel %vm5397, %v5387, 2102212464
    %v5400 = vsel %vm5396, %v5384, %v5399
    %v5401 = vsel %vm5395, %v5398, %v5400
    %v5402 = vsel %vm5394, %v5381, %v5384
    %v5403 = vsel %vm5397, %v5390, 920167782
    %v5404 = vsel %vm5396, %v5387, %v5403
    %v5405 = vsel %vm5395, %v5402, %v5404
    %v5406 = vsel %vm5394, %v5384, %v5387
    %v5407 = vsel %vm5397, %v5393, 1326507024
    %v5408 = vsel %vm5396, %v5390, %v5407
    %v5409 = vsel %vm5395, %v5406, %v5408
    %v5410 = vshll.u32 %v5370, 8
    %v5411 = vmul.u32.u64.compose %v5410, %v5409
    %v5412 = vextract.low.u32 %v5411
    %v5413 = vextract.high.u32 %v5411
    %v5414 = vmul.u32.u64.compose %v5410, %v5405
    %v5415 = vextract.low.u32 %v5414
    %v5416 = vextract.high.u32 %v5414
    %v5417 = vmul.u32 %v5410, %v5401
    %v5418 = vadd.s32 %v5413, %v5415
    %vm5419 = vc.u32 %v5413, %v5415
    %v5420 = vadd.s32 %v5416, 1
    %v5421 = vsel %vm5419, %v5420, %v5416
    %v5422 = vadd.s32 %v5417, %v5421
    %v5423 = vadd.s32 %v5422, 536870912
    %v5424 = vshrl.u32 %v5423, 30
    %v5425 = vshll.u32 %v5424, 30
    %v5426 = vsub.s32 %v5422, %v5425
    %vm5427 = vcmp.lt.s32.totalorder %v5426, 0
    %v5428 = vsub.s32 0, %v5426
    %v5429 = vsel %vm5427, %v5428, %v5426
    %v5430 = vclz %v5429
    %v5431 = vsub.s32 %v5430, 2
    %vm5432 = vcmp.gt.s32.totalorder 0, %v5431
    %v5433 = vsel %vm5432, 0, %v5431
    %v5434 = vsub.s32 32, %v5433
    %v5435 = vshll.u32 %v5426, %v5433
    %v5436 = vshrl.u32 %v5418, %v5434
    %v5437 = vor.u32 %v5435, %v5436
    %v5438 = vsub.s32 4294967266, %v5433
    %v5439 = vadd.s32 %v5438, 127
    %v5440 = vshll.u32 %v5439, 23
    %v5441 = vor.u32 4788187, %v5440
    %v5442 = vand.u32 2147483647, %v5441
    %v5444 = vcvt.s32.f32 %v5437
    %v5445 = vmul.f32 %v5444, %v5442
    %v5446 = vxor.u32 %v5445, 2147483648
    %v5447 = vsel %vm5364, %v5446, %v5445
    %v5448 = vsub.s32 4, %v5424
    %v5449 = vsel %vm5364, %v5448, %v5424
    %v5450 = vsel %vm5363, %v560, %v5447
    %v5451 = vsel %vm5363, 0, %v5449
    %v5452 = vcosq.f32.pop %v5450
    %v5453 = vsinq.f32.pop %v5450
    %vm5454 = vweird.f32 %v560
    %v5455 = vadd.s32 %v5451, 3
    %v5456 = vand.u32 %v5455, 3
    %vm5457 = vcmp.lt.s32.totalorder %v5456, 2
    %vm5458 = vcmp.eq.s32.totalorder %v5456, 0
    %v5459 = vxor.u32 %v5453, 2147483648
    %v5460 = vsel %vm5458, %v5452, %v5459
    %vm5461 = vcmp.eq.s32.totalorder %v5456, 2
    %v5462 = vxor.u32 %v5452, 2147483648
    %v5463 = vsel %vm5461, %v5462, %v5453
    %v5464 = vsel %vm5457, %v5460, %v5463
    %v5465 = vsel %vm5454, nan, %v5464
    %v5466 = vand.u32 2147483647, %v561
    %vm5467 = vcmp.le.f32.partialorder %v5466, 0.7853982
    %vm5468 = vcmp.lt.s32.totalorder %v561, 0
    %v5469 = vand.u32 %v561, 2139095040
    %v5470 = vshrl.u32 %v5469, 23
    %v5471 = vsub.s32 %v5470, 127
    %v5472 = vand.u32 2147483647, %v561
    %v5473 = vand.u32 %v5472, 8388607
    %v5474 = vor.u32 %v5473, 8388608
    %v5475 = vsub.s32 0, %v5474
    %v5476 = vadd.s32 %v5471, 1
    %vm5477 = vcmp.gt.s32.totalorder %v5476, 0
    %v5478 = vsel %vm5477, %v5476, 0
    %v5479 = vshrl.u32 %v5478, 5
    %v5480 = vand.u32 %v5478, 31
    %v5481 = vsub.s32 32, %v5480
    %v5482 = vshrl.u32 683565275, %v5481
    %v5483 = vshll.u32 683565275, %v5480
    %v5484 = vshrl.u32 2475754826, %v5481
    %v5485 = vor.u32 %v5483, %v5484
    %v5486 = vshll.u32 2475754826, %v5480
    %v5487 = vshrl.u32 2131351028, %v5481
    %v5488 = vor.u32 %v5486, %v5487
    %v5489 = vshll.u32 2131351028, %v5480
    %v5490 = vshrl.u32 2102212464, %v5481
    %v5491 = vor.u32 %v5489, %v5490
    %v5492 = vshll.u32 2102212464, %v5480
    %v5493 = vshrl.u32 920167782, %v5481
    %v5494 = vor.u32 %v5492, %v5493
    %v5495 = vshll.u32 920167782, %v5480
    %v5496 = vshrl.u32 1326507024, %v5481
    %v5497 = vor.u32 %v5495, %v5496
    %vm5498 = vcmp.lt.s32.totalorder %v5479, 1
    %vm5499 = vcmp.lt.s32.totalorder %v5479, 2
    %vm5500 = vcmp.lt.s32.totalorder %v5479, 3
    %vm5501 = vcmp.lt.s32.totalorder %v5479, 4
    %v5502 = vsel %vm5498, %v5482, %v5485
    %v5503 = vsel %vm5501, %v5491, 2102212464
    %v5504 = vsel %vm5500, %v5488, %v5503
    %v5505 = vsel %vm5499, %v5502, %v5504
    %v5506 = vsel %vm5498, %v5485, %v5488
    %v5507 = vsel %vm5501, %v5494, 920167782
    %v5508 = vsel %vm5500, %v5491, %v5507
    %v5509 = vsel %vm5499, %v5506, %v5508
    %v5510 = vsel %vm5498, %v5488, %v5491
    %v5511 = vsel %vm5501, %v5497, 1326507024
    %v5512 = vsel %vm5500, %v5494, %v5511
    %v5513 = vsel %vm5499, %v5510, %v5512
    %v5514 = vshll.u32 %v5474, 8
    %v5515 = vmul.u32.u64.compose %v5514, %v5513
    %v5516 = vextract.low.u32 %v5515
    %v5517 = vextract.high.u32 %v5515
    %v5518 = vmul.u32.u64.compose %v5514, %v5509
    %v5519 = vextract.low.u32 %v5518
    %v5520 = vextract.high.u32 %v5518
    %v5521 = vmul.u32 %v5514, %v5505
    %v5522 = vadd.s32 %v5517, %v5519
    %vm5523 = vc.u32 %v5517, %v5519
    %v5524 = vadd.s32 %v5520, 1
    %v5525 = vsel %vm5523, %v5524, %v5520
    %v5526 = vadd.s32 %v5521, %v5525
    %v5527 = vadd.s32 %v5526, 536870912
    %v5528 = vshrl.u32 %v5527, 30
    %v5529 = vshll.u32 %v5528, 30
    %v5530 = vsub.s32 %v5526, %v5529
    %vm5531 = vcmp.lt.s32.totalorder %v5530, 0
    %v5532 = vsub.s32 0, %v5530
    %v5533 = vsel %vm5531, %v5532, %v5530
    %v5534 = vclz %v5533
    %v5535 = vsub.s32 %v5534, 2
    %vm5536 = vcmp.gt.s32.totalorder 0, %v5535
    %v5537 = vsel %vm5536, 0, %v5535
    %v5538 = vsub.s32 32, %v5537
    %v5539 = vshll.u32 %v5530, %v5537
    %v5540 = vshrl.u32 %v5522, %v5538
    %v5541 = vor.u32 %v5539, %v5540
    %v5542 = vsub.s32 4294967266, %v5537
    %v5543 = vadd.s32 %v5542, 127
    %v5544 = vshll.u32 %v5543, 23
    %v5545 = vor.u32 4788187, %v5544
    %v5546 = vand.u32 2147483647, %v5545
    %v5548 = vcvt.s32.f32 %v5541
    %v5549 = vmul.f32 %v5548, %v5546
    %v5550 = vxor.u32 %v5549, 2147483648
    %v5551 = vsel %vm5468, %v5550, %v5549
    %v5552 = vsub.s32 4, %v5528
    %v5553 = vsel %vm5468, %v5552, %v5528
    %v5554 = vsel %vm5467, %v561, %v5551
    %v5555 = vsel %vm5467, 0, %v5553
    %v5556 = vcosq.f32.pop %v5554
    %v5557 = vsinq.f32.pop %v5554
    %vm5558 = vweird.f32 %v561
    %v5559 = vadd.s32 %v5555, 3
    %v5560 = vand.u32 %v5559, 3
    %vm5561 = vcmp.lt.s32.totalorder %v5560, 2
    %vm5562 = vcmp.eq.s32.totalorder %v5560, 0
    %v5563 = vxor.u32 %v5557, 2147483648
    %v5564 = vsel %vm5562, %v5556, %v5563
    %vm5565 = vcmp.eq.s32.totalorder %v5560, 2
    %v5566 = vxor.u32 %v5556, 2147483648
    %v5567 = vsel %vm5565, %v5566, %v5557
    %v5568 = vsel %vm5561, %v5564, %v5567
    %v5569 = vsel %vm5558, nan, %v5568
    %v5570 = vand.u32 2147483647, %v562
    %vm5571 = vcmp.le.f32.partialorder %v5570, 0.7853982
    %vm5572 = vcmp.lt.s32.totalorder %v562, 0
    %v5573 = vand.u32 %v562, 2139095040
    %v5574 = vshrl.u32 %v5573, 23
    %v5575 = vsub.s32 %v5574, 127
    %v5576 = vand.u32 2147483647, %v562
    %v5577 = vand.u32 %v5576, 8388607
    %v5578 = vor.u32 %v5577, 8388608
    %v5579 = vsub.s32 0, %v5578
    %v5580 = vadd.s32 %v5575, 1
    %vm5581 = vcmp.gt.s32.totalorder %v5580, 0
    %v5582 = vsel %vm5581, %v5580, 0
    %v5583 = vshrl.u32 %v5582, 5
    %v5584 = vand.u32 %v5582, 31
    %v5585 = vsub.s32 32, %v5584
    %v5586 = vshrl.u32 683565275, %v5585
    %v5587 = vshll.u32 683565275, %v5584
    %v5588 = vshrl.u32 2475754826, %v5585
    %v5589 = vor.u32 %v5587, %v5588
    %v5590 = vshll.u32 2475754826, %v5584
    %v5591 = vshrl.u32 2131351028, %v5585
    %v5592 = vor.u32 %v5590, %v5591
    %v5593 = vshll.u32 2131351028, %v5584
    %v5594 = vshrl.u32 2102212464, %v5585
    %v5595 = vor.u32 %v5593, %v5594
    %v5596 = vshll.u32 2102212464, %v5584
    %v5597 = vshrl.u32 920167782, %v5585
    %v5598 = vor.u32 %v5596, %v5597
    %v5599 = vshll.u32 920167782, %v5584
    %v5600 = vshrl.u32 1326507024, %v5585
    %v5601 = vor.u32 %v5599, %v5600
    %vm5602 = vcmp.lt.s32.totalorder %v5583, 1
    %vm5603 = vcmp.lt.s32.totalorder %v5583, 2
    %vm5604 = vcmp.lt.s32.totalorder %v5583, 3
    %vm5605 = vcmp.lt.s32.totalorder %v5583, 4
    %v5606 = vsel %vm5602, %v5586, %v5589
    %v5607 = vsel %vm5605, %v5595, 2102212464
    %v5608 = vsel %vm5604, %v5592, %v5607
    %v5609 = vsel %vm5603, %v5606, %v5608
    %v5610 = vsel %vm5602, %v5589, %v5592
    %v5611 = vsel %vm5605, %v5598, 920167782
    %v5612 = vsel %vm5604, %v5595, %v5611
    %v5613 = vsel %vm5603, %v5610, %v5612
    %v5614 = vsel %vm5602, %v5592, %v5595
    %v5615 = vsel %vm5605, %v5601, 1326507024
    %v5616 = vsel %vm5604, %v5598, %v5615
    %v5617 = vsel %vm5603, %v5614, %v5616
    %v5618 = vshll.u32 %v5578, 8
    %v5619 = vmul.u32.u64.compose %v5618, %v5617
    %v5620 = vextract.low.u32 %v5619
    %v5621 = vextract.high.u32 %v5619
    %v5622 = vmul.u32.u64.compose %v5618, %v5613
    %v5623 = vextract.low.u32 %v5622
    %v5624 = vextract.high.u32 %v5622
    %v5625 = vmul.u32 %v5618, %v5609
    %v5626 = vadd.s32 %v5621, %v5623
    %vm5627 = vc.u32 %v5621, %v5623
    %v5628 = vadd.s32 %v5624, 1
    %v5629 = vsel %vm5627, %v5628, %v5624
    %v5630 = vadd.s32 %v5625, %v5629
    %v5631 = vadd.s32 %v5630, 536870912
    %v5632 = vshrl.u32 %v5631, 30
    %v5633 = vshll.u32 %v5632, 30
    %v5634 = vsub.s32 %v5630, %v5633
    %vm5635 = vcmp.lt.s32.totalorder %v5634, 0
    %v5636 = vsub.s32 0, %v5634
    %v5637 = vsel %vm5635, %v5636, %v5634
    %v5638 = vclz %v5637
    %v5639 = vsub.s32 %v5638, 2
    %vm5640 = vcmp.gt.s32.totalorder 0, %v5639
    %v5641 = vsel %vm5640, 0, %v5639
    %v5642 = vsub.s32 32, %v5641
    %v5643 = vshll.u32 %v5634, %v5641
    %v5644 = vshrl.u32 %v5626, %v5642
    %v5645 = vor.u32 %v5643, %v5644
    %v5646 = vsub.s32 4294967266, %v5641
    %v5647 = vadd.s32 %v5646, 127
    %v5648 = vshll.u32 %v5647, 23
    %v5649 = vor.u32 4788187, %v5648
    %v5650 = vand.u32 2147483647, %v5649
    %v5652 = vcvt.s32.f32 %v5645
    %v5653 = vmul.f32 %v5652, %v5650
    %v5654 = vxor.u32 %v5653, 2147483648
    %v5655 = vsel %vm5572, %v5654, %v5653
    %v5656 = vsub.s32 4, %v5632
    %v5657 = vsel %vm5572, %v5656, %v5632
    %v5658 = vsel %vm5571, %v562, %v5655
    %v5659 = vsel %vm5571, 0, %v5657
    %v5660 = vcosq.f32.pop %v5658
    %v5661 = vsinq.f32.pop %v5658
    %vm5662 = vweird.f32 %v562
    %v5663 = vadd.s32 %v5659, 3
    %v5664 = vand.u32 %v5663, 3
    %vm5665 = vcmp.lt.s32.totalorder %v5664, 2
    %vm5666 = vcmp.eq.s32.totalorder %v5664, 0
    %v5667 = vxor.u32 %v5661, 2147483648
    %v5668 = vsel %vm5666, %v5660, %v5667
    %vm5669 = vcmp.eq.s32.totalorder %v5664, 2
    %v5670 = vxor.u32 %v5660, 2147483648
    %v5671 = vsel %vm5669, %v5670, %v5661
    %v5672 = vsel %vm5665, %v5668, %v5671
    %v5673 = vsel %vm5662, nan, %v5672
    %v5674 = vand.u32 2147483647, %v563
    %vm5675 = vcmp.le.f32.partialorder %v5674, 0.7853982
    %vm5676 = vcmp.lt.s32.totalorder %v563, 0
    %v5677 = vand.u32 %v563, 2139095040
    %v5678 = vshrl.u32 %v5677, 23
    %v5679 = vsub.s32 %v5678, 127
    %v5680 = vand.u32 2147483647, %v563
    %v5681 = vand.u32 %v5680, 8388607
    %v5682 = vor.u32 %v5681, 8388608
    %v5683 = vsub.s32 0, %v5682
    %v5684 = vadd.s32 %v5679, 1
    %vm5685 = vcmp.gt.s32.totalorder %v5684, 0
    %v5686 = vsel %vm5685, %v5684, 0
    %v5687 = vshrl.u32 %v5686, 5
    %v5688 = vand.u32 %v5686, 31
    %v5689 = vsub.s32 32, %v5688
    %v5690 = vshrl.u32 683565275, %v5689
    %v5691 = vshll.u32 683565275, %v5688
    %v5692 = vshrl.u32 2475754826, %v5689
    %v5693 = vor.u32 %v5691, %v5692
    %v5694 = vshll.u32 2475754826, %v5688
    %v5695 = vshrl.u32 2131351028, %v5689
    %v5696 = vor.u32 %v5694, %v5695
    %v5697 = vshll.u32 2131351028, %v5688
    %v5698 = vshrl.u32 2102212464, %v5689
    %v5699 = vor.u32 %v5697, %v5698
    %v5700 = vshll.u32 2102212464, %v5688
    %v5701 = vshrl.u32 920167782, %v5689
    %v5702 = vor.u32 %v5700, %v5701
    %v5703 = vshll.u32 920167782, %v5688
    %v5704 = vshrl.u32 1326507024, %v5689
    %v5705 = vor.u32 %v5703, %v5704
    %vm5706 = vcmp.lt.s32.totalorder %v5687, 1
    %vm5707 = vcmp.lt.s32.totalorder %v5687, 2
    %vm5708 = vcmp.lt.s32.totalorder %v5687, 3
    %vm5709 = vcmp.lt.s32.totalorder %v5687, 4
    %v5710 = vsel %vm5706, %v5690, %v5693
    %v5711 = vsel %vm5709, %v5699, 2102212464
    %v5712 = vsel %vm5708, %v5696, %v5711
    %v5713 = vsel %vm5707, %v5710, %v5712
    %v5714 = vsel %vm5706, %v5693, %v5696
    %v5715 = vsel %vm5709, %v5702, 920167782
    %v5716 = vsel %vm5708, %v5699, %v5715
    %v5717 = vsel %vm5707, %v5714, %v5716
    %v5718 = vsel %vm5706, %v5696, %v5699
    %v5719 = vsel %vm5709, %v5705, 1326507024
    %v5720 = vsel %vm5708, %v5702, %v5719
    %v5721 = vsel %vm5707, %v5718, %v5720
    %v5722 = vshll.u32 %v5682, 8
    %v5723 = vmul.u32.u64.compose %v5722, %v5721
    %v5724 = vextract.low.u32 %v5723
    %v5725 = vextract.high.u32 %v5723
    %v5726 = vmul.u32.u64.compose %v5722, %v5717
    %v5727 = vextract.low.u32 %v5726
    %v5728 = vextract.high.u32 %v5726
    %v5729 = vmul.u32 %v5722, %v5713
    %v5730 = vadd.s32 %v5725, %v5727
    %vm5731 = vc.u32 %v5725, %v5727
    %v5732 = vadd.s32 %v5728, 1
    %v5733 = vsel %vm5731, %v5732, %v5728
    %v5734 = vadd.s32 %v5729, %v5733
    %v5735 = vadd.s32 %v5734, 536870912
    %v5736 = vshrl.u32 %v5735, 30
    %v5737 = vshll.u32 %v5736, 30
    %v5738 = vsub.s32 %v5734, %v5737
    %vm5739 = vcmp.lt.s32.totalorder %v5738, 0
    %v5740 = vsub.s32 0, %v5738
    %v5741 = vsel %vm5739, %v5740, %v5738
    %v5742 = vclz %v5741
    %v5743 = vsub.s32 %v5742, 2
    %vm5744 = vcmp.gt.s32.totalorder 0, %v5743
    %v5745 = vsel %vm5744, 0, %v5743
    %v5746 = vsub.s32 32, %v5745
    %v5747 = vshll.u32 %v5738, %v5745
    %v5748 = vshrl.u32 %v5730, %v5746
    %v5749 = vor.u32 %v5747, %v5748
    %v5750 = vsub.s32 4294967266, %v5745
    %v5751 = vadd.s32 %v5750, 127
    %v5752 = vshll.u32 %v5751, 23
    %v5753 = vor.u32 4788187, %v5752
    %v5754 = vand.u32 2147483647, %v5753
    %v5756 = vcvt.s32.f32 %v5749
    %v5757 = vmul.f32 %v5756, %v5754
    %v5758 = vxor.u32 %v5757, 2147483648
    %v5759 = vsel %vm5676, %v5758, %v5757
    %v5760 = vsub.s32 4, %v5736
    %v5761 = vsel %vm5676, %v5760, %v5736
    %v5762 = vsel %vm5675, %v563, %v5759
    %v5763 = vsel %vm5675, 0, %v5761
    %v5764 = vcosq.f32.pop %v5762
    %v5765 = vsinq.f32.pop %v5762
    %vm5766 = vweird.f32 %v563
    %v5767 = vadd.s32 %v5763, 3
    %v5768 = vand.u32 %v5767, 3
    %vm5769 = vcmp.lt.s32.totalorder %v5768, 2
    %vm5770 = vcmp.eq.s32.totalorder %v5768, 0
    %v5771 = vxor.u32 %v5765, 2147483648
    %v5772 = vsel %vm5770, %v5764, %v5771
    %vm5773 = vcmp.eq.s32.totalorder %v5768, 2
    %v5774 = vxor.u32 %v5764, 2147483648
    %v5775 = vsel %vm5773, %v5774, %v5765
    %v5776 = vsel %vm5769, %v5772, %v5775
    %v5777 = vsel %vm5766, nan, %v5776
    %v5778 = vand.u32 2147483647, %v564
    %vm5779 = vcmp.le.f32.partialorder %v5778, 0.7853982
    %vm5780 = vcmp.lt.s32.totalorder %v564, 0
    %v5781 = vand.u32 %v564, 2139095040
    %v5782 = vshrl.u32 %v5781, 23
    %v5783 = vsub.s32 %v5782, 127
    %v5784 = vand.u32 2147483647, %v564
    %v5785 = vand.u32 %v5784, 8388607
    %v5786 = vor.u32 %v5785, 8388608
    %v5787 = vsub.s32 0, %v5786
    %v5788 = vadd.s32 %v5783, 1
    %vm5789 = vcmp.gt.s32.totalorder %v5788, 0
    %v5790 = vsel %vm5789, %v5788, 0
    %v5791 = vshrl.u32 %v5790, 5
    %v5792 = vand.u32 %v5790, 31
    %v5793 = vsub.s32 32, %v5792
    %v5794 = vshrl.u32 683565275, %v5793
    %v5795 = vshll.u32 683565275, %v5792
    %v5796 = vshrl.u32 2475754826, %v5793
    %v5797 = vor.u32 %v5795, %v5796
    %v5798 = vshll.u32 2475754826, %v5792
    %v5799 = vshrl.u32 2131351028, %v5793
    %v5800 = vor.u32 %v5798, %v5799
    %v5801 = vshll.u32 2131351028, %v5792
    %v5802 = vshrl.u32 2102212464, %v5793
    %v5803 = vor.u32 %v5801, %v5802
    %v5804 = vshll.u32 2102212464, %v5792
    %v5805 = vshrl.u32 920167782, %v5793
    %v5806 = vor.u32 %v5804, %v5805
    %v5807 = vshll.u32 920167782, %v5792
    %v5808 = vshrl.u32 1326507024, %v5793
    %v5809 = vor.u32 %v5807, %v5808
    %vm5810 = vcmp.lt.s32.totalorder %v5791, 1
    %vm5811 = vcmp.lt.s32.totalorder %v5791, 2
    %vm5812 = vcmp.lt.s32.totalorder %v5791, 3
    %vm5813 = vcmp.lt.s32.totalorder %v5791, 4
    %v5814 = vsel %vm5810, %v5794, %v5797
    %v5815 = vsel %vm5813, %v5803, 2102212464
    %v5816 = vsel %vm5812, %v5800, %v5815
    %v5817 = vsel %vm5811, %v5814, %v5816
    %v5818 = vsel %vm5810, %v5797, %v5800
    %v5819 = vsel %vm5813, %v5806, 920167782
    %v5820 = vsel %vm5812, %v5803, %v5819
    %v5821 = vsel %vm5811, %v5818, %v5820
    %v5822 = vsel %vm5810, %v5800, %v5803
    %v5823 = vsel %vm5813, %v5809, 1326507024
    %v5824 = vsel %vm5812, %v5806, %v5823
    %v5825 = vsel %vm5811, %v5822, %v5824
    %v5826 = vshll.u32 %v5786, 8
    %v5827 = vmul.u32.u64.compose %v5826, %v5825
    %v5828 = vextract.low.u32 %v5827
    %v5829 = vextract.high.u32 %v5827
    %v5830 = vmul.u32.u64.compose %v5826, %v5821
    %v5831 = vextract.low.u32 %v5830
    %v5832 = vextract.high.u32 %v5830
    %v5833 = vmul.u32 %v5826, %v5817
    %v5834 = vadd.s32 %v5829, %v5831
    %vm5835 = vc.u32 %v5829, %v5831
    %v5836 = vadd.s32 %v5832, 1
    %v5837 = vsel %vm5835, %v5836, %v5832
    %v5838 = vadd.s32 %v5833, %v5837
    %v5839 = vadd.s32 %v5838, 536870912
    %v5840 = vshrl.u32 %v5839, 30
    %v5841 = vshll.u32 %v5840, 30
    %v5842 = vsub.s32 %v5838, %v5841
    %vm5843 = vcmp.lt.s32.totalorder %v5842, 0
    %v5844 = vsub.s32 0, %v5842
    %v5845 = vsel %vm5843, %v5844, %v5842
    %v5846 = vclz %v5845
    %v5847 = vsub.s32 %v5846, 2
    %vm5848 = vcmp.gt.s32.totalorder 0, %v5847
    %v5849 = vsel %vm5848, 0, %v5847
    %v5850 = vsub.s32 32, %v5849
    %v5851 = vshll.u32 %v5842, %v5849
    %v5852 = vshrl.u32 %v5834, %v5850
    %v5853 = vor.u32 %v5851, %v5852
    %v5854 = vsub.s32 4294967266, %v5849
    %v5855 = vadd.s32 %v5854, 127
    %v5856 = vshll.u32 %v5855, 23
    %v5857 = vor.u32 4788187, %v5856
    %v5858 = vand.u32 2147483647, %v5857
    %v5860 = vcvt.s32.f32 %v5853
    %v5861 = vmul.f32 %v5860, %v5858
    %v5862 = vxor.u32 %v5861, 2147483648
    %v5863 = vsel %vm5780, %v5862, %v5861
    %v5864 = vsub.s32 4, %v5840
    %v5865 = vsel %vm5780, %v5864, %v5840
    %v5866 = vsel %vm5779, %v564, %v5863
    %v5867 = vsel %vm5779, 0, %v5865
    %v5868 = vcosq.f32.pop %v5866
    %v5869 = vsinq.f32.pop %v5866
    %vm5870 = vweird.f32 %v564
    %v5871 = vadd.s32 %v5867, 3
    %v5872 = vand.u32 %v5871, 3
    %vm5873 = vcmp.lt.s32.totalorder %v5872, 2
    %vm5874 = vcmp.eq.s32.totalorder %v5872, 0
    %v5875 = vxor.u32 %v5869, 2147483648
    %v5876 = vsel %vm5874, %v5868, %v5875
    %vm5877 = vcmp.eq.s32.totalorder %v5872, 2
    %v5878 = vxor.u32 %v5868, 2147483648
    %v5879 = vsel %vm5877, %v5878, %v5869
    %v5880 = vsel %vm5873, %v5876, %v5879
    %v5881 = vsel %vm5870, nan, %v5880
    %v5882 = vand.u32 2147483647, %v565
    %vm5883 = vcmp.le.f32.partialorder %v5882, 0.7853982
    %vm5884 = vcmp.lt.s32.totalorder %v565, 0
    %v5885 = vand.u32 %v565, 2139095040
    %v5886 = vshrl.u32 %v5885, 23
    %v5887 = vsub.s32 %v5886, 127
    %v5888 = vand.u32 2147483647, %v565
    %v5889 = vand.u32 %v5888, 8388607
    %v5890 = vor.u32 %v5889, 8388608
    %v5891 = vsub.s32 0, %v5890
    %v5892 = vadd.s32 %v5887, 1
    %vm5893 = vcmp.gt.s32.totalorder %v5892, 0
    %v5894 = vsel %vm5893, %v5892, 0
    %v5895 = vshrl.u32 %v5894, 5
    %v5896 = vand.u32 %v5894, 31
    %v5897 = vsub.s32 32, %v5896
    %v5898 = vshrl.u32 683565275, %v5897
    %v5899 = vshll.u32 683565275, %v5896
    %v5900 = vshrl.u32 2475754826, %v5897
    %v5901 = vor.u32 %v5899, %v5900
    %v5902 = vshll.u32 2475754826, %v5896
    %v5903 = vshrl.u32 2131351028, %v5897
    %v5904 = vor.u32 %v5902, %v5903
    %v5905 = vshll.u32 2131351028, %v5896
    %v5906 = vshrl.u32 2102212464, %v5897
    %v5907 = vor.u32 %v5905, %v5906
    %v5908 = vshll.u32 2102212464, %v5896
    %v5909 = vshrl.u32 920167782, %v5897
    %v5910 = vor.u32 %v5908, %v5909
    %v5911 = vshll.u32 920167782, %v5896
    %v5912 = vshrl.u32 1326507024, %v5897
    %v5913 = vor.u32 %v5911, %v5912
    %vm5914 = vcmp.lt.s32.totalorder %v5895, 1
    %vm5915 = vcmp.lt.s32.totalorder %v5895, 2
    %vm5916 = vcmp.lt.s32.totalorder %v5895, 3
    %vm5917 = vcmp.lt.s32.totalorder %v5895, 4
    %v5918 = vsel %vm5914, %v5898, %v5901
    %v5919 = vsel %vm5917, %v5907, 2102212464
    %v5920 = vsel %vm5916, %v5904, %v5919
    %v5921 = vsel %vm5915, %v5918, %v5920
    %v5922 = vsel %vm5914, %v5901, %v5904
    %v5923 = vsel %vm5917, %v5910, 920167782
    %v5924 = vsel %vm5916, %v5907, %v5923
    %v5925 = vsel %vm5915, %v5922, %v5924
    %v5926 = vsel %vm5914, %v5904, %v5907
    %v5927 = vsel %vm5917, %v5913, 1326507024
    %v5928 = vsel %vm5916, %v5910, %v5927
    %v5929 = vsel %vm5915, %v5926, %v5928
    %v5930 = vshll.u32 %v5890, 8
    %v5931 = vmul.u32.u64.compose %v5930, %v5929
    %v5932 = vextract.low.u32 %v5931
    %v5933 = vextract.high.u32 %v5931
    %v5934 = vmul.u32.u64.compose %v5930, %v5925
    %v5935 = vextract.low.u32 %v5934
    %v5936 = vextract.high.u32 %v5934
    %v5937 = vmul.u32 %v5930, %v5921
    %v5938 = vadd.s32 %v5933, %v5935
    %vm5939 = vc.u32 %v5933, %v5935
    %v5940 = vadd.s32 %v5936, 1
    %v5941 = vsel %vm5939, %v5940, %v5936
    %v5942 = vadd.s32 %v5937, %v5941
    %v5943 = vadd.s32 %v5942, 536870912
    %v5944 = vshrl.u32 %v5943, 30
    %v5945 = vshll.u32 %v5944, 30
    %v5946 = vsub.s32 %v5942, %v5945
    %vm5947 = vcmp.lt.s32.totalorder %v5946, 0
    %v5948 = vsub.s32 0, %v5946
    %v5949 = vsel %vm5947, %v5948, %v5946
    %v5950 = vclz %v5949
    %v5951 = vsub.s32 %v5950, 2
    %vm5952 = vcmp.gt.s32.totalorder 0, %v5951
    %v5953 = vsel %vm5952, 0, %v5951
    %v5954 = vsub.s32 32, %v5953
    %v5955 = vshll.u32 %v5946, %v5953
    %v5956 = vshrl.u32 %v5938, %v5954
    %v5957 = vor.u32 %v5955, %v5956
    %v5958 = vsub.s32 4294967266, %v5953
    %v5959 = vadd.s32 %v5958, 127
    %v5960 = vshll.u32 %v5959, 23
    %v5961 = vor.u32 4788187, %v5960
    %v5962 = vand.u32 2147483647, %v5961
    %v5964 = vcvt.s32.f32 %v5957
    %v5965 = vmul.f32 %v5964, %v5962
    %v5966 = vxor.u32 %v5965, 2147483648
    %v5967 = vsel %vm5884, %v5966, %v5965
    %v5968 = vsub.s32 4, %v5944
    %v5969 = vsel %vm5884, %v5968, %v5944
    %v5970 = vsel %vm5883, %v565, %v5967
    %v5971 = vsel %vm5883, 0, %v5969
    %v5972 = vcosq.f32.pop %v5970
    %v5973 = vsinq.f32.pop %v5970
    %vm5974 = vweird.f32 %v565
    %v5975 = vadd.s32 %v5971, 3
    %v5976 = vand.u32 %v5975, 3
    %vm5977 = vcmp.lt.s32.totalorder %v5976, 2
    %vm5978 = vcmp.eq.s32.totalorder %v5976, 0
    %v5979 = vxor.u32 %v5973, 2147483648
    %v5980 = vsel %vm5978, %v5972, %v5979
    %vm5981 = vcmp.eq.s32.totalorder %v5976, 2
    %v5982 = vxor.u32 %v5972, 2147483648
    %v5983 = vsel %vm5981, %v5982, %v5973
    %v5984 = vsel %vm5977, %v5980, %v5983
    %v5985 = vsel %vm5974, nan, %v5984
    %v5986 = vand.u32 2147483647, %v566
    %vm5987 = vcmp.le.f32.partialorder %v5986, 0.7853982
    %vm5988 = vcmp.lt.s32.totalorder %v566, 0
    %v5989 = vand.u32 %v566, 2139095040
    %v5990 = vshrl.u32 %v5989, 23
    %v5991 = vsub.s32 %v5990, 127
    %v5992 = vand.u32 2147483647, %v566
    %v5993 = vand.u32 %v5992, 8388607
    %v5994 = vor.u32 %v5993, 8388608
    %v5995 = vsub.s32 0, %v5994
    %v5996 = vadd.s32 %v5991, 1
    %vm5997 = vcmp.gt.s32.totalorder %v5996, 0
    %v5998 = vsel %vm5997, %v5996, 0
    %v5999 = vshrl.u32 %v5998, 5
    %v6000 = vand.u32 %v5998, 31
    %v6001 = vsub.s32 32, %v6000
    %v6002 = vshrl.u32 683565275, %v6001
    %v6003 = vshll.u32 683565275, %v6000
    %v6004 = vshrl.u32 2475754826, %v6001
    %v6005 = vor.u32 %v6003, %v6004
    %v6006 = vshll.u32 2475754826, %v6000
    %v6007 = vshrl.u32 2131351028, %v6001
    %v6008 = vor.u32 %v6006, %v6007
    %v6009 = vshll.u32 2131351028, %v6000
    %v6010 = vshrl.u32 2102212464, %v6001
    %v6011 = vor.u32 %v6009, %v6010
    %v6012 = vshll.u32 2102212464, %v6000
    %v6013 = vshrl.u32 920167782, %v6001
    %v6014 = vor.u32 %v6012, %v6013
    %v6015 = vshll.u32 920167782, %v6000
    %v6016 = vshrl.u32 1326507024, %v6001
    %v6017 = vor.u32 %v6015, %v6016
    %vm6018 = vcmp.lt.s32.totalorder %v5999, 1
    %vm6019 = vcmp.lt.s32.totalorder %v5999, 2
    %vm6020 = vcmp.lt.s32.totalorder %v5999, 3
    %vm6021 = vcmp.lt.s32.totalorder %v5999, 4
    %v6022 = vsel %vm6018, %v6002, %v6005
    %v6023 = vsel %vm6021, %v6011, 2102212464
    %v6024 = vsel %vm6020, %v6008, %v6023
    %v6025 = vsel %vm6019, %v6022, %v6024
    %v6026 = vsel %vm6018, %v6005, %v6008
    %v6027 = vsel %vm6021, %v6014, 920167782
    %v6028 = vsel %vm6020, %v6011, %v6027
    %v6029 = vsel %vm6019, %v6026, %v6028
    %v6030 = vsel %vm6018, %v6008, %v6011
    %v6031 = vsel %vm6021, %v6017, 1326507024
    %v6032 = vsel %vm6020, %v6014, %v6031
    %v6033 = vsel %vm6019, %v6030, %v6032
    %v6034 = vshll.u32 %v5994, 8
    %v6035 = vmul.u32.u64.compose %v6034, %v6033
    %v6036 = vextract.low.u32 %v6035
    %v6037 = vextract.high.u32 %v6035
    %v6038 = vmul.u32.u64.compose %v6034, %v6029
    %v6039 = vextract.low.u32 %v6038
    %v6040 = vextract.high.u32 %v6038
    %v6041 = vmul.u32 %v6034, %v6025
    %v6042 = vadd.s32 %v6037, %v6039
    %vm6043 = vc.u32 %v6037, %v6039
    %v6044 = vadd.s32 %v6040, 1
    %v6045 = vsel %vm6043, %v6044, %v6040
    %v6046 = vadd.s32 %v6041, %v6045
    %v6047 = vadd.s32 %v6046, 536870912
    %v6048 = vshrl.u32 %v6047, 30
    %v6049 = vshll.u32 %v6048, 30
    %v6050 = vsub.s32 %v6046, %v6049
    %vm6051 = vcmp.lt.s32.totalorder %v6050, 0
    %v6052 = vsub.s32 0, %v6050
    %v6053 = vsel %vm6051, %v6052, %v6050
    %v6054 = vclz %v6053
    %v6055 = vsub.s32 %v6054, 2
    %vm6056 = vcmp.gt.s32.totalorder 0, %v6055
    %v6057 = vsel %vm6056, 0, %v6055
    %v6058 = vsub.s32 32, %v6057
    %v6059 = vshll.u32 %v6050, %v6057
    %v6060 = vshrl.u32 %v6042, %v6058
    %v6061 = vor.u32 %v6059, %v6060
    %v6062 = vsub.s32 4294967266, %v6057
    %v6063 = vadd.s32 %v6062, 127
    %v6064 = vshll.u32 %v6063, 23
    %v6065 = vor.u32 4788187, %v6064
    %v6066 = vand.u32 2147483647, %v6065
    %v6068 = vcvt.s32.f32 %v6061
    %v6069 = vmul.f32 %v6068, %v6066
    %v6070 = vxor.u32 %v6069, 2147483648
    %v6071 = vsel %vm5988, %v6070, %v6069
    %v6072 = vsub.s32 4, %v6048
    %v6073 = vsel %vm5988, %v6072, %v6048
    %v6074 = vsel %vm5987, %v566, %v6071
    %v6075 = vsel %vm5987, 0, %v6073
    %v6076 = vcosq.f32.pop %v6074
    %v6077 = vsinq.f32.pop %v6074
    %vm6078 = vweird.f32 %v566
    %v6079 = vadd.s32 %v6075, 3
    %v6080 = vand.u32 %v6079, 3
    %vm6081 = vcmp.lt.s32.totalorder %v6080, 2
    %vm6082 = vcmp.eq.s32.totalorder %v6080, 0
    %v6083 = vxor.u32 %v6077, 2147483648
    %v6084 = vsel %vm6082, %v6076, %v6083
    %vm6085 = vcmp.eq.s32.totalorder %v6080, 2
    %v6086 = vxor.u32 %v6076, 2147483648
    %v6087 = vsel %vm6085, %v6086, %v6077
    %v6088 = vsel %vm6081, %v6084, %v6087
    %v6089 = vsel %vm6078, nan, %v6088
    %v6090 = vand.u32 2147483647, %v567
    %vm6091 = vcmp.le.f32.partialorder %v6090, 0.7853982
    %vm6092 = vcmp.lt.s32.totalorder %v567, 0
    %v6093 = vand.u32 %v567, 2139095040
    %v6094 = vshrl.u32 %v6093, 23
    %v6095 = vsub.s32 %v6094, 127
    %v6096 = vand.u32 2147483647, %v567
    %v6097 = vand.u32 %v6096, 8388607
    %v6098 = vor.u32 %v6097, 8388608
    %v6099 = vsub.s32 0, %v6098
    %v6100 = vadd.s32 %v6095, 1
    %vm6101 = vcmp.gt.s32.totalorder %v6100, 0
    %v6102 = vsel %vm6101, %v6100, 0
    %v6103 = vshrl.u32 %v6102, 5
    %v6104 = vand.u32 %v6102, 31
    %v6105 = vsub.s32 32, %v6104
    %v6106 = vshrl.u32 683565275, %v6105
    %v6107 = vshll.u32 683565275, %v6104
    %v6108 = vshrl.u32 2475754826, %v6105
    %v6109 = vor.u32 %v6107, %v6108
    %v6110 = vshll.u32 2475754826, %v6104
    %v6111 = vshrl.u32 2131351028, %v6105
    %v6112 = vor.u32 %v6110, %v6111
    %v6113 = vshll.u32 2131351028, %v6104
    %v6114 = vshrl.u32 2102212464, %v6105
    %v6115 = vor.u32 %v6113, %v6114
    %v6116 = vshll.u32 2102212464, %v6104
    %v6117 = vshrl.u32 920167782, %v6105
    %v6118 = vor.u32 %v6116, %v6117
    %v6119 = vshll.u32 920167782, %v6104
    %v6120 = vshrl.u32 1326507024, %v6105
    %v6121 = vor.u32 %v6119, %v6120
    %vm6122 = vcmp.lt.s32.totalorder %v6103, 1
    %vm6123 = vcmp.lt.s32.totalorder %v6103, 2
    %vm6124 = vcmp.lt.s32.totalorder %v6103, 3
    %vm6125 = vcmp.lt.s32.totalorder %v6103, 4
    %v6126 = vsel %vm6122, %v6106, %v6109
    %v6127 = vsel %vm6125, %v6115, 2102212464
    %v6128 = vsel %vm6124, %v6112, %v6127
    %v6129 = vsel %vm6123, %v6126, %v6128
    %v6130 = vsel %vm6122, %v6109, %v6112
    %v6131 = vsel %vm6125, %v6118, 920167782
    %v6132 = vsel %vm6124, %v6115, %v6131
    %v6133 = vsel %vm6123, %v6130, %v6132
    %v6134 = vsel %vm6122, %v6112, %v6115
    %v6135 = vsel %vm6125, %v6121, 1326507024
    %v6136 = vsel %vm6124, %v6118, %v6135
    %v6137 = vsel %vm6123, %v6134, %v6136
    %v6138 = vshll.u32 %v6098, 8
    %v6139 = vmul.u32.u64.compose %v6138, %v6137
    %v6140 = vextract.low.u32 %v6139
    %v6141 = vextract.high.u32 %v6139
    %v6142 = vmul.u32.u64.compose %v6138, %v6133
    %v6143 = vextract.low.u32 %v6142
    %v6144 = vextract.high.u32 %v6142
    %v6145 = vmul.u32 %v6138, %v6129
    %v6146 = vadd.s32 %v6141, %v6143
    %vm6147 = vc.u32 %v6141, %v6143
    %v6148 = vadd.s32 %v6144, 1
    %v6149 = vsel %vm6147, %v6148, %v6144
    %v6150 = vadd.s32 %v6145, %v6149
    %v6151 = vadd.s32 %v6150, 536870912
    %v6152 = vshrl.u32 %v6151, 30
    %v6153 = vshll.u32 %v6152, 30
    %v6154 = vsub.s32 %v6150, %v6153
    %vm6155 = vcmp.lt.s32.totalorder %v6154, 0
    %v6156 = vsub.s32 0, %v6154
    %v6157 = vsel %vm6155, %v6156, %v6154
    %v6158 = vclz %v6157
    %v6159 = vsub.s32 %v6158, 2
    %vm6160 = vcmp.gt.s32.totalorder 0, %v6159
    %v6161 = vsel %vm6160, 0, %v6159
    %v6162 = vsub.s32 32, %v6161
    %v6163 = vshll.u32 %v6154, %v6161
    %v6164 = vshrl.u32 %v6146, %v6162
    %v6165 = vor.u32 %v6163, %v6164
    %v6166 = vsub.s32 4294967266, %v6161
    %v6167 = vadd.s32 %v6166, 127
    %v6168 = vshll.u32 %v6167, 23
    %v6169 = vor.u32 4788187, %v6168
    %v6170 = vand.u32 2147483647, %v6169
    %v6172 = vcvt.s32.f32 %v6165
    %v6173 = vmul.f32 %v6172, %v6170
    %v6174 = vxor.u32 %v6173, 2147483648
    %v6175 = vsel %vm6092, %v6174, %v6173
    %v6176 = vsub.s32 4, %v6152
    %v6177 = vsel %vm6092, %v6176, %v6152
    %v6178 = vsel %vm6091, %v567, %v6175
    %v6179 = vsel %vm6091, 0, %v6177
    %v6180 = vcosq.f32.pop %v6178
    %v6181 = vsinq.f32.pop %v6178
    %vm6182 = vweird.f32 %v567
    %v6183 = vadd.s32 %v6179, 3
    %v6184 = vand.u32 %v6183, 3
    %vm6185 = vcmp.lt.s32.totalorder %v6184, 2
    %vm6186 = vcmp.eq.s32.totalorder %v6184, 0
    %v6187 = vxor.u32 %v6181, 2147483648
    %v6188 = vsel %vm6186, %v6180, %v6187
    %vm6189 = vcmp.eq.s32.totalorder %v6184, 2
    %v6190 = vxor.u32 %v6180, 2147483648
    %v6191 = vsel %vm6189, %v6190, %v6181
    %v6192 = vsel %vm6185, %v6188, %v6191
    %v6193 = vsel %vm6182, nan, %v6192
    %v6194 = vand.u32 2147483647, %v568
    %vm6195 = vcmp.le.f32.partialorder %v6194, 0.7853982
    %vm6196 = vcmp.lt.s32.totalorder %v568, 0
    %v6197 = vand.u32 %v568, 2139095040
    %v6198 = vshrl.u32 %v6197, 23
    %v6199 = vsub.s32 %v6198, 127
    %v6200 = vand.u32 2147483647, %v568
    %v6201 = vand.u32 %v6200, 8388607
    %v6202 = vor.u32 %v6201, 8388608
    %v6203 = vsub.s32 0, %v6202
    %v6204 = vadd.s32 %v6199, 1
    %vm6205 = vcmp.gt.s32.totalorder %v6204, 0
    %v6206 = vsel %vm6205, %v6204, 0
    %v6207 = vshrl.u32 %v6206, 5
    %v6208 = vand.u32 %v6206, 31
    %v6209 = vsub.s32 32, %v6208
    %v6210 = vshrl.u32 683565275, %v6209
    %v6211 = vshll.u32 683565275, %v6208
    %v6212 = vshrl.u32 2475754826, %v6209
    %v6213 = vor.u32 %v6211, %v6212
    %v6214 = vshll.u32 2475754826, %v6208
    %v6215 = vshrl.u32 2131351028, %v6209
    %v6216 = vor.u32 %v6214, %v6215
    %v6217 = vshll.u32 2131351028, %v6208
    %v6218 = vshrl.u32 2102212464, %v6209
    %v6219 = vor.u32 %v6217, %v6218
    %v6220 = vshll.u32 2102212464, %v6208
    %v6221 = vshrl.u32 920167782, %v6209
    %v6222 = vor.u32 %v6220, %v6221
    %v6223 = vshll.u32 920167782, %v6208
    %v6224 = vshrl.u32 1326507024, %v6209
    %v6225 = vor.u32 %v6223, %v6224
    %vm6226 = vcmp.lt.s32.totalorder %v6207, 1
    %vm6227 = vcmp.lt.s32.totalorder %v6207, 2
    %vm6228 = vcmp.lt.s32.totalorder %v6207, 3
    %vm6229 = vcmp.lt.s32.totalorder %v6207, 4
    %v6230 = vsel %vm6226, %v6210, %v6213
    %v6231 = vsel %vm6229, %v6219, 2102212464
    %v6232 = vsel %vm6228, %v6216, %v6231
    %v6233 = vsel %vm6227, %v6230, %v6232
    %v6234 = vsel %vm6226, %v6213, %v6216
    %v6235 = vsel %vm6229, %v6222, 920167782
    %v6236 = vsel %vm6228, %v6219, %v6235
    %v6237 = vsel %vm6227, %v6234, %v6236
    %v6238 = vsel %vm6226, %v6216, %v6219
    %v6239 = vsel %vm6229, %v6225, 1326507024
    %v6240 = vsel %vm6228, %v6222, %v6239
    %v6241 = vsel %vm6227, %v6238, %v6240
    %v6242 = vshll.u32 %v6202, 8
    %v6243 = vmul.u32.u64.compose %v6242, %v6241
    %v6244 = vextract.low.u32 %v6243
    %v6245 = vextract.high.u32 %v6243
    %v6246 = vmul.u32.u64.compose %v6242, %v6237
    %v6247 = vextract.low.u32 %v6246
    %v6248 = vextract.high.u32 %v6246
    %v6249 = vmul.u32 %v6242, %v6233
    %v6250 = vadd.s32 %v6245, %v6247
    %vm6251 = vc.u32 %v6245, %v6247
    %v6252 = vadd.s32 %v6248, 1
    %v6253 = vsel %vm6251, %v6252, %v6248
    %v6254 = vadd.s32 %v6249, %v6253
    %v6255 = vadd.s32 %v6254, 536870912
    %v6256 = vshrl.u32 %v6255, 30
    %v6257 = vshll.u32 %v6256, 30
    %v6258 = vsub.s32 %v6254, %v6257
    %vm6259 = vcmp.lt.s32.totalorder %v6258, 0
    %v6260 = vsub.s32 0, %v6258
    %v6261 = vsel %vm6259, %v6260, %v6258
    %v6262 = vclz %v6261
    %v6263 = vsub.s32 %v6262, 2
    %vm6264 = vcmp.gt.s32.totalorder 0, %v6263
    %v6265 = vsel %vm6264, 0, %v6263
    %v6266 = vsub.s32 32, %v6265
    %v6267 = vshll.u32 %v6258, %v6265
    %v6268 = vshrl.u32 %v6250, %v6266
    %v6269 = vor.u32 %v6267, %v6268
    %v6270 = vsub.s32 4294967266, %v6265
    %v6271 = vadd.s32 %v6270, 127
    %v6272 = vshll.u32 %v6271, 23
    %v6273 = vor.u32 4788187, %v6272
    %v6274 = vand.u32 2147483647, %v6273
    %v6276 = vcvt.s32.f32 %v6269
    %v6277 = vmul.f32 %v6276, %v6274
    %v6278 = vxor.u32 %v6277, 2147483648
    %v6279 = vsel %vm6196, %v6278, %v6277
    %v6280 = vsub.s32 4, %v6256
    %v6281 = vsel %vm6196, %v6280, %v6256
    %v6282 = vsel %vm6195, %v568, %v6279
    %v6283 = vsel %vm6195, 0, %v6281
    %v6284 = vcosq.f32.pop %v6282
    %v6285 = vsinq.f32.pop %v6282
    %vm6286 = vweird.f32 %v568
    %v6287 = vadd.s32 %v6283, 3
    %v6288 = vand.u32 %v6287, 3
    %vm6289 = vcmp.lt.s32.totalorder %v6288, 2
    %vm6290 = vcmp.eq.s32.totalorder %v6288, 0
    %v6291 = vxor.u32 %v6285, 2147483648
    %v6292 = vsel %vm6290, %v6284, %v6291
    %vm6293 = vcmp.eq.s32.totalorder %v6288, 2
    %v6294 = vxor.u32 %v6284, 2147483648
    %v6295 = vsel %vm6293, %v6294, %v6285
    %v6296 = vsel %vm6289, %v6292, %v6295
    %v6297 = vsel %vm6286, nan, %v6296
    %v6298 = vand.u32 2147483647, %v569
    %vm6299 = vcmp.le.f32.partialorder %v6298, 0.7853982
    %vm6300 = vcmp.lt.s32.totalorder %v569, 0
    %v6301 = vand.u32 %v569, 2139095040
    %v6302 = vshrl.u32 %v6301, 23
    %v6303 = vsub.s32 %v6302, 127
    %v6304 = vand.u32 2147483647, %v569
    %v6305 = vand.u32 %v6304, 8388607
    %v6306 = vor.u32 %v6305, 8388608
    %v6307 = vsub.s32 0, %v6306
    %v6308 = vadd.s32 %v6303, 1
    %vm6309 = vcmp.gt.s32.totalorder %v6308, 0
    %v6310 = vsel %vm6309, %v6308, 0
    %v6311 = vshrl.u32 %v6310, 5
    %v6312 = vand.u32 %v6310, 31
    %v6313 = vsub.s32 32, %v6312
    %v6314 = vshrl.u32 683565275, %v6313
    %v6315 = vshll.u32 683565275, %v6312
    %v6316 = vshrl.u32 2475754826, %v6313
    %v6317 = vor.u32 %v6315, %v6316
    %v6318 = vshll.u32 2475754826, %v6312
    %v6319 = vshrl.u32 2131351028, %v6313
    %v6320 = vor.u32 %v6318, %v6319
    %v6321 = vshll.u32 2131351028, %v6312
    %v6322 = vshrl.u32 2102212464, %v6313
    %v6323 = vor.u32 %v6321, %v6322
    %v6324 = vshll.u32 2102212464, %v6312
    %v6325 = vshrl.u32 920167782, %v6313
    %v6326 = vor.u32 %v6324, %v6325
    %v6327 = vshll.u32 920167782, %v6312
    %v6328 = vshrl.u32 1326507024, %v6313
    %v6329 = vor.u32 %v6327, %v6328
    %vm6330 = vcmp.lt.s32.totalorder %v6311, 1
    %vm6331 = vcmp.lt.s32.totalorder %v6311, 2
    %vm6332 = vcmp.lt.s32.totalorder %v6311, 3
    %vm6333 = vcmp.lt.s32.totalorder %v6311, 4
    %v6334 = vsel %vm6330, %v6314, %v6317
    %v6335 = vsel %vm6333, %v6323, 2102212464
    %v6336 = vsel %vm6332, %v6320, %v6335
    %v6337 = vsel %vm6331, %v6334, %v6336
    %v6338 = vsel %vm6330, %v6317, %v6320
    %v6339 = vsel %vm6333, %v6326, 920167782
    %v6340 = vsel %vm6332, %v6323, %v6339
    %v6341 = vsel %vm6331, %v6338, %v6340
    %v6342 = vsel %vm6330, %v6320, %v6323
    %v6343 = vsel %vm6333, %v6329, 1326507024
    %v6344 = vsel %vm6332, %v6326, %v6343
    %v6345 = vsel %vm6331, %v6342, %v6344
    %v6346 = vshll.u32 %v6306, 8
    %v6347 = vmul.u32.u64.compose %v6346, %v6345
    %v6348 = vextract.low.u32 %v6347
    %v6349 = vextract.high.u32 %v6347
    %v6350 = vmul.u32.u64.compose %v6346, %v6341
    %v6351 = vextract.low.u32 %v6350
    %v6352 = vextract.high.u32 %v6350
    %v6353 = vmul.u32 %v6346, %v6337
    %v6354 = vadd.s32 %v6349, %v6351
    %vm6355 = vc.u32 %v6349, %v6351
    %v6356 = vadd.s32 %v6352, 1
    %v6357 = vsel %vm6355, %v6356, %v6352
    %v6358 = vadd.s32 %v6353, %v6357
    %v6359 = vadd.s32 %v6358, 536870912
    %v6360 = vshrl.u32 %v6359, 30
    %v6361 = vshll.u32 %v6360, 30
    %v6362 = vsub.s32 %v6358, %v6361
    %vm6363 = vcmp.lt.s32.totalorder %v6362, 0
    %v6364 = vsub.s32 0, %v6362
    %v6365 = vsel %vm6363, %v6364, %v6362
    %v6366 = vclz %v6365
    %v6367 = vsub.s32 %v6366, 2
    %vm6368 = vcmp.gt.s32.totalorder 0, %v6367
    %v6369 = vsel %vm6368, 0, %v6367
    %v6370 = vsub.s32 32, %v6369
    %v6371 = vshll.u32 %v6362, %v6369
    %v6372 = vshrl.u32 %v6354, %v6370
    %v6373 = vor.u32 %v6371, %v6372
    %v6374 = vsub.s32 4294967266, %v6369
    %v6375 = vadd.s32 %v6374, 127
    %v6376 = vshll.u32 %v6375, 23
    %v6377 = vor.u32 4788187, %v6376
    %v6378 = vand.u32 2147483647, %v6377
    %v6380 = vcvt.s32.f32 %v6373
    %v6381 = vmul.f32 %v6380, %v6378
    %v6382 = vxor.u32 %v6381, 2147483648
    %v6383 = vsel %vm6300, %v6382, %v6381
    %v6384 = vsub.s32 4, %v6360
    %v6385 = vsel %vm6300, %v6384, %v6360
    %v6386 = vsel %vm6299, %v569, %v6383
    %v6387 = vsel %vm6299, 0, %v6385
    %v6388 = vcosq.f32.pop %v6386
    %v6389 = vsinq.f32.pop %v6386
    %vm6390 = vweird.f32 %v569
    %v6391 = vadd.s32 %v6387, 3
    %v6392 = vand.u32 %v6391, 3
    %vm6393 = vcmp.lt.s32.totalorder %v6392, 2
    %vm6394 = vcmp.eq.s32.totalorder %v6392, 0
    %v6395 = vxor.u32 %v6389, 2147483648
    %v6396 = vsel %vm6394, %v6388, %v6395
    %vm6397 = vcmp.eq.s32.totalorder %v6392, 2
    %v6398 = vxor.u32 %v6388, 2147483648
    %v6399 = vsel %vm6397, %v6398, %v6389
    %v6400 = vsel %vm6393, %v6396, %v6399
    %v6401 = vsel %vm6390, nan, %v6400
    %v6402 = vand.u32 2147483647, %v570
    %vm6403 = vcmp.le.f32.partialorder %v6402, 0.7853982
    %vm6404 = vcmp.lt.s32.totalorder %v570, 0
    %v6405 = vand.u32 %v570, 2139095040
    %v6406 = vshrl.u32 %v6405, 23
    %v6407 = vsub.s32 %v6406, 127
    %v6408 = vand.u32 2147483647, %v570
    %v6409 = vand.u32 %v6408, 8388607
    %v6410 = vor.u32 %v6409, 8388608
    %v6411 = vsub.s32 0, %v6410
    %v6412 = vadd.s32 %v6407, 1
    %vm6413 = vcmp.gt.s32.totalorder %v6412, 0
    %v6414 = vsel %vm6413, %v6412, 0
    %v6415 = vshrl.u32 %v6414, 5
    %v6416 = vand.u32 %v6414, 31
    %v6417 = vsub.s32 32, %v6416
    %v6418 = vshrl.u32 683565275, %v6417
    %v6419 = vshll.u32 683565275, %v6416
    %v6420 = vshrl.u32 2475754826, %v6417
    %v6421 = vor.u32 %v6419, %v6420
    %v6422 = vshll.u32 2475754826, %v6416
    %v6423 = vshrl.u32 2131351028, %v6417
    %v6424 = vor.u32 %v6422, %v6423
    %v6425 = vshll.u32 2131351028, %v6416
    %v6426 = vshrl.u32 2102212464, %v6417
    %v6427 = vor.u32 %v6425, %v6426
    %v6428 = vshll.u32 2102212464, %v6416
    %v6429 = vshrl.u32 920167782, %v6417
    %v6430 = vor.u32 %v6428, %v6429
    %v6431 = vshll.u32 920167782, %v6416
    %v6432 = vshrl.u32 1326507024, %v6417
    %v6433 = vor.u32 %v6431, %v6432
    %vm6434 = vcmp.lt.s32.totalorder %v6415, 1
    %vm6435 = vcmp.lt.s32.totalorder %v6415, 2
    %vm6436 = vcmp.lt.s32.totalorder %v6415, 3
    %vm6437 = vcmp.lt.s32.totalorder %v6415, 4
    %v6438 = vsel %vm6434, %v6418, %v6421
    %v6439 = vsel %vm6437, %v6427, 2102212464
    %v6440 = vsel %vm6436, %v6424, %v6439
    %v6441 = vsel %vm6435, %v6438, %v6440
    %v6442 = vsel %vm6434, %v6421, %v6424
    %v6443 = vsel %vm6437, %v6430, 920167782
    %v6444 = vsel %vm6436, %v6427, %v6443
    %v6445 = vsel %vm6435, %v6442, %v6444
    %v6446 = vsel %vm6434, %v6424, %v6427
    %v6447 = vsel %vm6437, %v6433, 1326507024
    %v6448 = vsel %vm6436, %v6430, %v6447
    %v6449 = vsel %vm6435, %v6446, %v6448
    %v6450 = vshll.u32 %v6410, 8
    %v6451 = vmul.u32.u64.compose %v6450, %v6449
    %v6452 = vextract.low.u32 %v6451
    %v6453 = vextract.high.u32 %v6451
    %v6454 = vmul.u32.u64.compose %v6450, %v6445
    %v6455 = vextract.low.u32 %v6454
    %v6456 = vextract.high.u32 %v6454
    %v6457 = vmul.u32 %v6450, %v6441
    %v6458 = vadd.s32 %v6453, %v6455
    %vm6459 = vc.u32 %v6453, %v6455
    %v6460 = vadd.s32 %v6456, 1
    %v6461 = vsel %vm6459, %v6460, %v6456
    %v6462 = vadd.s32 %v6457, %v6461
    %v6463 = vadd.s32 %v6462, 536870912
    %v6464 = vshrl.u32 %v6463, 30
    %v6465 = vshll.u32 %v6464, 30
    %v6466 = vsub.s32 %v6462, %v6465
    %vm6467 = vcmp.lt.s32.totalorder %v6466, 0
    %v6468 = vsub.s32 0, %v6466
    %v6469 = vsel %vm6467, %v6468, %v6466
    %v6470 = vclz %v6469
    %v6471 = vsub.s32 %v6470, 2
    %vm6472 = vcmp.gt.s32.totalorder 0, %v6471
    %v6473 = vsel %vm6472, 0, %v6471
    %v6474 = vsub.s32 32, %v6473
    %v6475 = vshll.u32 %v6466, %v6473
    %v6476 = vshrl.u32 %v6458, %v6474
    %v6477 = vor.u32 %v6475, %v6476
    %v6478 = vsub.s32 4294967266, %v6473
    %v6479 = vadd.s32 %v6478, 127
    %v6480 = vshll.u32 %v6479, 23
    %v6481 = vor.u32 4788187, %v6480
    %v6482 = vand.u32 2147483647, %v6481
    %v6484 = vcvt.s32.f32 %v6477
    %v6485 = vmul.f32 %v6484, %v6482
    %v6486 = vxor.u32 %v6485, 2147483648
    %v6487 = vsel %vm6404, %v6486, %v6485
    %v6488 = vsub.s32 4, %v6464
    %v6489 = vsel %vm6404, %v6488, %v6464
    %v6490 = vsel %vm6403, %v570, %v6487
    %v6491 = vsel %vm6403, 0, %v6489
    %v6492 = vcosq.f32.pop %v6490
    %v6493 = vsinq.f32.pop %v6490
    %vm6494 = vweird.f32 %v570
    %v6495 = vadd.s32 %v6491, 3
    %v6496 = vand.u32 %v6495, 3
    %vm6497 = vcmp.lt.s32.totalorder %v6496, 2
    %vm6498 = vcmp.eq.s32.totalorder %v6496, 0
    %v6499 = vxor.u32 %v6493, 2147483648
    %v6500 = vsel %vm6498, %v6492, %v6499
    %vm6501 = vcmp.eq.s32.totalorder %v6496, 2
    %v6502 = vxor.u32 %v6492, 2147483648
    %v6503 = vsel %vm6501, %v6502, %v6493
    %v6504 = vsel %vm6497, %v6500, %v6503
    %v6505 = vsel %vm6494, nan, %v6504
    %v6506 = vand.u32 2147483647, %v571
    %vm6507 = vcmp.le.f32.partialorder %v6506, 0.7853982
    %vm6508 = vcmp.lt.s32.totalorder %v571, 0
    %v6509 = vand.u32 %v571, 2139095040
    %v6510 = vshrl.u32 %v6509, 23
    %v6511 = vsub.s32 %v6510, 127
    %v6512 = vand.u32 2147483647, %v571
    %v6513 = vand.u32 %v6512, 8388607
    %v6514 = vor.u32 %v6513, 8388608
    %v6515 = vsub.s32 0, %v6514
    %v6516 = vadd.s32 %v6511, 1
    %vm6517 = vcmp.gt.s32.totalorder %v6516, 0
    %v6518 = vsel %vm6517, %v6516, 0
    %v6519 = vshrl.u32 %v6518, 5
    %v6520 = vand.u32 %v6518, 31
    %v6521 = vsub.s32 32, %v6520
    %v6522 = vshrl.u32 683565275, %v6521
    %v6523 = vshll.u32 683565275, %v6520
    %v6524 = vshrl.u32 2475754826, %v6521
    %v6525 = vor.u32 %v6523, %v6524
    %v6526 = vshll.u32 2475754826, %v6520
    %v6527 = vshrl.u32 2131351028, %v6521
    %v6528 = vor.u32 %v6526, %v6527
    %v6529 = vshll.u32 2131351028, %v6520
    %v6530 = vshrl.u32 2102212464, %v6521
    %v6531 = vor.u32 %v6529, %v6530
    %v6532 = vshll.u32 2102212464, %v6520
    %v6533 = vshrl.u32 920167782, %v6521
    %v6534 = vor.u32 %v6532, %v6533
    %v6535 = vshll.u32 920167782, %v6520
    %v6536 = vshrl.u32 1326507024, %v6521
    %v6537 = vor.u32 %v6535, %v6536
    %vm6538 = vcmp.lt.s32.totalorder %v6519, 1
    %vm6539 = vcmp.lt.s32.totalorder %v6519, 2
    %vm6540 = vcmp.lt.s32.totalorder %v6519, 3
    %vm6541 = vcmp.lt.s32.totalorder %v6519, 4
    %v6542 = vsel %vm6538, %v6522, %v6525
    %v6543 = vsel %vm6541, %v6531, 2102212464
    %v6544 = vsel %vm6540, %v6528, %v6543
    %v6545 = vsel %vm6539, %v6542, %v6544
    %v6546 = vsel %vm6538, %v6525, %v6528
    %v6547 = vsel %vm6541, %v6534, 920167782
    %v6548 = vsel %vm6540, %v6531, %v6547
    %v6549 = vsel %vm6539, %v6546, %v6548
    %v6550 = vsel %vm6538, %v6528, %v6531
    %v6551 = vsel %vm6541, %v6537, 1326507024
    %v6552 = vsel %vm6540, %v6534, %v6551
    %v6553 = vsel %vm6539, %v6550, %v6552
    %v6554 = vshll.u32 %v6514, 8
    %v6555 = vmul.u32.u64.compose %v6554, %v6553
    %v6556 = vextract.low.u32 %v6555
    %v6557 = vextract.high.u32 %v6555
    %v6558 = vmul.u32.u64.compose %v6554, %v6549
    %v6559 = vextract.low.u32 %v6558
    %v6560 = vextract.high.u32 %v6558
    %v6561 = vmul.u32 %v6554, %v6545
    %v6562 = vadd.s32 %v6557, %v6559
    %vm6563 = vc.u32 %v6557, %v6559
    %v6564 = vadd.s32 %v6560, 1
    %v6565 = vsel %vm6563, %v6564, %v6560
    %v6566 = vadd.s32 %v6561, %v6565
    %v6567 = vadd.s32 %v6566, 536870912
    %v6568 = vshrl.u32 %v6567, 30
    %v6569 = vshll.u32 %v6568, 30
    %v6570 = vsub.s32 %v6566, %v6569
    %vm6571 = vcmp.lt.s32.totalorder %v6570, 0
    %v6572 = vsub.s32 0, %v6570
    %v6573 = vsel %vm6571, %v6572, %v6570
    %v6574 = vclz %v6573
    %v6575 = vsub.s32 %v6574, 2
    %vm6576 = vcmp.gt.s32.totalorder 0, %v6575
    %v6577 = vsel %vm6576, 0, %v6575
    %v6578 = vsub.s32 32, %v6577
    %v6579 = vshll.u32 %v6570, %v6577
    %v6580 = vshrl.u32 %v6562, %v6578
    %v6581 = vor.u32 %v6579, %v6580
    %v6582 = vsub.s32 4294967266, %v6577
    %v6583 = vadd.s32 %v6582, 127
    %v6584 = vshll.u32 %v6583, 23
    %v6585 = vor.u32 4788187, %v6584
    %v6586 = vand.u32 2147483647, %v6585
    %v6588 = vcvt.s32.f32 %v6581
    %v6589 = vmul.f32 %v6588, %v6586
    %v6590 = vxor.u32 %v6589, 2147483648
    %v6591 = vsel %vm6508, %v6590, %v6589
    %v6592 = vsub.s32 4, %v6568
    %v6593 = vsel %vm6508, %v6592, %v6568
    %v6594 = vsel %vm6507, %v571, %v6591
    %v6595 = vsel %vm6507, 0, %v6593
    %v6596 = vcosq.f32.pop %v6594
    %v6597 = vsinq.f32.pop %v6594
    %vm6598 = vweird.f32 %v571
    %v6599 = vadd.s32 %v6595, 3
    %v6600 = vand.u32 %v6599, 3
    %vm6601 = vcmp.lt.s32.totalorder %v6600, 2
    %vm6602 = vcmp.eq.s32.totalorder %v6600, 0
    %v6603 = vxor.u32 %v6597, 2147483648
    %v6604 = vsel %vm6602, %v6596, %v6603
    %vm6605 = vcmp.eq.s32.totalorder %v6600, 2
    %v6606 = vxor.u32 %v6596, 2147483648
    %v6607 = vsel %vm6605, %v6606, %v6597
    %v6608 = vsel %vm6601, %v6604, %v6607
    %v6609 = vsel %vm6598, nan, %v6608
    %v6610 = vand.u32 2147483647, %v572
    %vm6611 = vcmp.le.f32.partialorder %v6610, 0.7853982
    %vm6612 = vcmp.lt.s32.totalorder %v572, 0
    %v6613 = vand.u32 %v572, 2139095040
    %v6614 = vshrl.u32 %v6613, 23
    %v6615 = vsub.s32 %v6614, 127
    %v6616 = vand.u32 2147483647, %v572
    %v6617 = vand.u32 %v6616, 8388607
    %v6618 = vor.u32 %v6617, 8388608
    %v6619 = vsub.s32 0, %v6618
    %v6620 = vadd.s32 %v6615, 1
    %vm6621 = vcmp.gt.s32.totalorder %v6620, 0
    %v6622 = vsel %vm6621, %v6620, 0
    %v6623 = vshrl.u32 %v6622, 5
    %v6624 = vand.u32 %v6622, 31
    %v6625 = vsub.s32 32, %v6624
    %v6626 = vshrl.u32 683565275, %v6625
    %v6627 = vshll.u32 683565275, %v6624
    %v6628 = vshrl.u32 2475754826, %v6625
    %v6629 = vor.u32 %v6627, %v6628
    %v6630 = vshll.u32 2475754826, %v6624
    %v6631 = vshrl.u32 2131351028, %v6625
    %v6632 = vor.u32 %v6630, %v6631
    %v6633 = vshll.u32 2131351028, %v6624
    %v6634 = vshrl.u32 2102212464, %v6625
    %v6635 = vor.u32 %v6633, %v6634
    %v6636 = vshll.u32 2102212464, %v6624
    %v6637 = vshrl.u32 920167782, %v6625
    %v6638 = vor.u32 %v6636, %v6637
    %v6639 = vshll.u32 920167782, %v6624
    %v6640 = vshrl.u32 1326507024, %v6625
    %v6641 = vor.u32 %v6639, %v6640
    %vm6642 = vcmp.lt.s32.totalorder %v6623, 1
    %vm6643 = vcmp.lt.s32.totalorder %v6623, 2
    %vm6644 = vcmp.lt.s32.totalorder %v6623, 3
    %vm6645 = vcmp.lt.s32.totalorder %v6623, 4
    %v6646 = vsel %vm6642, %v6626, %v6629
    %v6647 = vsel %vm6645, %v6635, 2102212464
    %v6648 = vsel %vm6644, %v6632, %v6647
    %v6649 = vsel %vm6643, %v6646, %v6648
    %v6650 = vsel %vm6642, %v6629, %v6632
    %v6651 = vsel %vm6645, %v6638, 920167782
    %v6652 = vsel %vm6644, %v6635, %v6651
    %v6653 = vsel %vm6643, %v6650, %v6652
    %v6654 = vsel %vm6642, %v6632, %v6635
    %v6655 = vsel %vm6645, %v6641, 1326507024
    %v6656 = vsel %vm6644, %v6638, %v6655
    %v6657 = vsel %vm6643, %v6654, %v6656
    %v6658 = vshll.u32 %v6618, 8
    %v6659 = vmul.u32.u64.compose %v6658, %v6657
    %v6660 = vextract.low.u32 %v6659
    %v6661 = vextract.high.u32 %v6659
    %v6662 = vmul.u32.u64.compose %v6658, %v6653
    %v6663 = vextract.low.u32 %v6662
    %v6664 = vextract.high.u32 %v6662
    %v6665 = vmul.u32 %v6658, %v6649
    %v6666 = vadd.s32 %v6661, %v6663
    %vm6667 = vc.u32 %v6661, %v6663
    %v6668 = vadd.s32 %v6664, 1
    %v6669 = vsel %vm6667, %v6668, %v6664
    %v6670 = vadd.s32 %v6665, %v6669
    %v6671 = vadd.s32 %v6670, 536870912
    %v6672 = vshrl.u32 %v6671, 30
    %v6673 = vshll.u32 %v6672, 30
    %v6674 = vsub.s32 %v6670, %v6673
    %vm6675 = vcmp.lt.s32.totalorder %v6674, 0
    %v6676 = vsub.s32 0, %v6674
    %v6677 = vsel %vm6675, %v6676, %v6674
    %v6678 = vclz %v6677
    %v6679 = vsub.s32 %v6678, 2
    %vm6680 = vcmp.gt.s32.totalorder 0, %v6679
    %v6681 = vsel %vm6680, 0, %v6679
    %v6682 = vsub.s32 32, %v6681
    %v6683 = vshll.u32 %v6674, %v6681
    %v6684 = vshrl.u32 %v6666, %v6682
    %v6685 = vor.u32 %v6683, %v6684
    %v6686 = vsub.s32 4294967266, %v6681
    %v6687 = vadd.s32 %v6686, 127
    %v6688 = vshll.u32 %v6687, 23
    %v6689 = vor.u32 4788187, %v6688
    %v6690 = vand.u32 2147483647, %v6689
    %v6692 = vcvt.s32.f32 %v6685
    %v6693 = vmul.f32 %v6692, %v6690
    %v6694 = vxor.u32 %v6693, 2147483648
    %v6695 = vsel %vm6612, %v6694, %v6693
    %v6696 = vsub.s32 4, %v6672
    %v6697 = vsel %vm6612, %v6696, %v6672
    %v6698 = vsel %vm6611, %v572, %v6695
    %v6699 = vsel %vm6611, 0, %v6697
    %v6700 = vcosq.f32.pop %v6698
    %v6701 = vsinq.f32.pop %v6698
    %vm6702 = vweird.f32 %v572
    %v6703 = vadd.s32 %v6699, 3
    %v6704 = vand.u32 %v6703, 3
    %vm6705 = vcmp.lt.s32.totalorder %v6704, 2
    %vm6706 = vcmp.eq.s32.totalorder %v6704, 0
    %v6707 = vxor.u32 %v6701, 2147483648
    %v6708 = vsel %vm6706, %v6700, %v6707
    %vm6709 = vcmp.eq.s32.totalorder %v6704, 2
    %v6710 = vxor.u32 %v6700, 2147483648
    %v6711 = vsel %vm6709, %v6710, %v6701
    %v6712 = vsel %vm6705, %v6708, %v6711
    %v6713 = vsel %vm6702, nan, %v6712
    %v6714 = vand.u32 2147483647, %v573
    %vm6715 = vcmp.le.f32.partialorder %v6714, 0.7853982
    %vm6716 = vcmp.lt.s32.totalorder %v573, 0
    %v6717 = vand.u32 %v573, 2139095040
    %v6718 = vshrl.u32 %v6717, 23
    %v6719 = vsub.s32 %v6718, 127
    %v6720 = vand.u32 2147483647, %v573
    %v6721 = vand.u32 %v6720, 8388607
    %v6722 = vor.u32 %v6721, 8388608
    %v6723 = vsub.s32 0, %v6722
    %v6724 = vadd.s32 %v6719, 1
    %vm6725 = vcmp.gt.s32.totalorder %v6724, 0
    %v6726 = vsel %vm6725, %v6724, 0
    %v6727 = vshrl.u32 %v6726, 5
    %v6728 = vand.u32 %v6726, 31
    %v6729 = vsub.s32 32, %v6728
    %v6730 = vshrl.u32 683565275, %v6729
    %v6731 = vshll.u32 683565275, %v6728
    %v6732 = vshrl.u32 2475754826, %v6729
    %v6733 = vor.u32 %v6731, %v6732
    %v6734 = vshll.u32 2475754826, %v6728
    %v6735 = vshrl.u32 2131351028, %v6729
    %v6736 = vor.u32 %v6734, %v6735
    %v6737 = vshll.u32 2131351028, %v6728
    %v6738 = vshrl.u32 2102212464, %v6729
    %v6739 = vor.u32 %v6737, %v6738
    %v6740 = vshll.u32 2102212464, %v6728
    %v6741 = vshrl.u32 920167782, %v6729
    %v6742 = vor.u32 %v6740, %v6741
    %v6743 = vshll.u32 920167782, %v6728
    %v6744 = vshrl.u32 1326507024, %v6729
    %v6745 = vor.u32 %v6743, %v6744
    %vm6746 = vcmp.lt.s32.totalorder %v6727, 1
    %vm6747 = vcmp.lt.s32.totalorder %v6727, 2
    %vm6748 = vcmp.lt.s32.totalorder %v6727, 3
    %vm6749 = vcmp.lt.s32.totalorder %v6727, 4
    %v6750 = vsel %vm6746, %v6730, %v6733
    %v6751 = vsel %vm6749, %v6739, 2102212464
    %v6752 = vsel %vm6748, %v6736, %v6751
    %v6753 = vsel %vm6747, %v6750, %v6752
    %v6754 = vsel %vm6746, %v6733, %v6736
    %v6755 = vsel %vm6749, %v6742, 920167782
    %v6756 = vsel %vm6748, %v6739, %v6755
    %v6757 = vsel %vm6747, %v6754, %v6756
    %v6758 = vsel %vm6746, %v6736, %v6739
    %v6759 = vsel %vm6749, %v6745, 1326507024
    %v6760 = vsel %vm6748, %v6742, %v6759
    %v6761 = vsel %vm6747, %v6758, %v6760
    %v6762 = vshll.u32 %v6722, 8
    %v6763 = vmul.u32.u64.compose %v6762, %v6761
    %v6764 = vextract.low.u32 %v6763
    %v6765 = vextract.high.u32 %v6763
    %v6766 = vmul.u32.u64.compose %v6762, %v6757
    %v6767 = vextract.low.u32 %v6766
    %v6768 = vextract.high.u32 %v6766
    %v6769 = vmul.u32 %v6762, %v6753
    %v6770 = vadd.s32 %v6765, %v6767
    %vm6771 = vc.u32 %v6765, %v6767
    %v6772 = vadd.s32 %v6768, 1
    %v6773 = vsel %vm6771, %v6772, %v6768
    %v6774 = vadd.s32 %v6769, %v6773
    %v6775 = vadd.s32 %v6774, 536870912
    %v6776 = vshrl.u32 %v6775, 30
    %v6777 = vshll.u32 %v6776, 30
    %v6778 = vsub.s32 %v6774, %v6777
    %vm6779 = vcmp.lt.s32.totalorder %v6778, 0
    %v6780 = vsub.s32 0, %v6778
    %v6781 = vsel %vm6779, %v6780, %v6778
    %v6782 = vclz %v6781
    %v6783 = vsub.s32 %v6782, 2
    %vm6784 = vcmp.gt.s32.totalorder 0, %v6783
    %v6785 = vsel %vm6784, 0, %v6783
    %v6786 = vsub.s32 32, %v6785
    %v6787 = vshll.u32 %v6778, %v6785
    %v6788 = vshrl.u32 %v6770, %v6786
    %v6789 = vor.u32 %v6787, %v6788
    %v6790 = vsub.s32 4294967266, %v6785
    %v6791 = vadd.s32 %v6790, 127
    %v6792 = vshll.u32 %v6791, 23
    %v6793 = vor.u32 4788187, %v6792
    %v6794 = vand.u32 2147483647, %v6793
    %v6796 = vcvt.s32.f32 %v6789
    %v6797 = vmul.f32 %v6796, %v6794
    %v6798 = vxor.u32 %v6797, 2147483648
    %v6799 = vsel %vm6716, %v6798, %v6797
    %v6800 = vsub.s32 4, %v6776
    %v6801 = vsel %vm6716, %v6800, %v6776
    %v6802 = vsel %vm6715, %v573, %v6799
    %v6803 = vsel %vm6715, 0, %v6801
    %v6804 = vcosq.f32.pop %v6802
    %v6805 = vsinq.f32.pop %v6802
    %vm6806 = vweird.f32 %v573
    %v6807 = vadd.s32 %v6803, 3
    %v6808 = vand.u32 %v6807, 3
    %vm6809 = vcmp.lt.s32.totalorder %v6808, 2
    %vm6810 = vcmp.eq.s32.totalorder %v6808, 0
    %v6811 = vxor.u32 %v6805, 2147483648
    %v6812 = vsel %vm6810, %v6804, %v6811
    %vm6813 = vcmp.eq.s32.totalorder %v6808, 2
    %v6814 = vxor.u32 %v6804, 2147483648
    %v6815 = vsel %vm6813, %v6814, %v6805
    %v6816 = vsel %vm6809, %v6812, %v6815
    %v6817 = vsel %vm6806, nan, %v6816
    %v6818 = vand.u32 2147483647, %v574
    %vm6819 = vcmp.le.f32.partialorder %v6818, 0.7853982
    %vm6820 = vcmp.lt.s32.totalorder %v574, 0
    %v6821 = vand.u32 %v574, 2139095040
    %v6822 = vshrl.u32 %v6821, 23
    %v6823 = vsub.s32 %v6822, 127
    %v6824 = vand.u32 2147483647, %v574
    %v6825 = vand.u32 %v6824, 8388607
    %v6826 = vor.u32 %v6825, 8388608
    %v6827 = vsub.s32 0, %v6826
    %v6828 = vadd.s32 %v6823, 1
    %vm6829 = vcmp.gt.s32.totalorder %v6828, 0
    %v6830 = vsel %vm6829, %v6828, 0
    %v6831 = vshrl.u32 %v6830, 5
    %v6832 = vand.u32 %v6830, 31
    %v6833 = vsub.s32 32, %v6832
    %v6834 = vshrl.u32 683565275, %v6833
    %v6835 = vshll.u32 683565275, %v6832
    %v6836 = vshrl.u32 2475754826, %v6833
    %v6837 = vor.u32 %v6835, %v6836
    %v6838 = vshll.u32 2475754826, %v6832
    %v6839 = vshrl.u32 2131351028, %v6833
    %v6840 = vor.u32 %v6838, %v6839
    %v6841 = vshll.u32 2131351028, %v6832
    %v6842 = vshrl.u32 2102212464, %v6833
    %v6843 = vor.u32 %v6841, %v6842
    %v6844 = vshll.u32 2102212464, %v6832
    %v6845 = vshrl.u32 920167782, %v6833
    %v6846 = vor.u32 %v6844, %v6845
    %v6847 = vshll.u32 920167782, %v6832
    %v6848 = vshrl.u32 1326507024, %v6833
    %v6849 = vor.u32 %v6847, %v6848
    %vm6850 = vcmp.lt.s32.totalorder %v6831, 1
    %vm6851 = vcmp.lt.s32.totalorder %v6831, 2
    %vm6852 = vcmp.lt.s32.totalorder %v6831, 3
    %vm6853 = vcmp.lt.s32.totalorder %v6831, 4
    %v6854 = vsel %vm6850, %v6834, %v6837
    %v6855 = vsel %vm6853, %v6843, 2102212464
    %v6856 = vsel %vm6852, %v6840, %v6855
    %v6857 = vsel %vm6851, %v6854, %v6856
    %v6858 = vsel %vm6850, %v6837, %v6840
    %v6859 = vsel %vm6853, %v6846, 920167782
    %v6860 = vsel %vm6852, %v6843, %v6859
    %v6861 = vsel %vm6851, %v6858, %v6860
    %v6862 = vsel %vm6850, %v6840, %v6843
    %v6863 = vsel %vm6853, %v6849, 1326507024
    %v6864 = vsel %vm6852, %v6846, %v6863
    %v6865 = vsel %vm6851, %v6862, %v6864
    %v6866 = vshll.u32 %v6826, 8
    %v6867 = vmul.u32.u64.compose %v6866, %v6865
    %v6868 = vextract.low.u32 %v6867
    %v6869 = vextract.high.u32 %v6867
    %v6870 = vmul.u32.u64.compose %v6866, %v6861
    %v6871 = vextract.low.u32 %v6870
    %v6872 = vextract.high.u32 %v6870
    %v6873 = vmul.u32 %v6866, %v6857
    %v6874 = vadd.s32 %v6869, %v6871
    %vm6875 = vc.u32 %v6869, %v6871
    %v6876 = vadd.s32 %v6872, 1
    %v6877 = vsel %vm6875, %v6876, %v6872
    %v6878 = vadd.s32 %v6873, %v6877
    %v6879 = vadd.s32 %v6878, 536870912
    %v6880 = vshrl.u32 %v6879, 30
    %v6881 = vshll.u32 %v6880, 30
    %v6882 = vsub.s32 %v6878, %v6881
    %vm6883 = vcmp.lt.s32.totalorder %v6882, 0
    %v6884 = vsub.s32 0, %v6882
    %v6885 = vsel %vm6883, %v6884, %v6882
    %v6886 = vclz %v6885
    %v6887 = vsub.s32 %v6886, 2
    %vm6888 = vcmp.gt.s32.totalorder 0, %v6887
    %v6889 = vsel %vm6888, 0, %v6887
    %v6890 = vsub.s32 32, %v6889
    %v6891 = vshll.u32 %v6882, %v6889
    %v6892 = vshrl.u32 %v6874, %v6890
    %v6893 = vor.u32 %v6891, %v6892
    %v6894 = vsub.s32 4294967266, %v6889
    %v6895 = vadd.s32 %v6894, 127
    %v6896 = vshll.u32 %v6895, 23
    %v6897 = vor.u32 4788187, %v6896
    %v6898 = vand.u32 2147483647, %v6897
    %v6900 = vcvt.s32.f32 %v6893
    %v6901 = vmul.f32 %v6900, %v6898
    %v6902 = vxor.u32 %v6901, 2147483648
    %v6903 = vsel %vm6820, %v6902, %v6901
    %v6904 = vsub.s32 4, %v6880
    %v6905 = vsel %vm6820, %v6904, %v6880
    %v6906 = vsel %vm6819, %v574, %v6903
    %v6907 = vsel %vm6819, 0, %v6905
    %v6908 = vcosq.f32.pop %v6906
    %v6909 = vsinq.f32.pop %v6906
    %vm6910 = vweird.f32 %v574
    %v6911 = vadd.s32 %v6907, 3
    %v6912 = vand.u32 %v6911, 3
    %vm6913 = vcmp.lt.s32.totalorder %v6912, 2
    %vm6914 = vcmp.eq.s32.totalorder %v6912, 0
    %v6915 = vxor.u32 %v6909, 2147483648
    %v6916 = vsel %vm6914, %v6908, %v6915
    %vm6917 = vcmp.eq.s32.totalorder %v6912, 2
    %v6918 = vxor.u32 %v6908, 2147483648
    %v6919 = vsel %vm6917, %v6918, %v6909
    %v6920 = vsel %vm6913, %v6916, %v6919
    %v6921 = vsel %vm6910, nan, %v6920
    %v6922 = vand.u32 2147483647, %v575
    %vm6923 = vcmp.le.f32.partialorder %v6922, 0.7853982
    %vm6924 = vcmp.lt.s32.totalorder %v575, 0
    %v6925 = vand.u32 %v575, 2139095040
    %v6926 = vshrl.u32 %v6925, 23
    %v6927 = vsub.s32 %v6926, 127
    %v6928 = vand.u32 2147483647, %v575
    %v6929 = vand.u32 %v6928, 8388607
    %v6930 = vor.u32 %v6929, 8388608
    %v6931 = vsub.s32 0, %v6930
    %v6932 = vadd.s32 %v6927, 1
    %vm6933 = vcmp.gt.s32.totalorder %v6932, 0
    %v6934 = vsel %vm6933, %v6932, 0
    %v6935 = vshrl.u32 %v6934, 5
    %v6936 = vand.u32 %v6934, 31
    %v6937 = vsub.s32 32, %v6936
    %v6938 = vshrl.u32 683565275, %v6937
    %v6939 = vshll.u32 683565275, %v6936
    %v6940 = vshrl.u32 2475754826, %v6937
    %v6941 = vor.u32 %v6939, %v6940
    %v6942 = vshll.u32 2475754826, %v6936
    %v6943 = vshrl.u32 2131351028, %v6937
    %v6944 = vor.u32 %v6942, %v6943
    %v6945 = vshll.u32 2131351028, %v6936
    %v6946 = vshrl.u32 2102212464, %v6937
    %v6947 = vor.u32 %v6945, %v6946
    %v6948 = vshll.u32 2102212464, %v6936
    %v6949 = vshrl.u32 920167782, %v6937
    %v6950 = vor.u32 %v6948, %v6949
    %v6951 = vshll.u32 920167782, %v6936
    %v6952 = vshrl.u32 1326507024, %v6937
    %v6953 = vor.u32 %v6951, %v6952
    %vm6954 = vcmp.lt.s32.totalorder %v6935, 1
    %vm6955 = vcmp.lt.s32.totalorder %v6935, 2
    %vm6956 = vcmp.lt.s32.totalorder %v6935, 3
    %vm6957 = vcmp.lt.s32.totalorder %v6935, 4
    %v6958 = vsel %vm6954, %v6938, %v6941
    %v6959 = vsel %vm6957, %v6947, 2102212464
    %v6960 = vsel %vm6956, %v6944, %v6959
    %v6961 = vsel %vm6955, %v6958, %v6960
    %v6962 = vsel %vm6954, %v6941, %v6944
    %v6963 = vsel %vm6957, %v6950, 920167782
    %v6964 = vsel %vm6956, %v6947, %v6963
    %v6965 = vsel %vm6955, %v6962, %v6964
    %v6966 = vsel %vm6954, %v6944, %v6947
    %v6967 = vsel %vm6957, %v6953, 1326507024
    %v6968 = vsel %vm6956, %v6950, %v6967
    %v6969 = vsel %vm6955, %v6966, %v6968
    %v6970 = vshll.u32 %v6930, 8
    %v6971 = vmul.u32.u64.compose %v6970, %v6969
    %v6972 = vextract.low.u32 %v6971
    %v6973 = vextract.high.u32 %v6971
    %v6974 = vmul.u32.u64.compose %v6970, %v6965
    %v6975 = vextract.low.u32 %v6974
    %v6976 = vextract.high.u32 %v6974
    %v6977 = vmul.u32 %v6970, %v6961
    %v6978 = vadd.s32 %v6973, %v6975
    %vm6979 = vc.u32 %v6973, %v6975
    %v6980 = vadd.s32 %v6976, 1
    %v6981 = vsel %vm6979, %v6980, %v6976
    %v6982 = vadd.s32 %v6977, %v6981
    %v6983 = vadd.s32 %v6982, 536870912
    %v6984 = vshrl.u32 %v6983, 30
    %v6985 = vshll.u32 %v6984, 30
    %v6986 = vsub.s32 %v6982, %v6985
    %vm6987 = vcmp.lt.s32.totalorder %v6986, 0
    %v6988 = vsub.s32 0, %v6986
    %v6989 = vsel %vm6987, %v6988, %v6986
    %v6990 = vclz %v6989
    %v6991 = vsub.s32 %v6990, 2
    %vm6992 = vcmp.gt.s32.totalorder 0, %v6991
    %v6993 = vsel %vm6992, 0, %v6991
    %v6994 = vsub.s32 32, %v6993
    %v6995 = vshll.u32 %v6986, %v6993
    %v6996 = vshrl.u32 %v6978, %v6994
    %v6997 = vor.u32 %v6995, %v6996
    %v6998 = vsub.s32 4294967266, %v6993
    %v6999 = vadd.s32 %v6998, 127
    %v7000 = vshll.u32 %v6999, 23
    %v7001 = vor.u32 4788187, %v7000
    %v7002 = vand.u32 2147483647, %v7001
    %v7004 = vcvt.s32.f32 %v6997
    %v7005 = vmul.f32 %v7004, %v7002
    %v7006 = vxor.u32 %v7005, 2147483648
    %v7007 = vsel %vm6924, %v7006, %v7005
    %v7008 = vsub.s32 4, %v6984
    %v7009 = vsel %vm6924, %v7008, %v6984
    %v7010 = vsel %vm6923, %v575, %v7007
    %v7011 = vsel %vm6923, 0, %v7009
    %v7012 = vcosq.f32.pop %v7010
    %v7013 = vsinq.f32.pop %v7010
    %vm7014 = vweird.f32 %v575
    %v7015 = vadd.s32 %v7011, 3
    %v7016 = vand.u32 %v7015, 3
    %vm7017 = vcmp.lt.s32.totalorder %v7016, 2
    %vm7018 = vcmp.eq.s32.totalorder %v7016, 0
    %v7019 = vxor.u32 %v7013, 2147483648
    %v7020 = vsel %vm7018, %v7012, %v7019
    %vm7021 = vcmp.eq.s32.totalorder %v7016, 2
    %v7022 = vxor.u32 %v7012, 2147483648
    %v7023 = vsel %vm7021, %v7022, %v7013
    %v7024 = vsel %vm7017, %v7020, %v7023
    %v7025 = vsel %vm7014, nan, %v7024
    %v7026 = vand.u32 2147483647, %v576
    %vm7027 = vcmp.le.f32.partialorder %v7026, 0.7853982
    %vm7028 = vcmp.lt.s32.totalorder %v576, 0
    %v7029 = vand.u32 %v576, 2139095040
    %v7030 = vshrl.u32 %v7029, 23
    %v7031 = vsub.s32 %v7030, 127
    %v7032 = vand.u32 2147483647, %v576
    %v7033 = vand.u32 %v7032, 8388607
    %v7034 = vor.u32 %v7033, 8388608
    %v7035 = vsub.s32 0, %v7034
    %v7036 = vadd.s32 %v7031, 1
    %vm7037 = vcmp.gt.s32.totalorder %v7036, 0
    %v7038 = vsel %vm7037, %v7036, 0
    %v7039 = vshrl.u32 %v7038, 5
    %v7040 = vand.u32 %v7038, 31
    %v7041 = vsub.s32 32, %v7040
    %v7042 = vshrl.u32 683565275, %v7041
    %v7043 = vshll.u32 683565275, %v7040
    %v7044 = vshrl.u32 2475754826, %v7041
    %v7045 = vor.u32 %v7043, %v7044
    %v7046 = vshll.u32 2475754826, %v7040
    %v7047 = vshrl.u32 2131351028, %v7041
    %v7048 = vor.u32 %v7046, %v7047
    %v7049 = vshll.u32 2131351028, %v7040
    %v7050 = vshrl.u32 2102212464, %v7041
    %v7051 = vor.u32 %v7049, %v7050
    %v7052 = vshll.u32 2102212464, %v7040
    %v7053 = vshrl.u32 920167782, %v7041
    %v7054 = vor.u32 %v7052, %v7053
    %v7055 = vshll.u32 920167782, %v7040
    %v7056 = vshrl.u32 1326507024, %v7041
    %v7057 = vor.u32 %v7055, %v7056
    %vm7058 = vcmp.lt.s32.totalorder %v7039, 1
    %vm7059 = vcmp.lt.s32.totalorder %v7039, 2
    %vm7060 = vcmp.lt.s32.totalorder %v7039, 3
    %vm7061 = vcmp.lt.s32.totalorder %v7039, 4
    %v7062 = vsel %vm7058, %v7042, %v7045
    %v7063 = vsel %vm7061, %v7051, 2102212464
    %v7064 = vsel %vm7060, %v7048, %v7063
    %v7065 = vsel %vm7059, %v7062, %v7064
    %v7066 = vsel %vm7058, %v7045, %v7048
    %v7067 = vsel %vm7061, %v7054, 920167782
    %v7068 = vsel %vm7060, %v7051, %v7067
    %v7069 = vsel %vm7059, %v7066, %v7068
    %v7070 = vsel %vm7058, %v7048, %v7051
    %v7071 = vsel %vm7061, %v7057, 1326507024
    %v7072 = vsel %vm7060, %v7054, %v7071
    %v7073 = vsel %vm7059, %v7070, %v7072
    %v7074 = vshll.u32 %v7034, 8
    %v7075 = vmul.u32.u64.compose %v7074, %v7073
    %v7076 = vextract.low.u32 %v7075
    %v7077 = vextract.high.u32 %v7075
    %v7078 = vmul.u32.u64.compose %v7074, %v7069
    %v7079 = vextract.low.u32 %v7078
    %v7080 = vextract.high.u32 %v7078
    %v7081 = vmul.u32 %v7074, %v7065
    %v7082 = vadd.s32 %v7077, %v7079
    %vm7083 = vc.u32 %v7077, %v7079
    %v7084 = vadd.s32 %v7080, 1
    %v7085 = vsel %vm7083, %v7084, %v7080
    %v7086 = vadd.s32 %v7081, %v7085
    %v7087 = vadd.s32 %v7086, 536870912
    %v7088 = vshrl.u32 %v7087, 30
    %v7089 = vshll.u32 %v7088, 30
    %v7090 = vsub.s32 %v7086, %v7089
    %vm7091 = vcmp.lt.s32.totalorder %v7090, 0
    %v7092 = vsub.s32 0, %v7090
    %v7093 = vsel %vm7091, %v7092, %v7090
    %v7094 = vclz %v7093
    %v7095 = vsub.s32 %v7094, 2
    %vm7096 = vcmp.gt.s32.totalorder 0, %v7095
    %v7097 = vsel %vm7096, 0, %v7095
    %v7098 = vsub.s32 32, %v7097
    %v7099 = vshll.u32 %v7090, %v7097
    %v7100 = vshrl.u32 %v7082, %v7098
    %v7101 = vor.u32 %v7099, %v7100
    %v7102 = vsub.s32 4294967266, %v7097
    %v7103 = vadd.s32 %v7102, 127
    %v7104 = vshll.u32 %v7103, 23
    %v7105 = vor.u32 4788187, %v7104
    %v7106 = vand.u32 2147483647, %v7105
    %v7108 = vcvt.s32.f32 %v7101
    %v7109 = vmul.f32 %v7108, %v7106
    %v7110 = vxor.u32 %v7109, 2147483648
    %v7111 = vsel %vm7028, %v7110, %v7109
    %v7112 = vsub.s32 4, %v7088
    %v7113 = vsel %vm7028, %v7112, %v7088
    %v7114 = vsel %vm7027, %v576, %v7111
    %v7115 = vsel %vm7027, 0, %v7113
    %v7116 = vcosq.f32.pop %v7114
    %v7117 = vsinq.f32.pop %v7114
    %vm7118 = vweird.f32 %v576
    %v7119 = vadd.s32 %v7115, 3
    %v7120 = vand.u32 %v7119, 3
    %vm7121 = vcmp.lt.s32.totalorder %v7120, 2
    %vm7122 = vcmp.eq.s32.totalorder %v7120, 0
    %v7123 = vxor.u32 %v7117, 2147483648
    %v7124 = vsel %vm7122, %v7116, %v7123
    %vm7125 = vcmp.eq.s32.totalorder %v7120, 2
    %v7126 = vxor.u32 %v7116, 2147483648
    %v7127 = vsel %vm7125, %v7126, %v7117
    %v7128 = vsel %vm7121, %v7124, %v7127
    %v7129 = vsel %vm7118, nan, %v7128
    %v7130 = vand.u32 2147483647, %v577
    %vm7131 = vcmp.le.f32.partialorder %v7130, 0.7853982
    %vm7132 = vcmp.lt.s32.totalorder %v577, 0
    %v7133 = vand.u32 %v577, 2139095040
    %v7134 = vshrl.u32 %v7133, 23
    %v7135 = vsub.s32 %v7134, 127
    %v7136 = vand.u32 2147483647, %v577
    %v7137 = vand.u32 %v7136, 8388607
    %v7138 = vor.u32 %v7137, 8388608
    %v7139 = vsub.s32 0, %v7138
    %v7140 = vadd.s32 %v7135, 1
    %vm7141 = vcmp.gt.s32.totalorder %v7140, 0
    %v7142 = vsel %vm7141, %v7140, 0
    %v7143 = vshrl.u32 %v7142, 5
    %v7144 = vand.u32 %v7142, 31
    %v7145 = vsub.s32 32, %v7144
    %v7146 = vshrl.u32 683565275, %v7145
    %v7147 = vshll.u32 683565275, %v7144
    %v7148 = vshrl.u32 2475754826, %v7145
    %v7149 = vor.u32 %v7147, %v7148
    %v7150 = vshll.u32 2475754826, %v7144
    %v7151 = vshrl.u32 2131351028, %v7145
    %v7152 = vor.u32 %v7150, %v7151
    %v7153 = vshll.u32 2131351028, %v7144
    %v7154 = vshrl.u32 2102212464, %v7145
    %v7155 = vor.u32 %v7153, %v7154
    %v7156 = vshll.u32 2102212464, %v7144
    %v7157 = vshrl.u32 920167782, %v7145
    %v7158 = vor.u32 %v7156, %v7157
    %v7159 = vshll.u32 920167782, %v7144
    %v7160 = vshrl.u32 1326507024, %v7145
    %v7161 = vor.u32 %v7159, %v7160
    %vm7162 = vcmp.lt.s32.totalorder %v7143, 1
    %vm7163 = vcmp.lt.s32.totalorder %v7143, 2
    %vm7164 = vcmp.lt.s32.totalorder %v7143, 3
    %vm7165 = vcmp.lt.s32.totalorder %v7143, 4
    %v7166 = vsel %vm7162, %v7146, %v7149
    %v7167 = vsel %vm7165, %v7155, 2102212464
    %v7168 = vsel %vm7164, %v7152, %v7167
    %v7169 = vsel %vm7163, %v7166, %v7168
    %v7170 = vsel %vm7162, %v7149, %v7152
    %v7171 = vsel %vm7165, %v7158, 920167782
    %v7172 = vsel %vm7164, %v7155, %v7171
    %v7173 = vsel %vm7163, %v7170, %v7172
    %v7174 = vsel %vm7162, %v7152, %v7155
    %v7175 = vsel %vm7165, %v7161, 1326507024
    %v7176 = vsel %vm7164, %v7158, %v7175
    %v7177 = vsel %vm7163, %v7174, %v7176
    %v7178 = vshll.u32 %v7138, 8
    %v7179 = vmul.u32.u64.compose %v7178, %v7177
    %v7180 = vextract.low.u32 %v7179
    %v7181 = vextract.high.u32 %v7179
    %v7182 = vmul.u32.u64.compose %v7178, %v7173
    %v7183 = vextract.low.u32 %v7182
    %v7184 = vextract.high.u32 %v7182
    %v7185 = vmul.u32 %v7178, %v7169
    %v7186 = vadd.s32 %v7181, %v7183
    %vm7187 = vc.u32 %v7181, %v7183
    %v7188 = vadd.s32 %v7184, 1
    %v7189 = vsel %vm7187, %v7188, %v7184
    %v7190 = vadd.s32 %v7185, %v7189
    %v7191 = vadd.s32 %v7190, 536870912
    %v7192 = vshrl.u32 %v7191, 30
    %v7193 = vshll.u32 %v7192, 30
    %v7194 = vsub.s32 %v7190, %v7193
    %vm7195 = vcmp.lt.s32.totalorder %v7194, 0
    %v7196 = vsub.s32 0, %v7194
    %v7197 = vsel %vm7195, %v7196, %v7194
    %v7198 = vclz %v7197
    %v7199 = vsub.s32 %v7198, 2
    %vm7200 = vcmp.gt.s32.totalorder 0, %v7199
    %v7201 = vsel %vm7200, 0, %v7199
    %v7202 = vsub.s32 32, %v7201
    %v7203 = vshll.u32 %v7194, %v7201
    %v7204 = vshrl.u32 %v7186, %v7202
    %v7205 = vor.u32 %v7203, %v7204
    %v7206 = vsub.s32 4294967266, %v7201
    %v7207 = vadd.s32 %v7206, 127
    %v7208 = vshll.u32 %v7207, 23
    %v7209 = vor.u32 4788187, %v7208
    %v7210 = vand.u32 2147483647, %v7209
    %v7212 = vcvt.s32.f32 %v7205
    %v7213 = vmul.f32 %v7212, %v7210
    %v7214 = vxor.u32 %v7213, 2147483648
    %v7215 = vsel %vm7132, %v7214, %v7213
    %v7216 = vsub.s32 4, %v7192
    %v7217 = vsel %vm7132, %v7216, %v7192
    %v7218 = vsel %vm7131, %v577, %v7215
    %v7219 = vsel %vm7131, 0, %v7217
    %v7220 = vcosq.f32.pop %v7218
    %v7221 = vsinq.f32.pop %v7218
    %vm7222 = vweird.f32 %v577
    %v7223 = vadd.s32 %v7219, 3
    %v7224 = vand.u32 %v7223, 3
    %vm7225 = vcmp.lt.s32.totalorder %v7224, 2
    %vm7226 = vcmp.eq.s32.totalorder %v7224, 0
    %v7227 = vxor.u32 %v7221, 2147483648
    %v7228 = vsel %vm7226, %v7220, %v7227
    %vm7229 = vcmp.eq.s32.totalorder %v7224, 2
    %v7230 = vxor.u32 %v7220, 2147483648
    %v7231 = vsel %vm7229, %v7230, %v7221
    %v7232 = vsel %vm7225, %v7228, %v7231
    %v7233 = vsel %vm7222, nan, %v7232
    %7234 = vst [vmem:[#allocation8] sm:$0xff] %v681
    %7235 = vst [vmem:[#allocation8 + $0x8] sm:$0xff] %v785
    %7236 = vst [vmem:[#allocation8 + $0x10] sm:$0xff] %v889
    %7237 = vst [vmem:[#allocation8 + $0x18] sm:$0xff] %v993
    %7238 = vst [vmem:[#allocation8 + $0x20] sm:$0xff] %v1097
    %7239 = vst [vmem:[#allocation8 + $0x28] sm:$0xff] %v1201
    %7240 = vst [vmem:[#allocation8 + $0x30] sm:$0xff] %v1305
    %7241 = vst [vmem:[#allocation8 + $0x38] sm:$0xff] %v1409
    %7242 = vst [vmem:[#allocation8 + $0x40] sm:$0xff] %v1513
    %7243 = vst [vmem:[#allocation8 + $0x48] sm:$0xff] %v1617
    %7244 = vst [vmem:[#allocation8 + $0x50] sm:$0xff] %v1721
    %7245 = vst [vmem:[#allocation8 + $0x58] sm:$0xff] %v1825
    %7246 = vst [vmem:[#allocation8 + $0x60] sm:$0xff] %v1929
    %7247 = vst [vmem:[#allocation8 + $0x68] sm:$0xff] %v2033
    %7248 = vst [vmem:[#allocation8 + $0x70] sm:$0xff] %v2137
    %7249 = vst [vmem:[#allocation8 + $0x78] sm:$0xff] %v2241
    %7250 = vst [vmem:[#allocation8 + $0x80] sm:$0xff] %v2345
    %7251 = vst [vmem:[#allocation8 + $0x88] sm:$0xff] %v2449
    %7252 = vst [vmem:[#allocation8 + $0x90] sm:$0xff] %v2553
    %7253 = vst [vmem:[#allocation8 + $0x98] sm:$0xff] %v2657
    %7254 = vst [vmem:[#allocation8 + $0xa0] sm:$0xff] %v2761
    %7255 = vst [vmem:[#allocation8 + $0xa8] sm:$0xff] %v2865
    %7256 = vst [vmem:[#allocation8 + $0xb0] sm:$0xff] %v2969
    %7257 = vst [vmem:[#allocation8 + $0xb8] sm:$0xff] %v3073
    %7258 = vst [vmem:[#allocation8 + $0xc0] sm:$0xff] %v3177
    %7259 = vst [vmem:[#allocation8 + $0xc8] sm:$0xff] %v3281
    %7260 = vst [vmem:[#allocation8 + $0xd0] sm:$0xff] %v3385
    %7261 = vst [vmem:[#allocation8 + $0xd8] sm:$0xff] %v3489
    %7262 = vst [vmem:[#allocation8 + $0xe0] sm:$0xff] %v3593
    %7263 = vst [vmem:[#allocation8 + $0xe8] sm:$0xff] %v3697
    %7264 = vst [vmem:[#allocation8 + $0xf0] sm:$0xff] %v3801
    %7265 = vst [vmem:[#allocation8 + $0xf8] sm:$0xff] %v3905
    %7266 = vst [vmem:[#allocation8 + $0x100] sm:$0xff] %v4009
    %7267 = vst [vmem:[#allocation8 + $0x108] sm:$0xff] %v4113
    %7268 = vst [vmem:[#allocation8 + $0x110] sm:$0xff] %v4217
    %7269 = vst [vmem:[#allocation8 + $0x118] sm:$0xff] %v4321
    %7270 = vst [vmem:[#allocation8 + $0x120] sm:$0xff] %v4425
    %7271 = vst [vmem:[#allocation8 + $0x128] sm:$0xff] %v4529
    %7272 = vst [vmem:[#allocation8 + $0x130] sm:$0xff] %v4633
    %7273 = vst [vmem:[#allocation8 + $0x138] sm:$0xff] %v4737
    %7274 = vst [vmem:[#allocation8 + $0x140] sm:$0xff] %v4841
    %7275 = vst [vmem:[#allocation8 + $0x148] sm:$0xff] %v4945
    %7276 = vst [vmem:[#allocation8 + $0x150] sm:$0xff] %v5049
    %7277 = vst [vmem:[#allocation8 + $0x158] sm:$0xff] %v5153
    %7278 = vst [vmem:[#allocation8 + $0x160] sm:$0xff] %v5257
    %7279 = vst [vmem:[#allocation8 + $0x168] sm:$0xff] %v5361
    %7280 = vst [vmem:[#allocation8 + $0x170] sm:$0xff] %v5465
    %7281 = vst [vmem:[#allocation8 + $0x178] sm:$0xff] %v5569
    %7282 = vst [vmem:[#allocation8 + $0x180] sm:$0xff] %v5673
    %7283 = vst [vmem:[#allocation8 + $0x188] sm:$0xff] %v5777
    %7284 = vst [vmem:[#allocation8 + $0x190] sm:$0xff] %v5881
    %7285 = vst [vmem:[#allocation8 + $0x198] sm:$0xff] %v5985
    %7286 = vst [vmem:[#allocation8 + $0x1a0] sm:$0xff] %v6089
    %7287 = vst [vmem:[#allocation8 + $0x1a8] sm:$0xff] %v6193
    %7288 = vst [vmem:[#allocation8 + $0x1b0] sm:$0xff] %v6297
    %7289 = vst [vmem:[#allocation8 + $0x1b8] sm:$0xff] %v6401
    %7290 = vst [vmem:[#allocation8 + $0x1c0] sm:$0xff] %v6505
    %7291 = vst [vmem:[#allocation8 + $0x1c8] sm:$0xff] %v6609
    %7292 = vst [vmem:[#allocation8 + $0x1d0] sm:$0xff] %v6713
    %7293 = vst [vmem:[#allocation8 + $0x1d8] sm:$0xff] %v6817
    %7294 = vst [vmem:[#allocation8 + $0x1e0] sm:$0xff] %v6921
    %7295 = vst [vmem:[#allocation8 + $0x1e8] sm:$0xff] %v7025
    %7296 = vst [vmem:[#allocation8 + $0x1f0] sm:$0xff] %v7129
    %7297 = vst [vmem:[#allocation8 + $0x1f8] sm:$0xff] %v7233
    // Predicated region
    $region26: #{tpu_custom_call.1} parent=1 // pred_check
      _
    $region27: #{tpu_custom_call.1} parent=1 // pred_check_branch
      %7299 = sbr.rel (0) target = $region29
    $region28: #{tpu_custom_call.1} parent=1 // pred_region
      %s7301 = ssub.s32 8192, 8192
      %7302 = vsyncadd [#allocation4], %s7301
      %s7303 = sshll.u32 [#allocation8], 4
      %s7304 = int_to_ptr.vmem [resolvable:$true] %s7303
      %7309 = dma.vmem_to_hbm [thread:$0]  %s7304, 8192, %s3, [#allocation4], 128, 128, 8
    $region29: #{tpu_custom_call.1} parent=1 // pred_fallthru
      _
    // Predicated region
    $region30: #{tpu_custom_call.1} parent=1 // pred_check
      _
    $region31: #{tpu_custom_call.1} parent=1 // pred_check_branch
      %7311 = sbr.rel (0) target = $region33
    $region32: #{tpu_custom_call.1} parent=1 // pred_region
      %7312 = dma.done [#allocation4], 8192
    $region33: #{tpu_custom_call.1} parent=1 // pred_fallthru
      _
    %7313 = vsyncpa [#allocation3], 1
    %7314 = vsyncpa [#allocation6], 1
    %7315 = vsyncpa [#allocation4], 1

</llo_original>
